<compile_context>
chip_gen: v5e
topology: v5e:2x2
jax: 0.10.0
libtpu: 0.0.40
codegen_flags: <defaults>
</compile_context>

<pallas_src>
import functools

import jax
import jax.numpy as jnp
import numpy as np
from jax.experimental import pallas as pl
from jax.experimental.pallas import tpu as pltpu


def _grid_sample_kernel(coord_ref, fsrc_ref, out_ref, *, L, H, W):
    """One (batch, point-tile) grid step of separable trilinear grid_sample.

    coord_ref : (1, 8, T)       rows 0/1/2 = px/py/pz pixel coords (x->W, y->H, z->L axes)
    fsrc_ref  : (1, CP*L*H, W)  channel-padded source volume, x (W) fastest
    out_ref   : (1, CP, T)      lane-dense output block (T multiple of 128, CP multiple of 8)
    """
    CP = out_ref.shape[1]
    coords = coord_ref[0]                       # (8, T)
    px = coords[0:1, :]                         # (1, T)
    py = coords[1:2, :]
    pz = coords[2:3, :]
    T = px.shape[-1]

    x0f, y0f, z0f = jnp.floor(px), jnp.floor(py), jnp.floor(pz)
    wx1, wy1, wz1 = px - x0f, py - y0f, pz - z0f
    wx0, wy0, wz0 = 1.0 - wx1, 1.0 - wy1, 1.0 - wz1
    x0 = x0f.astype(jnp.int32)
    y0 = y0f.astype(jnp.int32)
    z0 = z0f.astype(jnp.int32)
    x1 = jnp.minimum(x0 + 1, W - 1)
    y1 = jnp.minimum(y0 + 1, H - 1)
    z1 = jnp.minimum(z0 + 1, L - 1)

    # Separable per-axis two-hot weight matrices: 2 jnp.where passes per axis, O((L+H+W)*T)
    # VALU work instead of the old 8-pass O(S*T) dense matrix.  When a corner clamps
    # (x0 == x1 at the boundary) the two contributions add, matching grid_sample semantics.
    rx = jax.lax.broadcasted_iota(jnp.int32, (W, T), 0)
    mx = jnp.where(rx == x0, wx0, 0.0) + jnp.where(rx == x1, wx1, 0.0)      # (W, T)
    ry = jax.lax.broadcasted_iota(jnp.int32, (H, T), 0)
    my = jnp.where(ry == y0, wy0, 0.0) + jnp.where(ry == y1, wy1, 0.0)      # (H, T)
    rz = jax.lax.broadcasted_iota(jnp.int32, (L, T), 0)
    mz = jnp.where(rz == z0, wz0, 0.0) + jnp.where(rz == z1, wz1, 0.0)      # (L, T)

    # x-contraction on the MXU: (CP*L*H, W) @ (W, T) -> (CP*L*H, T), lane-dense result.
    # HIGHEST kept: with K = W the matmul stays off the critical path (review: drop to HIGH
    # only if the MXU ever becomes visible; the convex non-negative weights don't cancel).
    fsrc = fsrc_ref[0]                                                      # (CP*L*H, W)
    a = jnp.dot(fsrc, mx, preferred_element_type=jnp.float32,
                precision=jax.lax.Precision.HIGHEST)                        # (CP*L*H, T)

    # y- and z-contractions: per-point VPU multiply + sublane (XLU) reductions.  The reshapes
    # only regroup leading rows (free when H, L are multiples of 8, as at typical volumes).
    a = a.reshape(CP * L, H, T)
    b = jnp.sum(a * my[None, :, :], axis=1)                                 # (CP*L, T)
    b = b.reshape(CP, L, T)
    out_ref[0] = jnp.sum(b * mz[None, :, :], axis=1)                        # (CP, T)


def _vmem_limit_bytes():
    """Generation-aware scoped-VMEM request (v5e/v6e: 128 MiB physical; v7x: 64 MiB per TC)."""
    cap = None
    try:
        info = pltpu.get_tpu_info()
        cap = getattr(info, "vmem_capacity_bytes", None)
    except Exception:
        cap = None
    if not cap or cap <= 0:
        cap = 64 * 1024 * 1024                      # conservative default: v7x per-TC VMEM
    if cap >= 100 * 1024 * 1024:                    # v5e / v6e
        return 100 * 1024 * 1024
    return 48 * 1024 * 1024                         # v7x


def _pick_point_tile(n_pad, L, H, W, CP, budget_bytes):
    """Largest lane-aligned point tile dividing n_pad whose per-step scratch fits the budget."""
    for t in (4096, 2048, 1024, 512, 256, 128):
        if n_pad % t:
            continue
        step_bytes = (
            3 * 4 * CP * L * H * t            # MXU result A + elementwise product temp + slack
            + 2 * 4 * CP * L * t              # y-reduced intermediate + temp
            + 5 * 4 * (L + H + W) * t         # mx/my/mz (f32) + int32 iotas / compare temps
            + 2 * 4 * (8 + CP) * t            # double-buffered coord + output blocks
        )
        if step_bytes <= budget_bytes:
            return t
    return 128                                # n_pad is always a multiple of 128


def dfwin2_forward(f, conv_w, conv_b, gamma, beta, *, kernel_size, scope, eps=1e-5):
    """f: (B, L, H, W, C) float32 -> (B, L, H, W, C) float32 (matches PyTorch DfWin2.forward)."""
    B, L, H, W, C = f.shape
    p = (kernel_size - 1) // 2
    N = L * H * W
    f = f.astype(jnp.float32)

    # ---- Conv3d + BatchNorm3d (train stats) + scope*tanh: tiny 3-channel work, stays in XLA ----
    fp = jnp.transpose(f, (0, 4, 1, 2, 3))                               # (B, C, L, H, W)
    off = jax.lax.conv_general_dilated(
        fp, conv_w, (1, 1, 1), [(p, p)] * 3,
        dimension_numbers=('NCDHW', 'OIDHW', 'NCDHW'),
        precision=jax.lax.Precision.HIGHEST)
    off = off + conv_b[None, :, None, None, None]
    mean = off.mean(axis=(0, 2, 3, 4), keepdims=True)
    var = ((off - mean) ** 2).mean(axis=(0, 2, 3, 4), keepdims=True)     # biased var (BN train)
    off = (off - mean) * jax.lax.rsqrt(var + eps)
    off = off * gamma[None, :, None, None, None] + beta[None, :, None, None, None]
    off = jnp.tanh(off * float(scope))                                   # (B, 3, L, H, W)

    # ---- new_grid = offset/[l,h,w] + offset, clamp, align_corners=True pixel coordinates ----
    # grid_sample convention: channel 0 -> x (W axis), 1 -> y (H axis), 2 -> z (L axis).
    gx = jnp.clip(off[:, 0] * (1.0 + 1.0 / L), -1.0, 1.0)
    gy = jnp.clip(off[:, 1] * (1.0 + 1.0 / H), -1.0, 1.0)
    gz = jnp.clip(off[:, 2] * (1.0 + 1.0 / W), -1.0, 1.0)
    px = ((gx + 1.0) * 0.5 * (W - 1)).reshape(B, N)
    py = ((gy + 1.0) * 0.5 * (H - 1)).reshape(B, N)
    pz = ((gz + 1.0) * 0.5 * (L - 1)).reshape(B, N)

    # Packed coordinate block (one aligned DMA per step) + N padded to a multiple of 128.
    N_pad = -(-N // 128) * 128
    coords = jnp.stack([px, py, pz], axis=1)                             # (B, 3, N)
    coords = jnp.pad(coords, ((0, 0), (0, 8 - 3), (0, N_pad - N)))       # (B, 8, N_pad)

    # Channel-padded, x-fastest source volume for the separable x-contraction (free reshape).
    CP = -(-C // 8) * 8
    f_src = jnp.pad(fp, ((0, 0), (0, CP - C), (0, 0), (0, 0), (0, 0)))   # (B, CP, L, H, W)
    f_src = f_src.reshape(B, CP * L * H, W)

    vmem_limit = _vmem_limit_bytes()
    fsrc_buf_bytes = 4 * CP * L * H * (-(-W // 128) * 128)               # lane-padded VMEM buf
    tile_budget = max(8 * 1024 * 1024, (3 * vmem_limit) // 4 - 2 * fsrc_buf_bytes)
    tile = _pick_point_tile(N_pad, L, H, W, CP, tile_budget)
    grid = (B, N_pad // tile)

    out_t = pl.pallas_call(
        functools.partial(_grid_sample_kernel, L=L, H=H, W=W),
        out_shape=jax.ShapeDtypeStruct((B, CP, N_pad), jnp.float32),
        grid=grid,
        in_specs=[pl.BlockSpec((1, 8, tile), lambda b, t: (b, 0, t)),
                  pl.BlockSpec((1, CP * L * H, W), lambda b, t: (b, 0, 0))],
        out_specs=pl.BlockSpec((1, CP, tile), lambda b, t: (b, 0, t)),
        compiler_params=pltpu.CompilerParams(
            dimension_semantics=("parallel", "parallel"),   # megacore / v7x 2 TCs
            vmem_limit_bytes=vmem_limit),
    )(coords, f_src)

    # Lane-dense (B, CP, N_pad) -> PyTorch output layout (B, L, H, W, C).
    # (Consumers able to take channels-major (B, C, N) directly could skip this transpose.)
    out = out_t[:, :C, :N]
    return jnp.transpose(out, (0, 2, 1)).reshape(B, L, H, W, C)


def dfwin2_reference(f, conv_w, conv_b, gamma, beta, *, kernel_size, scope):
    """Pure-JAX reference (independent gather-based grid_sample) for validation."""
    B, L, H, W, C = f.shape
    p = (kernel_size - 1) // 2
    fp = jnp.transpose(f, (0, 4, 1, 2, 3))                              # NCDHW
    off = jax.lax.conv_general_dilated(
        fp, conv_w, (1, 1, 1), [(p, p)] * 3,
        dimension_numbers=('NCDHW', 'OIDHW', 'NCDHW'),
        precision=jax.lax.Precision.HIGHEST)
    off = off + conv_b[None, :, None, None, None]
    mean = off.mean(axis=(0, 2, 3, 4), keepdims=True)
    var = ((off - mean) ** 2).mean(axis=(0, 2, 3, 4), keepdims=True)
    off = (off - mean) / jnp.sqrt(var + 1e-5)
    off = off * gamma[None, :, None, None, None] + beta[None, :, None, None, None]
    off = jnp.tanh(off * float(scope))
    gx = jnp.clip(off[:, 0] * (1.0 + 1.0 / L), -1.0, 1.0)
    gy = jnp.clip(off[:, 1] * (1.0 + 1.0 / H), -1.0, 1.0)
    gz = jnp.clip(off[:, 2] * (1.0 + 1.0 / W), -1.0, 1.0)
    px = (gx + 1.0) * 0.5 * (W - 1)
    py = (gy + 1.0) * 0.5 * (H - 1)
    pz = (gz + 1.0) * 0.5 * (L - 1)
    x0 = jnp.floor(px).astype(jnp.int32); x1 = jnp.minimum(x0 + 1, W - 1)
    y0 = jnp.floor(py).astype(jnp.int32); y1 = jnp.minimum(y0 + 1, H - 1)
    z0 = jnp.floor(pz).astype(jnp.int32); z1 = jnp.minimum(z0 + 1, L - 1)
    wx1 = px - x0; wy1 = py - y0; wz1 = pz - z0
    bidx = jnp.arange(B)[:, None, None, None]
    out = jnp.zeros((B, L, H, W, C), jnp.float32)
    for zi, wz in ((z0, 1.0 - wz1), (z1, wz1)):
        for yi, wy in ((y0, 1.0 - wy1), (y1, wy1)):
            for xi, wx in ((x0, 1.0 - wx1), (x1, wx1)):
                gathered = fp[bidx, :, zi, yi, xi]                      # (B, L, H, W, C)
                out = out + (wz * wy * wx)[..., None] * gathered
    return out


if __name__ == "__main__":
    key = jax.random.PRNGKey(0)
    B, C, L, H, W = 2, 4, 8, 8, 8
    kernel_size, scope = 3, 3

    kf, kw, kb, kg, kbe = jax.random.split(key, 5)
    # DfWin2(in_ch=C, kernel_size=3, scope=3): Conv3d(C, 3, 3, padding=1) + BatchNorm3d(3)
    f = jax.random.normal(kf, (B, L, H, W, C), jnp.float32)
    conv_w = 0.1 * jax.random.normal(kw, (3, C, kernel_size, kernel_size, kernel_size), jnp.float32)
    conv_b = 0.1 * jax.random.normal(kb, (3,), jnp.float32)
    gamma = 1.0 + 0.1 * jax.random.normal(kg, (3,), jnp.float32)
    beta = 0.1 * jax.random.normal(kbe, (3,), jnp.float32)

    fwd = jax.jit(functools.partial(dfwin2_forward, kernel_size=kernel_size, scope=scope))
    out = jax.block_until_ready(fwd(f, conv_w, conv_b, gamma, beta))
    assert out.shape == (B, L, H, W, C)

    ref = jax.block_until_ready(
        dfwin2_reference(f, conv_w, conv_b, gamma, beta,
                         kernel_size=kernel_size, scope=scope))
    np.testing.assert_allclose(np.asarray(out), np.asarray(ref), rtol=5e-3, atol=5e-3)

    print("KERNEL_OK")
</pallas_src>

<mosaic_0001>
module attributes {stable_mosaic.version = 11 : i64} {
  func.func @_grid_sample_kernel(%arg0: i32, %arg1: i32, %arg2: memref<1x8x512xf32, #tpu.memory_space<vmem>>, %arg3: memref<1x512x8xf32, #tpu.memory_space<vmem>>, %arg4: memref<1x8x512xf32, #tpu.memory_space<vmem>>) attributes {dimension_semantics = [#tpu.dimension_semantics<parallel>, #tpu.dimension_semantics<parallel>], iteration_bounds = array<i64: 2, 1>, scalar_prefetch = 0 : i64, scratch_operands = 0 : i64, tpu.core_type = #tpu.core_type<tc>, window_params = [{transform_indices = @transform_0, window_bounds = array<i64: 1, 8, 512>}, {transform_indices = @transform_1, window_bounds = array<i64: 1, 512, 8>}, {transform_indices = @transform_2, window_bounds = array<i64: 1, 8, 512>}]} {
    %c0 = arith.constant 0 : index
    %c0_0 = arith.constant 0 : index
    %c0_1 = arith.constant 0 : index
    %0 = vector.load %arg2[%c0, %c0_0, %c0_1] : memref<1x8x512xf32, #tpu.memory_space<vmem>>, vector<1x8x512xf32>
    %1 = vector.shape_cast %0 : vector<1x8x512xf32> to vector<8x512xf32>
    %2 = vector.extract_strided_slice %1 {offsets = [0, 0], sizes = [1, 512], strides = [1, 1]} : vector<8x512xf32> to vector<1x512xf32>
    %3 = vector.extract_strided_slice %1 {offsets = [1, 0], sizes = [1, 512], strides = [1, 1]} : vector<8x512xf32> to vector<1x512xf32>
    %4 = vector.extract_strided_slice %1 {offsets = [2, 0], sizes = [1, 512], strides = [1, 1]} : vector<8x512xf32> to vector<1x512xf32>
    %5 = math.floor %2 : vector<1x512xf32>
    %6 = math.floor %3 : vector<1x512xf32>
    %7 = math.floor %4 : vector<1x512xf32>
    %8 = arith.subf %2, %5 : vector<1x512xf32>
    %9 = arith.subf %3, %6 : vector<1x512xf32>
    %10 = arith.subf %4, %7 : vector<1x512xf32>
    %cst = arith.constant 1.000000e+00 : f32
    %11 = vector.broadcast %cst : f32 to vector<1x512xf32>
    %12 = arith.subf %11, %8 : vector<1x512xf32>
    %cst_2 = arith.constant 1.000000e+00 : f32
    %13 = vector.broadcast %cst_2 : f32 to vector<1x512xf32>
    %14 = arith.subf %13, %9 : vector<1x512xf32>
    %cst_3 = arith.constant 1.000000e+00 : f32
    %15 = vector.broadcast %cst_3 : f32 to vector<1x512xf32>
    %16 = arith.subf %15, %10 : vector<1x512xf32>
    %17 = arith.fptosi %5 : vector<1x512xf32> to vector<1x512xi32>
    %18 = arith.fptosi %6 : vector<1x512xf32> to vector<1x512xi32>
    %19 = arith.fptosi %7 : vector<1x512xf32> to vector<1x512xi32>
    %c1_i32 = arith.constant 1 : i32
    %20 = vector.broadcast %c1_i32 : i32 to vector<1x512xi32>
    %21 = arith.addi %17, %20 : vector<1x512xi32>
    %c7_i32 = arith.constant 7 : i32
    %22 = vector.broadcast %c7_i32 : i32 to vector<1x512xi32>
    %23 = arith.minsi %21, %22 : vector<1x512xi32>
    %c1_i32_4 = arith.constant 1 : i32
    %24 = vector.broadcast %c1_i32_4 : i32 to vector<1x512xi32>
    %25 = arith.addi %18, %24 : vector<1x512xi32>
    %c7_i32_5 = arith.constant 7 : i32
    %26 = vector.broadcast %c7_i32_5 : i32 to vector<1x512xi32>
    %27 = arith.minsi %25, %26 : vector<1x512xi32>
    %c1_i32_6 = arith.constant 1 : i32
    %28 = vector.broadcast %c1_i32_6 : i32 to vector<1x512xi32>
    %29 = arith.addi %19, %28 : vector<1x512xi32>
    %c7_i32_7 = arith.constant 7 : i32
    %30 = vector.broadcast %c7_i32_7 : i32 to vector<1x512xi32>
    %31 = arith.minsi %29, %30 : vector<1x512xi32>
    %32 = tpu.iota {dimensions = array<i32: 0>} : vector<8x512xi32>
    %33 = vector.broadcast %17 : vector<1x512xi32> to vector<8x512xi32>
    %34 = arith.cmpi eq, %32, %33 : vector<8x512xi32>
    %cst_8 = arith.constant 0.000000e+00 : f32
    %35 = vector.shape_cast %12 : vector<1x512xf32> to vector<1x512xf32>
    %36 = vector.broadcast %35 : vector<1x512xf32> to vector<8x512xf32>
    %37 = vector.broadcast %cst_8 : f32 to vector<8x512xf32>
    %38 = arith.select %34, %36, %37 : vector<8x512xi1>, vector<8x512xf32>
    %39 = vector.broadcast %23 : vector<1x512xi32> to vector<8x512xi32>
    %40 = arith.cmpi eq, %32, %39 : vector<8x512xi32>
    %cst_9 = arith.constant 0.000000e+00 : f32
    %41 = vector.shape_cast %8 : vector<1x512xf32> to vector<1x512xf32>
    %42 = vector.broadcast %41 : vector<1x512xf32> to vector<8x512xf32>
    %43 = vector.broadcast %cst_9 : f32 to vector<8x512xf32>
    %44 = arith.select %40, %42, %43 : vector<8x512xi1>, vector<8x512xf32>
    %45 = arith.addf %38, %44 : vector<8x512xf32>
    %46 = tpu.iota {dimensions = array<i32: 0>} : vector<8x512xi32>
    %47 = vector.broadcast %18 : vector<1x512xi32> to vector<8x512xi32>
    %48 = arith.cmpi eq, %46, %47 : vector<8x512xi32>
    %cst_10 = arith.constant 0.000000e+00 : f32
    %49 = vector.shape_cast %14 : vector<1x512xf32> to vector<1x512xf32>
    %50 = vector.broadcast %49 : vector<1x512xf32> to vector<8x512xf32>
    %51 = vector.broadcast %cst_10 : f32 to vector<8x512xf32>
    %52 = arith.select %48, %50, %51 : vector<8x512xi1>, vector<8x512xf32>
    %53 = vector.broadcast %27 : vector<1x512xi32> to vector<8x512xi32>
    %54 = arith.cmpi eq, %46, %53 : vector<8x512xi32>
    %cst_11 = arith.constant 0.000000e+00 : f32
    %55 = vector.shape_cast %9 : vector<1x512xf32> to vector<1x512xf32>
    %56 = vector.broadcast %55 : vector<1x512xf32> to vector<8x512xf32>
    %57 = vector.broadcast %cst_11 : f32 to vector<8x512xf32>
    %58 = arith.select %54, %56, %57 : vector<8x512xi1>, vector<8x512xf32>
    %59 = arith.addf %52, %58 : vector<8x512xf32>
    %60 = tpu.iota {dimensions = array<i32: 0>} : vector<8x512xi32>
    %61 = vector.broadcast %19 : vector<1x512xi32> to vector<8x512xi32>
    %62 = arith.cmpi eq, %60, %61 : vector<8x512xi32>
    %cst_12 = arith.constant 0.000000e+00 : f32
    %63 = vector.shape_cast %16 : vector<1x512xf32> to vector<1x512xf32>
    %64 = vector.broadcast %63 : vector<1x512xf32> to vector<8x512xf32>
    %65 = vector.broadcast %cst_12 : f32 to vector<8x512xf32>
    %66 = arith.select %62, %64, %65 : vector<8x512xi1>, vector<8x512xf32>
    %67 = vector.broadcast %31 : vector<1x512xi32> to vector<8x512xi32>
    %68 = arith.cmpi eq, %60, %67 : vector<8x512xi32>
    %cst_13 = arith.constant 0.000000e+00 : f32
    %69 = vector.shape_cast %10 : vector<1x512xf32> to vector<1x512xf32>
    %70 = vector.broadcast %69 : vector<1x512xf32> to vector<8x512xf32>
    %71 = vector.broadcast %cst_13 : f32 to vector<8x512xf32>
    %72 = arith.select %68, %70, %71 : vector<8x512xi1>, vector<8x512xf32>
    %73 = arith.addf %66, %72 : vector<8x512xf32>
    %c0_14 = arith.constant 0 : index
    %c0_15 = arith.constant 0 : index
    %c0_16 = arith.constant 0 : index
    %74 = vector.load %arg3[%c0_14, %c0_15, %c0_16] : memref<1x512x8xf32, #tpu.memory_space<vmem>>, vector<1x512x8xf32>
    %75 = vector.shape_cast %74 : vector<1x512x8xf32> to vector<512x8xf32>
    %cst_17 = arith.constant dense<0.000000e+00> : vector<512x512xf32>
    %76 = tpu.matmul %75, %45, %cst_17 {dimension_numbers = #tpu.dot_dimension_numbers<[1], [0], [0], [1], [0, 0, 1, 1], [], []>, precision = #tpu.contract_precision<fp32>} : vector<512x8xf32>, vector<8x512xf32>, vector<512x512xf32> -> vector<512x512xf32>
    %77 = vector.shape_cast %76 : vector<512x512xf32> to vector<64x8x512xf32>
    %78 = vector.shape_cast %59 : vector<8x512xf32> to vector<1x8x512xf32>
    %79 = vector.broadcast %78 : vector<1x8x512xf32> to vector<64x8x512xf32>
    %80 = arith.mulf %77, %79 : vector<64x8x512xf32>
    %cst_18 = arith.constant dense<0.000000e+00> : vector<64x512xf32>
    %81 = vector.multi_reduction <add>, %80, %cst_18 [1] : vector<64x8x512xf32> to vector<64x512xf32>
    %82 = vector.shape_cast %81 : vector<64x512xf32> to vector<8x8x512xf32>
    %83 = vector.shape_cast %73 : vector<8x512xf32> to vector<1x8x512xf32>
    %84 = vector.broadcast %83 : vector<1x8x512xf32> to vector<8x8x512xf32>
    %85 = arith.mulf %82, %84 : vector<8x8x512xf32>
    %cst_19 = arith.constant dense<0.000000e+00> : vector<8x512xf32>
    %86 = vector.multi_reduction <add>, %85, %cst_19 [1] : vector<8x8x512xf32> to vector<8x512xf32>
    %c0_20 = arith.constant 0 : index
    %c0_21 = arith.constant 0 : index
    %c0_22 = arith.constant 0 : index
    %87 = vector.load %arg4[%c0_20, %c0_21, %c0_22] : memref<1x8x512xf32, #tpu.memory_space<vmem>>, vector<1x8x512xf32>
    %88 = vector.shape_cast %87 : vector<1x8x512xf32> to vector<8x512xf32>
    %89 = vector.shape_cast %86 : vector<8x512xf32> to vector<1x8x512xf32>
    tpu.vector_store %arg4[%c0_20, %c0_21, %c0_22], %89 {strides = array<i32>} : memref<1x8x512xf32, #tpu.memory_space<vmem>>, vector<1x8x512xf32>,
    return
  }
  func.func @transform_0(%arg0: i32, %arg1: i32) -> (i32, i32, i32) {
    %c0_i32 = arith.constant 0 : i32
    %c0_i32_0 = arith.constant 0 : i32
    return %arg0, %c0_i32, %arg1 : i32, i32, i32
  }
  func.func @transform_1(%arg0: i32, %arg1: i32) -> (i32, i32, i32) {
    %c0_i32 = arith.constant 0 : i32
    %c0_i32_0 = arith.constant 0 : i32
    %c0_i32_1 = arith.constant 0 : i32
    return %arg0, %c0_i32, %c0_i32_0 : i32, i32, i32
  }
  func.func @transform_2(%arg0: i32, %arg1: i32) -> (i32, i32, i32) {
    %c0_i32 = arith.constant 0 : i32
    %c0_i32_0 = arith.constant 0 : i32
    return %arg0, %c0_i32, %arg1 : i32, i32, i32
  }
}

</mosaic_0001>

<llo_original>
// kernel: dfwin2_forward.1
$region0: #{dfwin2_forward.1}
  #allocation0 [shape = 'u32[]', space=smem, size = 0x4, offset = 0x4, fixed_abs, tag = 'smem constant byte address 0x4 - core index']
  #allocation1 [shape = 'u32[72,128]{1,0:T(1,128)}', space=vmem, size = 0x9000, scoped, tag = 'internal scratch']
  %s0 = inlined_call_operand.vmem [shape: f32[2,8,512], index: 0, kind: input, shape index: {}]
  %s1 = inlined_call_operand.vmem [shape: f32[2,512,8], index: 1, kind: input, shape index: {}]
  %s2 = inlined_call_operand.vmem [shape: f32[2,8,512], index: 2, kind: output, shape index: {}]
  %s3 = sld [smem:[#allocation0]]
  $region41: #{dfwin2_forward.1} parent=0
    _
  %s5 = ssub.s32 1, %s3
  %s6 = scalar_select 0, %s5, %s3
  loop: start=0, step=1, limit=4
  $region2: #{dfwin2_forward.1} parent=0 // loop_pre_header
    _
  $region3: #{dfwin2_forward.1} parent=0 // loop_header
    %s8 = sphi 0, %s12
    %p9 = scmp.ge.s32.totalorder %s8, 4
    %s15 = sphi 0, %s27
    %s16 = sphi 0, %s23
    %s17 = sphi 0, %s15
    %s18 = sphi 0, %s16
    %s19 = sphi 0, %s17
    %s20 = sphi 0, %s18
    %s32 = sphi 0, %s34
    %s35 = sphi 0, %s32
    %s36 = sphi 0, %s35
    %s52 = sphi 0, %s36
    %s58 = sphi 0, %s60
    %s61 = sphi 0, %s58
    %s62 = sphi 0, %s61
    %s78 = sphi 0, %s62
    %s86 = sphi 0, %s88
    %s89 = sphi 0, %s86
    %s90 = sphi 0, %s89
    %s106 = sphi 0, %s90
  $region4: #{dfwin2_forward.1} parent=0 // loop_header_branch
    %11 = sbr.rel (%p9) target = $region8
  $region5: #{dfwin2_forward.1} parent=0 // loop_body
    %s13 = ssub.s32 %s8, 1
    %s14 = ssub.s32 %s8, 2
    %s21 = sadd.s32 1, %s16
    %p22 = scmp.ge.s32.totalorder %s21, 1
    %s23 = scalar_select %p22, 0, %s21
    %s24 = sadd.s32 1, %s15
    %s25 = scalar_select %p22, %s24, %s15
    %p26 = scmp.ge.s32.totalorder %s25, 2
    %s27 = scalar_select %p26, 0, %s25
    %s28 = ssub.s32 %s15, %s27
    %s29 = ssub.s32 %s16, %s23
    %s30 = sor.u32 %s28, %s29
    %p31 = scmp.eq.s32.totalorder %s30, 0
    %s33 = sadd.s32 %s32, 1
    %s34 = scalar_select %p31, %s32, %s33
    %p37 = pneg %p31
    %p38 = scmp.eq.s32.totalorder %s8, 1
    %p39 = por %p37, %p38
    %p40 = scmp.ne.s32.totalorder %s32, %s35
    %p41 = scmp.eq.s32.totalorder %s8, 0
    %p42 = por %p40, %p41
    %p43 = scmp.ne.s32.totalorder %s32, %s35
    %p44 = scmp.eq.s32.totalorder %s13, 1
    %p45 = por %p43, %p44
    %p46 = scmp.ne.s32.totalorder %s35, %s36
    %p47 = scmp.eq.s32.totalorder %s13, 0
    %p48 = por %p46, %p47
    %p49 = scmp.ne.s32.totalorder %s35, %s36
    %p50 = scmp.eq.s32.totalorder %s14, 1
    %p51 = por %p49, %p50
    %p53 = scmp.ne.s32.totalorder %s36, %s52
    %p54 = scmp.eq.s32.totalorder %s14, 0
    %p55 = por %p53, %p54
    %s56 = ssub.s32 %s15, %s27
    %p57 = scmp.eq.s32.totalorder %s56, 0
    %s59 = sadd.s32 %s58, 1
    %s60 = scalar_select %p57, %s58, %s59
    %p63 = pneg %p57
    %p64 = scmp.eq.s32.totalorder %s8, 1
    %p65 = por %p63, %p64
    %p66 = scmp.ne.s32.totalorder %s58, %s61
    %p67 = scmp.eq.s32.totalorder %s8, 0
    %p68 = por %p66, %p67
    %p69 = scmp.ne.s32.totalorder %s58, %s61
    %p70 = scmp.eq.s32.totalorder %s13, 1
    %p71 = por %p69, %p70
    %p72 = scmp.ne.s32.totalorder %s61, %s62
    %p73 = scmp.eq.s32.totalorder %s13, 0
    %p74 = por %p72, %p73
    %p75 = scmp.ne.s32.totalorder %s61, %s62
    %p76 = scmp.eq.s32.totalorder %s14, 1
    %p77 = por %p75, %p76
    %p79 = scmp.ne.s32.totalorder %s62, %s78
    %p80 = scmp.eq.s32.totalorder %s14, 0
    %p81 = por %p79, %p80
    %s82 = ssub.s32 %s15, %s27
    %s83 = ssub.s32 %s16, %s23
    %s84 = sor.u32 %s82, %s83
    %p85 = scmp.eq.s32.totalorder %s84, 0
    %s87 = sadd.s32 %s86, 1
    %s88 = scalar_select %p85, %s86, %s87
    %p91 = pneg %p85
    %p92 = scmp.eq.s32.totalorder %s8, 1
    %p93 = por %p91, %p92
    %p94 = scmp.ne.s32.totalorder %s86, %s89
    %p95 = scmp.eq.s32.totalorder %s8, 0
    %p96 = por %p94, %p95
    %p97 = scmp.ne.s32.totalorder %s86, %s89
    %p98 = scmp.eq.s32.totalorder %s13, 1
    %p99 = por %p97, %p98
    %p100 = scmp.ne.s32.totalorder %s89, %s90
    %p101 = scmp.eq.s32.totalorder %s13, 0
    %p102 = por %p100, %p101
    %p103 = scmp.ne.s32.totalorder %s89, %s90
    %p104 = scmp.eq.s32.totalorder %s14, 1
    %p105 = por %p103, %p104
    %p107 = scmp.ne.s32.totalorder %s90, %s106
    %p108 = scmp.eq.s32.totalorder %s14, 0
    %p109 = por %p107, %p108
    %p110 = scmp.le.s32.totalorder 1, %s8
    %p111 = scmp.lt.s32.totalorder %s8, 3
    %p112 = pnand %p110, %p111
    %p113 = pneg %p112
    // Predicated region
    $region9: #{dfwin2_forward.1} parent=5 // pred_check
      _
    $region10: #{dfwin2_forward.1} parent=5 // pred_check_branch
      %115 = sbr.rel (%p112) target = $region12
    $region11: #{dfwin2_forward.1} parent=5 // pred_region
      %s116 = ssub.s32 %s8, 1
    $region12: #{dfwin2_forward.1} parent=5 // pred_fallthru
      _
    %p117 = scmp.lt.s32.totalorder %s8, 2
    // Predicated region
    $region13: #{dfwin2_forward.1} parent=5 // pred_check
      %p118 = pneg %p117
    $region14: #{dfwin2_forward.1} parent=5 // pred_check_branch
      %120 = sbr.rel (%p118) target = $region16
    $region15: #{dfwin2_forward.1} parent=5 // pred_region
      // Predicated region
      $region17: #{dfwin2_forward.1} parent=15 // pred_check
        %p121 = pneg %p42
      $region18: #{dfwin2_forward.1} parent=15 // pred_check_branch
        %123 = sbr.rel (%p121) target = $region20
      $region19: #{dfwin2_forward.1} parent=15 // pred_region
        %s124 = smul.u32 4, %s16
        %p125 = scmp.lt.s32.totalorder %s15, 1
        %s126 = scalar_select %p125, %s15, 1
        %p127 = scmp.lt.s32.totalorder %s124, 3
        %s128 = scalar_select %p127, %s124, 3
        %s129 = smul.addr %s126, 4
        %s130 = sadd.s32 %s128, %s129
        %s131 = smul.addr %s130, 8
        %s132 = scalar_lea.vmem %s0, %s131
        %s133 = smul.u32 4, %s16
      $region20: #{dfwin2_forward.1} parent=15 // pred_fallthru
        _
      // Predicated region
      $region21: #{dfwin2_forward.1} parent=15 // pred_check
        %p134 = pneg %p68
      $region22: #{dfwin2_forward.1} parent=15 // pred_check_branch
        %136 = sbr.rel (%p134) target = $region24
      $region23: #{dfwin2_forward.1} parent=15 // pred_region
        %p137 = scmp.lt.s32.totalorder %s15, 1
        %s138 = scalar_select %p137, %s15, 1
        %s139 = smul.addr %s138, 64
        %s140 = smul.addr %s139, 8
        %s141 = scalar_lea.vmem %s1, %s140
      $region24: #{dfwin2_forward.1} parent=15 // pred_fallthru
        _
    $region16: #{dfwin2_forward.1} parent=5 // pred_fallthru
      _
    %p142 = scmp.le.s32.totalorder 1, %s8
    %p143 = scmp.lt.s32.totalorder %s8, 3
    %p144 = pnand %p142, %p143
    %p145 = pneg %p144
    // Predicated region
    $region25: #{dfwin2_forward.1} parent=5 // pred_check
      _
    $region26: #{dfwin2_forward.1} parent=5 // pred_check_branch
      %147 = sbr.rel (%p144) target = $region28
    $region27: #{dfwin2_forward.1} parent=5 // pred_region
      %s148 = ssub.s32 %s8, 1
      %s149 = smul.u32 4, %s18
      %p150 = scmp.lt.s32.totalorder %s17, 1
      %s151 = scalar_select %p150, %s17, 1
      %p152 = scmp.lt.s32.totalorder %s149, 3
      %s153 = scalar_select %p152, %s149, 3
      %s154 = smul.addr %s151, 4
      %s155 = sadd.s32 %s153, %s154
      %s156 = smul.addr %s155, 8
      %s157 = scalar_lea.vmem %s0, %s156
      %p158 = pneg %p48
      %p159 = pneg %p45
      %p160 = scmp.lt.s32.totalorder %s17, 1
      %s161 = scalar_select %p160, %s17, 1
      %s162 = smul.addr %s161, 64
      %s163 = smul.addr %s162, 8
      %s164 = scalar_lea.vmem %s1, %s163
      %p165 = pneg %p74
      %p166 = pneg %p71
      %p167 = pneg %p102
      %p168 = pneg %p99
      %s169 = smul.u32 4, %s18
      %p170 = scmp.lt.s32.totalorder %s17, 1
      %s171 = scalar_select %p170, %s17, 1
      %p172 = scmp.lt.s32.totalorder %s169, 3
      %s173 = scalar_select %p172, %s169, 3
      %s174 = smul.addr %s171, 4
      %s175 = sadd.s32 %s173, %s174
      %s176 = smul.addr %s175, 8
      %s177 = scalar_lea.vmem %s2, %s176
      %s178 = smul.u32 4, %s18
      %p179 = scmp.lt.s32.totalorder %s17, 1
      %s180 = scalar_select %p179, %s17, 1
      %p181 = scmp.lt.s32.totalorder %s178, 3
      %s182 = scalar_select %p181, %s178, 3
      %s183 = smul.addr %s180, 4
      %s184 = sadd.s32 %s182, %s183
      %s185 = smul.addr %s184, 8
      %s186 = scalar_lea.vmem %s0, %s185
      %s187 = smul.u32 4, %s18
      %p188 = scmp.lt.s32.totalorder %s17, 1
      %s189 = scalar_select %p188, %s17, 1
      %s190 = smul.addr %s189, 64
      %s191 = smul.addr %s190, 8
      %s192 = scalar_lea.vmem %s1, %s191
      %s193 = smul.u32 4, %s18
      %p194 = scmp.lt.s32.totalorder %s17, 1
      %s195 = scalar_select %p194, %s17, 1
      %p196 = scmp.lt.s32.totalorder %s193, 3
      %s197 = scalar_select %p196, %s193, 3
      %s198 = smul.addr %s195, 4
      %s199 = sadd.s32 %s197, %s198
      %s200 = smul.addr %s199, 8
      %s201 = scalar_lea.vmem %s2, %s200
      %s202 = smul.u32 4, %s18
      %v203 = vld [vmem:[%s186] sm:$0xff]
      %v204 = vld [vmem:[%s186 + $0x8] sm:$0xff]
      %v205 = vld [vmem:[%s186 + $0x10] sm:$0xff]
      %v206 = vld [vmem:[%s186 + $0x18] sm:$0xff]
      %v207 = vfloor.f32 %v203
      %v208 = vfloor.f32 %v204
      %v209 = vfloor.f32 %v205
      %v210 = vfloor.f32 %v206
      %v211 = vsub.f32 %v203, %v207
      %v212 = vsub.f32 %v204, %v208
      %v213 = vsub.f32 %v205, %v209
      %v214 = vsub.f32 %v206, %v210
      %v215 = vsub.f32 1.0, %v211
      %v216 = vsub.f32 1.0, %v212
      %v217 = vsub.f32 1.0, %v213
      %v218 = vsub.f32 1.0, %v214
      %v219 = vcvt.f32.s32.to.zero.pseudo %v207
      %v220 = vcvt.f32.s32.to.zero.pseudo %v208
      %v221 = vcvt.f32.s32.to.zero.pseudo %v209
      %v222 = vcvt.f32.s32.to.zero.pseudo %v210
      %v223 = vadd.s32 %v219, 1
      %v224 = vadd.s32 %v220, 1
      %v225 = vadd.s32 %v221, 1
      %v226 = vadd.s32 %v222, 1
      %vm227 = vcmp.lt.s32.totalorder %v223, 7
      %v228 = vsel %vm227, %v223, 7
      %vm229 = vcmp.lt.s32.totalorder %v224, 7
      %v230 = vsel %vm229, %v224, 7
      %vm231 = vcmp.lt.s32.totalorder %v225, 7
      %v232 = vsel %vm231, %v225, 7
      %vm233 = vcmp.lt.s32.totalorder %v226, 7
      %v234 = vsel %vm233, %v226, 7
      %v235 = vlaneseq
      %v236 = vshrl.u32 %v235, 7
      %v237 = vperm.slane %v219, 0
      %v238 = vperm.slane %v220, 0
      %v239 = vperm.slane %v221, 0
      %v240 = vperm.slane %v222, 0
      %vm241 = vcmp.eq.s32.totalorder %v236, %v237
      %vm242 = vcmp.eq.s32.totalorder %v236, %v238
      %vm243 = vcmp.eq.s32.totalorder %v236, %v239
      %vm244 = vcmp.eq.s32.totalorder %v236, %v240
      %v245 = vperm.slane %v215, 0
      %v246 = vperm.slane %v216, 0
      %v247 = vperm.slane %v217, 0
      %v248 = vperm.slane %v218, 0
      %v249 = vsel %vm241, %v245, 0.0
      %v250 = vsel %vm242, %v246, 0.0
      %v251 = vsel %vm243, %v247, 0.0
      %v252 = vsel %vm244, %v248, 0.0
      %v253 = vperm.slane %v228, 0
      %v254 = vperm.slane %v230, 0
      %v255 = vperm.slane %v232, 0
      %v256 = vperm.slane %v234, 0
      %vm257 = vcmp.eq.s32.totalorder %v236, %v253
      %vm258 = vcmp.eq.s32.totalorder %v236, %v254
      %vm259 = vcmp.eq.s32.totalorder %v236, %v255
      %vm260 = vcmp.eq.s32.totalorder %v236, %v256
      %v261 = vperm.slane %v211, 0
      %v262 = vperm.slane %v212, 0
      %v263 = vperm.slane %v213, 0
      %v264 = vperm.slane %v214, 0
      %v265 = vsel %vm257, %v261, 0.0
      %v266 = vsel %vm258, %v262, 0.0
      %v267 = vsel %vm259, %v263, 0.0
      %v268 = vsel %vm260, %v264, 0.0
      %v269 = vadd.f32 %v249, %v265
      %v270 = vadd.f32 %v250, %v266
      %v271 = vadd.f32 %v251, %v267
      %v272 = vadd.f32 %v252, %v268
      %v273 = vperm.slane %v219, 1
      %v274 = vperm.slane %v220, 1
      %v275 = vperm.slane %v221, 1
      %v276 = vperm.slane %v222, 1
      %vm277 = vcmp.eq.s32.totalorder %v236, %v273
      %vm278 = vcmp.eq.s32.totalorder %v236, %v274
      %vm279 = vcmp.eq.s32.totalorder %v236, %v275
      %vm280 = vcmp.eq.s32.totalorder %v236, %v276
      %v281 = vperm.slane %v215, 1
      %v282 = vperm.slane %v216, 1
      %v283 = vperm.slane %v217, 1
      %v284 = vperm.slane %v218, 1
      %v285 = vsel %vm277, %v281, 0.0
      %v286 = vsel %vm278, %v282, 0.0
      %v287 = vsel %vm279, %v283, 0.0
      %v288 = vsel %vm280, %v284, 0.0
      %v289 = vperm.slane %v228, 1
      %v290 = vperm.slane %v230, 1
      %v291 = vperm.slane %v232, 1
      %v292 = vperm.slane %v234, 1
      %vm293 = vcmp.eq.s32.totalorder %v236, %v289
      %vm294 = vcmp.eq.s32.totalorder %v236, %v290
      %vm295 = vcmp.eq.s32.totalorder %v236, %v291
      %vm296 = vcmp.eq.s32.totalorder %v236, %v292
      %v297 = vperm.slane %v211, 1
      %v298 = vperm.slane %v212, 1
      %v299 = vperm.slane %v213, 1
      %v300 = vperm.slane %v214, 1
      %v301 = vsel %vm293, %v297, 0.0
      %v302 = vsel %vm294, %v298, 0.0
      %v303 = vsel %vm295, %v299, 0.0
      %v304 = vsel %vm296, %v300, 0.0
      %v305 = vadd.f32 %v285, %v301
      %v306 = vadd.f32 %v286, %v302
      %v307 = vadd.f32 %v287, %v303
      %v308 = vadd.f32 %v288, %v304
      %v309 = vperm.slane %v219, 2
      %v310 = vperm.slane %v220, 2
      %v311 = vperm.slane %v221, 2
      %v312 = vperm.slane %v222, 2
      %vm313 = vcmp.eq.s32.totalorder %v236, %v309
      %vm314 = vcmp.eq.s32.totalorder %v236, %v310
      %vm315 = vcmp.eq.s32.totalorder %v236, %v311
      %vm316 = vcmp.eq.s32.totalorder %v236, %v312
      %v317 = vperm.slane %v215, 2
      %v318 = vperm.slane %v216, 2
      %v319 = vperm.slane %v217, 2
      %v320 = vperm.slane %v218, 2
      %v321 = vsel %vm313, %v317, 0.0
      %v322 = vsel %vm314, %v318, 0.0
      %v323 = vsel %vm315, %v319, 0.0
      %v324 = vsel %vm316, %v320, 0.0
      %v325 = vperm.slane %v228, 2
      %v326 = vperm.slane %v230, 2
      %v327 = vperm.slane %v232, 2
      %v328 = vperm.slane %v234, 2
      %vm329 = vcmp.eq.s32.totalorder %v236, %v325
      %vm330 = vcmp.eq.s32.totalorder %v236, %v326
      %vm331 = vcmp.eq.s32.totalorder %v236, %v327
      %vm332 = vcmp.eq.s32.totalorder %v236, %v328
      %v333 = vperm.slane %v211, 2
      %v334 = vperm.slane %v212, 2
      %v335 = vperm.slane %v213, 2
      %v336 = vperm.slane %v214, 2
      %v337 = vsel %vm329, %v333, 0.0
      %v338 = vsel %vm330, %v334, 0.0
      %v339 = vsel %vm331, %v335, 0.0
      %v340 = vsel %vm332, %v336, 0.0
      %v341 = vadd.f32 %v321, %v337
      %v342 = vadd.f32 %v322, %v338
      %v343 = vadd.f32 %v323, %v339
      %v344 = vadd.f32 %v324, %v340
      %v345 = vld [vmem:[%s192] sm:$0xff]
      %v346 = vld [vmem:[%s192 + $0x8] sm:$0xff]
      %v347 = vld [vmem:[%s192 + $0x10] sm:$0xff]
      %v348 = vld [vmem:[%s192 + $0x18] sm:$0xff]
      %v349 = vld [vmem:[%s192 + $0x20] sm:$0xff]
      %v350 = vld [vmem:[%s192 + $0x28] sm:$0xff]
      %v351 = vld [vmem:[%s192 + $0x30] sm:$0xff]
      %v352 = vld [vmem:[%s192 + $0x38] sm:$0xff]
      %v353 = vld [vmem:[%s192 + $0x40] sm:$0xff]
      %v354 = vld [vmem:[%s192 + $0x48] sm:$0xff]
      %v355 = vld [vmem:[%s192 + $0x50] sm:$0xff]
      %v356 = vld [vmem:[%s192 + $0x58] sm:$0xff]
      %v357 = vld [vmem:[%s192 + $0x60] sm:$0xff]
      %v358 = vld [vmem:[%s192 + $0x68] sm:$0xff]
      %v359 = vld [vmem:[%s192 + $0x70] sm:$0xff]
      %v360 = vld [vmem:[%s192 + $0x78] sm:$0xff]
      %v361 = vld [vmem:[%s192 + $0x80] sm:$0xff]
      %v362 = vld [vmem:[%s192 + $0x88] sm:$0xff]
      %v363 = vld [vmem:[%s192 + $0x90] sm:$0xff]
      %v364 = vld [vmem:[%s192 + $0x98] sm:$0xff]
      %v365 = vld [vmem:[%s192 + $0xa0] sm:$0xff]
      %v366 = vld [vmem:[%s192 + $0xa8] sm:$0xff]
      %v367 = vld [vmem:[%s192 + $0xb0] sm:$0xff]
      %v368 = vld [vmem:[%s192 + $0xb8] sm:$0xff]
      %v369 = vld [vmem:[%s192 + $0xc0] sm:$0xff]
      %v370 = vld [vmem:[%s192 + $0xc8] sm:$0xff]
      %v371 = vld [vmem:[%s192 + $0xd0] sm:$0xff]
      %v372 = vld [vmem:[%s192 + $0xd8] sm:$0xff]
      %v373 = vld [vmem:[%s192 + $0xe0] sm:$0xff]
      %v374 = vld [vmem:[%s192 + $0xe8] sm:$0xff]
      %v375 = vld [vmem:[%s192 + $0xf0] sm:$0xff]
      %v376 = vld [vmem:[%s192 + $0xf8] sm:$0xff]
      %v377 = vld [vmem:[%s192 + $0x100] sm:$0xff]
      %v378 = vld [vmem:[%s192 + $0x108] sm:$0xff]
      %v379 = vld [vmem:[%s192 + $0x110] sm:$0xff]
      %v380 = vld [vmem:[%s192 + $0x118] sm:$0xff]
      %v381 = vld [vmem:[%s192 + $0x120] sm:$0xff]
      %v382 = vld [vmem:[%s192 + $0x128] sm:$0xff]
      %v383 = vld [vmem:[%s192 + $0x130] sm:$0xff]
      %v384 = vld [vmem:[%s192 + $0x138] sm:$0xff]
      %v385 = vld [vmem:[%s192 + $0x140] sm:$0xff]
      %v386 = vld [vmem:[%s192 + $0x148] sm:$0xff]
      %v387 = vld [vmem:[%s192 + $0x150] sm:$0xff]
      %v388 = vld [vmem:[%s192 + $0x158] sm:$0xff]
      %v389 = vld [vmem:[%s192 + $0x160] sm:$0xff]
      %v390 = vld [vmem:[%s192 + $0x168] sm:$0xff]
      %v391 = vld [vmem:[%s192 + $0x170] sm:$0xff]
      %v392 = vld [vmem:[%s192 + $0x178] sm:$0xff]
      %v393 = vld [vmem:[%s192 + $0x180] sm:$0xff]
      %v394 = vld [vmem:[%s192 + $0x188] sm:$0xff]
      %v395 = vld [vmem:[%s192 + $0x190] sm:$0xff]
      %v396 = vld [vmem:[%s192 + $0x198] sm:$0xff]
      %v397 = vld [vmem:[%s192 + $0x1a0] sm:$0xff]
      %v398 = vld [vmem:[%s192 + $0x1a8] sm:$0xff]
      %v399 = vld [vmem:[%s192 + $0x1b0] sm:$0xff]
      %v400 = vld [vmem:[%s192 + $0x1b8] sm:$0xff]
      %v401 = vld [vmem:[%s192 + $0x1c0] sm:$0xff]
      %v402 = vld [vmem:[%s192 + $0x1c8] sm:$0xff]
      %v403 = vld [vmem:[%s192 + $0x1d0] sm:$0xff]
      %v404 = vld [vmem:[%s192 + $0x1d8] sm:$0xff]
      %v405 = vld [vmem:[%s192 + $0x1e0] sm:$0xff]
      %v406 = vld [vmem:[%s192 + $0x1e8] sm:$0xff]
      %v407 = vld [vmem:[%s192 + $0x1f0] sm:$0xff]
      %v408 = vld [vmem:[%s192 + $0x1f8] sm:$0xff]
      %vm409 = vcmask 64512
      %v411 = vsel %vm409, %v345, 0
      %v414 = vsel %vm409, %v346, 0
      %v417 = vsel %vm409, %v347, 0
      %v420 = vsel %vm409, %v348, 0
      %v423 = vsel %vm409, %v349, 0
      %v426 = vsel %vm409, %v350, 0
      %v429 = vsel %vm409, %v351, 0
      %v432 = vsel %vm409, %v352, 0
      %v435 = vsel %vm409, %v353, 0
      %v438 = vsel %vm409, %v354, 0
      %v441 = vsel %vm409, %v355, 0
      %v444 = vsel %vm409, %v356, 0
      %v447 = vsel %vm409, %v357, 0
      %v450 = vsel %vm409, %v358, 0
      %v453 = vsel %vm409, %v359, 0
      %v456 = vsel %vm409, %v360, 0
      %v459 = vsel %vm409, %v361, 0
      %v462 = vsel %vm409, %v362, 0
      %v465 = vsel %vm409, %v363, 0
      %v468 = vsel %vm409, %v364, 0
      %v471 = vsel %vm409, %v365, 0
      %v474 = vsel %vm409, %v366, 0
      %v477 = vsel %vm409, %v367, 0
      %v480 = vsel %vm409, %v368, 0
      %v483 = vsel %vm409, %v369, 0
      %v486 = vsel %vm409, %v370, 0
      %v489 = vsel %vm409, %v371, 0
      %v492 = vsel %vm409, %v372, 0
      %v495 = vsel %vm409, %v373, 0
      %v498 = vsel %vm409, %v374, 0
      %v501 = vsel %vm409, %v375, 0
      %v504 = vsel %vm409, %v376, 0
      %v507 = vsel %vm409, %v377, 0
      %v510 = vsel %vm409, %v378, 0
      %v513 = vsel %vm409, %v379, 0
      %v516 = vsel %vm409, %v380, 0
      %v519 = vsel %vm409, %v381, 0
      %v522 = vsel %vm409, %v382, 0
      %v525 = vsel %vm409, %v383, 0
      %v528 = vsel %vm409, %v384, 0
      %v531 = vsel %vm409, %v385, 0
      %v534 = vsel %vm409, %v386, 0
      %v537 = vsel %vm409, %v387, 0
      %v540 = vsel %vm409, %v388, 0
      %v543 = vsel %vm409, %v389, 0
      %v546 = vsel %vm409, %v390, 0
      %v549 = vsel %vm409, %v391, 0
      %v552 = vsel %vm409, %v392, 0
      %v555 = vsel %vm409, %v393, 0
      %v558 = vsel %vm409, %v394, 0
      %v561 = vsel %vm409, %v395, 0
      %v564 = vsel %vm409, %v396, 0
      %v567 = vsel %vm409, %v397, 0
      %v570 = vsel %vm409, %v398, 0
      %v573 = vsel %vm409, %v399, 0
      %v576 = vsel %vm409, %v400, 0
      %v579 = vsel %vm409, %v401, 0
      %v582 = vsel %vm409, %v402, 0
      %v585 = vsel %vm409, %v403, 0
      %v588 = vsel %vm409, %v404, 0
      %v591 = vsel %vm409, %v405, 0
      %v594 = vsel %vm409, %v406, 0
      %v597 = vsel %vm409, %v407, 0
      %v600 = vsel %vm409, %v408, 0
      %602 = vmatpush.msra.mxu0 0.0
      %603 = vmatpush.msra.mxu0 0.0
      %604 = vmatpush.msra.mxu0 0.0
      %605 = vmatpush.msra.mxu0 0.0
      %606 = vmatpush.msra.mxu0 0.0
      %607 = vmatpush.msra.mxu0 0.0
      %608 = vmatpush.msra.mxu0 0.0
      %609 = vmatpush.msra.mxu0 0.0
      %610 = vmatpush.msra.mxu0 0.0
      %611 = vmatpush.msra.mxu0 0.0
      %612 = vmatpush.msra.mxu0 0.0
      %613 = vmatpush.msra.mxu0 0.0
      %614 = vmatpush.msra.mxu0 0.0
      %615 = vmatpush.msra.mxu0 0.0
      %616 = vmatpush.msra.mxu0 0.0
      %v617 = vand.u32 %v269, 4294901760
      %618 = vmatpush.msra.mxu0 %v617
      %v619 = vand.u32 %v411, 4294901760
      %v620 = vsub.f32 %v411, %v619
      %v621 = vand.u32 %v620, 4294901760
      %v622 = vsub.f32 %v620, %v621
      %v623 = vand.u32 %v622, 4294901760
      %624 = vmatmul.f32.gmra.mxu0 %v623
      %v625 = vpop.f32.mrf.mxu0
      %v626 = vadd.f32 0.0, %v625
      %v627 = vand.u32 %v414, 4294901760
      %v628 = vsub.f32 %v414, %v627
      %v629 = vand.u32 %v628, 4294901760
      %v630 = vsub.f32 %v628, %v629
      %v631 = vand.u32 %v630, 4294901760
      %632 = vmatmul.f32.gmra.mxu0 %v631
      %v633 = vpop.f32.mrf.mxu0
      %v634 = vadd.f32 0.0, %v633
      %v635 = vand.u32 %v417, 4294901760
      %v636 = vsub.f32 %v417, %v635
      %v637 = vand.u32 %v636, 4294901760
      %v638 = vsub.f32 %v636, %v637
      %v639 = vand.u32 %v638, 4294901760
      %640 = vmatmul.f32.gmra.mxu0 %v639
      %v641 = vpop.f32.mrf.mxu0
      %v642 = vadd.f32 0.0, %v641
      %v643 = vand.u32 %v420, 4294901760
      %v644 = vsub.f32 %v420, %v643
      %v645 = vand.u32 %v644, 4294901760
      %v646 = vsub.f32 %v644, %v645
      %v647 = vand.u32 %v646, 4294901760
      %648 = vmatmul.f32.gmra.mxu0 %v647
      %v649 = vpop.f32.mrf.mxu0
      %v650 = vadd.f32 0.0, %v649
      %v651 = vand.u32 %v423, 4294901760
      %v652 = vsub.f32 %v423, %v651
      %v653 = vand.u32 %v652, 4294901760
      %v654 = vsub.f32 %v652, %v653
      %v655 = vand.u32 %v654, 4294901760
      %656 = vmatmul.f32.gmra.mxu0 %v655
      %v657 = vpop.f32.mrf.mxu0
      %v658 = vadd.f32 0.0, %v657
      %v659 = vand.u32 %v426, 4294901760
      %v660 = vsub.f32 %v426, %v659
      %v661 = vand.u32 %v660, 4294901760
      %v662 = vsub.f32 %v660, %v661
      %v663 = vand.u32 %v662, 4294901760
      %664 = vmatmul.f32.gmra.mxu0 %v663
      %v665 = vpop.f32.mrf.mxu0
      %v666 = vadd.f32 0.0, %v665
      %v667 = vand.u32 %v429, 4294901760
      %v668 = vsub.f32 %v429, %v667
      %v669 = vand.u32 %v668, 4294901760
      %v670 = vsub.f32 %v668, %v669
      %v671 = vand.u32 %v670, 4294901760
      %672 = vmatmul.f32.gmra.mxu0 %v671
      %v673 = vpop.f32.mrf.mxu0
      %v674 = vadd.f32 0.0, %v673
      %v675 = vand.u32 %v432, 4294901760
      %v676 = vsub.f32 %v432, %v675
      %v677 = vand.u32 %v676, 4294901760
      %v678 = vsub.f32 %v676, %v677
      %v679 = vand.u32 %v678, 4294901760
      %680 = vmatmul.f32.gmra.mxu0 %v679
      %v681 = vpop.f32.mrf.mxu0
      %v682 = vadd.f32 0.0, %v681
      %v683 = vand.u32 %v435, 4294901760
      %v684 = vsub.f32 %v435, %v683
      %v685 = vand.u32 %v684, 4294901760
      %v686 = vsub.f32 %v684, %v685
      %v687 = vand.u32 %v686, 4294901760
      %688 = vmatmul.f32.gmra.mxu0 %v687
      %v689 = vpop.f32.mrf.mxu0
      %v690 = vadd.f32 0.0, %v689
      %v691 = vand.u32 %v438, 4294901760
      %v692 = vsub.f32 %v438, %v691
      %v693 = vand.u32 %v692, 4294901760
      %v694 = vsub.f32 %v692, %v693
      %v695 = vand.u32 %v694, 4294901760
      %696 = vmatmul.f32.gmra.mxu0 %v695
      %v697 = vpop.f32.mrf.mxu0
      %v698 = vadd.f32 0.0, %v697
      %v699 = vand.u32 %v441, 4294901760
      %v700 = vsub.f32 %v441, %v699
      %v701 = vand.u32 %v700, 4294901760
      %v702 = vsub.f32 %v700, %v701
      %v703 = vand.u32 %v702, 4294901760
      %704 = vmatmul.f32.gmra.mxu0 %v703
      %v705 = vpop.f32.mrf.mxu0
      %v706 = vadd.f32 0.0, %v705
      %v707 = vand.u32 %v444, 4294901760
      %v708 = vsub.f32 %v444, %v707
      %v709 = vand.u32 %v708, 4294901760
      %v710 = vsub.f32 %v708, %v709
      %v711 = vand.u32 %v710, 4294901760
      %712 = vmatmul.f32.gmra.mxu0 %v711
      %v713 = vpop.f32.mrf.mxu0
      %v714 = vadd.f32 0.0, %v713
      %v715 = vand.u32 %v447, 4294901760
      %v716 = vsub.f32 %v447, %v715
      %v717 = vand.u32 %v716, 4294901760
      %v718 = vsub.f32 %v716, %v717
      %v719 = vand.u32 %v718, 4294901760
      %720 = vmatmul.f32.gmra.mxu0 %v719
      %v721 = vpop.f32.mrf.mxu0
      %v722 = vadd.f32 0.0, %v721
      %v723 = vand.u32 %v450, 4294901760
      %v724 = vsub.f32 %v450, %v723
      %v725 = vand.u32 %v724, 4294901760
      %v726 = vsub.f32 %v724, %v725
      %v727 = vand.u32 %v726, 4294901760
      %728 = vmatmul.f32.gmra.mxu0 %v727
      %v729 = vpop.f32.mrf.mxu0
      %v730 = vadd.f32 0.0, %v729
      %v731 = vand.u32 %v453, 4294901760
      %v732 = vsub.f32 %v453, %v731
      %v733 = vand.u32 %v732, 4294901760
      %v734 = vsub.f32 %v732, %v733
      %v735 = vand.u32 %v734, 4294901760
      %736 = vmatmul.f32.gmra.mxu0 %v735
      %v737 = vpop.f32.mrf.mxu0
      %v738 = vadd.f32 0.0, %v737
      %v739 = vand.u32 %v456, 4294901760
      %v740 = vsub.f32 %v456, %v739
      %v741 = vand.u32 %v740, 4294901760
      %v742 = vsub.f32 %v740, %v741
      %v743 = vand.u32 %v742, 4294901760
      %744 = vmatmul.f32.gmra.mxu0 %v743
      %v745 = vpop.f32.mrf.mxu0
      %v746 = vadd.f32 0.0, %v745
      %v747 = vand.u32 %v459, 4294901760
      %v748 = vsub.f32 %v459, %v747
      %v749 = vand.u32 %v748, 4294901760
      %v750 = vsub.f32 %v748, %v749
      %v751 = vand.u32 %v750, 4294901760
      %752 = vmatmul.f32.gmra.mxu0 %v751
      %v753 = vpop.f32.mrf.mxu0
      %v754 = vadd.f32 0.0, %v753
      %v755 = vand.u32 %v462, 4294901760
      %v756 = vsub.f32 %v462, %v755
      %v757 = vand.u32 %v756, 4294901760
      %v758 = vsub.f32 %v756, %v757
      %v759 = vand.u32 %v758, 4294901760
      %760 = vmatmul.f32.gmra.mxu0 %v759
      %v761 = vpop.f32.mrf.mxu0
      %v762 = vadd.f32 0.0, %v761
      %v763 = vand.u32 %v465, 4294901760
      %v764 = vsub.f32 %v465, %v763
      %v765 = vand.u32 %v764, 4294901760
      %v766 = vsub.f32 %v764, %v765
      %v767 = vand.u32 %v766, 4294901760
      %768 = vmatmul.f32.gmra.mxu0 %v767
      %v769 = vpop.f32.mrf.mxu0
      %v770 = vadd.f32 0.0, %v769
      %v771 = vand.u32 %v468, 4294901760
      %v772 = vsub.f32 %v468, %v771
      %v773 = vand.u32 %v772, 4294901760
      %v774 = vsub.f32 %v772, %v773
      %v775 = vand.u32 %v774, 4294901760
      %776 = vmatmul.f32.gmra.mxu0 %v775
      %v777 = vpop.f32.mrf.mxu0
      %v778 = vadd.f32 0.0, %v777
      %v779 = vand.u32 %v471, 4294901760
      %v780 = vsub.f32 %v471, %v779
      %v781 = vand.u32 %v780, 4294901760
      %v782 = vsub.f32 %v780, %v781
      %v783 = vand.u32 %v782, 4294901760
      %784 = vmatmul.f32.gmra.mxu0 %v783
      %v785 = vpop.f32.mrf.mxu0
      %v786 = vadd.f32 0.0, %v785
      %v787 = vand.u32 %v474, 4294901760
      %v788 = vsub.f32 %v474, %v787
      %v789 = vand.u32 %v788, 4294901760
      %v790 = vsub.f32 %v788, %v789
      %v791 = vand.u32 %v790, 4294901760
      %792 = vmatmul.f32.gmra.mxu0 %v791
      %v793 = vpop.f32.mrf.mxu0
      %v794 = vadd.f32 0.0, %v793
      %v795 = vand.u32 %v477, 4294901760
      %v796 = vsub.f32 %v477, %v795
      %v797 = vand.u32 %v796, 4294901760
      %v798 = vsub.f32 %v796, %v797
      %v799 = vand.u32 %v798, 4294901760
      %800 = vmatmul.f32.gmra.mxu0 %v799
      %v801 = vpop.f32.mrf.mxu0
      %v802 = vadd.f32 0.0, %v801
      %v803 = vand.u32 %v480, 4294901760
      %v804 = vsub.f32 %v480, %v803
      %v805 = vand.u32 %v804, 4294901760
      %v806 = vsub.f32 %v804, %v805
      %v807 = vand.u32 %v806, 4294901760
      %808 = vmatmul.f32.gmra.mxu0 %v807
      %v809 = vpop.f32.mrf.mxu0
      %v810 = vadd.f32 0.0, %v809
      %v811 = vand.u32 %v483, 4294901760
      %v812 = vsub.f32 %v483, %v811
      %v813 = vand.u32 %v812, 4294901760
      %v814 = vsub.f32 %v812, %v813
      %v815 = vand.u32 %v814, 4294901760
      %816 = vmatmul.f32.gmra.mxu0 %v815
      %v817 = vpop.f32.mrf.mxu0
      %v818 = vadd.f32 0.0, %v817
      %v819 = vand.u32 %v486, 4294901760
      %v820 = vsub.f32 %v486, %v819
      %v821 = vand.u32 %v820, 4294901760
      %v822 = vsub.f32 %v820, %v821
      %v823 = vand.u32 %v822, 4294901760
      %824 = vmatmul.f32.gmra.mxu0 %v823
      %v825 = vpop.f32.mrf.mxu0
      %v826 = vadd.f32 0.0, %v825
      %v827 = vand.u32 %v489, 4294901760
      %v828 = vsub.f32 %v489, %v827
      %v829 = vand.u32 %v828, 4294901760
      %v830 = vsub.f32 %v828, %v829
      %v831 = vand.u32 %v830, 4294901760
      %832 = vmatmul.f32.gmra.mxu0 %v831
      %v833 = vpop.f32.mrf.mxu0
      %v834 = vadd.f32 0.0, %v833
      %v835 = vand.u32 %v492, 4294901760
      %v836 = vsub.f32 %v492, %v835
      %v837 = vand.u32 %v836, 4294901760
      %v838 = vsub.f32 %v836, %v837
      %v839 = vand.u32 %v838, 4294901760
      %840 = vmatmul.f32.gmra.mxu0 %v839
      %v841 = vpop.f32.mrf.mxu0
      %v842 = vadd.f32 0.0, %v841
      %v843 = vand.u32 %v495, 4294901760
      %v844 = vsub.f32 %v495, %v843
      %v845 = vand.u32 %v844, 4294901760
      %v846 = vsub.f32 %v844, %v845
      %v847 = vand.u32 %v846, 4294901760
      %848 = vmatmul.f32.gmra.mxu0 %v847
      %v849 = vpop.f32.mrf.mxu0
      %v850 = vadd.f32 0.0, %v849
      %v851 = vand.u32 %v498, 4294901760
      %v852 = vsub.f32 %v498, %v851
      %v853 = vand.u32 %v852, 4294901760
      %v854 = vsub.f32 %v852, %v853
      %v855 = vand.u32 %v854, 4294901760
      %856 = vmatmul.f32.gmra.mxu0 %v855
      %v857 = vpop.f32.mrf.mxu0
      %v858 = vadd.f32 0.0, %v857
      %v859 = vand.u32 %v501, 4294901760
      %v860 = vsub.f32 %v501, %v859
      %v861 = vand.u32 %v860, 4294901760
      %v862 = vsub.f32 %v860, %v861
      %v863 = vand.u32 %v862, 4294901760
      %864 = vmatmul.f32.gmra.mxu0 %v863
      %v865 = vpop.f32.mrf.mxu0
      %v866 = vadd.f32 0.0, %v865
      %v867 = vand.u32 %v504, 4294901760
      %v868 = vsub.f32 %v504, %v867
      %v869 = vand.u32 %v868, 4294901760
      %v870 = vsub.f32 %v868, %v869
      %v871 = vand.u32 %v870, 4294901760
      %872 = vmatmul.f32.gmra.mxu0 %v871
      %v873 = vpop.f32.mrf.mxu0
      %v874 = vadd.f32 0.0, %v873
      %v875 = vand.u32 %v507, 4294901760
      %v876 = vsub.f32 %v507, %v875
      %v877 = vand.u32 %v876, 4294901760
      %v878 = vsub.f32 %v876, %v877
      %v879 = vand.u32 %v878, 4294901760
      %880 = vmatmul.f32.gmra.mxu0 %v879
      %v881 = vpop.f32.mrf.mxu0
      %v882 = vadd.f32 0.0, %v881
      %v883 = vand.u32 %v510, 4294901760
      %v884 = vsub.f32 %v510, %v883
      %v885 = vand.u32 %v884, 4294901760
      %v886 = vsub.f32 %v884, %v885
      %v887 = vand.u32 %v886, 4294901760
      %888 = vmatmul.f32.gmra.mxu0 %v887
      %v889 = vpop.f32.mrf.mxu0
      %v890 = vadd.f32 0.0, %v889
      %v891 = vand.u32 %v513, 4294901760
      %v892 = vsub.f32 %v513, %v891
      %v893 = vand.u32 %v892, 4294901760
      %v894 = vsub.f32 %v892, %v893
      %v895 = vand.u32 %v894, 4294901760
      %896 = vmatmul.f32.gmra.mxu0 %v895
      %v897 = vpop.f32.mrf.mxu0
      %v898 = vadd.f32 0.0, %v897
      %v899 = vand.u32 %v516, 4294901760
      %v900 = vsub.f32 %v516, %v899
      %v901 = vand.u32 %v900, 4294901760
      %v902 = vsub.f32 %v900, %v901
      %v903 = vand.u32 %v902, 4294901760
      %904 = vmatmul.f32.gmra.mxu0 %v903
      %v905 = vpop.f32.mrf.mxu0
      %v906 = vadd.f32 0.0, %v905
      %v907 = vand.u32 %v519, 4294901760
      %v908 = vsub.f32 %v519, %v907
      %v909 = vand.u32 %v908, 4294901760
      %v910 = vsub.f32 %v908, %v909
      %v911 = vand.u32 %v910, 4294901760
      %912 = vmatmul.f32.gmra.mxu0 %v911
      %v913 = vpop.f32.mrf.mxu0
      %v914 = vadd.f32 0.0, %v913
      %v915 = vand.u32 %v522, 4294901760
      %v916 = vsub.f32 %v522, %v915
      %v917 = vand.u32 %v916, 4294901760
      %v918 = vsub.f32 %v916, %v917
      %v919 = vand.u32 %v918, 4294901760
      %920 = vmatmul.f32.gmra.mxu0 %v919
      %v921 = vpop.f32.mrf.mxu0
      %v922 = vadd.f32 0.0, %v921
      %v923 = vand.u32 %v525, 4294901760
      %v924 = vsub.f32 %v525, %v923
      %v925 = vand.u32 %v924, 4294901760
      %v926 = vsub.f32 %v924, %v925
      %v927 = vand.u32 %v926, 4294901760
      %928 = vmatmul.f32.gmra.mxu0 %v927
      %v929 = vpop.f32.mrf.mxu0
      %v930 = vadd.f32 0.0, %v929
      %v931 = vand.u32 %v528, 4294901760
      %v932 = vsub.f32 %v528, %v931
      %v933 = vand.u32 %v932, 4294901760
      %v934 = vsub.f32 %v932, %v933
      %v935 = vand.u32 %v934, 4294901760
      %936 = vmatmul.f32.gmra.mxu0 %v935
      %v937 = vpop.f32.mrf.mxu0
      %v938 = vadd.f32 0.0, %v937
      %v939 = vand.u32 %v531, 4294901760
      %v940 = vsub.f32 %v531, %v939
      %v941 = vand.u32 %v940, 4294901760
      %v942 = vsub.f32 %v940, %v941
      %v943 = vand.u32 %v942, 4294901760
      %944 = vmatmul.f32.gmra.mxu0 %v943
      %v945 = vpop.f32.mrf.mxu0
      %v946 = vadd.f32 0.0, %v945
      %v947 = vand.u32 %v534, 4294901760
      %v948 = vsub.f32 %v534, %v947
      %v949 = vand.u32 %v948, 4294901760
      %v950 = vsub.f32 %v948, %v949
      %v951 = vand.u32 %v950, 4294901760
      %952 = vmatmul.f32.gmra.mxu0 %v951
      %v953 = vpop.f32.mrf.mxu0
      %v954 = vadd.f32 0.0, %v953
      %v955 = vand.u32 %v537, 4294901760
      %v956 = vsub.f32 %v537, %v955
      %v957 = vand.u32 %v956, 4294901760
      %v958 = vsub.f32 %v956, %v957
      %v959 = vand.u32 %v958, 4294901760
      %960 = vmatmul.f32.gmra.mxu0 %v959
      %v961 = vpop.f32.mrf.mxu0
      %v962 = vadd.f32 0.0, %v961
      %v963 = vand.u32 %v540, 4294901760
      %v964 = vsub.f32 %v540, %v963
      %v965 = vand.u32 %v964, 4294901760
      %v966 = vsub.f32 %v964, %v965
      %v967 = vand.u32 %v966, 4294901760
      %968 = vmatmul.f32.gmra.mxu0 %v967
      %v969 = vpop.f32.mrf.mxu0
      %v970 = vadd.f32 0.0, %v969
      %v971 = vand.u32 %v543, 4294901760
      %v972 = vsub.f32 %v543, %v971
      %v973 = vand.u32 %v972, 4294901760
      %v974 = vsub.f32 %v972, %v973
      %v975 = vand.u32 %v974, 4294901760
      %976 = vmatmul.f32.gmra.mxu0 %v975
      %v977 = vpop.f32.mrf.mxu0
      %v978 = vadd.f32 0.0, %v977
      %v979 = vand.u32 %v546, 4294901760
      %v980 = vsub.f32 %v546, %v979
      %v981 = vand.u32 %v980, 4294901760
      %v982 = vsub.f32 %v980, %v981
      %v983 = vand.u32 %v982, 4294901760
      %984 = vmatmul.f32.gmra.mxu0 %v983
      %v985 = vpop.f32.mrf.mxu0
      %v986 = vadd.f32 0.0, %v985
      %v987 = vand.u32 %v549, 4294901760
      %v988 = vsub.f32 %v549, %v987
      %v989 = vand.u32 %v988, 4294901760
      %v990 = vsub.f32 %v988, %v989
      %v991 = vand.u32 %v990, 4294901760
      %992 = vmatmul.f32.gmra.mxu0 %v991
      %v993 = vpop.f32.mrf.mxu0
      %v994 = vadd.f32 0.0, %v993
      %v995 = vand.u32 %v552, 4294901760
      %v996 = vsub.f32 %v552, %v995
      %v997 = vand.u32 %v996, 4294901760
      %v998 = vsub.f32 %v996, %v997
      %v999 = vand.u32 %v998, 4294901760
      %1000 = vmatmul.f32.gmra.mxu0 %v999
      %v1001 = vpop.f32.mrf.mxu0
      %v1002 = vadd.f32 0.0, %v1001
      %v1003 = vand.u32 %v555, 4294901760
      %v1004 = vsub.f32 %v555, %v1003
      %v1005 = vand.u32 %v1004, 4294901760
      %v1006 = vsub.f32 %v1004, %v1005
      %v1007 = vand.u32 %v1006, 4294901760
      %1008 = vmatmul.f32.gmra.mxu0 %v1007
      %v1009 = vpop.f32.mrf.mxu0
      %v1010 = vadd.f32 0.0, %v1009
      %v1011 = vand.u32 %v558, 4294901760
      %v1012 = vsub.f32 %v558, %v1011
      %v1013 = vand.u32 %v1012, 4294901760
      %v1014 = vsub.f32 %v1012, %v1013
      %v1015 = vand.u32 %v1014, 4294901760
      %1016 = vmatmul.f32.gmra.mxu0 %v1015
      %v1017 = vpop.f32.mrf.mxu0
      %v1018 = vadd.f32 0.0, %v1017
      %v1019 = vand.u32 %v561, 4294901760
      %v1020 = vsub.f32 %v561, %v1019
      %v1021 = vand.u32 %v1020, 4294901760
      %v1022 = vsub.f32 %v1020, %v1021
      %v1023 = vand.u32 %v1022, 4294901760
      %1024 = vmatmul.f32.gmra.mxu0 %v1023
      %v1025 = vpop.f32.mrf.mxu0
      %v1026 = vadd.f32 0.0, %v1025
      %v1027 = vand.u32 %v564, 4294901760
      %v1028 = vsub.f32 %v564, %v1027
      %v1029 = vand.u32 %v1028, 4294901760
      %v1030 = vsub.f32 %v1028, %v1029
      %v1031 = vand.u32 %v1030, 4294901760
      %1032 = vmatmul.f32.gmra.mxu0 %v1031
      %v1033 = vpop.f32.mrf.mxu0
      %v1034 = vadd.f32 0.0, %v1033
      %v1035 = vand.u32 %v567, 4294901760
      %v1036 = vsub.f32 %v567, %v1035
      %v1037 = vand.u32 %v1036, 4294901760
      %v1038 = vsub.f32 %v1036, %v1037
      %v1039 = vand.u32 %v1038, 4294901760
      %1040 = vmatmul.f32.gmra.mxu0 %v1039
      %v1041 = vpop.f32.mrf.mxu0
      %v1042 = vadd.f32 0.0, %v1041
      %v1043 = vand.u32 %v570, 4294901760
      %v1044 = vsub.f32 %v570, %v1043
      %v1045 = vand.u32 %v1044, 4294901760
      %v1046 = vsub.f32 %v1044, %v1045
      %v1047 = vand.u32 %v1046, 4294901760
      %1048 = vmatmul.f32.gmra.mxu0 %v1047
      %v1049 = vpop.f32.mrf.mxu0
      %v1050 = vadd.f32 0.0, %v1049
      %v1051 = vand.u32 %v573, 4294901760
      %v1052 = vsub.f32 %v573, %v1051
      %v1053 = vand.u32 %v1052, 4294901760
      %v1054 = vsub.f32 %v1052, %v1053
      %v1055 = vand.u32 %v1054, 4294901760
      %1056 = vmatmul.f32.gmra.mxu0 %v1055
      %v1057 = vpop.f32.mrf.mxu0
      %v1058 = vadd.f32 0.0, %v1057
      %v1059 = vand.u32 %v576, 4294901760
      %v1060 = vsub.f32 %v576, %v1059
      %v1061 = vand.u32 %v1060, 4294901760
      %v1062 = vsub.f32 %v1060, %v1061
      %v1063 = vand.u32 %v1062, 4294901760
      %1064 = vmatmul.f32.gmra.mxu0 %v1063
      %v1065 = vpop.f32.mrf.mxu0
      %v1066 = vadd.f32 0.0, %v1065
      %v1067 = vand.u32 %v579, 4294901760
      %v1068 = vsub.f32 %v579, %v1067
      %v1069 = vand.u32 %v1068, 4294901760
      %v1070 = vsub.f32 %v1068, %v1069
      %v1071 = vand.u32 %v1070, 4294901760
      %1072 = vmatmul.f32.gmra.mxu0 %v1071
      %v1073 = vpop.f32.mrf.mxu0
      %v1074 = vadd.f32 0.0, %v1073
      %v1075 = vand.u32 %v582, 4294901760
      %v1076 = vsub.f32 %v582, %v1075
      %v1077 = vand.u32 %v1076, 4294901760
      %v1078 = vsub.f32 %v1076, %v1077
      %v1079 = vand.u32 %v1078, 4294901760
      %1080 = vmatmul.f32.gmra.mxu0 %v1079
      %v1081 = vpop.f32.mrf.mxu0
      %v1082 = vadd.f32 0.0, %v1081
      %v1083 = vand.u32 %v585, 4294901760
      %v1084 = vsub.f32 %v585, %v1083
      %v1085 = vand.u32 %v1084, 4294901760
      %v1086 = vsub.f32 %v1084, %v1085
      %v1087 = vand.u32 %v1086, 4294901760
      %1088 = vmatmul.f32.gmra.mxu0 %v1087
      %v1089 = vpop.f32.mrf.mxu0
      %v1090 = vadd.f32 0.0, %v1089
      %v1091 = vand.u32 %v588, 4294901760
      %v1092 = vsub.f32 %v588, %v1091
      %v1093 = vand.u32 %v1092, 4294901760
      %v1094 = vsub.f32 %v1092, %v1093
      %v1095 = vand.u32 %v1094, 4294901760
      %1096 = vmatmul.f32.gmra.mxu0 %v1095
      %v1097 = vpop.f32.mrf.mxu0
      %v1098 = vadd.f32 0.0, %v1097
      %v1099 = vand.u32 %v591, 4294901760
      %v1100 = vsub.f32 %v591, %v1099
      %v1101 = vand.u32 %v1100, 4294901760
      %v1102 = vsub.f32 %v1100, %v1101
      %v1103 = vand.u32 %v1102, 4294901760
      %1104 = vmatmul.f32.gmra.mxu0 %v1103
      %v1105 = vpop.f32.mrf.mxu0
      %v1106 = vadd.f32 0.0, %v1105
      %v1107 = vand.u32 %v594, 4294901760
      %v1108 = vsub.f32 %v594, %v1107
      %v1109 = vand.u32 %v1108, 4294901760
      %v1110 = vsub.f32 %v1108, %v1109
      %v1111 = vand.u32 %v1110, 4294901760
      %1112 = vmatmul.f32.gmra.mxu0 %v1111
      %v1113 = vpop.f32.mrf.mxu0
      %v1114 = vadd.f32 0.0, %v1113
      %v1115 = vand.u32 %v597, 4294901760
      %v1116 = vsub.f32 %v597, %v1115
      %v1117 = vand.u32 %v1116, 4294901760
      %v1118 = vsub.f32 %v1116, %v1117
      %v1119 = vand.u32 %v1118, 4294901760
      %1120 = vmatmul.f32.gmra.mxu0 %v1119
      %v1121 = vpop.f32.mrf.mxu0
      %v1122 = vadd.f32 0.0, %v1121
      %v1123 = vand.u32 %v600, 4294901760
      %v1124 = vsub.f32 %v600, %v1123
      %v1125 = vand.u32 %v1124, 4294901760
      %v1126 = vsub.f32 %v1124, %v1125
      %v1127 = vand.u32 %v1126, 4294901760
      %1128 = vmatmul.f32.gmra.mxu0 %v1127
      %v1129 = vpop.f32.mrf.mxu0
      %v1130 = vadd.f32 0.0, %v1129
      %1131 = vdwg.mxu0
      %1132 = vmatpush.msra.mxu0 0.0
      %1133 = vmatpush.msra.mxu0 0.0
      %1134 = vmatpush.msra.mxu0 0.0
      %1135 = vmatpush.msra.mxu0 0.0
      %1136 = vmatpush.msra.mxu0 0.0
      %1137 = vmatpush.msra.mxu0 0.0
      %1138 = vmatpush.msra.mxu0 0.0
      %1139 = vmatpush.msra.mxu0 0.0
      %1140 = vmatpush.msra.mxu0 0.0
      %1141 = vmatpush.msra.mxu0 0.0
      %1142 = vmatpush.msra.mxu0 0.0
      %1143 = vmatpush.msra.mxu0 0.0
      %1144 = vmatpush.msra.mxu0 0.0
      %1145 = vmatpush.msra.mxu0 0.0
      %1146 = vmatpush.msra.mxu0 0.0
      %v1147 = vand.u32 %v269, 4294901760
      %v1148 = vsub.f32 %v269, %v1147
      %v1149 = vand.u32 %v1148, 4294901760
      %v1150 = vsub.f32 %v1148, %v1149
      %v1151 = vand.u32 %v1150, 4294901760
      %1152 = vmatpush.msra.mxu0 %v1151
      %v1153 = vand.u32 %v411, 4294901760
      %1154 = vmatmul.f32.gmra.mxu0 %v1153
      %v1155 = vpop.f32.mrf.mxu0
      %v1156 = vadd.f32 %v626, %v1155
      %v1157 = vand.u32 %v414, 4294901760
      %1158 = vmatmul.f32.gmra.mxu0 %v1157
      %v1159 = vpop.f32.mrf.mxu0
      %v1160 = vadd.f32 %v634, %v1159
      %v1161 = vand.u32 %v417, 4294901760
      %1162 = vmatmul.f32.gmra.mxu0 %v1161
      %v1163 = vpop.f32.mrf.mxu0
      %v1164 = vadd.f32 %v642, %v1163
      %v1165 = vand.u32 %v420, 4294901760
      %1166 = vmatmul.f32.gmra.mxu0 %v1165
      %v1167 = vpop.f32.mrf.mxu0
      %v1168 = vadd.f32 %v650, %v1167
      %v1169 = vand.u32 %v423, 4294901760
      %1170 = vmatmul.f32.gmra.mxu0 %v1169
      %v1171 = vpop.f32.mrf.mxu0
      %v1172 = vadd.f32 %v658, %v1171
      %v1173 = vand.u32 %v426, 4294901760
      %1174 = vmatmul.f32.gmra.mxu0 %v1173
      %v1175 = vpop.f32.mrf.mxu0
      %v1176 = vadd.f32 %v666, %v1175
      %v1177 = vand.u32 %v429, 4294901760
      %1178 = vmatmul.f32.gmra.mxu0 %v1177
      %v1179 = vpop.f32.mrf.mxu0
      %v1180 = vadd.f32 %v674, %v1179
      %v1181 = vand.u32 %v432, 4294901760
      %1182 = vmatmul.f32.gmra.mxu0 %v1181
      %v1183 = vpop.f32.mrf.mxu0
      %v1184 = vadd.f32 %v682, %v1183
      %v1185 = vand.u32 %v435, 4294901760
      %1186 = vmatmul.f32.gmra.mxu0 %v1185
      %v1187 = vpop.f32.mrf.mxu0
      %v1188 = vadd.f32 %v690, %v1187
      %v1189 = vand.u32 %v438, 4294901760
      %1190 = vmatmul.f32.gmra.mxu0 %v1189
      %v1191 = vpop.f32.mrf.mxu0
      %v1192 = vadd.f32 %v698, %v1191
      %v1193 = vand.u32 %v441, 4294901760
      %1194 = vmatmul.f32.gmra.mxu0 %v1193
      %v1195 = vpop.f32.mrf.mxu0
      %v1196 = vadd.f32 %v706, %v1195
      %v1197 = vand.u32 %v444, 4294901760
      %1198 = vmatmul.f32.gmra.mxu0 %v1197
      %v1199 = vpop.f32.mrf.mxu0
      %v1200 = vadd.f32 %v714, %v1199
      %v1201 = vand.u32 %v447, 4294901760
      %1202 = vmatmul.f32.gmra.mxu0 %v1201
      %v1203 = vpop.f32.mrf.mxu0
      %v1204 = vadd.f32 %v722, %v1203
      %v1205 = vand.u32 %v450, 4294901760
      %1206 = vmatmul.f32.gmra.mxu0 %v1205
      %v1207 = vpop.f32.mrf.mxu0
      %v1208 = vadd.f32 %v730, %v1207
      %v1209 = vand.u32 %v453, 4294901760
      %1210 = vmatmul.f32.gmra.mxu0 %v1209
      %v1211 = vpop.f32.mrf.mxu0
      %v1212 = vadd.f32 %v738, %v1211
      %v1213 = vand.u32 %v456, 4294901760
      %1214 = vmatmul.f32.gmra.mxu0 %v1213
      %v1215 = vpop.f32.mrf.mxu0
      %v1216 = vadd.f32 %v746, %v1215
      %v1217 = vand.u32 %v459, 4294901760
      %1218 = vmatmul.f32.gmra.mxu0 %v1217
      %v1219 = vpop.f32.mrf.mxu0
      %v1220 = vadd.f32 %v754, %v1219
      %v1221 = vand.u32 %v462, 4294901760
      %1222 = vmatmul.f32.gmra.mxu0 %v1221
      %v1223 = vpop.f32.mrf.mxu0
      %v1224 = vadd.f32 %v762, %v1223
      %v1225 = vand.u32 %v465, 4294901760
      %1226 = vmatmul.f32.gmra.mxu0 %v1225
      %v1227 = vpop.f32.mrf.mxu0
      %v1228 = vadd.f32 %v770, %v1227
      %v1229 = vand.u32 %v468, 4294901760
      %1230 = vmatmul.f32.gmra.mxu0 %v1229
      %v1231 = vpop.f32.mrf.mxu0
      %v1232 = vadd.f32 %v778, %v1231
      %v1233 = vand.u32 %v471, 4294901760
      %1234 = vmatmul.f32.gmra.mxu0 %v1233
      %v1235 = vpop.f32.mrf.mxu0
      %v1236 = vadd.f32 %v786, %v1235
      %v1237 = vand.u32 %v474, 4294901760
      %1238 = vmatmul.f32.gmra.mxu0 %v1237
      %v1239 = vpop.f32.mrf.mxu0
      %v1240 = vadd.f32 %v794, %v1239
      %v1241 = vand.u32 %v477, 4294901760
      %1242 = vmatmul.f32.gmra.mxu0 %v1241
      %v1243 = vpop.f32.mrf.mxu0
      %v1244 = vadd.f32 %v802, %v1243
      %v1245 = vand.u32 %v480, 4294901760
      %1246 = vmatmul.f32.gmra.mxu0 %v1245
      %v1247 = vpop.f32.mrf.mxu0
      %v1248 = vadd.f32 %v810, %v1247
      %v1249 = vand.u32 %v483, 4294901760
      %1250 = vmatmul.f32.gmra.mxu0 %v1249
      %v1251 = vpop.f32.mrf.mxu0
      %v1252 = vadd.f32 %v818, %v1251
      %v1253 = vand.u32 %v486, 4294901760
      %1254 = vmatmul.f32.gmra.mxu0 %v1253
      %v1255 = vpop.f32.mrf.mxu0
      %v1256 = vadd.f32 %v826, %v1255
      %v1257 = vand.u32 %v489, 4294901760
      %1258 = vmatmul.f32.gmra.mxu0 %v1257
      %v1259 = vpop.f32.mrf.mxu0
      %v1260 = vadd.f32 %v834, %v1259
      %v1261 = vand.u32 %v492, 4294901760
      %1262 = vmatmul.f32.gmra.mxu0 %v1261
      %v1263 = vpop.f32.mrf.mxu0
      %v1264 = vadd.f32 %v842, %v1263
      %v1265 = vand.u32 %v495, 4294901760
      %1266 = vmatmul.f32.gmra.mxu0 %v1265
      %v1267 = vpop.f32.mrf.mxu0
      %v1268 = vadd.f32 %v850, %v1267
      %v1269 = vand.u32 %v498, 4294901760
      %1270 = vmatmul.f32.gmra.mxu0 %v1269
      %v1271 = vpop.f32.mrf.mxu0
      %v1272 = vadd.f32 %v858, %v1271
      %v1273 = vand.u32 %v501, 4294901760
      %1274 = vmatmul.f32.gmra.mxu0 %v1273
      %v1275 = vpop.f32.mrf.mxu0
      %v1276 = vadd.f32 %v866, %v1275
      %v1277 = vand.u32 %v504, 4294901760
      %1278 = vmatmul.f32.gmra.mxu0 %v1277
      %v1279 = vpop.f32.mrf.mxu0
      %v1280 = vadd.f32 %v874, %v1279
      %v1281 = vand.u32 %v507, 4294901760
      %1282 = vmatmul.f32.gmra.mxu0 %v1281
      %v1283 = vpop.f32.mrf.mxu0
      %v1284 = vadd.f32 %v882, %v1283
      %v1285 = vand.u32 %v510, 4294901760
      %1286 = vmatmul.f32.gmra.mxu0 %v1285
      %v1287 = vpop.f32.mrf.mxu0
      %v1288 = vadd.f32 %v890, %v1287
      %v1289 = vand.u32 %v513, 4294901760
      %1290 = vmatmul.f32.gmra.mxu0 %v1289
      %v1291 = vpop.f32.mrf.mxu0
      %v1292 = vadd.f32 %v898, %v1291
      %v1293 = vand.u32 %v516, 4294901760
      %1294 = vmatmul.f32.gmra.mxu0 %v1293
      %v1295 = vpop.f32.mrf.mxu0
      %v1296 = vadd.f32 %v906, %v1295
      %v1297 = vand.u32 %v519, 4294901760
      %1298 = vmatmul.f32.gmra.mxu0 %v1297
      %v1299 = vpop.f32.mrf.mxu0
      %v1300 = vadd.f32 %v914, %v1299
      %v1301 = vand.u32 %v522, 4294901760
      %1302 = vmatmul.f32.gmra.mxu0 %v1301
      %v1303 = vpop.f32.mrf.mxu0
      %v1304 = vadd.f32 %v922, %v1303
      %v1305 = vand.u32 %v525, 4294901760
      %1306 = vmatmul.f32.gmra.mxu0 %v1305
      %v1307 = vpop.f32.mrf.mxu0
      %v1308 = vadd.f32 %v930, %v1307
      %v1309 = vand.u32 %v528, 4294901760
      %1310 = vmatmul.f32.gmra.mxu0 %v1309
      %v1311 = vpop.f32.mrf.mxu0
      %v1312 = vadd.f32 %v938, %v1311
      %v1313 = vand.u32 %v531, 4294901760
      %1314 = vmatmul.f32.gmra.mxu0 %v1313
      %v1315 = vpop.f32.mrf.mxu0
      %v1316 = vadd.f32 %v946, %v1315
      %v1317 = vand.u32 %v534, 4294901760
      %1318 = vmatmul.f32.gmra.mxu0 %v1317
      %v1319 = vpop.f32.mrf.mxu0
      %v1320 = vadd.f32 %v954, %v1319
      %v1321 = vand.u32 %v537, 4294901760
      %1322 = vmatmul.f32.gmra.mxu0 %v1321
      %v1323 = vpop.f32.mrf.mxu0
      %v1324 = vadd.f32 %v962, %v1323
      %v1325 = vand.u32 %v540, 4294901760
      %1326 = vmatmul.f32.gmra.mxu0 %v1325
      %v1327 = vpop.f32.mrf.mxu0
      %v1328 = vadd.f32 %v970, %v1327
      %v1329 = vand.u32 %v543, 4294901760
      %1330 = vmatmul.f32.gmra.mxu0 %v1329
      %v1331 = vpop.f32.mrf.mxu0
      %v1332 = vadd.f32 %v978, %v1331
      %v1333 = vand.u32 %v546, 4294901760
      %1334 = vmatmul.f32.gmra.mxu0 %v1333
      %v1335 = vpop.f32.mrf.mxu0
      %v1336 = vadd.f32 %v986, %v1335
      %v1337 = vand.u32 %v549, 4294901760
      %1338 = vmatmul.f32.gmra.mxu0 %v1337
      %v1339 = vpop.f32.mrf.mxu0
      %v1340 = vadd.f32 %v994, %v1339
      %v1341 = vand.u32 %v552, 4294901760
      %1342 = vmatmul.f32.gmra.mxu0 %v1341
      %v1343 = vpop.f32.mrf.mxu0
      %v1344 = vadd.f32 %v1002, %v1343
      %v1345 = vand.u32 %v555, 4294901760
      %1346 = vmatmul.f32.gmra.mxu0 %v1345
      %v1347 = vpop.f32.mrf.mxu0
      %v1348 = vadd.f32 %v1010, %v1347
      %v1349 = vand.u32 %v558, 4294901760
      %1350 = vmatmul.f32.gmra.mxu0 %v1349
      %v1351 = vpop.f32.mrf.mxu0
      %v1352 = vadd.f32 %v1018, %v1351
      %v1353 = vand.u32 %v561, 4294901760
      %1354 = vmatmul.f32.gmra.mxu0 %v1353
      %v1355 = vpop.f32.mrf.mxu0
      %v1356 = vadd.f32 %v1026, %v1355
      %v1357 = vand.u32 %v564, 4294901760
      %1358 = vmatmul.f32.gmra.mxu0 %v1357
      %v1359 = vpop.f32.mrf.mxu0
      %v1360 = vadd.f32 %v1034, %v1359
      %v1361 = vand.u32 %v567, 4294901760
      %1362 = vmatmul.f32.gmra.mxu0 %v1361
      %v1363 = vpop.f32.mrf.mxu0
      %v1364 = vadd.f32 %v1042, %v1363
      %v1365 = vand.u32 %v570, 4294901760
      %1366 = vmatmul.f32.gmra.mxu0 %v1365
      %v1367 = vpop.f32.mrf.mxu0
      %v1368 = vadd.f32 %v1050, %v1367
      %v1369 = vand.u32 %v573, 4294901760
      %1370 = vmatmul.f32.gmra.mxu0 %v1369
      %v1371 = vpop.f32.mrf.mxu0
      %v1372 = vadd.f32 %v1058, %v1371
      %v1373 = vand.u32 %v576, 4294901760
      %1374 = vmatmul.f32.gmra.mxu0 %v1373
      %v1375 = vpop.f32.mrf.mxu0
      %v1376 = vadd.f32 %v1066, %v1375
      %v1377 = vand.u32 %v579, 4294901760
      %1378 = vmatmul.f32.gmra.mxu0 %v1377
      %v1379 = vpop.f32.mrf.mxu0
      %v1380 = vadd.f32 %v1074, %v1379
      %v1381 = vand.u32 %v582, 4294901760
      %1382 = vmatmul.f32.gmra.mxu0 %v1381
      %v1383 = vpop.f32.mrf.mxu0
      %v1384 = vadd.f32 %v1082, %v1383
      %v1385 = vand.u32 %v585, 4294901760
      %1386 = vmatmul.f32.gmra.mxu0 %v1385
      %v1387 = vpop.f32.mrf.mxu0
      %v1388 = vadd.f32 %v1090, %v1387
      %v1389 = vand.u32 %v588, 4294901760
      %1390 = vmatmul.f32.gmra.mxu0 %v1389
      %v1391 = vpop.f32.mrf.mxu0
      %v1392 = vadd.f32 %v1098, %v1391
      %v1393 = vand.u32 %v591, 4294901760
      %1394 = vmatmul.f32.gmra.mxu0 %v1393
      %v1395 = vpop.f32.mrf.mxu0
      %v1396 = vadd.f32 %v1106, %v1395
      %v1397 = vand.u32 %v594, 4294901760
      %1398 = vmatmul.f32.gmra.mxu0 %v1397
      %v1399 = vpop.f32.mrf.mxu0
      %v1400 = vadd.f32 %v1114, %v1399
      %v1401 = vand.u32 %v597, 4294901760
      %1402 = vmatmul.f32.gmra.mxu0 %v1401
      %v1403 = vpop.f32.mrf.mxu0
      %v1404 = vadd.f32 %v1122, %v1403
      %v1405 = vand.u32 %v600, 4294901760
      %1406 = vmatmul.f32.gmra.mxu0 %v1405
      %v1407 = vpop.f32.mrf.mxu0
      %v1408 = vadd.f32 %v1130, %v1407
      %1409 = vdwg.mxu0
      %1410 = vmatpush.msra.mxu0 0.0
      %1411 = vmatpush.msra.mxu0 0.0
      %1412 = vmatpush.msra.mxu0 0.0
      %1413 = vmatpush.msra.mxu0 0.0
      %1414 = vmatpush.msra.mxu0 0.0
      %1415 = vmatpush.msra.mxu0 0.0
      %1416 = vmatpush.msra.mxu0 0.0
      %1417 = vmatpush.msra.mxu0 0.0
      %1418 = vmatpush.msra.mxu0 0.0
      %1419 = vmatpush.msra.mxu0 0.0
      %1420 = vmatpush.msra.mxu0 0.0
      %1421 = vmatpush.msra.mxu0 0.0
      %1422 = vmatpush.msra.mxu0 0.0
      %1423 = vmatpush.msra.mxu0 0.0
      %1424 = vmatpush.msra.mxu0 0.0
      %v1425 = vand.u32 %v269, 4294901760
      %v1426 = vsub.f32 %v269, %v1425
      %1427 = vmatpush.msra.mxu0 %v1426
      %v1428 = vand.u32 %v411, 4294901760
      %v1429 = vsub.f32 %v411, %v1428
      %1430 = vmatmul.f32.gmra.mxu0 %v1429
      %v1431 = vpop.f32.mrf.mxu0
      %v1432 = vadd.f32 %v1156, %v1431
      %v1433 = vand.u32 %v414, 4294901760
      %v1434 = vsub.f32 %v414, %v1433
      %1435 = vmatmul.f32.gmra.mxu0 %v1434
      %v1436 = vpop.f32.mrf.mxu0
      %v1437 = vadd.f32 %v1160, %v1436
      %v1438 = vand.u32 %v417, 4294901760
      %v1439 = vsub.f32 %v417, %v1438
      %1440 = vmatmul.f32.gmra.mxu0 %v1439
      %v1441 = vpop.f32.mrf.mxu0
      %v1442 = vadd.f32 %v1164, %v1441
      %v1443 = vand.u32 %v420, 4294901760
      %v1444 = vsub.f32 %v420, %v1443
      %1445 = vmatmul.f32.gmra.mxu0 %v1444
      %v1446 = vpop.f32.mrf.mxu0
      %v1447 = vadd.f32 %v1168, %v1446
      %v1448 = vand.u32 %v423, 4294901760
      %v1449 = vsub.f32 %v423, %v1448
      %1450 = vmatmul.f32.gmra.mxu0 %v1449
      %v1451 = vpop.f32.mrf.mxu0
      %v1452 = vadd.f32 %v1172, %v1451
      %v1453 = vand.u32 %v426, 4294901760
      %v1454 = vsub.f32 %v426, %v1453
      %1455 = vmatmul.f32.gmra.mxu0 %v1454
      %v1456 = vpop.f32.mrf.mxu0
      %v1457 = vadd.f32 %v1176, %v1456
      %v1458 = vand.u32 %v429, 4294901760
      %v1459 = vsub.f32 %v429, %v1458
      %1460 = vmatmul.f32.gmra.mxu0 %v1459
      %v1461 = vpop.f32.mrf.mxu0
      %v1462 = vadd.f32 %v1180, %v1461
      %v1463 = vand.u32 %v432, 4294901760
      %v1464 = vsub.f32 %v432, %v1463
      %1465 = vmatmul.f32.gmra.mxu0 %v1464
      %v1466 = vpop.f32.mrf.mxu0
      %v1467 = vadd.f32 %v1184, %v1466
      %v1468 = vand.u32 %v435, 4294901760
      %v1469 = vsub.f32 %v435, %v1468
      %1470 = vmatmul.f32.gmra.mxu0 %v1469
      %v1471 = vpop.f32.mrf.mxu0
      %v1472 = vadd.f32 %v1188, %v1471
      %v1473 = vand.u32 %v438, 4294901760
      %v1474 = vsub.f32 %v438, %v1473
      %1475 = vmatmul.f32.gmra.mxu0 %v1474
      %v1476 = vpop.f32.mrf.mxu0
      %v1477 = vadd.f32 %v1192, %v1476
      %v1478 = vand.u32 %v441, 4294901760
      %v1479 = vsub.f32 %v441, %v1478
      %1480 = vmatmul.f32.gmra.mxu0 %v1479
      %v1481 = vpop.f32.mrf.mxu0
      %v1482 = vadd.f32 %v1196, %v1481
      %v1483 = vand.u32 %v444, 4294901760
      %v1484 = vsub.f32 %v444, %v1483
      %1485 = vmatmul.f32.gmra.mxu0 %v1484
      %v1486 = vpop.f32.mrf.mxu0
      %v1487 = vadd.f32 %v1200, %v1486
      %v1488 = vand.u32 %v447, 4294901760
      %v1489 = vsub.f32 %v447, %v1488
      %1490 = vmatmul.f32.gmra.mxu0 %v1489
      %v1491 = vpop.f32.mrf.mxu0
      %v1492 = vadd.f32 %v1204, %v1491
      %v1493 = vand.u32 %v450, 4294901760
      %v1494 = vsub.f32 %v450, %v1493
      %1495 = vmatmul.f32.gmra.mxu0 %v1494
      %v1496 = vpop.f32.mrf.mxu0
      %v1497 = vadd.f32 %v1208, %v1496
      %v1498 = vand.u32 %v453, 4294901760
      %v1499 = vsub.f32 %v453, %v1498
      %1500 = vmatmul.f32.gmra.mxu0 %v1499
      %v1501 = vpop.f32.mrf.mxu0
      %v1502 = vadd.f32 %v1212, %v1501
      %v1503 = vand.u32 %v456, 4294901760
      %v1504 = vsub.f32 %v456, %v1503
      %1505 = vmatmul.f32.gmra.mxu0 %v1504
      %v1506 = vpop.f32.mrf.mxu0
      %v1507 = vadd.f32 %v1216, %v1506
      %v1508 = vand.u32 %v459, 4294901760
      %v1509 = vsub.f32 %v459, %v1508
      %1510 = vmatmul.f32.gmra.mxu0 %v1509
      %v1511 = vpop.f32.mrf.mxu0
      %v1512 = vadd.f32 %v1220, %v1511
      %v1513 = vand.u32 %v462, 4294901760
      %v1514 = vsub.f32 %v462, %v1513
      %1515 = vmatmul.f32.gmra.mxu0 %v1514
      %v1516 = vpop.f32.mrf.mxu0
      %v1517 = vadd.f32 %v1224, %v1516
      %v1518 = vand.u32 %v465, 4294901760
      %v1519 = vsub.f32 %v465, %v1518
      %1520 = vmatmul.f32.gmra.mxu0 %v1519
      %v1521 = vpop.f32.mrf.mxu0
      %v1522 = vadd.f32 %v1228, %v1521
      %v1523 = vand.u32 %v468, 4294901760
      %v1524 = vsub.f32 %v468, %v1523
      %1525 = vmatmul.f32.gmra.mxu0 %v1524
      %v1526 = vpop.f32.mrf.mxu0
      %v1527 = vadd.f32 %v1232, %v1526
      %v1528 = vand.u32 %v471, 4294901760
      %v1529 = vsub.f32 %v471, %v1528
      %1530 = vmatmul.f32.gmra.mxu0 %v1529
      %v1531 = vpop.f32.mrf.mxu0
      %v1532 = vadd.f32 %v1236, %v1531
      %v1533 = vand.u32 %v474, 4294901760
      %v1534 = vsub.f32 %v474, %v1533
      %1535 = vmatmul.f32.gmra.mxu0 %v1534
      %v1536 = vpop.f32.mrf.mxu0
      %v1537 = vadd.f32 %v1240, %v1536
      %v1538 = vand.u32 %v477, 4294901760
      %v1539 = vsub.f32 %v477, %v1538
      %1540 = vmatmul.f32.gmra.mxu0 %v1539
      %v1541 = vpop.f32.mrf.mxu0
      %v1542 = vadd.f32 %v1244, %v1541
      %v1543 = vand.u32 %v480, 4294901760
      %v1544 = vsub.f32 %v480, %v1543
      %1545 = vmatmul.f32.gmra.mxu0 %v1544
      %v1546 = vpop.f32.mrf.mxu0
      %v1547 = vadd.f32 %v1248, %v1546
      %v1548 = vand.u32 %v483, 4294901760
      %v1549 = vsub.f32 %v483, %v1548
      %1550 = vmatmul.f32.gmra.mxu0 %v1549
      %v1551 = vpop.f32.mrf.mxu0
      %v1552 = vadd.f32 %v1252, %v1551
      %v1553 = vand.u32 %v486, 4294901760
      %v1554 = vsub.f32 %v486, %v1553
      %1555 = vmatmul.f32.gmra.mxu0 %v1554
      %v1556 = vpop.f32.mrf.mxu0
      %v1557 = vadd.f32 %v1256, %v1556
      %v1558 = vand.u32 %v489, 4294901760
      %v1559 = vsub.f32 %v489, %v1558
      %1560 = vmatmul.f32.gmra.mxu0 %v1559
      %v1561 = vpop.f32.mrf.mxu0
      %v1562 = vadd.f32 %v1260, %v1561
      %v1563 = vand.u32 %v492, 4294901760
      %v1564 = vsub.f32 %v492, %v1563
      %1565 = vmatmul.f32.gmra.mxu0 %v1564
      %v1566 = vpop.f32.mrf.mxu0
      %v1567 = vadd.f32 %v1264, %v1566
      %v1568 = vand.u32 %v495, 4294901760
      %v1569 = vsub.f32 %v495, %v1568
      %1570 = vmatmul.f32.gmra.mxu0 %v1569
      %v1571 = vpop.f32.mrf.mxu0
      %v1572 = vadd.f32 %v1268, %v1571
      %v1573 = vand.u32 %v498, 4294901760
      %v1574 = vsub.f32 %v498, %v1573
      %1575 = vmatmul.f32.gmra.mxu0 %v1574
      %v1576 = vpop.f32.mrf.mxu0
      %v1577 = vadd.f32 %v1272, %v1576
      %v1578 = vand.u32 %v501, 4294901760
      %v1579 = vsub.f32 %v501, %v1578
      %1580 = vmatmul.f32.gmra.mxu0 %v1579
      %v1581 = vpop.f32.mrf.mxu0
      %v1582 = vadd.f32 %v1276, %v1581
      %v1583 = vand.u32 %v504, 4294901760
      %v1584 = vsub.f32 %v504, %v1583
      %1585 = vmatmul.f32.gmra.mxu0 %v1584
      %v1586 = vpop.f32.mrf.mxu0
      %v1587 = vadd.f32 %v1280, %v1586
      %v1588 = vand.u32 %v507, 4294901760
      %v1589 = vsub.f32 %v507, %v1588
      %1590 = vmatmul.f32.gmra.mxu0 %v1589
      %v1591 = vpop.f32.mrf.mxu0
      %v1592 = vadd.f32 %v1284, %v1591
      %v1593 = vand.u32 %v510, 4294901760
      %v1594 = vsub.f32 %v510, %v1593
      %1595 = vmatmul.f32.gmra.mxu0 %v1594
      %v1596 = vpop.f32.mrf.mxu0
      %v1597 = vadd.f32 %v1288, %v1596
      %v1598 = vand.u32 %v513, 4294901760
      %v1599 = vsub.f32 %v513, %v1598
      %1600 = vmatmul.f32.gmra.mxu0 %v1599
      %v1601 = vpop.f32.mrf.mxu0
      %v1602 = vadd.f32 %v1292, %v1601
      %v1603 = vand.u32 %v516, 4294901760
      %v1604 = vsub.f32 %v516, %v1603
      %1605 = vmatmul.f32.gmra.mxu0 %v1604
      %v1606 = vpop.f32.mrf.mxu0
      %v1607 = vadd.f32 %v1296, %v1606
      %v1608 = vand.u32 %v519, 4294901760
      %v1609 = vsub.f32 %v519, %v1608
      %1610 = vmatmul.f32.gmra.mxu0 %v1609
      %v1611 = vpop.f32.mrf.mxu0
      %v1612 = vadd.f32 %v1300, %v1611
      %v1613 = vand.u32 %v522, 4294901760
      %v1614 = vsub.f32 %v522, %v1613
      %1615 = vmatmul.f32.gmra.mxu0 %v1614
      %v1616 = vpop.f32.mrf.mxu0
      %v1617 = vadd.f32 %v1304, %v1616
      %v1618 = vand.u32 %v525, 4294901760
      %v1619 = vsub.f32 %v525, %v1618
      %1620 = vmatmul.f32.gmra.mxu0 %v1619
      %v1621 = vpop.f32.mrf.mxu0
      %v1622 = vadd.f32 %v1308, %v1621
      %v1623 = vand.u32 %v528, 4294901760
      %v1624 = vsub.f32 %v528, %v1623
      %1625 = vmatmul.f32.gmra.mxu0 %v1624
      %v1626 = vpop.f32.mrf.mxu0
      %v1627 = vadd.f32 %v1312, %v1626
      %v1628 = vand.u32 %v531, 4294901760
      %v1629 = vsub.f32 %v531, %v1628
      %1630 = vmatmul.f32.gmra.mxu0 %v1629
      %v1631 = vpop.f32.mrf.mxu0
      %v1632 = vadd.f32 %v1316, %v1631
      %v1633 = vand.u32 %v534, 4294901760
      %v1634 = vsub.f32 %v534, %v1633
      %1635 = vmatmul.f32.gmra.mxu0 %v1634
      %v1636 = vpop.f32.mrf.mxu0
      %v1637 = vadd.f32 %v1320, %v1636
      %v1638 = vand.u32 %v537, 4294901760
      %v1639 = vsub.f32 %v537, %v1638
      %1640 = vmatmul.f32.gmra.mxu0 %v1639
      %v1641 = vpop.f32.mrf.mxu0
      %v1642 = vadd.f32 %v1324, %v1641
      %v1643 = vand.u32 %v540, 4294901760
      %v1644 = vsub.f32 %v540, %v1643
      %1645 = vmatmul.f32.gmra.mxu0 %v1644
      %v1646 = vpop.f32.mrf.mxu0
      %v1647 = vadd.f32 %v1328, %v1646
      %v1648 = vand.u32 %v543, 4294901760
      %v1649 = vsub.f32 %v543, %v1648
      %1650 = vmatmul.f32.gmra.mxu0 %v1649
      %v1651 = vpop.f32.mrf.mxu0
      %v1652 = vadd.f32 %v1332, %v1651
      %v1653 = vand.u32 %v546, 4294901760
      %v1654 = vsub.f32 %v546, %v1653
      %1655 = vmatmul.f32.gmra.mxu0 %v1654
      %v1656 = vpop.f32.mrf.mxu0
      %v1657 = vadd.f32 %v1336, %v1656
      %v1658 = vand.u32 %v549, 4294901760
      %v1659 = vsub.f32 %v549, %v1658
      %1660 = vmatmul.f32.gmra.mxu0 %v1659
      %v1661 = vpop.f32.mrf.mxu0
      %v1662 = vadd.f32 %v1340, %v1661
      %v1663 = vand.u32 %v552, 4294901760
      %v1664 = vsub.f32 %v552, %v1663
      %1665 = vmatmul.f32.gmra.mxu0 %v1664
      %v1666 = vpop.f32.mrf.mxu0
      %v1667 = vadd.f32 %v1344, %v1666
      %v1668 = vand.u32 %v555, 4294901760
      %v1669 = vsub.f32 %v555, %v1668
      %1670 = vmatmul.f32.gmra.mxu0 %v1669
      %v1671 = vpop.f32.mrf.mxu0
      %v1672 = vadd.f32 %v1348, %v1671
      %v1673 = vand.u32 %v558, 4294901760
      %v1674 = vsub.f32 %v558, %v1673
      %1675 = vmatmul.f32.gmra.mxu0 %v1674
      %v1676 = vpop.f32.mrf.mxu0
      %v1677 = vadd.f32 %v1352, %v1676
      %v1678 = vand.u32 %v561, 4294901760
      %v1679 = vsub.f32 %v561, %v1678
      %1680 = vmatmul.f32.gmra.mxu0 %v1679
      %v1681 = vpop.f32.mrf.mxu0
      %v1682 = vadd.f32 %v1356, %v1681
      %v1683 = vand.u32 %v564, 4294901760
      %v1684 = vsub.f32 %v564, %v1683
      %1685 = vmatmul.f32.gmra.mxu0 %v1684
      %v1686 = vpop.f32.mrf.mxu0
      %v1687 = vadd.f32 %v1360, %v1686
      %v1688 = vand.u32 %v567, 4294901760
      %v1689 = vsub.f32 %v567, %v1688
      %1690 = vmatmul.f32.gmra.mxu0 %v1689
      %v1691 = vpop.f32.mrf.mxu0
      %v1692 = vadd.f32 %v1364, %v1691
      %v1693 = vand.u32 %v570, 4294901760
      %v1694 = vsub.f32 %v570, %v1693
      %1695 = vmatmul.f32.gmra.mxu0 %v1694
      %v1696 = vpop.f32.mrf.mxu0
      %v1697 = vadd.f32 %v1368, %v1696
      %v1698 = vand.u32 %v573, 4294901760
      %v1699 = vsub.f32 %v573, %v1698
      %1700 = vmatmul.f32.gmra.mxu0 %v1699
      %v1701 = vpop.f32.mrf.mxu0
      %v1702 = vadd.f32 %v1372, %v1701
      %v1703 = vand.u32 %v576, 4294901760
      %v1704 = vsub.f32 %v576, %v1703
      %1705 = vmatmul.f32.gmra.mxu0 %v1704
      %v1706 = vpop.f32.mrf.mxu0
      %v1707 = vadd.f32 %v1376, %v1706
      %v1708 = vand.u32 %v579, 4294901760
      %v1709 = vsub.f32 %v579, %v1708
      %1710 = vmatmul.f32.gmra.mxu0 %v1709
      %v1711 = vpop.f32.mrf.mxu0
      %v1712 = vadd.f32 %v1380, %v1711
      %v1713 = vand.u32 %v582, 4294901760
      %v1714 = vsub.f32 %v582, %v1713
      %1715 = vmatmul.f32.gmra.mxu0 %v1714
      %v1716 = vpop.f32.mrf.mxu0
      %v1717 = vadd.f32 %v1384, %v1716
      %v1718 = vand.u32 %v585, 4294901760
      %v1719 = vsub.f32 %v585, %v1718
      %1720 = vmatmul.f32.gmra.mxu0 %v1719
      %v1721 = vpop.f32.mrf.mxu0
      %v1722 = vadd.f32 %v1388, %v1721
      %v1723 = vand.u32 %v588, 4294901760
      %v1724 = vsub.f32 %v588, %v1723
      %1725 = vmatmul.f32.gmra.mxu0 %v1724
      %v1726 = vpop.f32.mrf.mxu0
      %v1727 = vadd.f32 %v1392, %v1726
      %v1728 = vand.u32 %v591, 4294901760
      %v1729 = vsub.f32 %v591, %v1728
      %1730 = vmatmul.f32.gmra.mxu0 %v1729
      %v1731 = vpop.f32.mrf.mxu0
      %v1732 = vadd.f32 %v1396, %v1731
      %v1733 = vand.u32 %v594, 4294901760
      %v1734 = vsub.f32 %v594, %v1733
      %1735 = vmatmul.f32.gmra.mxu0 %v1734
      %v1736 = vpop.f32.mrf.mxu0
      %v1737 = vadd.f32 %v1400, %v1736
      %v1738 = vand.u32 %v597, 4294901760
      %v1739 = vsub.f32 %v597, %v1738
      %1740 = vmatmul.f32.gmra.mxu0 %v1739
      %v1741 = vpop.f32.mrf.mxu0
      %v1742 = vadd.f32 %v1404, %v1741
      %v1743 = vand.u32 %v600, 4294901760
      %v1744 = vsub.f32 %v600, %v1743
      %1745 = vmatmul.f32.gmra.mxu0 %v1744
      %v1746 = vpop.f32.mrf.mxu0
      %v1747 = vadd.f32 %v1408, %v1746
      %1748 = vdwg.mxu0
      %1749 = vmatpush.msra.mxu0 0.0
      %1750 = vmatpush.msra.mxu0 0.0
      %1751 = vmatpush.msra.mxu0 0.0
      %1752 = vmatpush.msra.mxu0 0.0
      %1753 = vmatpush.msra.mxu0 0.0
      %1754 = vmatpush.msra.mxu0 0.0
      %1755 = vmatpush.msra.mxu0 0.0
      %1756 = vmatpush.msra.mxu0 0.0
      %1757 = vmatpush.msra.mxu0 0.0
      %1758 = vmatpush.msra.mxu0 0.0
      %1759 = vmatpush.msra.mxu0 0.0
      %1760 = vmatpush.msra.mxu0 0.0
      %1761 = vmatpush.msra.mxu0 0.0
      %1762 = vmatpush.msra.mxu0 0.0
      %1763 = vmatpush.msra.mxu0 0.0
      %v1764 = vand.u32 %v269, 4294901760
      %1765 = vmatpush.msra.mxu0 %v1764
      %v1766 = vand.u32 %v411, 4294901760
      %v1767 = vsub.f32 %v411, %v1766
      %v1768 = vand.u32 %v1767, 4294901760
      %1769 = vmatmul.f32.gmra.mxu0 %v1768
      %v1770 = vpop.f32.mrf.mxu0
      %v1771 = vadd.f32 %v1432, %v1770
      %v1772 = vand.u32 %v414, 4294901760
      %v1773 = vsub.f32 %v414, %v1772
      %v1774 = vand.u32 %v1773, 4294901760
      %1775 = vmatmul.f32.gmra.mxu0 %v1774
      %v1776 = vpop.f32.mrf.mxu0
      %v1777 = vadd.f32 %v1437, %v1776
      %v1778 = vand.u32 %v417, 4294901760
      %v1779 = vsub.f32 %v417, %v1778
      %v1780 = vand.u32 %v1779, 4294901760
      %1781 = vmatmul.f32.gmra.mxu0 %v1780
      %v1782 = vpop.f32.mrf.mxu0
      %v1783 = vadd.f32 %v1442, %v1782
      %v1784 = vand.u32 %v420, 4294901760
      %v1785 = vsub.f32 %v420, %v1784
      %v1786 = vand.u32 %v1785, 4294901760
      %1787 = vmatmul.f32.gmra.mxu0 %v1786
      %v1788 = vpop.f32.mrf.mxu0
      %v1789 = vadd.f32 %v1447, %v1788
      %v1790 = vand.u32 %v423, 4294901760
      %v1791 = vsub.f32 %v423, %v1790
      %v1792 = vand.u32 %v1791, 4294901760
      %1793 = vmatmul.f32.gmra.mxu0 %v1792
      %v1794 = vpop.f32.mrf.mxu0
      %v1795 = vadd.f32 %v1452, %v1794
      %v1796 = vand.u32 %v426, 4294901760
      %v1797 = vsub.f32 %v426, %v1796
      %v1798 = vand.u32 %v1797, 4294901760
      %1799 = vmatmul.f32.gmra.mxu0 %v1798
      %v1800 = vpop.f32.mrf.mxu0
      %v1801 = vadd.f32 %v1457, %v1800
      %v1802 = vand.u32 %v429, 4294901760
      %v1803 = vsub.f32 %v429, %v1802
      %v1804 = vand.u32 %v1803, 4294901760
      %1805 = vmatmul.f32.gmra.mxu0 %v1804
      %v1806 = vpop.f32.mrf.mxu0
      %v1807 = vadd.f32 %v1462, %v1806
      %v1808 = vand.u32 %v432, 4294901760
      %v1809 = vsub.f32 %v432, %v1808
      %v1810 = vand.u32 %v1809, 4294901760
      %1811 = vmatmul.f32.gmra.mxu0 %v1810
      %v1812 = vpop.f32.mrf.mxu0
      %v1813 = vadd.f32 %v1467, %v1812
      %v1814 = vand.u32 %v435, 4294901760
      %v1815 = vsub.f32 %v435, %v1814
      %v1816 = vand.u32 %v1815, 4294901760
      %1817 = vmatmul.f32.gmra.mxu0 %v1816
      %v1818 = vpop.f32.mrf.mxu0
      %v1819 = vadd.f32 %v1472, %v1818
      %v1820 = vand.u32 %v438, 4294901760
      %v1821 = vsub.f32 %v438, %v1820
      %v1822 = vand.u32 %v1821, 4294901760
      %1823 = vmatmul.f32.gmra.mxu0 %v1822
      %v1824 = vpop.f32.mrf.mxu0
      %v1825 = vadd.f32 %v1477, %v1824
      %v1826 = vand.u32 %v441, 4294901760
      %v1827 = vsub.f32 %v441, %v1826
      %v1828 = vand.u32 %v1827, 4294901760
      %1829 = vmatmul.f32.gmra.mxu0 %v1828
      %v1830 = vpop.f32.mrf.mxu0
      %v1831 = vadd.f32 %v1482, %v1830
      %v1832 = vand.u32 %v444, 4294901760
      %v1833 = vsub.f32 %v444, %v1832
      %v1834 = vand.u32 %v1833, 4294901760
      %1835 = vmatmul.f32.gmra.mxu0 %v1834
      %v1836 = vpop.f32.mrf.mxu0
      %v1837 = vadd.f32 %v1487, %v1836
      %v1838 = vand.u32 %v447, 4294901760
      %v1839 = vsub.f32 %v447, %v1838
      %v1840 = vand.u32 %v1839, 4294901760
      %1841 = vmatmul.f32.gmra.mxu0 %v1840
      %v1842 = vpop.f32.mrf.mxu0
      %v1843 = vadd.f32 %v1492, %v1842
      %v1844 = vand.u32 %v450, 4294901760
      %v1845 = vsub.f32 %v450, %v1844
      %v1846 = vand.u32 %v1845, 4294901760
      %1847 = vmatmul.f32.gmra.mxu0 %v1846
      %v1848 = vpop.f32.mrf.mxu0
      %v1849 = vadd.f32 %v1497, %v1848
      %v1850 = vand.u32 %v453, 4294901760
      %v1851 = vsub.f32 %v453, %v1850
      %v1852 = vand.u32 %v1851, 4294901760
      %1853 = vmatmul.f32.gmra.mxu0 %v1852
      %v1854 = vpop.f32.mrf.mxu0
      %v1855 = vadd.f32 %v1502, %v1854
      %v1856 = vand.u32 %v456, 4294901760
      %v1857 = vsub.f32 %v456, %v1856
      %v1858 = vand.u32 %v1857, 4294901760
      %1859 = vmatmul.f32.gmra.mxu0 %v1858
      %v1860 = vpop.f32.mrf.mxu0
      %v1861 = vadd.f32 %v1507, %v1860
      %v1862 = vand.u32 %v459, 4294901760
      %v1863 = vsub.f32 %v459, %v1862
      %v1864 = vand.u32 %v1863, 4294901760
      %1865 = vmatmul.f32.gmra.mxu0 %v1864
      %v1866 = vpop.f32.mrf.mxu0
      %v1867 = vadd.f32 %v1512, %v1866
      %v1868 = vand.u32 %v462, 4294901760
      %v1869 = vsub.f32 %v462, %v1868
      %v1870 = vand.u32 %v1869, 4294901760
      %1871 = vmatmul.f32.gmra.mxu0 %v1870
      %v1872 = vpop.f32.mrf.mxu0
      %v1873 = vadd.f32 %v1517, %v1872
      %v1874 = vand.u32 %v465, 4294901760
      %v1875 = vsub.f32 %v465, %v1874
      %v1876 = vand.u32 %v1875, 4294901760
      %1877 = vmatmul.f32.gmra.mxu0 %v1876
      %v1878 = vpop.f32.mrf.mxu0
      %v1879 = vadd.f32 %v1522, %v1878
      %v1880 = vand.u32 %v468, 4294901760
      %v1881 = vsub.f32 %v468, %v1880
      %v1882 = vand.u32 %v1881, 4294901760
      %1883 = vmatmul.f32.gmra.mxu0 %v1882
      %v1884 = vpop.f32.mrf.mxu0
      %v1885 = vadd.f32 %v1527, %v1884
      %v1886 = vand.u32 %v471, 4294901760
      %v1887 = vsub.f32 %v471, %v1886
      %v1888 = vand.u32 %v1887, 4294901760
      %1889 = vmatmul.f32.gmra.mxu0 %v1888
      %v1890 = vpop.f32.mrf.mxu0
      %v1891 = vadd.f32 %v1532, %v1890
      %v1892 = vand.u32 %v474, 4294901760
      %v1893 = vsub.f32 %v474, %v1892
      %v1894 = vand.u32 %v1893, 4294901760
      %1895 = vmatmul.f32.gmra.mxu0 %v1894
      %v1896 = vpop.f32.mrf.mxu0
      %v1897 = vadd.f32 %v1537, %v1896
      %v1898 = vand.u32 %v477, 4294901760
      %v1899 = vsub.f32 %v477, %v1898
      %v1900 = vand.u32 %v1899, 4294901760
      %1901 = vmatmul.f32.gmra.mxu0 %v1900
      %v1902 = vpop.f32.mrf.mxu0
      %v1903 = vadd.f32 %v1542, %v1902
      %v1904 = vand.u32 %v480, 4294901760
      %v1905 = vsub.f32 %v480, %v1904
      %v1906 = vand.u32 %v1905, 4294901760
      %1907 = vmatmul.f32.gmra.mxu0 %v1906
      %v1908 = vpop.f32.mrf.mxu0
      %v1909 = vadd.f32 %v1547, %v1908
      %v1910 = vand.u32 %v483, 4294901760
      %v1911 = vsub.f32 %v483, %v1910
      %v1912 = vand.u32 %v1911, 4294901760
      %1913 = vmatmul.f32.gmra.mxu0 %v1912
      %v1914 = vpop.f32.mrf.mxu0
      %v1915 = vadd.f32 %v1552, %v1914
      %v1916 = vand.u32 %v486, 4294901760
      %v1917 = vsub.f32 %v486, %v1916
      %v1918 = vand.u32 %v1917, 4294901760
      %1919 = vmatmul.f32.gmra.mxu0 %v1918
      %v1920 = vpop.f32.mrf.mxu0
      %v1921 = vadd.f32 %v1557, %v1920
      %v1922 = vand.u32 %v489, 4294901760
      %v1923 = vsub.f32 %v489, %v1922
      %v1924 = vand.u32 %v1923, 4294901760
      %1925 = vmatmul.f32.gmra.mxu0 %v1924
      %v1926 = vpop.f32.mrf.mxu0
      %v1927 = vadd.f32 %v1562, %v1926
      %v1928 = vand.u32 %v492, 4294901760
      %v1929 = vsub.f32 %v492, %v1928
      %v1930 = vand.u32 %v1929, 4294901760
      %1931 = vmatmul.f32.gmra.mxu0 %v1930
      %v1932 = vpop.f32.mrf.mxu0
      %v1933 = vadd.f32 %v1567, %v1932
      %v1934 = vand.u32 %v495, 4294901760
      %v1935 = vsub.f32 %v495, %v1934
      %v1936 = vand.u32 %v1935, 4294901760
      %1937 = vmatmul.f32.gmra.mxu0 %v1936
      %v1938 = vpop.f32.mrf.mxu0
      %v1939 = vadd.f32 %v1572, %v1938
      %v1940 = vand.u32 %v498, 4294901760
      %v1941 = vsub.f32 %v498, %v1940
      %v1942 = vand.u32 %v1941, 4294901760
      %1943 = vmatmul.f32.gmra.mxu0 %v1942
      %v1944 = vpop.f32.mrf.mxu0
      %v1945 = vadd.f32 %v1577, %v1944
      %v1946 = vand.u32 %v501, 4294901760
      %v1947 = vsub.f32 %v501, %v1946
      %v1948 = vand.u32 %v1947, 4294901760
      %1949 = vmatmul.f32.gmra.mxu0 %v1948
      %v1950 = vpop.f32.mrf.mxu0
      %v1951 = vadd.f32 %v1582, %v1950
      %v1952 = vand.u32 %v504, 4294901760
      %v1953 = vsub.f32 %v504, %v1952
      %v1954 = vand.u32 %v1953, 4294901760
      %1955 = vmatmul.f32.gmra.mxu0 %v1954
      %v1956 = vpop.f32.mrf.mxu0
      %v1957 = vadd.f32 %v1587, %v1956
      %v1958 = vand.u32 %v507, 4294901760
      %v1959 = vsub.f32 %v507, %v1958
      %v1960 = vand.u32 %v1959, 4294901760
      %1961 = vmatmul.f32.gmra.mxu0 %v1960
      %v1962 = vpop.f32.mrf.mxu0
      %v1963 = vadd.f32 %v1592, %v1962
      %v1964 = vand.u32 %v510, 4294901760
      %v1965 = vsub.f32 %v510, %v1964
      %v1966 = vand.u32 %v1965, 4294901760
      %1967 = vmatmul.f32.gmra.mxu0 %v1966
      %v1968 = vpop.f32.mrf.mxu0
      %v1969 = vadd.f32 %v1597, %v1968
      %v1970 = vand.u32 %v513, 4294901760
      %v1971 = vsub.f32 %v513, %v1970
      %v1972 = vand.u32 %v1971, 4294901760
      %1973 = vmatmul.f32.gmra.mxu0 %v1972
      %v1974 = vpop.f32.mrf.mxu0
      %v1975 = vadd.f32 %v1602, %v1974
      %v1976 = vand.u32 %v516, 4294901760
      %v1977 = vsub.f32 %v516, %v1976
      %v1978 = vand.u32 %v1977, 4294901760
      %1979 = vmatmul.f32.gmra.mxu0 %v1978
      %v1980 = vpop.f32.mrf.mxu0
      %v1981 = vadd.f32 %v1607, %v1980
      %v1982 = vand.u32 %v519, 4294901760
      %v1983 = vsub.f32 %v519, %v1982
      %v1984 = vand.u32 %v1983, 4294901760
      %1985 = vmatmul.f32.gmra.mxu0 %v1984
      %v1986 = vpop.f32.mrf.mxu0
      %v1987 = vadd.f32 %v1612, %v1986
      %v1988 = vand.u32 %v522, 4294901760
      %v1989 = vsub.f32 %v522, %v1988
      %v1990 = vand.u32 %v1989, 4294901760
      %1991 = vmatmul.f32.gmra.mxu0 %v1990
      %v1992 = vpop.f32.mrf.mxu0
      %v1993 = vadd.f32 %v1617, %v1992
      %v1994 = vand.u32 %v525, 4294901760
      %v1995 = vsub.f32 %v525, %v1994
      %v1996 = vand.u32 %v1995, 4294901760
      %1997 = vmatmul.f32.gmra.mxu0 %v1996
      %v1998 = vpop.f32.mrf.mxu0
      %v1999 = vadd.f32 %v1622, %v1998
      %v2000 = vand.u32 %v528, 4294901760
      %v2001 = vsub.f32 %v528, %v2000
      %v2002 = vand.u32 %v2001, 4294901760
      %2003 = vmatmul.f32.gmra.mxu0 %v2002
      %v2004 = vpop.f32.mrf.mxu0
      %v2005 = vadd.f32 %v1627, %v2004
      %v2006 = vand.u32 %v531, 4294901760
      %v2007 = vsub.f32 %v531, %v2006
      %v2008 = vand.u32 %v2007, 4294901760
      %2009 = vmatmul.f32.gmra.mxu0 %v2008
      %v2010 = vpop.f32.mrf.mxu0
      %v2011 = vadd.f32 %v1632, %v2010
      %v2012 = vand.u32 %v534, 4294901760
      %v2013 = vsub.f32 %v534, %v2012
      %v2014 = vand.u32 %v2013, 4294901760
      %2015 = vmatmul.f32.gmra.mxu0 %v2014
      %v2016 = vpop.f32.mrf.mxu0
      %v2017 = vadd.f32 %v1637, %v2016
      %v2018 = vand.u32 %v537, 4294901760
      %v2019 = vsub.f32 %v537, %v2018
      %v2020 = vand.u32 %v2019, 4294901760
      %2021 = vmatmul.f32.gmra.mxu0 %v2020
      %v2022 = vpop.f32.mrf.mxu0
      %v2023 = vadd.f32 %v1642, %v2022
      %v2024 = vand.u32 %v540, 4294901760
      %v2025 = vsub.f32 %v540, %v2024
      %v2026 = vand.u32 %v2025, 4294901760
      %2027 = vmatmul.f32.gmra.mxu0 %v2026
      %v2028 = vpop.f32.mrf.mxu0
      %v2029 = vadd.f32 %v1647, %v2028
      %v2030 = vand.u32 %v543, 4294901760
      %v2031 = vsub.f32 %v543, %v2030
      %v2032 = vand.u32 %v2031, 4294901760
      %2033 = vmatmul.f32.gmra.mxu0 %v2032
      %v2034 = vpop.f32.mrf.mxu0
      %v2035 = vadd.f32 %v1652, %v2034
      %v2036 = vand.u32 %v546, 4294901760
      %v2037 = vsub.f32 %v546, %v2036
      %v2038 = vand.u32 %v2037, 4294901760
      %2039 = vmatmul.f32.gmra.mxu0 %v2038
      %v2040 = vpop.f32.mrf.mxu0
      %v2041 = vadd.f32 %v1657, %v2040
      %v2042 = vand.u32 %v549, 4294901760
      %v2043 = vsub.f32 %v549, %v2042
      %v2044 = vand.u32 %v2043, 4294901760
      %2045 = vmatmul.f32.gmra.mxu0 %v2044
      %v2046 = vpop.f32.mrf.mxu0
      %v2047 = vadd.f32 %v1662, %v2046
      %v2048 = vand.u32 %v552, 4294901760
      %v2049 = vsub.f32 %v552, %v2048
      %v2050 = vand.u32 %v2049, 4294901760
      %2051 = vmatmul.f32.gmra.mxu0 %v2050
      %v2052 = vpop.f32.mrf.mxu0
      %v2053 = vadd.f32 %v1667, %v2052
      %v2054 = vand.u32 %v555, 4294901760
      %v2055 = vsub.f32 %v555, %v2054
      %v2056 = vand.u32 %v2055, 4294901760
      %2057 = vmatmul.f32.gmra.mxu0 %v2056
      %v2058 = vpop.f32.mrf.mxu0
      %v2059 = vadd.f32 %v1672, %v2058
      %v2060 = vand.u32 %v558, 4294901760
      %v2061 = vsub.f32 %v558, %v2060
      %v2062 = vand.u32 %v2061, 4294901760
      %2063 = vmatmul.f32.gmra.mxu0 %v2062
      %v2064 = vpop.f32.mrf.mxu0
      %v2065 = vadd.f32 %v1677, %v2064
      %v2066 = vand.u32 %v561, 4294901760
      %v2067 = vsub.f32 %v561, %v2066
      %v2068 = vand.u32 %v2067, 4294901760
      %2069 = vmatmul.f32.gmra.mxu0 %v2068
      %v2070 = vpop.f32.mrf.mxu0
      %v2071 = vadd.f32 %v1682, %v2070
      %v2072 = vand.u32 %v564, 4294901760
      %v2073 = vsub.f32 %v564, %v2072
      %v2074 = vand.u32 %v2073, 4294901760
      %2075 = vmatmul.f32.gmra.mxu0 %v2074
      %v2076 = vpop.f32.mrf.mxu0
      %v2077 = vadd.f32 %v1687, %v2076
      %v2078 = vand.u32 %v567, 4294901760
      %v2079 = vsub.f32 %v567, %v2078
      %v2080 = vand.u32 %v2079, 4294901760
      %2081 = vmatmul.f32.gmra.mxu0 %v2080
      %v2082 = vpop.f32.mrf.mxu0
      %v2083 = vadd.f32 %v1692, %v2082
      %v2084 = vand.u32 %v570, 4294901760
      %v2085 = vsub.f32 %v570, %v2084
      %v2086 = vand.u32 %v2085, 4294901760
      %2087 = vmatmul.f32.gmra.mxu0 %v2086
      %v2088 = vpop.f32.mrf.mxu0
      %v2089 = vadd.f32 %v1697, %v2088
      %v2090 = vand.u32 %v573, 4294901760
      %v2091 = vsub.f32 %v573, %v2090
      %v2092 = vand.u32 %v2091, 4294901760
      %2093 = vmatmul.f32.gmra.mxu0 %v2092
      %v2094 = vpop.f32.mrf.mxu0
      %v2095 = vadd.f32 %v1702, %v2094
      %v2096 = vand.u32 %v576, 4294901760
      %v2097 = vsub.f32 %v576, %v2096
      %v2098 = vand.u32 %v2097, 4294901760
      %2099 = vmatmul.f32.gmra.mxu0 %v2098
      %v2100 = vpop.f32.mrf.mxu0
      %v2101 = vadd.f32 %v1707, %v2100
      %v2102 = vand.u32 %v579, 4294901760
      %v2103 = vsub.f32 %v579, %v2102
      %v2104 = vand.u32 %v2103, 4294901760
      %2105 = vmatmul.f32.gmra.mxu0 %v2104
      %v2106 = vpop.f32.mrf.mxu0
      %v2107 = vadd.f32 %v1712, %v2106
      %v2108 = vand.u32 %v582, 4294901760
      %v2109 = vsub.f32 %v582, %v2108
      %v2110 = vand.u32 %v2109, 4294901760
      %2111 = vmatmul.f32.gmra.mxu0 %v2110
      %v2112 = vpop.f32.mrf.mxu0
      %v2113 = vadd.f32 %v1717, %v2112
      %v2114 = vand.u32 %v585, 4294901760
      %v2115 = vsub.f32 %v585, %v2114
      %v2116 = vand.u32 %v2115, 4294901760
      %2117 = vmatmul.f32.gmra.mxu0 %v2116
      %v2118 = vpop.f32.mrf.mxu0
      %v2119 = vadd.f32 %v1722, %v2118
      %v2120 = vand.u32 %v588, 4294901760
      %v2121 = vsub.f32 %v588, %v2120
      %v2122 = vand.u32 %v2121, 4294901760
      %2123 = vmatmul.f32.gmra.mxu0 %v2122
      %v2124 = vpop.f32.mrf.mxu0
      %v2125 = vadd.f32 %v1727, %v2124
      %v2126 = vand.u32 %v591, 4294901760
      %v2127 = vsub.f32 %v591, %v2126
      %v2128 = vand.u32 %v2127, 4294901760
      %2129 = vmatmul.f32.gmra.mxu0 %v2128
      %v2130 = vpop.f32.mrf.mxu0
      %v2131 = vadd.f32 %v1732, %v2130
      %v2132 = vand.u32 %v594, 4294901760
      %v2133 = vsub.f32 %v594, %v2132
      %v2134 = vand.u32 %v2133, 4294901760
      %2135 = vmatmul.f32.gmra.mxu0 %v2134
      %v2136 = vpop.f32.mrf.mxu0
      %v2137 = vadd.f32 %v1737, %v2136
      %v2138 = vand.u32 %v597, 4294901760
      %v2139 = vsub.f32 %v597, %v2138
      %v2140 = vand.u32 %v2139, 4294901760
      %2141 = vmatmul.f32.gmra.mxu0 %v2140
      %v2142 = vpop.f32.mrf.mxu0
      %v2143 = vadd.f32 %v1742, %v2142
      %v2144 = vand.u32 %v600, 4294901760
      %v2145 = vsub.f32 %v600, %v2144
      %v2146 = vand.u32 %v2145, 4294901760
      %2147 = vmatmul.f32.gmra.mxu0 %v2146
      %v2148 = vpop.f32.mrf.mxu0
      %v2149 = vadd.f32 %v1747, %v2148
      %2150 = vdwg.mxu0
      %2151 = vmatpush.msra.mxu0 0.0
      %2152 = vmatpush.msra.mxu0 0.0
      %2153 = vmatpush.msra.mxu0 0.0
      %2154 = vmatpush.msra.mxu0 0.0
      %2155 = vmatpush.msra.mxu0 0.0
      %2156 = vmatpush.msra.mxu0 0.0
      %2157 = vmatpush.msra.mxu0 0.0
      %2158 = vmatpush.msra.mxu0 0.0
      %2159 = vmatpush.msra.mxu0 0.0
      %2160 = vmatpush.msra.mxu0 0.0
      %2161 = vmatpush.msra.mxu0 0.0
      %2162 = vmatpush.msra.mxu0 0.0
      %2163 = vmatpush.msra.mxu0 0.0
      %2164 = vmatpush.msra.mxu0 0.0
      %2165 = vmatpush.msra.mxu0 0.0
      %v2166 = vand.u32 %v269, 4294901760
      %v2167 = vsub.f32 %v269, %v2166
      %v2168 = vand.u32 %v2167, 4294901760
      %2169 = vmatpush.msra.mxu0 %v2168
      %v2170 = vand.u32 %v411, 4294901760
      %2171 = vmatmul.f32.gmra.mxu0 %v2170
      %v2172 = vpop.f32.mrf.mxu0
      %v2173 = vadd.f32 %v1771, %v2172
      %v2174 = vand.u32 %v414, 4294901760
      %2175 = vmatmul.f32.gmra.mxu0 %v2174
      %v2176 = vpop.f32.mrf.mxu0
      %v2177 = vadd.f32 %v1777, %v2176
      %v2178 = vand.u32 %v417, 4294901760
      %2179 = vmatmul.f32.gmra.mxu0 %v2178
      %v2180 = vpop.f32.mrf.mxu0
      %v2181 = vadd.f32 %v1783, %v2180
      %v2182 = vand.u32 %v420, 4294901760
      %2183 = vmatmul.f32.gmra.mxu0 %v2182
      %v2184 = vpop.f32.mrf.mxu0
      %v2185 = vadd.f32 %v1789, %v2184
      %v2186 = vand.u32 %v423, 4294901760
      %2187 = vmatmul.f32.gmra.mxu0 %v2186
      %v2188 = vpop.f32.mrf.mxu0
      %v2189 = vadd.f32 %v1795, %v2188
      %v2190 = vand.u32 %v426, 4294901760
      %2191 = vmatmul.f32.gmra.mxu0 %v2190
      %v2192 = vpop.f32.mrf.mxu0
      %v2193 = vadd.f32 %v1801, %v2192
      %v2194 = vand.u32 %v429, 4294901760
      %2195 = vmatmul.f32.gmra.mxu0 %v2194
      %v2196 = vpop.f32.mrf.mxu0
      %v2197 = vadd.f32 %v1807, %v2196
      %v2198 = vand.u32 %v432, 4294901760
      %2199 = vmatmul.f32.gmra.mxu0 %v2198
      %v2200 = vpop.f32.mrf.mxu0
      %v2201 = vadd.f32 %v1813, %v2200
      %v2202 = vand.u32 %v435, 4294901760
      %2203 = vmatmul.f32.gmra.mxu0 %v2202
      %v2204 = vpop.f32.mrf.mxu0
      %v2205 = vadd.f32 %v1819, %v2204
      %v2206 = vand.u32 %v438, 4294901760
      %2207 = vmatmul.f32.gmra.mxu0 %v2206
      %v2208 = vpop.f32.mrf.mxu0
      %v2209 = vadd.f32 %v1825, %v2208
      %v2210 = vand.u32 %v441, 4294901760
      %2211 = vmatmul.f32.gmra.mxu0 %v2210
      %v2212 = vpop.f32.mrf.mxu0
      %v2213 = vadd.f32 %v1831, %v2212
      %v2214 = vand.u32 %v444, 4294901760
      %2215 = vmatmul.f32.gmra.mxu0 %v2214
      %v2216 = vpop.f32.mrf.mxu0
      %v2217 = vadd.f32 %v1837, %v2216
      %v2218 = vand.u32 %v447, 4294901760
      %2219 = vmatmul.f32.gmra.mxu0 %v2218
      %v2220 = vpop.f32.mrf.mxu0
      %v2221 = vadd.f32 %v1843, %v2220
      %v2222 = vand.u32 %v450, 4294901760
      %2223 = vmatmul.f32.gmra.mxu0 %v2222
      %v2224 = vpop.f32.mrf.mxu0
      %v2225 = vadd.f32 %v1849, %v2224
      %v2226 = vand.u32 %v453, 4294901760
      %2227 = vmatmul.f32.gmra.mxu0 %v2226
      %v2228 = vpop.f32.mrf.mxu0
      %v2229 = vadd.f32 %v1855, %v2228
      %v2230 = vand.u32 %v456, 4294901760
      %2231 = vmatmul.f32.gmra.mxu0 %v2230
      %v2232 = vpop.f32.mrf.mxu0
      %v2233 = vadd.f32 %v1861, %v2232
      %v2234 = vand.u32 %v459, 4294901760
      %2235 = vmatmul.f32.gmra.mxu0 %v2234
      %v2236 = vpop.f32.mrf.mxu0
      %v2237 = vadd.f32 %v1867, %v2236
      %v2238 = vand.u32 %v462, 4294901760
      %2239 = vmatmul.f32.gmra.mxu0 %v2238
      %v2240 = vpop.f32.mrf.mxu0
      %v2241 = vadd.f32 %v1873, %v2240
      %v2242 = vand.u32 %v465, 4294901760
      %2243 = vmatmul.f32.gmra.mxu0 %v2242
      %v2244 = vpop.f32.mrf.mxu0
      %v2245 = vadd.f32 %v1879, %v2244
      %v2246 = vand.u32 %v468, 4294901760
      %2247 = vmatmul.f32.gmra.mxu0 %v2246
      %v2248 = vpop.f32.mrf.mxu0
      %v2249 = vadd.f32 %v1885, %v2248
      %v2250 = vand.u32 %v471, 4294901760
      %2251 = vmatmul.f32.gmra.mxu0 %v2250
      %v2252 = vpop.f32.mrf.mxu0
      %v2253 = vadd.f32 %v1891, %v2252
      %v2254 = vand.u32 %v474, 4294901760
      %2255 = vmatmul.f32.gmra.mxu0 %v2254
      %v2256 = vpop.f32.mrf.mxu0
      %v2257 = vadd.f32 %v1897, %v2256
      %v2258 = vand.u32 %v477, 4294901760
      %2259 = vmatmul.f32.gmra.mxu0 %v2258
      %v2260 = vpop.f32.mrf.mxu0
      %v2261 = vadd.f32 %v1903, %v2260
      %v2262 = vand.u32 %v480, 4294901760
      %2263 = vmatmul.f32.gmra.mxu0 %v2262
      %v2264 = vpop.f32.mrf.mxu0
      %v2265 = vadd.f32 %v1909, %v2264
      %v2266 = vand.u32 %v483, 4294901760
      %2267 = vmatmul.f32.gmra.mxu0 %v2266
      %v2268 = vpop.f32.mrf.mxu0
      %v2269 = vadd.f32 %v1915, %v2268
      %v2270 = vand.u32 %v486, 4294901760
      %2271 = vmatmul.f32.gmra.mxu0 %v2270
      %v2272 = vpop.f32.mrf.mxu0
      %v2273 = vadd.f32 %v1921, %v2272
      %v2274 = vand.u32 %v489, 4294901760
      %2275 = vmatmul.f32.gmra.mxu0 %v2274
      %v2276 = vpop.f32.mrf.mxu0
      %v2277 = vadd.f32 %v1927, %v2276
      %v2278 = vand.u32 %v492, 4294901760
      %2279 = vmatmul.f32.gmra.mxu0 %v2278
      %v2280 = vpop.f32.mrf.mxu0
      %v2281 = vadd.f32 %v1933, %v2280
      %v2282 = vand.u32 %v495, 4294901760
      %2283 = vmatmul.f32.gmra.mxu0 %v2282
      %v2284 = vpop.f32.mrf.mxu0
      %v2285 = vadd.f32 %v1939, %v2284
      %v2286 = vand.u32 %v498, 4294901760
      %2287 = vmatmul.f32.gmra.mxu0 %v2286
      %v2288 = vpop.f32.mrf.mxu0
      %v2289 = vadd.f32 %v1945, %v2288
      %v2290 = vand.u32 %v501, 4294901760
      %2291 = vmatmul.f32.gmra.mxu0 %v2290
      %v2292 = vpop.f32.mrf.mxu0
      %v2293 = vadd.f32 %v1951, %v2292
      %v2294 = vand.u32 %v504, 4294901760
      %2295 = vmatmul.f32.gmra.mxu0 %v2294
      %v2296 = vpop.f32.mrf.mxu0
      %v2297 = vadd.f32 %v1957, %v2296
      %v2298 = vand.u32 %v507, 4294901760
      %2299 = vmatmul.f32.gmra.mxu0 %v2298
      %v2300 = vpop.f32.mrf.mxu0
      %v2301 = vadd.f32 %v1963, %v2300
      %v2302 = vand.u32 %v510, 4294901760
      %2303 = vmatmul.f32.gmra.mxu0 %v2302
      %v2304 = vpop.f32.mrf.mxu0
      %v2305 = vadd.f32 %v1969, %v2304
      %v2306 = vand.u32 %v513, 4294901760
      %2307 = vmatmul.f32.gmra.mxu0 %v2306
      %v2308 = vpop.f32.mrf.mxu0
      %v2309 = vadd.f32 %v1975, %v2308
      %v2310 = vand.u32 %v516, 4294901760
      %2311 = vmatmul.f32.gmra.mxu0 %v2310
      %v2312 = vpop.f32.mrf.mxu0
      %v2313 = vadd.f32 %v1981, %v2312
      %v2314 = vand.u32 %v519, 4294901760
      %2315 = vmatmul.f32.gmra.mxu0 %v2314
      %v2316 = vpop.f32.mrf.mxu0
      %v2317 = vadd.f32 %v1987, %v2316
      %v2318 = vand.u32 %v522, 4294901760
      %2319 = vmatmul.f32.gmra.mxu0 %v2318
      %v2320 = vpop.f32.mrf.mxu0
      %v2321 = vadd.f32 %v1993, %v2320
      %v2322 = vand.u32 %v525, 4294901760
      %2323 = vmatmul.f32.gmra.mxu0 %v2322
      %v2324 = vpop.f32.mrf.mxu0
      %v2325 = vadd.f32 %v1999, %v2324
      %v2326 = vand.u32 %v528, 4294901760
      %2327 = vmatmul.f32.gmra.mxu0 %v2326
      %v2328 = vpop.f32.mrf.mxu0
      %v2329 = vadd.f32 %v2005, %v2328
      %v2330 = vand.u32 %v531, 4294901760
      %2331 = vmatmul.f32.gmra.mxu0 %v2330
      %v2332 = vpop.f32.mrf.mxu0
      %v2333 = vadd.f32 %v2011, %v2332
      %v2334 = vand.u32 %v534, 4294901760
      %2335 = vmatmul.f32.gmra.mxu0 %v2334
      %v2336 = vpop.f32.mrf.mxu0
      %v2337 = vadd.f32 %v2017, %v2336
      %v2338 = vand.u32 %v537, 4294901760
      %2339 = vmatmul.f32.gmra.mxu0 %v2338
      %v2340 = vpop.f32.mrf.mxu0
      %v2341 = vadd.f32 %v2023, %v2340
      %v2342 = vand.u32 %v540, 4294901760
      %2343 = vmatmul.f32.gmra.mxu0 %v2342
      %v2344 = vpop.f32.mrf.mxu0
      %v2345 = vadd.f32 %v2029, %v2344
      %v2346 = vand.u32 %v543, 4294901760
      %2347 = vmatmul.f32.gmra.mxu0 %v2346
      %v2348 = vpop.f32.mrf.mxu0
      %v2349 = vadd.f32 %v2035, %v2348
      %v2350 = vand.u32 %v546, 4294901760
      %2351 = vmatmul.f32.gmra.mxu0 %v2350
      %v2352 = vpop.f32.mrf.mxu0
      %v2353 = vadd.f32 %v2041, %v2352
      %v2354 = vand.u32 %v549, 4294901760
      %2355 = vmatmul.f32.gmra.mxu0 %v2354
      %v2356 = vpop.f32.mrf.mxu0
      %v2357 = vadd.f32 %v2047, %v2356
      %v2358 = vand.u32 %v552, 4294901760
      %2359 = vmatmul.f32.gmra.mxu0 %v2358
      %v2360 = vpop.f32.mrf.mxu0
      %v2361 = vadd.f32 %v2053, %v2360
      %v2362 = vand.u32 %v555, 4294901760
      %2363 = vmatmul.f32.gmra.mxu0 %v2362
      %v2364 = vpop.f32.mrf.mxu0
      %v2365 = vadd.f32 %v2059, %v2364
      %v2366 = vand.u32 %v558, 4294901760
      %2367 = vmatmul.f32.gmra.mxu0 %v2366
      %v2368 = vpop.f32.mrf.mxu0
      %v2369 = vadd.f32 %v2065, %v2368
      %v2370 = vand.u32 %v561, 4294901760
      %2371 = vmatmul.f32.gmra.mxu0 %v2370
      %v2372 = vpop.f32.mrf.mxu0
      %v2373 = vadd.f32 %v2071, %v2372
      %v2374 = vand.u32 %v564, 4294901760
      %2375 = vmatmul.f32.gmra.mxu0 %v2374
      %v2376 = vpop.f32.mrf.mxu0
      %v2377 = vadd.f32 %v2077, %v2376
      %v2378 = vand.u32 %v567, 4294901760
      %2379 = vmatmul.f32.gmra.mxu0 %v2378
      %v2380 = vpop.f32.mrf.mxu0
      %v2381 = vadd.f32 %v2083, %v2380
      %v2382 = vand.u32 %v570, 4294901760
      %2383 = vmatmul.f32.gmra.mxu0 %v2382
      %v2384 = vpop.f32.mrf.mxu0
      %v2385 = vadd.f32 %v2089, %v2384
      %v2386 = vand.u32 %v573, 4294901760
      %2387 = vmatmul.f32.gmra.mxu0 %v2386
      %v2388 = vpop.f32.mrf.mxu0
      %v2389 = vadd.f32 %v2095, %v2388
      %v2390 = vand.u32 %v576, 4294901760
      %2391 = vmatmul.f32.gmra.mxu0 %v2390
      %v2392 = vpop.f32.mrf.mxu0
      %v2393 = vadd.f32 %v2101, %v2392
      %v2394 = vand.u32 %v579, 4294901760
      %2395 = vmatmul.f32.gmra.mxu0 %v2394
      %v2396 = vpop.f32.mrf.mxu0
      %v2397 = vadd.f32 %v2107, %v2396
      %v2398 = vand.u32 %v582, 4294901760
      %2399 = vmatmul.f32.gmra.mxu0 %v2398
      %v2400 = vpop.f32.mrf.mxu0
      %v2401 = vadd.f32 %v2113, %v2400
      %v2402 = vand.u32 %v585, 4294901760
      %2403 = vmatmul.f32.gmra.mxu0 %v2402
      %v2404 = vpop.f32.mrf.mxu0
      %v2405 = vadd.f32 %v2119, %v2404
      %v2406 = vand.u32 %v588, 4294901760
      %2407 = vmatmul.f32.gmra.mxu0 %v2406
      %v2408 = vpop.f32.mrf.mxu0
      %v2409 = vadd.f32 %v2125, %v2408
      %v2410 = vand.u32 %v591, 4294901760
      %2411 = vmatmul.f32.gmra.mxu0 %v2410
      %v2412 = vpop.f32.mrf.mxu0
      %v2413 = vadd.f32 %v2131, %v2412
      %v2414 = vand.u32 %v594, 4294901760
      %2415 = vmatmul.f32.gmra.mxu0 %v2414
      %v2416 = vpop.f32.mrf.mxu0
      %v2417 = vadd.f32 %v2137, %v2416
      %v2418 = vand.u32 %v597, 4294901760
      %2419 = vmatmul.f32.gmra.mxu0 %v2418
      %v2420 = vpop.f32.mrf.mxu0
      %v2421 = vadd.f32 %v2143, %v2420
      %v2422 = vand.u32 %v600, 4294901760
      %2423 = vmatmul.f32.gmra.mxu0 %v2422
      %v2424 = vpop.f32.mrf.mxu0
      %v2425 = vadd.f32 %v2149, %v2424
      %2426 = vdwg.mxu0
      %2427 = vmatpush.msra.mxu0 0.0
      %2428 = vmatpush.msra.mxu0 0.0
      %2429 = vmatpush.msra.mxu0 0.0
      %2430 = vmatpush.msra.mxu0 0.0
      %2431 = vmatpush.msra.mxu0 0.0
      %2432 = vmatpush.msra.mxu0 0.0
      %2433 = vmatpush.msra.mxu0 0.0
      %2434 = vmatpush.msra.mxu0 0.0
      %2435 = vmatpush.msra.mxu0 0.0
      %2436 = vmatpush.msra.mxu0 0.0
      %2437 = vmatpush.msra.mxu0 0.0
      %2438 = vmatpush.msra.mxu0 0.0
      %2439 = vmatpush.msra.mxu0 0.0
      %2440 = vmatpush.msra.mxu0 0.0
      %2441 = vmatpush.msra.mxu0 0.0
      %v2442 = vand.u32 %v269, 4294901760
      %2443 = vmatpush.msra.mxu0 %v2442
      %v2444 = vand.u32 %v411, 4294901760
      %2445 = vmatmul.f32.gmra.mxu0 %v2444
      %v2446 = vpop.f32.mrf.mxu0
      %v2447 = vadd.f32 %v2173, %v2446
      %v2448 = vand.u32 %v414, 4294901760
      %2449 = vmatmul.f32.gmra.mxu0 %v2448
      %v2450 = vpop.f32.mrf.mxu0
      %v2451 = vadd.f32 %v2177, %v2450
      %v2452 = vand.u32 %v417, 4294901760
      %2453 = vmatmul.f32.gmra.mxu0 %v2452
      %v2454 = vpop.f32.mrf.mxu0
      %v2455 = vadd.f32 %v2181, %v2454
      %v2456 = vand.u32 %v420, 4294901760
      %2457 = vmatmul.f32.gmra.mxu0 %v2456
      %v2458 = vpop.f32.mrf.mxu0
      %v2459 = vadd.f32 %v2185, %v2458
      %v2460 = vand.u32 %v423, 4294901760
      %2461 = vmatmul.f32.gmra.mxu0 %v2460
      %v2462 = vpop.f32.mrf.mxu0
      %v2463 = vadd.f32 %v2189, %v2462
      %v2464 = vand.u32 %v426, 4294901760
      %2465 = vmatmul.f32.gmra.mxu0 %v2464
      %v2466 = vpop.f32.mrf.mxu0
      %v2467 = vadd.f32 %v2193, %v2466
      %v2468 = vand.u32 %v429, 4294901760
      %2469 = vmatmul.f32.gmra.mxu0 %v2468
      %v2470 = vpop.f32.mrf.mxu0
      %v2471 = vadd.f32 %v2197, %v2470
      %v2472 = vand.u32 %v432, 4294901760
      %2473 = vmatmul.f32.gmra.mxu0 %v2472
      %v2474 = vpop.f32.mrf.mxu0
      %v2475 = vadd.f32 %v2201, %v2474
      %v2476 = vand.u32 %v435, 4294901760
      %2477 = vmatmul.f32.gmra.mxu0 %v2476
      %v2478 = vpop.f32.mrf.mxu0
      %v2479 = vadd.f32 %v2205, %v2478
      %v2480 = vand.u32 %v438, 4294901760
      %2481 = vmatmul.f32.gmra.mxu0 %v2480
      %v2482 = vpop.f32.mrf.mxu0
      %v2483 = vadd.f32 %v2209, %v2482
      %v2484 = vand.u32 %v441, 4294901760
      %2485 = vmatmul.f32.gmra.mxu0 %v2484
      %v2486 = vpop.f32.mrf.mxu0
      %v2487 = vadd.f32 %v2213, %v2486
      %v2488 = vand.u32 %v444, 4294901760
      %2489 = vmatmul.f32.gmra.mxu0 %v2488
      %v2490 = vpop.f32.mrf.mxu0
      %v2491 = vadd.f32 %v2217, %v2490
      %v2492 = vand.u32 %v447, 4294901760
      %2493 = vmatmul.f32.gmra.mxu0 %v2492
      %v2494 = vpop.f32.mrf.mxu0
      %v2495 = vadd.f32 %v2221, %v2494
      %v2496 = vand.u32 %v450, 4294901760
      %2497 = vmatmul.f32.gmra.mxu0 %v2496
      %v2498 = vpop.f32.mrf.mxu0
      %v2499 = vadd.f32 %v2225, %v2498
      %v2500 = vand.u32 %v453, 4294901760
      %2501 = vmatmul.f32.gmra.mxu0 %v2500
      %v2502 = vpop.f32.mrf.mxu0
      %v2503 = vadd.f32 %v2229, %v2502
      %v2504 = vand.u32 %v456, 4294901760
      %2505 = vmatmul.f32.gmra.mxu0 %v2504
      %v2506 = vpop.f32.mrf.mxu0
      %v2507 = vadd.f32 %v2233, %v2506
      %v2508 = vand.u32 %v459, 4294901760
      %2509 = vmatmul.f32.gmra.mxu0 %v2508
      %v2510 = vpop.f32.mrf.mxu0
      %v2511 = vadd.f32 %v2237, %v2510
      %v2512 = vand.u32 %v462, 4294901760
      %2513 = vmatmul.f32.gmra.mxu0 %v2512
      %v2514 = vpop.f32.mrf.mxu0
      %v2515 = vadd.f32 %v2241, %v2514
      %v2516 = vand.u32 %v465, 4294901760
      %2517 = vmatmul.f32.gmra.mxu0 %v2516
      %v2518 = vpop.f32.mrf.mxu0
      %v2519 = vadd.f32 %v2245, %v2518
      %v2520 = vand.u32 %v468, 4294901760
      %2521 = vmatmul.f32.gmra.mxu0 %v2520
      %v2522 = vpop.f32.mrf.mxu0
      %v2523 = vadd.f32 %v2249, %v2522
      %v2524 = vand.u32 %v471, 4294901760
      %2525 = vmatmul.f32.gmra.mxu0 %v2524
      %v2526 = vpop.f32.mrf.mxu0
      %v2527 = vadd.f32 %v2253, %v2526
      %v2528 = vand.u32 %v474, 4294901760
      %2529 = vmatmul.f32.gmra.mxu0 %v2528
      %v2530 = vpop.f32.mrf.mxu0
      %v2531 = vadd.f32 %v2257, %v2530
      %v2532 = vand.u32 %v477, 4294901760
      %2533 = vmatmul.f32.gmra.mxu0 %v2532
      %v2534 = vpop.f32.mrf.mxu0
      %v2535 = vadd.f32 %v2261, %v2534
      %v2536 = vand.u32 %v480, 4294901760
      %2537 = vmatmul.f32.gmra.mxu0 %v2536
      %v2538 = vpop.f32.mrf.mxu0
      %v2539 = vadd.f32 %v2265, %v2538
      %v2540 = vand.u32 %v483, 4294901760
      %2541 = vmatmul.f32.gmra.mxu0 %v2540
      %v2542 = vpop.f32.mrf.mxu0
      %v2543 = vadd.f32 %v2269, %v2542
      %v2544 = vand.u32 %v486, 4294901760
      %2545 = vmatmul.f32.gmra.mxu0 %v2544
      %v2546 = vpop.f32.mrf.mxu0
      %v2547 = vadd.f32 %v2273, %v2546
      %v2548 = vand.u32 %v489, 4294901760
      %2549 = vmatmul.f32.gmra.mxu0 %v2548
      %v2550 = vpop.f32.mrf.mxu0
      %v2551 = vadd.f32 %v2277, %v2550
      %v2552 = vand.u32 %v492, 4294901760
      %2553 = vmatmul.f32.gmra.mxu0 %v2552
      %v2554 = vpop.f32.mrf.mxu0
      %v2555 = vadd.f32 %v2281, %v2554
      %v2556 = vand.u32 %v495, 4294901760
      %2557 = vmatmul.f32.gmra.mxu0 %v2556
      %v2558 = vpop.f32.mrf.mxu0
      %v2559 = vadd.f32 %v2285, %v2558
      %v2560 = vand.u32 %v498, 4294901760
      %2561 = vmatmul.f32.gmra.mxu0 %v2560
      %v2562 = vpop.f32.mrf.mxu0
      %v2563 = vadd.f32 %v2289, %v2562
      %v2564 = vand.u32 %v501, 4294901760
      %2565 = vmatmul.f32.gmra.mxu0 %v2564
      %v2566 = vpop.f32.mrf.mxu0
      %v2567 = vadd.f32 %v2293, %v2566
      %v2568 = vand.u32 %v504, 4294901760
      %2569 = vmatmul.f32.gmra.mxu0 %v2568
      %v2570 = vpop.f32.mrf.mxu0
      %v2571 = vadd.f32 %v2297, %v2570
      %v2572 = vand.u32 %v507, 4294901760
      %2573 = vmatmul.f32.gmra.mxu0 %v2572
      %v2574 = vpop.f32.mrf.mxu0
      %v2575 = vadd.f32 %v2301, %v2574
      %v2576 = vand.u32 %v510, 4294901760
      %2577 = vmatmul.f32.gmra.mxu0 %v2576
      %v2578 = vpop.f32.mrf.mxu0
      %v2579 = vadd.f32 %v2305, %v2578
      %v2580 = vand.u32 %v513, 4294901760
      %2581 = vmatmul.f32.gmra.mxu0 %v2580
      %v2582 = vpop.f32.mrf.mxu0
      %v2583 = vadd.f32 %v2309, %v2582
      %v2584 = vand.u32 %v516, 4294901760
      %2585 = vmatmul.f32.gmra.mxu0 %v2584
      %v2586 = vpop.f32.mrf.mxu0
      %v2587 = vadd.f32 %v2313, %v2586
      %v2588 = vand.u32 %v519, 4294901760
      %2589 = vmatmul.f32.gmra.mxu0 %v2588
      %v2590 = vpop.f32.mrf.mxu0
      %v2591 = vadd.f32 %v2317, %v2590
      %v2592 = vand.u32 %v522, 4294901760
      %2593 = vmatmul.f32.gmra.mxu0 %v2592
      %v2594 = vpop.f32.mrf.mxu0
      %v2595 = vadd.f32 %v2321, %v2594
      %v2596 = vand.u32 %v525, 4294901760
      %2597 = vmatmul.f32.gmra.mxu0 %v2596
      %v2598 = vpop.f32.mrf.mxu0
      %v2599 = vadd.f32 %v2325, %v2598
      %v2600 = vand.u32 %v528, 4294901760
      %2601 = vmatmul.f32.gmra.mxu0 %v2600
      %v2602 = vpop.f32.mrf.mxu0
      %v2603 = vadd.f32 %v2329, %v2602
      %v2604 = vand.u32 %v531, 4294901760
      %2605 = vmatmul.f32.gmra.mxu0 %v2604
      %v2606 = vpop.f32.mrf.mxu0
      %v2607 = vadd.f32 %v2333, %v2606
      %v2608 = vand.u32 %v534, 4294901760
      %2609 = vmatmul.f32.gmra.mxu0 %v2608
      %v2610 = vpop.f32.mrf.mxu0
      %v2611 = vadd.f32 %v2337, %v2610
      %v2612 = vand.u32 %v537, 4294901760
      %2613 = vmatmul.f32.gmra.mxu0 %v2612
      %v2614 = vpop.f32.mrf.mxu0
      %v2615 = vadd.f32 %v2341, %v2614
      %v2616 = vand.u32 %v540, 4294901760
      %2617 = vmatmul.f32.gmra.mxu0 %v2616
      %v2618 = vpop.f32.mrf.mxu0
      %v2619 = vadd.f32 %v2345, %v2618
      %v2620 = vand.u32 %v543, 4294901760
      %2621 = vmatmul.f32.gmra.mxu0 %v2620
      %v2622 = vpop.f32.mrf.mxu0
      %v2623 = vadd.f32 %v2349, %v2622
      %v2624 = vand.u32 %v546, 4294901760
      %2625 = vmatmul.f32.gmra.mxu0 %v2624
      %v2626 = vpop.f32.mrf.mxu0
      %v2627 = vadd.f32 %v2353, %v2626
      %v2628 = vand.u32 %v549, 4294901760
      %2629 = vmatmul.f32.gmra.mxu0 %v2628
      %v2630 = vpop.f32.mrf.mxu0
      %v2631 = vadd.f32 %v2357, %v2630
      %v2632 = vand.u32 %v552, 4294901760
      %2633 = vmatmul.f32.gmra.mxu0 %v2632
      %v2634 = vpop.f32.mrf.mxu0
      %v2635 = vadd.f32 %v2361, %v2634
      %v2636 = vand.u32 %v555, 4294901760
      %2637 = vmatmul.f32.gmra.mxu0 %v2636
      %v2638 = vpop.f32.mrf.mxu0
      %v2639 = vadd.f32 %v2365, %v2638
      %v2640 = vand.u32 %v558, 4294901760
      %2641 = vmatmul.f32.gmra.mxu0 %v2640
      %v2642 = vpop.f32.mrf.mxu0
      %v2643 = vadd.f32 %v2369, %v2642
      %v2644 = vand.u32 %v561, 4294901760
      %2645 = vmatmul.f32.gmra.mxu0 %v2644
      %v2646 = vpop.f32.mrf.mxu0
      %v2647 = vadd.f32 %v2373, %v2646
      %v2648 = vand.u32 %v564, 4294901760
      %2649 = vmatmul.f32.gmra.mxu0 %v2648
      %v2650 = vpop.f32.mrf.mxu0
      %v2651 = vadd.f32 %v2377, %v2650
      %v2652 = vand.u32 %v567, 4294901760
      %2653 = vmatmul.f32.gmra.mxu0 %v2652
      %v2654 = vpop.f32.mrf.mxu0
      %v2655 = vadd.f32 %v2381, %v2654
      %v2656 = vand.u32 %v570, 4294901760
      %2657 = vmatmul.f32.gmra.mxu0 %v2656
      %v2658 = vpop.f32.mrf.mxu0
      %v2659 = vadd.f32 %v2385, %v2658
      %v2660 = vand.u32 %v573, 4294901760
      %2661 = vmatmul.f32.gmra.mxu0 %v2660
      %v2662 = vpop.f32.mrf.mxu0
      %v2663 = vadd.f32 %v2389, %v2662
      %v2664 = vand.u32 %v576, 4294901760
      %2665 = vmatmul.f32.gmra.mxu0 %v2664
      %v2666 = vpop.f32.mrf.mxu0
      %v2667 = vadd.f32 %v2393, %v2666
      %v2668 = vand.u32 %v579, 4294901760
      %2669 = vmatmul.f32.gmra.mxu0 %v2668
      %v2670 = vpop.f32.mrf.mxu0
      %v2671 = vadd.f32 %v2397, %v2670
      %v2672 = vand.u32 %v582, 4294901760
      %2673 = vmatmul.f32.gmra.mxu0 %v2672
      %v2674 = vpop.f32.mrf.mxu0
      %v2675 = vadd.f32 %v2401, %v2674
      %v2676 = vand.u32 %v585, 4294901760
      %2677 = vmatmul.f32.gmra.mxu0 %v2676
      %v2678 = vpop.f32.mrf.mxu0
      %v2679 = vadd.f32 %v2405, %v2678
      %v2680 = vand.u32 %v588, 4294901760
      %2681 = vmatmul.f32.gmra.mxu0 %v2680
      %v2682 = vpop.f32.mrf.mxu0
      %v2683 = vadd.f32 %v2409, %v2682
      %v2684 = vand.u32 %v591, 4294901760
      %2685 = vmatmul.f32.gmra.mxu0 %v2684
      %v2686 = vpop.f32.mrf.mxu0
      %v2687 = vadd.f32 %v2413, %v2686
      %v2688 = vand.u32 %v594, 4294901760
      %2689 = vmatmul.f32.gmra.mxu0 %v2688
      %v2690 = vpop.f32.mrf.mxu0
      %v2691 = vadd.f32 %v2417, %v2690
      %v2692 = vand.u32 %v597, 4294901760
      %2693 = vmatmul.f32.gmra.mxu0 %v2692
      %v2694 = vpop.f32.mrf.mxu0
      %v2695 = vadd.f32 %v2421, %v2694
      %v2696 = vand.u32 %v600, 4294901760
      %2697 = vmatmul.f32.gmra.mxu0 %v2696
      %v2698 = vpop.f32.mrf.mxu0
      %v2699 = vadd.f32 %v2425, %v2698
      %2700 = vdwg.mxu0
      %2701 = vmatpush.msra.mxu0 0.0
      %2702 = vmatpush.msra.mxu0 0.0
      %2703 = vmatpush.msra.mxu0 0.0
      %2704 = vmatpush.msra.mxu0 0.0
      %2705 = vmatpush.msra.mxu0 0.0
      %2706 = vmatpush.msra.mxu0 0.0
      %2707 = vmatpush.msra.mxu0 0.0
      %2708 = vmatpush.msra.mxu0 0.0
      %2709 = vmatpush.msra.mxu0 0.0
      %2710 = vmatpush.msra.mxu0 0.0
      %2711 = vmatpush.msra.mxu0 0.0
      %2712 = vmatpush.msra.mxu0 0.0
      %2713 = vmatpush.msra.mxu0 0.0
      %2714 = vmatpush.msra.mxu0 0.0
      %2715 = vmatpush.msra.mxu0 0.0
      %v2716 = vand.u32 %v270, 4294901760
      %2717 = vmatpush.msra.mxu0 %v2716
      %v2718 = vand.u32 %v411, 4294901760
      %v2719 = vsub.f32 %v411, %v2718
      %v2720 = vand.u32 %v2719, 4294901760
      %v2721 = vsub.f32 %v2719, %v2720
      %v2722 = vand.u32 %v2721, 4294901760
      %2723 = vmatmul.f32.gmra.mxu0 %v2722
      %v2724 = vpop.f32.mrf.mxu0
      %v2725 = vadd.f32 0.0, %v2724
      %v2726 = vand.u32 %v414, 4294901760
      %v2727 = vsub.f32 %v414, %v2726
      %v2728 = vand.u32 %v2727, 4294901760
      %v2729 = vsub.f32 %v2727, %v2728
      %v2730 = vand.u32 %v2729, 4294901760
      %2731 = vmatmul.f32.gmra.mxu0 %v2730
      %v2732 = vpop.f32.mrf.mxu0
      %v2733 = vadd.f32 0.0, %v2732
      %v2734 = vand.u32 %v417, 4294901760
      %v2735 = vsub.f32 %v417, %v2734
      %v2736 = vand.u32 %v2735, 4294901760
      %v2737 = vsub.f32 %v2735, %v2736
      %v2738 = vand.u32 %v2737, 4294901760
      %2739 = vmatmul.f32.gmra.mxu0 %v2738
      %v2740 = vpop.f32.mrf.mxu0
      %v2741 = vadd.f32 0.0, %v2740
      %v2742 = vand.u32 %v420, 4294901760
      %v2743 = vsub.f32 %v420, %v2742
      %v2744 = vand.u32 %v2743, 4294901760
      %v2745 = vsub.f32 %v2743, %v2744
      %v2746 = vand.u32 %v2745, 4294901760
      %2747 = vmatmul.f32.gmra.mxu0 %v2746
      %v2748 = vpop.f32.mrf.mxu0
      %v2749 = vadd.f32 0.0, %v2748
      %v2750 = vand.u32 %v423, 4294901760
      %v2751 = vsub.f32 %v423, %v2750
      %v2752 = vand.u32 %v2751, 4294901760
      %v2753 = vsub.f32 %v2751, %v2752
      %v2754 = vand.u32 %v2753, 4294901760
      %2755 = vmatmul.f32.gmra.mxu0 %v2754
      %v2756 = vpop.f32.mrf.mxu0
      %v2757 = vadd.f32 0.0, %v2756
      %v2758 = vand.u32 %v426, 4294901760
      %v2759 = vsub.f32 %v426, %v2758
      %v2760 = vand.u32 %v2759, 4294901760
      %v2761 = vsub.f32 %v2759, %v2760
      %v2762 = vand.u32 %v2761, 4294901760
      %2763 = vmatmul.f32.gmra.mxu0 %v2762
      %v2764 = vpop.f32.mrf.mxu0
      %v2765 = vadd.f32 0.0, %v2764
      %v2766 = vand.u32 %v429, 4294901760
      %v2767 = vsub.f32 %v429, %v2766
      %v2768 = vand.u32 %v2767, 4294901760
      %v2769 = vsub.f32 %v2767, %v2768
      %v2770 = vand.u32 %v2769, 4294901760
      %2771 = vmatmul.f32.gmra.mxu0 %v2770
      %v2772 = vpop.f32.mrf.mxu0
      %v2773 = vadd.f32 0.0, %v2772
      %v2774 = vand.u32 %v432, 4294901760
      %v2775 = vsub.f32 %v432, %v2774
      %v2776 = vand.u32 %v2775, 4294901760
      %v2777 = vsub.f32 %v2775, %v2776
      %v2778 = vand.u32 %v2777, 4294901760
      %2779 = vmatmul.f32.gmra.mxu0 %v2778
      %v2780 = vpop.f32.mrf.mxu0
      %v2781 = vadd.f32 0.0, %v2780
      %v2782 = vand.u32 %v435, 4294901760
      %v2783 = vsub.f32 %v435, %v2782
      %v2784 = vand.u32 %v2783, 4294901760
      %v2785 = vsub.f32 %v2783, %v2784
      %v2786 = vand.u32 %v2785, 4294901760
      %2787 = vmatmul.f32.gmra.mxu0 %v2786
      %v2788 = vpop.f32.mrf.mxu0
      %v2789 = vadd.f32 0.0, %v2788
      %v2790 = vand.u32 %v438, 4294901760
      %v2791 = vsub.f32 %v438, %v2790
      %v2792 = vand.u32 %v2791, 4294901760
      %v2793 = vsub.f32 %v2791, %v2792
      %v2794 = vand.u32 %v2793, 4294901760
      %2795 = vmatmul.f32.gmra.mxu0 %v2794
      %v2796 = vpop.f32.mrf.mxu0
      %v2797 = vadd.f32 0.0, %v2796
      %v2798 = vand.u32 %v441, 4294901760
      %v2799 = vsub.f32 %v441, %v2798
      %v2800 = vand.u32 %v2799, 4294901760
      %v2801 = vsub.f32 %v2799, %v2800
      %v2802 = vand.u32 %v2801, 4294901760
      %2803 = vmatmul.f32.gmra.mxu0 %v2802
      %v2804 = vpop.f32.mrf.mxu0
      %v2805 = vadd.f32 0.0, %v2804
      %v2806 = vand.u32 %v444, 4294901760
      %v2807 = vsub.f32 %v444, %v2806
      %v2808 = vand.u32 %v2807, 4294901760
      %v2809 = vsub.f32 %v2807, %v2808
      %v2810 = vand.u32 %v2809, 4294901760
      %2811 = vmatmul.f32.gmra.mxu0 %v2810
      %v2812 = vpop.f32.mrf.mxu0
      %v2813 = vadd.f32 0.0, %v2812
      %v2814 = vand.u32 %v447, 4294901760
      %v2815 = vsub.f32 %v447, %v2814
      %v2816 = vand.u32 %v2815, 4294901760
      %v2817 = vsub.f32 %v2815, %v2816
      %v2818 = vand.u32 %v2817, 4294901760
      %2819 = vmatmul.f32.gmra.mxu0 %v2818
      %v2820 = vpop.f32.mrf.mxu0
      %v2821 = vadd.f32 0.0, %v2820
      %v2822 = vand.u32 %v450, 4294901760
      %v2823 = vsub.f32 %v450, %v2822
      %v2824 = vand.u32 %v2823, 4294901760
      %v2825 = vsub.f32 %v2823, %v2824
      %v2826 = vand.u32 %v2825, 4294901760
      %2827 = vmatmul.f32.gmra.mxu0 %v2826
      %v2828 = vpop.f32.mrf.mxu0
      %v2829 = vadd.f32 0.0, %v2828
      %v2830 = vand.u32 %v453, 4294901760
      %v2831 = vsub.f32 %v453, %v2830
      %v2832 = vand.u32 %v2831, 4294901760
      %v2833 = vsub.f32 %v2831, %v2832
      %v2834 = vand.u32 %v2833, 4294901760
      %2835 = vmatmul.f32.gmra.mxu0 %v2834
      %v2836 = vpop.f32.mrf.mxu0
      %v2837 = vadd.f32 0.0, %v2836
      %v2838 = vand.u32 %v456, 4294901760
      %v2839 = vsub.f32 %v456, %v2838
      %v2840 = vand.u32 %v2839, 4294901760
      %v2841 = vsub.f32 %v2839, %v2840
      %v2842 = vand.u32 %v2841, 4294901760
      %2843 = vmatmul.f32.gmra.mxu0 %v2842
      %v2844 = vpop.f32.mrf.mxu0
      %v2845 = vadd.f32 0.0, %v2844
      %v2846 = vand.u32 %v459, 4294901760
      %v2847 = vsub.f32 %v459, %v2846
      %v2848 = vand.u32 %v2847, 4294901760
      %v2849 = vsub.f32 %v2847, %v2848
      %v2850 = vand.u32 %v2849, 4294901760
      %2851 = vmatmul.f32.gmra.mxu0 %v2850
      %v2852 = vpop.f32.mrf.mxu0
      %v2853 = vadd.f32 0.0, %v2852
      %v2854 = vand.u32 %v462, 4294901760
      %v2855 = vsub.f32 %v462, %v2854
      %v2856 = vand.u32 %v2855, 4294901760
      %v2857 = vsub.f32 %v2855, %v2856
      %v2858 = vand.u32 %v2857, 4294901760
      %2859 = vmatmul.f32.gmra.mxu0 %v2858
      %v2860 = vpop.f32.mrf.mxu0
      %v2861 = vadd.f32 0.0, %v2860
      %v2862 = vand.u32 %v465, 4294901760
      %v2863 = vsub.f32 %v465, %v2862
      %v2864 = vand.u32 %v2863, 4294901760
      %v2865 = vsub.f32 %v2863, %v2864
      %v2866 = vand.u32 %v2865, 4294901760
      %2867 = vmatmul.f32.gmra.mxu0 %v2866
      %v2868 = vpop.f32.mrf.mxu0
      %v2869 = vadd.f32 0.0, %v2868
      %v2870 = vand.u32 %v468, 4294901760
      %v2871 = vsub.f32 %v468, %v2870
      %v2872 = vand.u32 %v2871, 4294901760
      %v2873 = vsub.f32 %v2871, %v2872
      %v2874 = vand.u32 %v2873, 4294901760
      %2875 = vmatmul.f32.gmra.mxu0 %v2874
      %v2876 = vpop.f32.mrf.mxu0
      %v2877 = vadd.f32 0.0, %v2876
      %v2878 = vand.u32 %v471, 4294901760
      %v2879 = vsub.f32 %v471, %v2878
      %v2880 = vand.u32 %v2879, 4294901760
      %v2881 = vsub.f32 %v2879, %v2880
      %v2882 = vand.u32 %v2881, 4294901760
      %2883 = vmatmul.f32.gmra.mxu0 %v2882
      %v2884 = vpop.f32.mrf.mxu0
      %v2885 = vadd.f32 0.0, %v2884
      %v2886 = vand.u32 %v474, 4294901760
      %v2887 = vsub.f32 %v474, %v2886
      %v2888 = vand.u32 %v2887, 4294901760
      %v2889 = vsub.f32 %v2887, %v2888
      %v2890 = vand.u32 %v2889, 4294901760
      %2891 = vmatmul.f32.gmra.mxu0 %v2890
      %v2892 = vpop.f32.mrf.mxu0
      %v2893 = vadd.f32 0.0, %v2892
      %v2894 = vand.u32 %v477, 4294901760
      %v2895 = vsub.f32 %v477, %v2894
      %v2896 = vand.u32 %v2895, 4294901760
      %v2897 = vsub.f32 %v2895, %v2896
      %v2898 = vand.u32 %v2897, 4294901760
      %2899 = vmatmul.f32.gmra.mxu0 %v2898
      %v2900 = vpop.f32.mrf.mxu0
      %v2901 = vadd.f32 0.0, %v2900
      %v2902 = vand.u32 %v480, 4294901760
      %v2903 = vsub.f32 %v480, %v2902
      %v2904 = vand.u32 %v2903, 4294901760
      %v2905 = vsub.f32 %v2903, %v2904
      %v2906 = vand.u32 %v2905, 4294901760
      %2907 = vmatmul.f32.gmra.mxu0 %v2906
      %v2908 = vpop.f32.mrf.mxu0
      %v2909 = vadd.f32 0.0, %v2908
      %v2910 = vand.u32 %v483, 4294901760
      %v2911 = vsub.f32 %v483, %v2910
      %v2912 = vand.u32 %v2911, 4294901760
      %v2913 = vsub.f32 %v2911, %v2912
      %v2914 = vand.u32 %v2913, 4294901760
      %2915 = vmatmul.f32.gmra.mxu0 %v2914
      %v2916 = vpop.f32.mrf.mxu0
      %v2917 = vadd.f32 0.0, %v2916
      %v2918 = vand.u32 %v486, 4294901760
      %v2919 = vsub.f32 %v486, %v2918
      %v2920 = vand.u32 %v2919, 4294901760
      %v2921 = vsub.f32 %v2919, %v2920
      %v2922 = vand.u32 %v2921, 4294901760
      %2923 = vmatmul.f32.gmra.mxu0 %v2922
      %v2924 = vpop.f32.mrf.mxu0
      %v2925 = vadd.f32 0.0, %v2924
      %v2926 = vand.u32 %v489, 4294901760
      %v2927 = vsub.f32 %v489, %v2926
      %v2928 = vand.u32 %v2927, 4294901760
      %v2929 = vsub.f32 %v2927, %v2928
      %v2930 = vand.u32 %v2929, 4294901760
      %2931 = vmatmul.f32.gmra.mxu0 %v2930
      %v2932 = vpop.f32.mrf.mxu0
      %v2933 = vadd.f32 0.0, %v2932
      %v2934 = vand.u32 %v492, 4294901760
      %v2935 = vsub.f32 %v492, %v2934
      %v2936 = vand.u32 %v2935, 4294901760
      %v2937 = vsub.f32 %v2935, %v2936
      %v2938 = vand.u32 %v2937, 4294901760
      %2939 = vmatmul.f32.gmra.mxu0 %v2938
      %v2940 = vpop.f32.mrf.mxu0
      %v2941 = vadd.f32 0.0, %v2940
      %v2942 = vand.u32 %v495, 4294901760
      %v2943 = vsub.f32 %v495, %v2942
      %v2944 = vand.u32 %v2943, 4294901760
      %v2945 = vsub.f32 %v2943, %v2944
      %v2946 = vand.u32 %v2945, 4294901760
      %2947 = vmatmul.f32.gmra.mxu0 %v2946
      %v2948 = vpop.f32.mrf.mxu0
      %v2949 = vadd.f32 0.0, %v2948
      %v2950 = vand.u32 %v498, 4294901760
      %v2951 = vsub.f32 %v498, %v2950
      %v2952 = vand.u32 %v2951, 4294901760
      %v2953 = vsub.f32 %v2951, %v2952
      %v2954 = vand.u32 %v2953, 4294901760
      %2955 = vmatmul.f32.gmra.mxu0 %v2954
      %v2956 = vpop.f32.mrf.mxu0
      %v2957 = vadd.f32 0.0, %v2956
      %v2958 = vand.u32 %v501, 4294901760
      %v2959 = vsub.f32 %v501, %v2958
      %v2960 = vand.u32 %v2959, 4294901760
      %v2961 = vsub.f32 %v2959, %v2960
      %v2962 = vand.u32 %v2961, 4294901760
      %2963 = vmatmul.f32.gmra.mxu0 %v2962
      %v2964 = vpop.f32.mrf.mxu0
      %v2965 = vadd.f32 0.0, %v2964
      %v2966 = vand.u32 %v504, 4294901760
      %v2967 = vsub.f32 %v504, %v2966
      %v2968 = vand.u32 %v2967, 4294901760
      %v2969 = vsub.f32 %v2967, %v2968
      %v2970 = vand.u32 %v2969, 4294901760
      %2971 = vmatmul.f32.gmra.mxu0 %v2970
      %v2972 = vpop.f32.mrf.mxu0
      %v2973 = vadd.f32 0.0, %v2972
      %v2974 = vand.u32 %v507, 4294901760
      %v2975 = vsub.f32 %v507, %v2974
      %v2976 = vand.u32 %v2975, 4294901760
      %v2977 = vsub.f32 %v2975, %v2976
      %v2978 = vand.u32 %v2977, 4294901760
      %2979 = vmatmul.f32.gmra.mxu0 %v2978
      %v2980 = vpop.f32.mrf.mxu0
      %v2981 = vadd.f32 0.0, %v2980
      %v2982 = vand.u32 %v510, 4294901760
      %v2983 = vsub.f32 %v510, %v2982
      %v2984 = vand.u32 %v2983, 4294901760
      %v2985 = vsub.f32 %v2983, %v2984
      %v2986 = vand.u32 %v2985, 4294901760
      %2987 = vmatmul.f32.gmra.mxu0 %v2986
      %v2988 = vpop.f32.mrf.mxu0
      %v2989 = vadd.f32 0.0, %v2988
      %v2990 = vand.u32 %v513, 4294901760
      %v2991 = vsub.f32 %v513, %v2990
      %v2992 = vand.u32 %v2991, 4294901760
      %v2993 = vsub.f32 %v2991, %v2992
      %v2994 = vand.u32 %v2993, 4294901760
      %2995 = vmatmul.f32.gmra.mxu0 %v2994
      %v2996 = vpop.f32.mrf.mxu0
      %v2997 = vadd.f32 0.0, %v2996
      %v2998 = vand.u32 %v516, 4294901760
      %v2999 = vsub.f32 %v516, %v2998
      %v3000 = vand.u32 %v2999, 4294901760
      %v3001 = vsub.f32 %v2999, %v3000
      %v3002 = vand.u32 %v3001, 4294901760
      %3003 = vmatmul.f32.gmra.mxu0 %v3002
      %v3004 = vpop.f32.mrf.mxu0
      %v3005 = vadd.f32 0.0, %v3004
      %v3006 = vand.u32 %v519, 4294901760
      %v3007 = vsub.f32 %v519, %v3006
      %v3008 = vand.u32 %v3007, 4294901760
      %v3009 = vsub.f32 %v3007, %v3008
      %v3010 = vand.u32 %v3009, 4294901760
      %3011 = vmatmul.f32.gmra.mxu0 %v3010
      %v3012 = vpop.f32.mrf.mxu0
      %v3013 = vadd.f32 0.0, %v3012
      %v3014 = vand.u32 %v522, 4294901760
      %v3015 = vsub.f32 %v522, %v3014
      %v3016 = vand.u32 %v3015, 4294901760
      %v3017 = vsub.f32 %v3015, %v3016
      %v3018 = vand.u32 %v3017, 4294901760
      %3019 = vmatmul.f32.gmra.mxu0 %v3018
      %v3020 = vpop.f32.mrf.mxu0
      %v3021 = vadd.f32 0.0, %v3020
      %v3022 = vand.u32 %v525, 4294901760
      %v3023 = vsub.f32 %v525, %v3022
      %v3024 = vand.u32 %v3023, 4294901760
      %v3025 = vsub.f32 %v3023, %v3024
      %v3026 = vand.u32 %v3025, 4294901760
      %3027 = vmatmul.f32.gmra.mxu0 %v3026
      %v3028 = vpop.f32.mrf.mxu0
      %v3029 = vadd.f32 0.0, %v3028
      %v3030 = vand.u32 %v528, 4294901760
      %v3031 = vsub.f32 %v528, %v3030
      %v3032 = vand.u32 %v3031, 4294901760
      %v3033 = vsub.f32 %v3031, %v3032
      %v3034 = vand.u32 %v3033, 4294901760
      %3035 = vmatmul.f32.gmra.mxu0 %v3034
      %v3036 = vpop.f32.mrf.mxu0
      %v3037 = vadd.f32 0.0, %v3036
      %v3038 = vand.u32 %v531, 4294901760
      %v3039 = vsub.f32 %v531, %v3038
      %v3040 = vand.u32 %v3039, 4294901760
      %v3041 = vsub.f32 %v3039, %v3040
      %v3042 = vand.u32 %v3041, 4294901760
      %3043 = vmatmul.f32.gmra.mxu0 %v3042
      %v3044 = vpop.f32.mrf.mxu0
      %v3045 = vadd.f32 0.0, %v3044
      %v3046 = vand.u32 %v534, 4294901760
      %v3047 = vsub.f32 %v534, %v3046
      %v3048 = vand.u32 %v3047, 4294901760
      %v3049 = vsub.f32 %v3047, %v3048
      %v3050 = vand.u32 %v3049, 4294901760
      %3051 = vmatmul.f32.gmra.mxu0 %v3050
      %v3052 = vpop.f32.mrf.mxu0
      %v3053 = vadd.f32 0.0, %v3052
      %v3054 = vand.u32 %v537, 4294901760
      %v3055 = vsub.f32 %v537, %v3054
      %v3056 = vand.u32 %v3055, 4294901760
      %v3057 = vsub.f32 %v3055, %v3056
      %v3058 = vand.u32 %v3057, 4294901760
      %3059 = vmatmul.f32.gmra.mxu0 %v3058
      %v3060 = vpop.f32.mrf.mxu0
      %v3061 = vadd.f32 0.0, %v3060
      %v3062 = vand.u32 %v540, 4294901760
      %v3063 = vsub.f32 %v540, %v3062
      %v3064 = vand.u32 %v3063, 4294901760
      %v3065 = vsub.f32 %v3063, %v3064
      %v3066 = vand.u32 %v3065, 4294901760
      %3067 = vmatmul.f32.gmra.mxu0 %v3066
      %v3068 = vpop.f32.mrf.mxu0
      %v3069 = vadd.f32 0.0, %v3068
      %v3070 = vand.u32 %v543, 4294901760
      %v3071 = vsub.f32 %v543, %v3070
      %v3072 = vand.u32 %v3071, 4294901760
      %v3073 = vsub.f32 %v3071, %v3072
      %v3074 = vand.u32 %v3073, 4294901760
      %3075 = vmatmul.f32.gmra.mxu0 %v3074
      %v3076 = vpop.f32.mrf.mxu0
      %v3077 = vadd.f32 0.0, %v3076
      %v3078 = vand.u32 %v546, 4294901760
      %v3079 = vsub.f32 %v546, %v3078
      %v3080 = vand.u32 %v3079, 4294901760
      %v3081 = vsub.f32 %v3079, %v3080
      %v3082 = vand.u32 %v3081, 4294901760
      %3083 = vmatmul.f32.gmra.mxu0 %v3082
      %v3084 = vpop.f32.mrf.mxu0
      %v3085 = vadd.f32 0.0, %v3084
      %v3086 = vand.u32 %v549, 4294901760
      %v3087 = vsub.f32 %v549, %v3086
      %v3088 = vand.u32 %v3087, 4294901760
      %v3089 = vsub.f32 %v3087, %v3088
      %v3090 = vand.u32 %v3089, 4294901760
      %3091 = vmatmul.f32.gmra.mxu0 %v3090
      %v3092 = vpop.f32.mrf.mxu0
      %v3093 = vadd.f32 0.0, %v3092
      %v3094 = vand.u32 %v552, 4294901760
      %v3095 = vsub.f32 %v552, %v3094
      %v3096 = vand.u32 %v3095, 4294901760
      %v3097 = vsub.f32 %v3095, %v3096
      %v3098 = vand.u32 %v3097, 4294901760
      %3099 = vmatmul.f32.gmra.mxu0 %v3098
      %v3100 = vpop.f32.mrf.mxu0
      %v3101 = vadd.f32 0.0, %v3100
      %v3102 = vand.u32 %v555, 4294901760
      %v3103 = vsub.f32 %v555, %v3102
      %v3104 = vand.u32 %v3103, 4294901760
      %v3105 = vsub.f32 %v3103, %v3104
      %v3106 = vand.u32 %v3105, 4294901760
      %3107 = vmatmul.f32.gmra.mxu0 %v3106
      %v3108 = vpop.f32.mrf.mxu0
      %v3109 = vadd.f32 0.0, %v3108
      %v3110 = vand.u32 %v558, 4294901760
      %v3111 = vsub.f32 %v558, %v3110
      %v3112 = vand.u32 %v3111, 4294901760
      %v3113 = vsub.f32 %v3111, %v3112
      %v3114 = vand.u32 %v3113, 4294901760
      %3115 = vmatmul.f32.gmra.mxu0 %v3114
      %v3116 = vpop.f32.mrf.mxu0
      %v3117 = vadd.f32 0.0, %v3116
      %v3118 = vand.u32 %v561, 4294901760
      %v3119 = vsub.f32 %v561, %v3118
      %v3120 = vand.u32 %v3119, 4294901760
      %v3121 = vsub.f32 %v3119, %v3120
      %v3122 = vand.u32 %v3121, 4294901760
      %3123 = vmatmul.f32.gmra.mxu0 %v3122
      %v3124 = vpop.f32.mrf.mxu0
      %v3125 = vadd.f32 0.0, %v3124
      %v3126 = vand.u32 %v564, 4294901760
      %v3127 = vsub.f32 %v564, %v3126
      %v3128 = vand.u32 %v3127, 4294901760
      %v3129 = vsub.f32 %v3127, %v3128
      %v3130 = vand.u32 %v3129, 4294901760
      %3131 = vmatmul.f32.gmra.mxu0 %v3130
      %v3132 = vpop.f32.mrf.mxu0
      %v3133 = vadd.f32 0.0, %v3132
      %v3134 = vand.u32 %v567, 4294901760
      %v3135 = vsub.f32 %v567, %v3134
      %v3136 = vand.u32 %v3135, 4294901760
      %v3137 = vsub.f32 %v3135, %v3136
      %v3138 = vand.u32 %v3137, 4294901760
      %3139 = vmatmul.f32.gmra.mxu0 %v3138
      %v3140 = vpop.f32.mrf.mxu0
      %v3141 = vadd.f32 0.0, %v3140
      %v3142 = vand.u32 %v570, 4294901760
      %v3143 = vsub.f32 %v570, %v3142
      %v3144 = vand.u32 %v3143, 4294901760
      %v3145 = vsub.f32 %v3143, %v3144
      %v3146 = vand.u32 %v3145, 4294901760
      %3147 = vmatmul.f32.gmra.mxu0 %v3146
      %v3148 = vpop.f32.mrf.mxu0
      %v3149 = vadd.f32 0.0, %v3148
      %v3150 = vand.u32 %v573, 4294901760
      %v3151 = vsub.f32 %v573, %v3150
      %v3152 = vand.u32 %v3151, 4294901760
      %v3153 = vsub.f32 %v3151, %v3152
      %v3154 = vand.u32 %v3153, 4294901760
      %3155 = vmatmul.f32.gmra.mxu0 %v3154
      %v3156 = vpop.f32.mrf.mxu0
      %v3157 = vadd.f32 0.0, %v3156
      %v3158 = vand.u32 %v576, 4294901760
      %v3159 = vsub.f32 %v576, %v3158
      %v3160 = vand.u32 %v3159, 4294901760
      %v3161 = vsub.f32 %v3159, %v3160
      %v3162 = vand.u32 %v3161, 4294901760
      %3163 = vmatmul.f32.gmra.mxu0 %v3162
      %v3164 = vpop.f32.mrf.mxu0
      %v3165 = vadd.f32 0.0, %v3164
      %v3166 = vand.u32 %v579, 4294901760
      %v3167 = vsub.f32 %v579, %v3166
      %v3168 = vand.u32 %v3167, 4294901760
      %v3169 = vsub.f32 %v3167, %v3168
      %v3170 = vand.u32 %v3169, 4294901760
      %3171 = vmatmul.f32.gmra.mxu0 %v3170
      %v3172 = vpop.f32.mrf.mxu0
      %v3173 = vadd.f32 0.0, %v3172
      %v3174 = vand.u32 %v582, 4294901760
      %v3175 = vsub.f32 %v582, %v3174
      %v3176 = vand.u32 %v3175, 4294901760
      %v3177 = vsub.f32 %v3175, %v3176
      %v3178 = vand.u32 %v3177, 4294901760
      %3179 = vmatmul.f32.gmra.mxu0 %v3178
      %v3180 = vpop.f32.mrf.mxu0
      %v3181 = vadd.f32 0.0, %v3180
      %v3182 = vand.u32 %v585, 4294901760
      %v3183 = vsub.f32 %v585, %v3182
      %v3184 = vand.u32 %v3183, 4294901760
      %v3185 = vsub.f32 %v3183, %v3184
      %v3186 = vand.u32 %v3185, 4294901760
      %3187 = vmatmul.f32.gmra.mxu0 %v3186
      %v3188 = vpop.f32.mrf.mxu0
      %v3189 = vadd.f32 0.0, %v3188
      %v3190 = vand.u32 %v588, 4294901760
      %v3191 = vsub.f32 %v588, %v3190
      %v3192 = vand.u32 %v3191, 4294901760
      %v3193 = vsub.f32 %v3191, %v3192
      %v3194 = vand.u32 %v3193, 4294901760
      %3195 = vmatmul.f32.gmra.mxu0 %v3194
      %v3196 = vpop.f32.mrf.mxu0
      %v3197 = vadd.f32 0.0, %v3196
      %v3198 = vand.u32 %v591, 4294901760
      %v3199 = vsub.f32 %v591, %v3198
      %v3200 = vand.u32 %v3199, 4294901760
      %v3201 = vsub.f32 %v3199, %v3200
      %v3202 = vand.u32 %v3201, 4294901760
      %3203 = vmatmul.f32.gmra.mxu0 %v3202
      %v3204 = vpop.f32.mrf.mxu0
      %v3205 = vadd.f32 0.0, %v3204
      %v3206 = vand.u32 %v594, 4294901760
      %v3207 = vsub.f32 %v594, %v3206
      %v3208 = vand.u32 %v3207, 4294901760
      %v3209 = vsub.f32 %v3207, %v3208
      %v3210 = vand.u32 %v3209, 4294901760
      %3211 = vmatmul.f32.gmra.mxu0 %v3210
      %v3212 = vpop.f32.mrf.mxu0
      %v3213 = vadd.f32 0.0, %v3212
      %v3214 = vand.u32 %v597, 4294901760
      %v3215 = vsub.f32 %v597, %v3214
      %v3216 = vand.u32 %v3215, 4294901760
      %v3217 = vsub.f32 %v3215, %v3216
      %v3218 = vand.u32 %v3217, 4294901760
      %3219 = vmatmul.f32.gmra.mxu0 %v3218
      %v3220 = vpop.f32.mrf.mxu0
      %v3221 = vadd.f32 0.0, %v3220
      %v3222 = vand.u32 %v600, 4294901760
      %v3223 = vsub.f32 %v600, %v3222
      %v3224 = vand.u32 %v3223, 4294901760
      %v3225 = vsub.f32 %v3223, %v3224
      %v3226 = vand.u32 %v3225, 4294901760
      %3227 = vmatmul.f32.gmra.mxu0 %v3226
      %v3228 = vpop.f32.mrf.mxu0
      %v3229 = vadd.f32 0.0, %v3228
      %3230 = vdwg.mxu0
      %3231 = vmatpush.msra.mxu0 0.0
      %3232 = vmatpush.msra.mxu0 0.0
      %3233 = vmatpush.msra.mxu0 0.0
      %3234 = vmatpush.msra.mxu0 0.0
      %3235 = vmatpush.msra.mxu0 0.0
      %3236 = vmatpush.msra.mxu0 0.0
      %3237 = vmatpush.msra.mxu0 0.0
      %3238 = vmatpush.msra.mxu0 0.0
      %3239 = vmatpush.msra.mxu0 0.0
      %3240 = vmatpush.msra.mxu0 0.0
      %3241 = vmatpush.msra.mxu0 0.0
      %3242 = vmatpush.msra.mxu0 0.0
      %3243 = vmatpush.msra.mxu0 0.0
      %3244 = vmatpush.msra.mxu0 0.0
      %3245 = vmatpush.msra.mxu0 0.0
      %v3246 = vand.u32 %v270, 4294901760
      %v3247 = vsub.f32 %v270, %v3246
      %v3248 = vand.u32 %v3247, 4294901760
      %v3249 = vsub.f32 %v3247, %v3248
      %v3250 = vand.u32 %v3249, 4294901760
      %3251 = vmatpush.msra.mxu0 %v3250
      %v3252 = vand.u32 %v411, 4294901760
      %3253 = vmatmul.f32.gmra.mxu0 %v3252
      %v3254 = vpop.f32.mrf.mxu0
      %v3255 = vadd.f32 %v2725, %v3254
      %v3256 = vand.u32 %v414, 4294901760
      %3257 = vmatmul.f32.gmra.mxu0 %v3256
      %v3258 = vpop.f32.mrf.mxu0
      %v3259 = vadd.f32 %v2733, %v3258
      %v3260 = vand.u32 %v417, 4294901760
      %3261 = vmatmul.f32.gmra.mxu0 %v3260
      %v3262 = vpop.f32.mrf.mxu0
      %v3263 = vadd.f32 %v2741, %v3262
      %v3264 = vand.u32 %v420, 4294901760
      %3265 = vmatmul.f32.gmra.mxu0 %v3264
      %v3266 = vpop.f32.mrf.mxu0
      %v3267 = vadd.f32 %v2749, %v3266
      %v3268 = vand.u32 %v423, 4294901760
      %3269 = vmatmul.f32.gmra.mxu0 %v3268
      %v3270 = vpop.f32.mrf.mxu0
      %v3271 = vadd.f32 %v2757, %v3270
      %v3272 = vand.u32 %v426, 4294901760
      %3273 = vmatmul.f32.gmra.mxu0 %v3272
      %v3274 = vpop.f32.mrf.mxu0
      %v3275 = vadd.f32 %v2765, %v3274
      %v3276 = vand.u32 %v429, 4294901760
      %3277 = vmatmul.f32.gmra.mxu0 %v3276
      %v3278 = vpop.f32.mrf.mxu0
      %v3279 = vadd.f32 %v2773, %v3278
      %v3280 = vand.u32 %v432, 4294901760
      %3281 = vmatmul.f32.gmra.mxu0 %v3280
      %v3282 = vpop.f32.mrf.mxu0
      %v3283 = vadd.f32 %v2781, %v3282
      %v3284 = vand.u32 %v435, 4294901760
      %3285 = vmatmul.f32.gmra.mxu0 %v3284
      %v3286 = vpop.f32.mrf.mxu0
      %v3287 = vadd.f32 %v2789, %v3286
      %v3288 = vand.u32 %v438, 4294901760
      %3289 = vmatmul.f32.gmra.mxu0 %v3288
      %v3290 = vpop.f32.mrf.mxu0
      %v3291 = vadd.f32 %v2797, %v3290
      %v3292 = vand.u32 %v441, 4294901760
      %3293 = vmatmul.f32.gmra.mxu0 %v3292
      %v3294 = vpop.f32.mrf.mxu0
      %v3295 = vadd.f32 %v2805, %v3294
      %v3296 = vand.u32 %v444, 4294901760
      %3297 = vmatmul.f32.gmra.mxu0 %v3296
      %v3298 = vpop.f32.mrf.mxu0
      %v3299 = vadd.f32 %v2813, %v3298
      %v3300 = vand.u32 %v447, 4294901760
      %3301 = vmatmul.f32.gmra.mxu0 %v3300
      %v3302 = vpop.f32.mrf.mxu0
      %v3303 = vadd.f32 %v2821, %v3302
      %v3304 = vand.u32 %v450, 4294901760
      %3305 = vmatmul.f32.gmra.mxu0 %v3304
      %v3306 = vpop.f32.mrf.mxu0
      %v3307 = vadd.f32 %v2829, %v3306
      %v3308 = vand.u32 %v453, 4294901760
      %3309 = vmatmul.f32.gmra.mxu0 %v3308
      %v3310 = vpop.f32.mrf.mxu0
      %v3311 = vadd.f32 %v2837, %v3310
      %v3312 = vand.u32 %v456, 4294901760
      %3313 = vmatmul.f32.gmra.mxu0 %v3312
      %v3314 = vpop.f32.mrf.mxu0
      %v3315 = vadd.f32 %v2845, %v3314
      %v3316 = vand.u32 %v459, 4294901760
      %3317 = vmatmul.f32.gmra.mxu0 %v3316
      %v3318 = vpop.f32.mrf.mxu0
      %v3319 = vadd.f32 %v2853, %v3318
      %v3320 = vand.u32 %v462, 4294901760
      %3321 = vmatmul.f32.gmra.mxu0 %v3320
      %v3322 = vpop.f32.mrf.mxu0
      %v3323 = vadd.f32 %v2861, %v3322
      %v3324 = vand.u32 %v465, 4294901760
      %3325 = vmatmul.f32.gmra.mxu0 %v3324
      %v3326 = vpop.f32.mrf.mxu0
      %v3327 = vadd.f32 %v2869, %v3326
      %v3328 = vand.u32 %v468, 4294901760
      %3329 = vmatmul.f32.gmra.mxu0 %v3328
      %v3330 = vpop.f32.mrf.mxu0
      %v3331 = vadd.f32 %v2877, %v3330
      %v3332 = vand.u32 %v471, 4294901760
      %3333 = vmatmul.f32.gmra.mxu0 %v3332
      %v3334 = vpop.f32.mrf.mxu0
      %v3335 = vadd.f32 %v2885, %v3334
      %v3336 = vand.u32 %v474, 4294901760
      %3337 = vmatmul.f32.gmra.mxu0 %v3336
      %v3338 = vpop.f32.mrf.mxu0
      %v3339 = vadd.f32 %v2893, %v3338
      %v3340 = vand.u32 %v477, 4294901760
      %3341 = vmatmul.f32.gmra.mxu0 %v3340
      %v3342 = vpop.f32.mrf.mxu0
      %v3343 = vadd.f32 %v2901, %v3342
      %v3344 = vand.u32 %v480, 4294901760
      %3345 = vmatmul.f32.gmra.mxu0 %v3344
      %v3346 = vpop.f32.mrf.mxu0
      %v3347 = vadd.f32 %v2909, %v3346
      %v3348 = vand.u32 %v483, 4294901760
      %3349 = vmatmul.f32.gmra.mxu0 %v3348
      %v3350 = vpop.f32.mrf.mxu0
      %v3351 = vadd.f32 %v2917, %v3350
      %v3352 = vand.u32 %v486, 4294901760
      %3353 = vmatmul.f32.gmra.mxu0 %v3352
      %v3354 = vpop.f32.mrf.mxu0
      %v3355 = vadd.f32 %v2925, %v3354
      %v3356 = vand.u32 %v489, 4294901760
      %3357 = vmatmul.f32.gmra.mxu0 %v3356
      %v3358 = vpop.f32.mrf.mxu0
      %v3359 = vadd.f32 %v2933, %v3358
      %v3360 = vand.u32 %v492, 4294901760
      %3361 = vmatmul.f32.gmra.mxu0 %v3360
      %v3362 = vpop.f32.mrf.mxu0
      %v3363 = vadd.f32 %v2941, %v3362
      %v3364 = vand.u32 %v495, 4294901760
      %3365 = vmatmul.f32.gmra.mxu0 %v3364
      %v3366 = vpop.f32.mrf.mxu0
      %v3367 = vadd.f32 %v2949, %v3366
      %v3368 = vand.u32 %v498, 4294901760
      %3369 = vmatmul.f32.gmra.mxu0 %v3368
      %v3370 = vpop.f32.mrf.mxu0
      %v3371 = vadd.f32 %v2957, %v3370
      %v3372 = vand.u32 %v501, 4294901760
      %3373 = vmatmul.f32.gmra.mxu0 %v3372
      %v3374 = vpop.f32.mrf.mxu0
      %v3375 = vadd.f32 %v2965, %v3374
      %v3376 = vand.u32 %v504, 4294901760
      %3377 = vmatmul.f32.gmra.mxu0 %v3376
      %v3378 = vpop.f32.mrf.mxu0
      %v3379 = vadd.f32 %v2973, %v3378
      %v3380 = vand.u32 %v507, 4294901760
      %3381 = vmatmul.f32.gmra.mxu0 %v3380
      %v3382 = vpop.f32.mrf.mxu0
      %v3383 = vadd.f32 %v2981, %v3382
      %v3384 = vand.u32 %v510, 4294901760
      %3385 = vmatmul.f32.gmra.mxu0 %v3384
      %v3386 = vpop.f32.mrf.mxu0
      %v3387 = vadd.f32 %v2989, %v3386
      %v3388 = vand.u32 %v513, 4294901760
      %3389 = vmatmul.f32.gmra.mxu0 %v3388
      %v3390 = vpop.f32.mrf.mxu0
      %v3391 = vadd.f32 %v2997, %v3390
      %v3392 = vand.u32 %v516, 4294901760
      %3393 = vmatmul.f32.gmra.mxu0 %v3392
      %v3394 = vpop.f32.mrf.mxu0
      %v3395 = vadd.f32 %v3005, %v3394
      %v3396 = vand.u32 %v519, 4294901760
      %3397 = vmatmul.f32.gmra.mxu0 %v3396
      %v3398 = vpop.f32.mrf.mxu0
      %v3399 = vadd.f32 %v3013, %v3398
      %v3400 = vand.u32 %v522, 4294901760
      %3401 = vmatmul.f32.gmra.mxu0 %v3400
      %v3402 = vpop.f32.mrf.mxu0
      %v3403 = vadd.f32 %v3021, %v3402
      %v3404 = vand.u32 %v525, 4294901760
      %3405 = vmatmul.f32.gmra.mxu0 %v3404
      %v3406 = vpop.f32.mrf.mxu0
      %v3407 = vadd.f32 %v3029, %v3406
      %v3408 = vand.u32 %v528, 4294901760
      %3409 = vmatmul.f32.gmra.mxu0 %v3408
      %v3410 = vpop.f32.mrf.mxu0
      %v3411 = vadd.f32 %v3037, %v3410
      %v3412 = vand.u32 %v531, 4294901760
      %3413 = vmatmul.f32.gmra.mxu0 %v3412
      %v3414 = vpop.f32.mrf.mxu0
      %v3415 = vadd.f32 %v3045, %v3414
      %v3416 = vand.u32 %v534, 4294901760
      %3417 = vmatmul.f32.gmra.mxu0 %v3416
      %v3418 = vpop.f32.mrf.mxu0
      %v3419 = vadd.f32 %v3053, %v3418
      %v3420 = vand.u32 %v537, 4294901760
      %3421 = vmatmul.f32.gmra.mxu0 %v3420
      %v3422 = vpop.f32.mrf.mxu0
      %v3423 = vadd.f32 %v3061, %v3422
      %v3424 = vand.u32 %v540, 4294901760
      %3425 = vmatmul.f32.gmra.mxu0 %v3424
      %v3426 = vpop.f32.mrf.mxu0
      %v3427 = vadd.f32 %v3069, %v3426
      %v3428 = vand.u32 %v543, 4294901760
      %3429 = vmatmul.f32.gmra.mxu0 %v3428
      %v3430 = vpop.f32.mrf.mxu0
      %v3431 = vadd.f32 %v3077, %v3430
      %v3432 = vand.u32 %v546, 4294901760
      %3433 = vmatmul.f32.gmra.mxu0 %v3432
      %v3434 = vpop.f32.mrf.mxu0
      %v3435 = vadd.f32 %v3085, %v3434
      %v3436 = vand.u32 %v549, 4294901760
      %3437 = vmatmul.f32.gmra.mxu0 %v3436
      %v3438 = vpop.f32.mrf.mxu0
      %v3439 = vadd.f32 %v3093, %v3438
      %v3440 = vand.u32 %v552, 4294901760
      %3441 = vmatmul.f32.gmra.mxu0 %v3440
      %v3442 = vpop.f32.mrf.mxu0
      %v3443 = vadd.f32 %v3101, %v3442
      %v3444 = vand.u32 %v555, 4294901760
      %3445 = vmatmul.f32.gmra.mxu0 %v3444
      %v3446 = vpop.f32.mrf.mxu0
      %v3447 = vadd.f32 %v3109, %v3446
      %v3448 = vand.u32 %v558, 4294901760
      %3449 = vmatmul.f32.gmra.mxu0 %v3448
      %v3450 = vpop.f32.mrf.mxu0
      %v3451 = vadd.f32 %v3117, %v3450
      %v3452 = vand.u32 %v561, 4294901760
      %3453 = vmatmul.f32.gmra.mxu0 %v3452
      %v3454 = vpop.f32.mrf.mxu0
      %v3455 = vadd.f32 %v3125, %v3454
      %v3456 = vand.u32 %v564, 4294901760
      %3457 = vmatmul.f32.gmra.mxu0 %v3456
      %v3458 = vpop.f32.mrf.mxu0
      %v3459 = vadd.f32 %v3133, %v3458
      %v3460 = vand.u32 %v567, 4294901760
      %3461 = vmatmul.f32.gmra.mxu0 %v3460
      %v3462 = vpop.f32.mrf.mxu0
      %v3463 = vadd.f32 %v3141, %v3462
      %v3464 = vand.u32 %v570, 4294901760
      %3465 = vmatmul.f32.gmra.mxu0 %v3464
      %v3466 = vpop.f32.mrf.mxu0
      %v3467 = vadd.f32 %v3149, %v3466
      %v3468 = vand.u32 %v573, 4294901760
      %3469 = vmatmul.f32.gmra.mxu0 %v3468
      %v3470 = vpop.f32.mrf.mxu0
      %v3471 = vadd.f32 %v3157, %v3470
      %v3472 = vand.u32 %v576, 4294901760
      %3473 = vmatmul.f32.gmra.mxu0 %v3472
      %v3474 = vpop.f32.mrf.mxu0
      %v3475 = vadd.f32 %v3165, %v3474
      %v3476 = vand.u32 %v579, 4294901760
      %3477 = vmatmul.f32.gmra.mxu0 %v3476
      %v3478 = vpop.f32.mrf.mxu0
      %v3479 = vadd.f32 %v3173, %v3478
      %v3480 = vand.u32 %v582, 4294901760
      %3481 = vmatmul.f32.gmra.mxu0 %v3480
      %v3482 = vpop.f32.mrf.mxu0
      %v3483 = vadd.f32 %v3181, %v3482
      %v3484 = vand.u32 %v585, 4294901760
      %3485 = vmatmul.f32.gmra.mxu0 %v3484
      %v3486 = vpop.f32.mrf.mxu0
      %v3487 = vadd.f32 %v3189, %v3486
      %v3488 = vand.u32 %v588, 4294901760
      %3489 = vmatmul.f32.gmra.mxu0 %v3488
      %v3490 = vpop.f32.mrf.mxu0
      %v3491 = vadd.f32 %v3197, %v3490
      %v3492 = vand.u32 %v591, 4294901760
      %3493 = vmatmul.f32.gmra.mxu0 %v3492
      %v3494 = vpop.f32.mrf.mxu0
      %v3495 = vadd.f32 %v3205, %v3494
      %v3496 = vand.u32 %v594, 4294901760
      %3497 = vmatmul.f32.gmra.mxu0 %v3496
      %v3498 = vpop.f32.mrf.mxu0
      %v3499 = vadd.f32 %v3213, %v3498
      %v3500 = vand.u32 %v597, 4294901760
      %3501 = vmatmul.f32.gmra.mxu0 %v3500
      %v3502 = vpop.f32.mrf.mxu0
      %v3503 = vadd.f32 %v3221, %v3502
      %v3504 = vand.u32 %v600, 4294901760
      %3505 = vmatmul.f32.gmra.mxu0 %v3504
      %v3506 = vpop.f32.mrf.mxu0
      %v3507 = vadd.f32 %v3229, %v3506
      %3508 = vdwg.mxu0
      %3509 = vmatpush.msra.mxu0 0.0
      %3510 = vmatpush.msra.mxu0 0.0
      %3511 = vmatpush.msra.mxu0 0.0
      %3512 = vmatpush.msra.mxu0 0.0
      %3513 = vmatpush.msra.mxu0 0.0
      %3514 = vmatpush.msra.mxu0 0.0
      %3515 = vmatpush.msra.mxu0 0.0
      %3516 = vmatpush.msra.mxu0 0.0
      %3517 = vmatpush.msra.mxu0 0.0
      %3518 = vmatpush.msra.mxu0 0.0
      %3519 = vmatpush.msra.mxu0 0.0
      %3520 = vmatpush.msra.mxu0 0.0
      %3521 = vmatpush.msra.mxu0 0.0
      %3522 = vmatpush.msra.mxu0 0.0
      %3523 = vmatpush.msra.mxu0 0.0
      %v3524 = vand.u32 %v270, 4294901760
      %v3525 = vsub.f32 %v270, %v3524
      %3526 = vmatpush.msra.mxu0 %v3525
      %v3527 = vand.u32 %v411, 4294901760
      %v3528 = vsub.f32 %v411, %v3527
      %3529 = vmatmul.f32.gmra.mxu0 %v3528
      %v3530 = vpop.f32.mrf.mxu0
      %v3531 = vadd.f32 %v3255, %v3530
      %v3532 = vand.u32 %v414, 4294901760
      %v3533 = vsub.f32 %v414, %v3532
      %3534 = vmatmul.f32.gmra.mxu0 %v3533
      %v3535 = vpop.f32.mrf.mxu0
      %v3536 = vadd.f32 %v3259, %v3535
      %v3537 = vand.u32 %v417, 4294901760
      %v3538 = vsub.f32 %v417, %v3537
      %3539 = vmatmul.f32.gmra.mxu0 %v3538
      %v3540 = vpop.f32.mrf.mxu0
      %v3541 = vadd.f32 %v3263, %v3540
      %v3542 = vand.u32 %v420, 4294901760
      %v3543 = vsub.f32 %v420, %v3542
      %3544 = vmatmul.f32.gmra.mxu0 %v3543
      %v3545 = vpop.f32.mrf.mxu0
      %v3546 = vadd.f32 %v3267, %v3545
      %v3547 = vand.u32 %v423, 4294901760
      %v3548 = vsub.f32 %v423, %v3547
      %3549 = vmatmul.f32.gmra.mxu0 %v3548
      %v3550 = vpop.f32.mrf.mxu0
      %v3551 = vadd.f32 %v3271, %v3550
      %v3552 = vand.u32 %v426, 4294901760
      %v3553 = vsub.f32 %v426, %v3552
      %3554 = vmatmul.f32.gmra.mxu0 %v3553
      %v3555 = vpop.f32.mrf.mxu0
      %v3556 = vadd.f32 %v3275, %v3555
      %v3557 = vand.u32 %v429, 4294901760
      %v3558 = vsub.f32 %v429, %v3557
      %3559 = vmatmul.f32.gmra.mxu0 %v3558
      %v3560 = vpop.f32.mrf.mxu0
      %v3561 = vadd.f32 %v3279, %v3560
      %v3562 = vand.u32 %v432, 4294901760
      %v3563 = vsub.f32 %v432, %v3562
      %3564 = vmatmul.f32.gmra.mxu0 %v3563
      %v3565 = vpop.f32.mrf.mxu0
      %v3566 = vadd.f32 %v3283, %v3565
      %v3567 = vand.u32 %v435, 4294901760
      %v3568 = vsub.f32 %v435, %v3567
      %3569 = vmatmul.f32.gmra.mxu0 %v3568
      %v3570 = vpop.f32.mrf.mxu0
      %v3571 = vadd.f32 %v3287, %v3570
      %v3572 = vand.u32 %v438, 4294901760
      %v3573 = vsub.f32 %v438, %v3572
      %3574 = vmatmul.f32.gmra.mxu0 %v3573
      %v3575 = vpop.f32.mrf.mxu0
      %v3576 = vadd.f32 %v3291, %v3575
      %v3577 = vand.u32 %v441, 4294901760
      %v3578 = vsub.f32 %v441, %v3577
      %3579 = vmatmul.f32.gmra.mxu0 %v3578
      %v3580 = vpop.f32.mrf.mxu0
      %v3581 = vadd.f32 %v3295, %v3580
      %v3582 = vand.u32 %v444, 4294901760
      %v3583 = vsub.f32 %v444, %v3582
      %3584 = vmatmul.f32.gmra.mxu0 %v3583
      %v3585 = vpop.f32.mrf.mxu0
      %v3586 = vadd.f32 %v3299, %v3585
      %v3587 = vand.u32 %v447, 4294901760
      %v3588 = vsub.f32 %v447, %v3587
      %3589 = vmatmul.f32.gmra.mxu0 %v3588
      %v3590 = vpop.f32.mrf.mxu0
      %v3591 = vadd.f32 %v3303, %v3590
      %v3592 = vand.u32 %v450, 4294901760
      %v3593 = vsub.f32 %v450, %v3592
      %3594 = vmatmul.f32.gmra.mxu0 %v3593
      %v3595 = vpop.f32.mrf.mxu0
      %v3596 = vadd.f32 %v3307, %v3595
      %v3597 = vand.u32 %v453, 4294901760
      %v3598 = vsub.f32 %v453, %v3597
      %3599 = vmatmul.f32.gmra.mxu0 %v3598
      %v3600 = vpop.f32.mrf.mxu0
      %v3601 = vadd.f32 %v3311, %v3600
      %v3602 = vand.u32 %v456, 4294901760
      %v3603 = vsub.f32 %v456, %v3602
      %3604 = vmatmul.f32.gmra.mxu0 %v3603
      %v3605 = vpop.f32.mrf.mxu0
      %v3606 = vadd.f32 %v3315, %v3605
      %v3607 = vand.u32 %v459, 4294901760
      %v3608 = vsub.f32 %v459, %v3607
      %3609 = vmatmul.f32.gmra.mxu0 %v3608
      %v3610 = vpop.f32.mrf.mxu0
      %v3611 = vadd.f32 %v3319, %v3610
      %v3612 = vand.u32 %v462, 4294901760
      %v3613 = vsub.f32 %v462, %v3612
      %3614 = vmatmul.f32.gmra.mxu0 %v3613
      %v3615 = vpop.f32.mrf.mxu0
      %v3616 = vadd.f32 %v3323, %v3615
      %v3617 = vand.u32 %v465, 4294901760
      %v3618 = vsub.f32 %v465, %v3617
      %3619 = vmatmul.f32.gmra.mxu0 %v3618
      %v3620 = vpop.f32.mrf.mxu0
      %v3621 = vadd.f32 %v3327, %v3620
      %v3622 = vand.u32 %v468, 4294901760
      %v3623 = vsub.f32 %v468, %v3622
      %3624 = vmatmul.f32.gmra.mxu0 %v3623
      %v3625 = vpop.f32.mrf.mxu0
      %v3626 = vadd.f32 %v3331, %v3625
      %v3627 = vand.u32 %v471, 4294901760
      %v3628 = vsub.f32 %v471, %v3627
      %3629 = vmatmul.f32.gmra.mxu0 %v3628
      %v3630 = vpop.f32.mrf.mxu0
      %v3631 = vadd.f32 %v3335, %v3630
      %v3632 = vand.u32 %v474, 4294901760
      %v3633 = vsub.f32 %v474, %v3632
      %3634 = vmatmul.f32.gmra.mxu0 %v3633
      %v3635 = vpop.f32.mrf.mxu0
      %v3636 = vadd.f32 %v3339, %v3635
      %v3637 = vand.u32 %v477, 4294901760
      %v3638 = vsub.f32 %v477, %v3637
      %3639 = vmatmul.f32.gmra.mxu0 %v3638
      %v3640 = vpop.f32.mrf.mxu0
      %v3641 = vadd.f32 %v3343, %v3640
      %v3642 = vand.u32 %v480, 4294901760
      %v3643 = vsub.f32 %v480, %v3642
      %3644 = vmatmul.f32.gmra.mxu0 %v3643
      %v3645 = vpop.f32.mrf.mxu0
      %v3646 = vadd.f32 %v3347, %v3645
      %v3647 = vand.u32 %v483, 4294901760
      %v3648 = vsub.f32 %v483, %v3647
      %3649 = vmatmul.f32.gmra.mxu0 %v3648
      %v3650 = vpop.f32.mrf.mxu0
      %v3651 = vadd.f32 %v3351, %v3650
      %v3652 = vand.u32 %v486, 4294901760
      %v3653 = vsub.f32 %v486, %v3652
      %3654 = vmatmul.f32.gmra.mxu0 %v3653
      %v3655 = vpop.f32.mrf.mxu0
      %v3656 = vadd.f32 %v3355, %v3655
      %v3657 = vand.u32 %v489, 4294901760
      %v3658 = vsub.f32 %v489, %v3657
      %3659 = vmatmul.f32.gmra.mxu0 %v3658
      %v3660 = vpop.f32.mrf.mxu0
      %v3661 = vadd.f32 %v3359, %v3660
      %v3662 = vand.u32 %v492, 4294901760
      %v3663 = vsub.f32 %v492, %v3662
      %3664 = vmatmul.f32.gmra.mxu0 %v3663
      %v3665 = vpop.f32.mrf.mxu0
      %v3666 = vadd.f32 %v3363, %v3665
      %v3667 = vand.u32 %v495, 4294901760
      %v3668 = vsub.f32 %v495, %v3667
      %3669 = vmatmul.f32.gmra.mxu0 %v3668
      %v3670 = vpop.f32.mrf.mxu0
      %v3671 = vadd.f32 %v3367, %v3670
      %v3672 = vand.u32 %v498, 4294901760
      %v3673 = vsub.f32 %v498, %v3672
      %3674 = vmatmul.f32.gmra.mxu0 %v3673
      %v3675 = vpop.f32.mrf.mxu0
      %v3676 = vadd.f32 %v3371, %v3675
      %v3677 = vand.u32 %v501, 4294901760
      %v3678 = vsub.f32 %v501, %v3677
      %3679 = vmatmul.f32.gmra.mxu0 %v3678
      %v3680 = vpop.f32.mrf.mxu0
      %v3681 = vadd.f32 %v3375, %v3680
      %v3682 = vand.u32 %v504, 4294901760
      %v3683 = vsub.f32 %v504, %v3682
      %3684 = vmatmul.f32.gmra.mxu0 %v3683
      %v3685 = vpop.f32.mrf.mxu0
      %v3686 = vadd.f32 %v3379, %v3685
      %v3687 = vand.u32 %v507, 4294901760
      %v3688 = vsub.f32 %v507, %v3687
      %3689 = vmatmul.f32.gmra.mxu0 %v3688
      %v3690 = vpop.f32.mrf.mxu0
      %v3691 = vadd.f32 %v3383, %v3690
      %v3692 = vand.u32 %v510, 4294901760
      %v3693 = vsub.f32 %v510, %v3692
      %3694 = vmatmul.f32.gmra.mxu0 %v3693
      %v3695 = vpop.f32.mrf.mxu0
      %v3696 = vadd.f32 %v3387, %v3695
      %v3697 = vand.u32 %v513, 4294901760
      %v3698 = vsub.f32 %v513, %v3697
      %3699 = vmatmul.f32.gmra.mxu0 %v3698
      %v3700 = vpop.f32.mrf.mxu0
      %v3701 = vadd.f32 %v3391, %v3700
      %v3702 = vand.u32 %v516, 4294901760
      %v3703 = vsub.f32 %v516, %v3702
      %3704 = vmatmul.f32.gmra.mxu0 %v3703
      %v3705 = vpop.f32.mrf.mxu0
      %v3706 = vadd.f32 %v3395, %v3705
      %v3707 = vand.u32 %v519, 4294901760
      %v3708 = vsub.f32 %v519, %v3707
      %3709 = vmatmul.f32.gmra.mxu0 %v3708
      %v3710 = vpop.f32.mrf.mxu0
      %v3711 = vadd.f32 %v3399, %v3710
      %v3712 = vand.u32 %v522, 4294901760
      %v3713 = vsub.f32 %v522, %v3712
      %3714 = vmatmul.f32.gmra.mxu0 %v3713
      %v3715 = vpop.f32.mrf.mxu0
      %v3716 = vadd.f32 %v3403, %v3715
      %v3717 = vand.u32 %v525, 4294901760
      %v3718 = vsub.f32 %v525, %v3717
      %3719 = vmatmul.f32.gmra.mxu0 %v3718
      %v3720 = vpop.f32.mrf.mxu0
      %v3721 = vadd.f32 %v3407, %v3720
      %v3722 = vand.u32 %v528, 4294901760
      %v3723 = vsub.f32 %v528, %v3722
      %3724 = vmatmul.f32.gmra.mxu0 %v3723
      %v3725 = vpop.f32.mrf.mxu0
      %v3726 = vadd.f32 %v3411, %v3725
      %v3727 = vand.u32 %v531, 4294901760
      %v3728 = vsub.f32 %v531, %v3727
      %3729 = vmatmul.f32.gmra.mxu0 %v3728
      %v3730 = vpop.f32.mrf.mxu0
      %v3731 = vadd.f32 %v3415, %v3730
      %v3732 = vand.u32 %v534, 4294901760
      %v3733 = vsub.f32 %v534, %v3732
      %3734 = vmatmul.f32.gmra.mxu0 %v3733
      %v3735 = vpop.f32.mrf.mxu0
      %v3736 = vadd.f32 %v3419, %v3735
      %v3737 = vand.u32 %v537, 4294901760
      %v3738 = vsub.f32 %v537, %v3737
      %3739 = vmatmul.f32.gmra.mxu0 %v3738
      %v3740 = vpop.f32.mrf.mxu0
      %v3741 = vadd.f32 %v3423, %v3740
      %v3742 = vand.u32 %v540, 4294901760
      %v3743 = vsub.f32 %v540, %v3742
      %3744 = vmatmul.f32.gmra.mxu0 %v3743
      %v3745 = vpop.f32.mrf.mxu0
      %v3746 = vadd.f32 %v3427, %v3745
      %v3747 = vand.u32 %v543, 4294901760
      %v3748 = vsub.f32 %v543, %v3747
      %3749 = vmatmul.f32.gmra.mxu0 %v3748
      %v3750 = vpop.f32.mrf.mxu0
      %v3751 = vadd.f32 %v3431, %v3750
      %v3752 = vand.u32 %v546, 4294901760
      %v3753 = vsub.f32 %v546, %v3752
      %3754 = vmatmul.f32.gmra.mxu0 %v3753
      %v3755 = vpop.f32.mrf.mxu0
      %v3756 = vadd.f32 %v3435, %v3755
      %v3757 = vand.u32 %v549, 4294901760
      %v3758 = vsub.f32 %v549, %v3757
      %3759 = vmatmul.f32.gmra.mxu0 %v3758
      %v3760 = vpop.f32.mrf.mxu0
      %v3761 = vadd.f32 %v3439, %v3760
      %v3762 = vand.u32 %v552, 4294901760
      %v3763 = vsub.f32 %v552, %v3762
      %3764 = vmatmul.f32.gmra.mxu0 %v3763
      %v3765 = vpop.f32.mrf.mxu0
      %v3766 = vadd.f32 %v3443, %v3765
      %v3767 = vand.u32 %v555, 4294901760
      %v3768 = vsub.f32 %v555, %v3767
      %3769 = vmatmul.f32.gmra.mxu0 %v3768
      %v3770 = vpop.f32.mrf.mxu0
      %v3771 = vadd.f32 %v3447, %v3770
      %v3772 = vand.u32 %v558, 4294901760
      %v3773 = vsub.f32 %v558, %v3772
      %3774 = vmatmul.f32.gmra.mxu0 %v3773
      %v3775 = vpop.f32.mrf.mxu0
      %v3776 = vadd.f32 %v3451, %v3775
      %v3777 = vand.u32 %v561, 4294901760
      %v3778 = vsub.f32 %v561, %v3777
      %3779 = vmatmul.f32.gmra.mxu0 %v3778
      %v3780 = vpop.f32.mrf.mxu0
      %v3781 = vadd.f32 %v3455, %v3780
      %v3782 = vand.u32 %v564, 4294901760
      %v3783 = vsub.f32 %v564, %v3782
      %3784 = vmatmul.f32.gmra.mxu0 %v3783
      %v3785 = vpop.f32.mrf.mxu0
      %v3786 = vadd.f32 %v3459, %v3785
      %v3787 = vand.u32 %v567, 4294901760
      %v3788 = vsub.f32 %v567, %v3787
      %3789 = vmatmul.f32.gmra.mxu0 %v3788
      %v3790 = vpop.f32.mrf.mxu0
      %v3791 = vadd.f32 %v3463, %v3790
      %v3792 = vand.u32 %v570, 4294901760
      %v3793 = vsub.f32 %v570, %v3792
      %3794 = vmatmul.f32.gmra.mxu0 %v3793
      %v3795 = vpop.f32.mrf.mxu0
      %v3796 = vadd.f32 %v3467, %v3795
      %v3797 = vand.u32 %v573, 4294901760
      %v3798 = vsub.f32 %v573, %v3797
      %3799 = vmatmul.f32.gmra.mxu0 %v3798
      %v3800 = vpop.f32.mrf.mxu0
      %v3801 = vadd.f32 %v3471, %v3800
      %v3802 = vand.u32 %v576, 4294901760
      %v3803 = vsub.f32 %v576, %v3802
      %3804 = vmatmul.f32.gmra.mxu0 %v3803
      %v3805 = vpop.f32.mrf.mxu0
      %v3806 = vadd.f32 %v3475, %v3805
      %v3807 = vand.u32 %v579, 4294901760
      %v3808 = vsub.f32 %v579, %v3807
      %3809 = vmatmul.f32.gmra.mxu0 %v3808
      %v3810 = vpop.f32.mrf.mxu0
      %v3811 = vadd.f32 %v3479, %v3810
      %v3812 = vand.u32 %v582, 4294901760
      %v3813 = vsub.f32 %v582, %v3812
      %3814 = vmatmul.f32.gmra.mxu0 %v3813
      %v3815 = vpop.f32.mrf.mxu0
      %v3816 = vadd.f32 %v3483, %v3815
      %v3817 = vand.u32 %v585, 4294901760
      %v3818 = vsub.f32 %v585, %v3817
      %3819 = vmatmul.f32.gmra.mxu0 %v3818
      %v3820 = vpop.f32.mrf.mxu0
      %v3821 = vadd.f32 %v3487, %v3820
      %v3822 = vand.u32 %v588, 4294901760
      %v3823 = vsub.f32 %v588, %v3822
      %3824 = vmatmul.f32.gmra.mxu0 %v3823
      %v3825 = vpop.f32.mrf.mxu0
      %v3826 = vadd.f32 %v3491, %v3825
      %v3827 = vand.u32 %v591, 4294901760
      %v3828 = vsub.f32 %v591, %v3827
      %3829 = vmatmul.f32.gmra.mxu0 %v3828
      %v3830 = vpop.f32.mrf.mxu0
      %v3831 = vadd.f32 %v3495, %v3830
      %v3832 = vand.u32 %v594, 4294901760
      %v3833 = vsub.f32 %v594, %v3832
      %3834 = vmatmul.f32.gmra.mxu0 %v3833
      %v3835 = vpop.f32.mrf.mxu0
      %v3836 = vadd.f32 %v3499, %v3835
      %v3837 = vand.u32 %v597, 4294901760
      %v3838 = vsub.f32 %v597, %v3837
      %3839 = vmatmul.f32.gmra.mxu0 %v3838
      %v3840 = vpop.f32.mrf.mxu0
      %v3841 = vadd.f32 %v3503, %v3840
      %v3842 = vand.u32 %v600, 4294901760
      %v3843 = vsub.f32 %v600, %v3842
      %3844 = vmatmul.f32.gmra.mxu0 %v3843
      %v3845 = vpop.f32.mrf.mxu0
      %v3846 = vadd.f32 %v3507, %v3845
      %3847 = vdwg.mxu0
      %3848 = vmatpush.msra.mxu0 0.0
      %3849 = vmatpush.msra.mxu0 0.0
      %3850 = vmatpush.msra.mxu0 0.0
      %3851 = vmatpush.msra.mxu0 0.0
      %3852 = vmatpush.msra.mxu0 0.0
      %3853 = vmatpush.msra.mxu0 0.0
      %3854 = vmatpush.msra.mxu0 0.0
      %3855 = vmatpush.msra.mxu0 0.0
      %3856 = vmatpush.msra.mxu0 0.0
      %3857 = vmatpush.msra.mxu0 0.0
      %3858 = vmatpush.msra.mxu0 0.0
      %3859 = vmatpush.msra.mxu0 0.0
      %3860 = vmatpush.msra.mxu0 0.0
      %3861 = vmatpush.msra.mxu0 0.0
      %3862 = vmatpush.msra.mxu0 0.0
      %v3863 = vand.u32 %v270, 4294901760
      %3864 = vmatpush.msra.mxu0 %v3863
      %v3865 = vand.u32 %v411, 4294901760
      %v3866 = vsub.f32 %v411, %v3865
      %v3867 = vand.u32 %v3866, 4294901760
      %3868 = vmatmul.f32.gmra.mxu0 %v3867
      %v3869 = vpop.f32.mrf.mxu0
      %v3870 = vadd.f32 %v3531, %v3869
      %v3871 = vand.u32 %v414, 4294901760
      %v3872 = vsub.f32 %v414, %v3871
      %v3873 = vand.u32 %v3872, 4294901760
      %3874 = vmatmul.f32.gmra.mxu0 %v3873
      %v3875 = vpop.f32.mrf.mxu0
      %v3876 = vadd.f32 %v3536, %v3875
      %v3877 = vand.u32 %v417, 4294901760
      %v3878 = vsub.f32 %v417, %v3877
      %v3879 = vand.u32 %v3878, 4294901760
      %3880 = vmatmul.f32.gmra.mxu0 %v3879
      %v3881 = vpop.f32.mrf.mxu0
      %v3882 = vadd.f32 %v3541, %v3881
      %v3883 = vand.u32 %v420, 4294901760
      %v3884 = vsub.f32 %v420, %v3883
      %v3885 = vand.u32 %v3884, 4294901760
      %3886 = vmatmul.f32.gmra.mxu0 %v3885
      %v3887 = vpop.f32.mrf.mxu0
      %v3888 = vadd.f32 %v3546, %v3887
      %v3889 = vand.u32 %v423, 4294901760
      %v3890 = vsub.f32 %v423, %v3889
      %v3891 = vand.u32 %v3890, 4294901760
      %3892 = vmatmul.f32.gmra.mxu0 %v3891
      %v3893 = vpop.f32.mrf.mxu0
      %v3894 = vadd.f32 %v3551, %v3893
      %v3895 = vand.u32 %v426, 4294901760
      %v3896 = vsub.f32 %v426, %v3895
      %v3897 = vand.u32 %v3896, 4294901760
      %3898 = vmatmul.f32.gmra.mxu0 %v3897
      %v3899 = vpop.f32.mrf.mxu0
      %v3900 = vadd.f32 %v3556, %v3899
      %v3901 = vand.u32 %v429, 4294901760
      %v3902 = vsub.f32 %v429, %v3901
      %v3903 = vand.u32 %v3902, 4294901760
      %3904 = vmatmul.f32.gmra.mxu0 %v3903
      %v3905 = vpop.f32.mrf.mxu0
      %v3906 = vadd.f32 %v3561, %v3905
      %v3907 = vand.u32 %v432, 4294901760
      %v3908 = vsub.f32 %v432, %v3907
      %v3909 = vand.u32 %v3908, 4294901760
      %3910 = vmatmul.f32.gmra.mxu0 %v3909
      %v3911 = vpop.f32.mrf.mxu0
      %v3912 = vadd.f32 %v3566, %v3911
      %v3913 = vand.u32 %v435, 4294901760
      %v3914 = vsub.f32 %v435, %v3913
      %v3915 = vand.u32 %v3914, 4294901760
      %3916 = vmatmul.f32.gmra.mxu0 %v3915
      %v3917 = vpop.f32.mrf.mxu0
      %v3918 = vadd.f32 %v3571, %v3917
      %v3919 = vand.u32 %v438, 4294901760
      %v3920 = vsub.f32 %v438, %v3919
      %v3921 = vand.u32 %v3920, 4294901760
      %3922 = vmatmul.f32.gmra.mxu0 %v3921
      %v3923 = vpop.f32.mrf.mxu0
      %v3924 = vadd.f32 %v3576, %v3923
      %v3925 = vand.u32 %v441, 4294901760
      %v3926 = vsub.f32 %v441, %v3925
      %v3927 = vand.u32 %v3926, 4294901760
      %3928 = vmatmul.f32.gmra.mxu0 %v3927
      %v3929 = vpop.f32.mrf.mxu0
      %v3930 = vadd.f32 %v3581, %v3929
      %v3931 = vand.u32 %v444, 4294901760
      %v3932 = vsub.f32 %v444, %v3931
      %v3933 = vand.u32 %v3932, 4294901760
      %3934 = vmatmul.f32.gmra.mxu0 %v3933
      %v3935 = vpop.f32.mrf.mxu0
      %v3936 = vadd.f32 %v3586, %v3935
      %v3937 = vand.u32 %v447, 4294901760
      %v3938 = vsub.f32 %v447, %v3937
      %v3939 = vand.u32 %v3938, 4294901760
      %3940 = vmatmul.f32.gmra.mxu0 %v3939
      %v3941 = vpop.f32.mrf.mxu0
      %v3942 = vadd.f32 %v3591, %v3941
      %v3943 = vand.u32 %v450, 4294901760
      %v3944 = vsub.f32 %v450, %v3943
      %v3945 = vand.u32 %v3944, 4294901760
      %3946 = vmatmul.f32.gmra.mxu0 %v3945
      %v3947 = vpop.f32.mrf.mxu0
      %v3948 = vadd.f32 %v3596, %v3947
      %v3949 = vand.u32 %v453, 4294901760
      %v3950 = vsub.f32 %v453, %v3949
      %v3951 = vand.u32 %v3950, 4294901760
      %3952 = vmatmul.f32.gmra.mxu0 %v3951
      %v3953 = vpop.f32.mrf.mxu0
      %v3954 = vadd.f32 %v3601, %v3953
      %v3955 = vand.u32 %v456, 4294901760
      %v3956 = vsub.f32 %v456, %v3955
      %v3957 = vand.u32 %v3956, 4294901760
      %3958 = vmatmul.f32.gmra.mxu0 %v3957
      %v3959 = vpop.f32.mrf.mxu0
      %v3960 = vadd.f32 %v3606, %v3959
      %v3961 = vand.u32 %v459, 4294901760
      %v3962 = vsub.f32 %v459, %v3961
      %v3963 = vand.u32 %v3962, 4294901760
      %3964 = vmatmul.f32.gmra.mxu0 %v3963
      %v3965 = vpop.f32.mrf.mxu0
      %v3966 = vadd.f32 %v3611, %v3965
      %v3967 = vand.u32 %v462, 4294901760
      %v3968 = vsub.f32 %v462, %v3967
      %v3969 = vand.u32 %v3968, 4294901760
      %3970 = vmatmul.f32.gmra.mxu0 %v3969
      %v3971 = vpop.f32.mrf.mxu0
      %v3972 = vadd.f32 %v3616, %v3971
      %v3973 = vand.u32 %v465, 4294901760
      %v3974 = vsub.f32 %v465, %v3973
      %v3975 = vand.u32 %v3974, 4294901760
      %3976 = vmatmul.f32.gmra.mxu0 %v3975
      %v3977 = vpop.f32.mrf.mxu0
      %v3978 = vadd.f32 %v3621, %v3977
      %v3979 = vand.u32 %v468, 4294901760
      %v3980 = vsub.f32 %v468, %v3979
      %v3981 = vand.u32 %v3980, 4294901760
      %3982 = vmatmul.f32.gmra.mxu0 %v3981
      %v3983 = vpop.f32.mrf.mxu0
      %v3984 = vadd.f32 %v3626, %v3983
      %v3985 = vand.u32 %v471, 4294901760
      %v3986 = vsub.f32 %v471, %v3985
      %v3987 = vand.u32 %v3986, 4294901760
      %3988 = vmatmul.f32.gmra.mxu0 %v3987
      %v3989 = vpop.f32.mrf.mxu0
      %v3990 = vadd.f32 %v3631, %v3989
      %v3991 = vand.u32 %v474, 4294901760
      %v3992 = vsub.f32 %v474, %v3991
      %v3993 = vand.u32 %v3992, 4294901760
      %3994 = vmatmul.f32.gmra.mxu0 %v3993
      %v3995 = vpop.f32.mrf.mxu0
      %v3996 = vadd.f32 %v3636, %v3995
      %v3997 = vand.u32 %v477, 4294901760
      %v3998 = vsub.f32 %v477, %v3997
      %v3999 = vand.u32 %v3998, 4294901760
      %4000 = vmatmul.f32.gmra.mxu0 %v3999
      %v4001 = vpop.f32.mrf.mxu0
      %v4002 = vadd.f32 %v3641, %v4001
      %v4003 = vand.u32 %v480, 4294901760
      %v4004 = vsub.f32 %v480, %v4003
      %v4005 = vand.u32 %v4004, 4294901760
      %4006 = vmatmul.f32.gmra.mxu0 %v4005
      %v4007 = vpop.f32.mrf.mxu0
      %v4008 = vadd.f32 %v3646, %v4007
      %v4009 = vand.u32 %v483, 4294901760
      %v4010 = vsub.f32 %v483, %v4009
      %v4011 = vand.u32 %v4010, 4294901760
      %4012 = vmatmul.f32.gmra.mxu0 %v4011
      %v4013 = vpop.f32.mrf.mxu0
      %v4014 = vadd.f32 %v3651, %v4013
      %v4015 = vand.u32 %v486, 4294901760
      %v4016 = vsub.f32 %v486, %v4015
      %v4017 = vand.u32 %v4016, 4294901760
      %4018 = vmatmul.f32.gmra.mxu0 %v4017
      %v4019 = vpop.f32.mrf.mxu0
      %v4020 = vadd.f32 %v3656, %v4019
      %v4021 = vand.u32 %v489, 4294901760
      %v4022 = vsub.f32 %v489, %v4021
      %v4023 = vand.u32 %v4022, 4294901760
      %4024 = vmatmul.f32.gmra.mxu0 %v4023
      %v4025 = vpop.f32.mrf.mxu0
      %v4026 = vadd.f32 %v3661, %v4025
      %v4027 = vand.u32 %v492, 4294901760
      %v4028 = vsub.f32 %v492, %v4027
      %v4029 = vand.u32 %v4028, 4294901760
      %4030 = vmatmul.f32.gmra.mxu0 %v4029
      %v4031 = vpop.f32.mrf.mxu0
      %v4032 = vadd.f32 %v3666, %v4031
      %v4033 = vand.u32 %v495, 4294901760
      %v4034 = vsub.f32 %v495, %v4033
      %v4035 = vand.u32 %v4034, 4294901760
      %4036 = vmatmul.f32.gmra.mxu0 %v4035
      %v4037 = vpop.f32.mrf.mxu0
      %v4038 = vadd.f32 %v3671, %v4037
      %v4039 = vand.u32 %v498, 4294901760
      %v4040 = vsub.f32 %v498, %v4039
      %v4041 = vand.u32 %v4040, 4294901760
      %4042 = vmatmul.f32.gmra.mxu0 %v4041
      %v4043 = vpop.f32.mrf.mxu0
      %v4044 = vadd.f32 %v3676, %v4043
      %v4045 = vand.u32 %v501, 4294901760
      %v4046 = vsub.f32 %v501, %v4045
      %v4047 = vand.u32 %v4046, 4294901760
      %4048 = vmatmul.f32.gmra.mxu0 %v4047
      %v4049 = vpop.f32.mrf.mxu0
      %v4050 = vadd.f32 %v3681, %v4049
      %v4051 = vand.u32 %v504, 4294901760
      %v4052 = vsub.f32 %v504, %v4051
      %v4053 = vand.u32 %v4052, 4294901760
      %4054 = vmatmul.f32.gmra.mxu0 %v4053
      %v4055 = vpop.f32.mrf.mxu0
      %v4056 = vadd.f32 %v3686, %v4055
      %v4057 = vand.u32 %v507, 4294901760
      %v4058 = vsub.f32 %v507, %v4057
      %v4059 = vand.u32 %v4058, 4294901760
      %4060 = vmatmul.f32.gmra.mxu0 %v4059
      %v4061 = vpop.f32.mrf.mxu0
      %v4062 = vadd.f32 %v3691, %v4061
      %v4063 = vand.u32 %v510, 4294901760
      %v4064 = vsub.f32 %v510, %v4063
      %v4065 = vand.u32 %v4064, 4294901760
      %4066 = vmatmul.f32.gmra.mxu0 %v4065
      %v4067 = vpop.f32.mrf.mxu0
      %v4068 = vadd.f32 %v3696, %v4067
      %v4069 = vand.u32 %v513, 4294901760
      %v4070 = vsub.f32 %v513, %v4069
      %v4071 = vand.u32 %v4070, 4294901760
      %4072 = vmatmul.f32.gmra.mxu0 %v4071
      %v4073 = vpop.f32.mrf.mxu0
      %v4074 = vadd.f32 %v3701, %v4073
      %v4075 = vand.u32 %v516, 4294901760
      %v4076 = vsub.f32 %v516, %v4075
      %v4077 = vand.u32 %v4076, 4294901760
      %4078 = vmatmul.f32.gmra.mxu0 %v4077
      %v4079 = vpop.f32.mrf.mxu0
      %v4080 = vadd.f32 %v3706, %v4079
      %v4081 = vand.u32 %v519, 4294901760
      %v4082 = vsub.f32 %v519, %v4081
      %v4083 = vand.u32 %v4082, 4294901760
      %4084 = vmatmul.f32.gmra.mxu0 %v4083
      %v4085 = vpop.f32.mrf.mxu0
      %v4086 = vadd.f32 %v3711, %v4085
      %v4087 = vand.u32 %v522, 4294901760
      %v4088 = vsub.f32 %v522, %v4087
      %v4089 = vand.u32 %v4088, 4294901760
      %4090 = vmatmul.f32.gmra.mxu0 %v4089
      %v4091 = vpop.f32.mrf.mxu0
      %v4092 = vadd.f32 %v3716, %v4091
      %v4093 = vand.u32 %v525, 4294901760
      %v4094 = vsub.f32 %v525, %v4093
      %v4095 = vand.u32 %v4094, 4294901760
      %4096 = vmatmul.f32.gmra.mxu0 %v4095
      %v4097 = vpop.f32.mrf.mxu0
      %v4098 = vadd.f32 %v3721, %v4097
      %v4099 = vand.u32 %v528, 4294901760
      %v4100 = vsub.f32 %v528, %v4099
      %v4101 = vand.u32 %v4100, 4294901760
      %4102 = vmatmul.f32.gmra.mxu0 %v4101
      %v4103 = vpop.f32.mrf.mxu0
      %v4104 = vadd.f32 %v3726, %v4103
      %v4105 = vand.u32 %v531, 4294901760
      %v4106 = vsub.f32 %v531, %v4105
      %v4107 = vand.u32 %v4106, 4294901760
      %4108 = vmatmul.f32.gmra.mxu0 %v4107
      %v4109 = vpop.f32.mrf.mxu0
      %v4110 = vadd.f32 %v3731, %v4109
      %v4111 = vand.u32 %v534, 4294901760
      %v4112 = vsub.f32 %v534, %v4111
      %v4113 = vand.u32 %v4112, 4294901760
      %4114 = vmatmul.f32.gmra.mxu0 %v4113
      %v4115 = vpop.f32.mrf.mxu0
      %v4116 = vadd.f32 %v3736, %v4115
      %v4117 = vand.u32 %v537, 4294901760
      %v4118 = vsub.f32 %v537, %v4117
      %v4119 = vand.u32 %v4118, 4294901760
      %4120 = vmatmul.f32.gmra.mxu0 %v4119
      %v4121 = vpop.f32.mrf.mxu0
      %v4122 = vadd.f32 %v3741, %v4121
      %v4123 = vand.u32 %v540, 4294901760
      %v4124 = vsub.f32 %v540, %v4123
      %v4125 = vand.u32 %v4124, 4294901760
      %4126 = vmatmul.f32.gmra.mxu0 %v4125
      %v4127 = vpop.f32.mrf.mxu0
      %v4128 = vadd.f32 %v3746, %v4127
      %v4129 = vand.u32 %v543, 4294901760
      %v4130 = vsub.f32 %v543, %v4129
      %v4131 = vand.u32 %v4130, 4294901760
      %4132 = vmatmul.f32.gmra.mxu0 %v4131
      %v4133 = vpop.f32.mrf.mxu0
      %v4134 = vadd.f32 %v3751, %v4133
      %v4135 = vand.u32 %v546, 4294901760
      %v4136 = vsub.f32 %v546, %v4135
      %v4137 = vand.u32 %v4136, 4294901760
      %4138 = vmatmul.f32.gmra.mxu0 %v4137
      %v4139 = vpop.f32.mrf.mxu0
      %v4140 = vadd.f32 %v3756, %v4139
      %v4141 = vand.u32 %v549, 4294901760
      %v4142 = vsub.f32 %v549, %v4141
      %v4143 = vand.u32 %v4142, 4294901760
      %4144 = vmatmul.f32.gmra.mxu0 %v4143
      %v4145 = vpop.f32.mrf.mxu0
      %v4146 = vadd.f32 %v3761, %v4145
      %v4147 = vand.u32 %v552, 4294901760
      %v4148 = vsub.f32 %v552, %v4147
      %v4149 = vand.u32 %v4148, 4294901760
      %4150 = vmatmul.f32.gmra.mxu0 %v4149
      %v4151 = vpop.f32.mrf.mxu0
      %v4152 = vadd.f32 %v3766, %v4151
      %v4153 = vand.u32 %v555, 4294901760
      %v4154 = vsub.f32 %v555, %v4153
      %v4155 = vand.u32 %v4154, 4294901760
      %4156 = vmatmul.f32.gmra.mxu0 %v4155
      %v4157 = vpop.f32.mrf.mxu0
      %v4158 = vadd.f32 %v3771, %v4157
      %v4159 = vand.u32 %v558, 4294901760
      %v4160 = vsub.f32 %v558, %v4159
      %v4161 = vand.u32 %v4160, 4294901760
      %4162 = vmatmul.f32.gmra.mxu0 %v4161
      %v4163 = vpop.f32.mrf.mxu0
      %v4164 = vadd.f32 %v3776, %v4163
      %v4165 = vand.u32 %v561, 4294901760
      %v4166 = vsub.f32 %v561, %v4165
      %v4167 = vand.u32 %v4166, 4294901760
      %4168 = vmatmul.f32.gmra.mxu0 %v4167
      %v4169 = vpop.f32.mrf.mxu0
      %v4170 = vadd.f32 %v3781, %v4169
      %v4171 = vand.u32 %v564, 4294901760
      %v4172 = vsub.f32 %v564, %v4171
      %v4173 = vand.u32 %v4172, 4294901760
      %4174 = vmatmul.f32.gmra.mxu0 %v4173
      %v4175 = vpop.f32.mrf.mxu0
      %v4176 = vadd.f32 %v3786, %v4175
      %v4177 = vand.u32 %v567, 4294901760
      %v4178 = vsub.f32 %v567, %v4177
      %v4179 = vand.u32 %v4178, 4294901760
      %4180 = vmatmul.f32.gmra.mxu0 %v4179
      %v4181 = vpop.f32.mrf.mxu0
      %v4182 = vadd.f32 %v3791, %v4181
      %v4183 = vand.u32 %v570, 4294901760
      %v4184 = vsub.f32 %v570, %v4183
      %v4185 = vand.u32 %v4184, 4294901760
      %4186 = vmatmul.f32.gmra.mxu0 %v4185
      %v4187 = vpop.f32.mrf.mxu0
      %v4188 = vadd.f32 %v3796, %v4187
      %v4189 = vand.u32 %v573, 4294901760
      %v4190 = vsub.f32 %v573, %v4189
      %v4191 = vand.u32 %v4190, 4294901760
      %4192 = vmatmul.f32.gmra.mxu0 %v4191
      %v4193 = vpop.f32.mrf.mxu0
      %v4194 = vadd.f32 %v3801, %v4193
      %v4195 = vand.u32 %v576, 4294901760
      %v4196 = vsub.f32 %v576, %v4195
      %v4197 = vand.u32 %v4196, 4294901760
      %4198 = vmatmul.f32.gmra.mxu0 %v4197
      %v4199 = vpop.f32.mrf.mxu0
      %v4200 = vadd.f32 %v3806, %v4199
      %v4201 = vand.u32 %v579, 4294901760
      %v4202 = vsub.f32 %v579, %v4201
      %v4203 = vand.u32 %v4202, 4294901760
      %4204 = vmatmul.f32.gmra.mxu0 %v4203
      %v4205 = vpop.f32.mrf.mxu0
      %v4206 = vadd.f32 %v3811, %v4205
      %v4207 = vand.u32 %v582, 4294901760
      %v4208 = vsub.f32 %v582, %v4207
      %v4209 = vand.u32 %v4208, 4294901760
      %4210 = vmatmul.f32.gmra.mxu0 %v4209
      %v4211 = vpop.f32.mrf.mxu0
      %v4212 = vadd.f32 %v3816, %v4211
      %v4213 = vand.u32 %v585, 4294901760
      %v4214 = vsub.f32 %v585, %v4213
      %v4215 = vand.u32 %v4214, 4294901760
      %4216 = vmatmul.f32.gmra.mxu0 %v4215
      %v4217 = vpop.f32.mrf.mxu0
      %v4218 = vadd.f32 %v3821, %v4217
      %v4219 = vand.u32 %v588, 4294901760
      %v4220 = vsub.f32 %v588, %v4219
      %v4221 = vand.u32 %v4220, 4294901760
      %4222 = vmatmul.f32.gmra.mxu0 %v4221
      %v4223 = vpop.f32.mrf.mxu0
      %v4224 = vadd.f32 %v3826, %v4223
      %v4225 = vand.u32 %v591, 4294901760
      %v4226 = vsub.f32 %v591, %v4225
      %v4227 = vand.u32 %v4226, 4294901760
      %4228 = vmatmul.f32.gmra.mxu0 %v4227
      %v4229 = vpop.f32.mrf.mxu0
      %v4230 = vadd.f32 %v3831, %v4229
      %v4231 = vand.u32 %v594, 4294901760
      %v4232 = vsub.f32 %v594, %v4231
      %v4233 = vand.u32 %v4232, 4294901760
      %4234 = vmatmul.f32.gmra.mxu0 %v4233
      %v4235 = vpop.f32.mrf.mxu0
      %v4236 = vadd.f32 %v3836, %v4235
      %v4237 = vand.u32 %v597, 4294901760
      %v4238 = vsub.f32 %v597, %v4237
      %v4239 = vand.u32 %v4238, 4294901760
      %4240 = vmatmul.f32.gmra.mxu0 %v4239
      %v4241 = vpop.f32.mrf.mxu0
      %v4242 = vadd.f32 %v3841, %v4241
      %v4243 = vand.u32 %v600, 4294901760
      %v4244 = vsub.f32 %v600, %v4243
      %v4245 = vand.u32 %v4244, 4294901760
      %4246 = vmatmul.f32.gmra.mxu0 %v4245
      %v4247 = vpop.f32.mrf.mxu0
      %v4248 = vadd.f32 %v3846, %v4247
      %4249 = vdwg.mxu0
      %4250 = vmatpush.msra.mxu0 0.0
      %4251 = vmatpush.msra.mxu0 0.0
      %4252 = vmatpush.msra.mxu0 0.0
      %4253 = vmatpush.msra.mxu0 0.0
      %4254 = vmatpush.msra.mxu0 0.0
      %4255 = vmatpush.msra.mxu0 0.0
      %4256 = vmatpush.msra.mxu0 0.0
      %4257 = vmatpush.msra.mxu0 0.0
      %4258 = vmatpush.msra.mxu0 0.0
      %4259 = vmatpush.msra.mxu0 0.0
      %4260 = vmatpush.msra.mxu0 0.0
      %4261 = vmatpush.msra.mxu0 0.0
      %4262 = vmatpush.msra.mxu0 0.0
      %4263 = vmatpush.msra.mxu0 0.0
      %4264 = vmatpush.msra.mxu0 0.0
      %v4265 = vand.u32 %v270, 4294901760
      %v4266 = vsub.f32 %v270, %v4265
      %v4267 = vand.u32 %v4266, 4294901760
      %4268 = vmatpush.msra.mxu0 %v4267
      %v4269 = vand.u32 %v411, 4294901760
      %4270 = vmatmul.f32.gmra.mxu0 %v4269
      %v4271 = vpop.f32.mrf.mxu0
      %v4272 = vadd.f32 %v3870, %v4271
      %v4273 = vand.u32 %v414, 4294901760
      %4274 = vmatmul.f32.gmra.mxu0 %v4273
      %v4275 = vpop.f32.mrf.mxu0
      %v4276 = vadd.f32 %v3876, %v4275
      %v4277 = vand.u32 %v417, 4294901760
      %4278 = vmatmul.f32.gmra.mxu0 %v4277
      %v4279 = vpop.f32.mrf.mxu0
      %v4280 = vadd.f32 %v3882, %v4279
      %v4281 = vand.u32 %v420, 4294901760
      %4282 = vmatmul.f32.gmra.mxu0 %v4281
      %v4283 = vpop.f32.mrf.mxu0
      %v4284 = vadd.f32 %v3888, %v4283
      %v4285 = vand.u32 %v423, 4294901760
      %4286 = vmatmul.f32.gmra.mxu0 %v4285
      %v4287 = vpop.f32.mrf.mxu0
      %v4288 = vadd.f32 %v3894, %v4287
      %v4289 = vand.u32 %v426, 4294901760
      %4290 = vmatmul.f32.gmra.mxu0 %v4289
      %v4291 = vpop.f32.mrf.mxu0
      %v4292 = vadd.f32 %v3900, %v4291
      %v4293 = vand.u32 %v429, 4294901760
      %4294 = vmatmul.f32.gmra.mxu0 %v4293
      %v4295 = vpop.f32.mrf.mxu0
      %v4296 = vadd.f32 %v3906, %v4295
      %v4297 = vand.u32 %v432, 4294901760
      %4298 = vmatmul.f32.gmra.mxu0 %v4297
      %v4299 = vpop.f32.mrf.mxu0
      %v4300 = vadd.f32 %v3912, %v4299
      %v4301 = vand.u32 %v435, 4294901760
      %4302 = vmatmul.f32.gmra.mxu0 %v4301
      %v4303 = vpop.f32.mrf.mxu0
      %v4304 = vadd.f32 %v3918, %v4303
      %v4305 = vand.u32 %v438, 4294901760
      %4306 = vmatmul.f32.gmra.mxu0 %v4305
      %v4307 = vpop.f32.mrf.mxu0
      %v4308 = vadd.f32 %v3924, %v4307
      %v4309 = vand.u32 %v441, 4294901760
      %4310 = vmatmul.f32.gmra.mxu0 %v4309
      %v4311 = vpop.f32.mrf.mxu0
      %v4312 = vadd.f32 %v3930, %v4311
      %v4313 = vand.u32 %v444, 4294901760
      %4314 = vmatmul.f32.gmra.mxu0 %v4313
      %v4315 = vpop.f32.mrf.mxu0
      %v4316 = vadd.f32 %v3936, %v4315
      %v4317 = vand.u32 %v447, 4294901760
      %4318 = vmatmul.f32.gmra.mxu0 %v4317
      %v4319 = vpop.f32.mrf.mxu0
      %v4320 = vadd.f32 %v3942, %v4319
      %v4321 = vand.u32 %v450, 4294901760
      %4322 = vmatmul.f32.gmra.mxu0 %v4321
      %v4323 = vpop.f32.mrf.mxu0
      %v4324 = vadd.f32 %v3948, %v4323
      %v4325 = vand.u32 %v453, 4294901760
      %4326 = vmatmul.f32.gmra.mxu0 %v4325
      %v4327 = vpop.f32.mrf.mxu0
      %v4328 = vadd.f32 %v3954, %v4327
      %v4329 = vand.u32 %v456, 4294901760
      %4330 = vmatmul.f32.gmra.mxu0 %v4329
      %v4331 = vpop.f32.mrf.mxu0
      %v4332 = vadd.f32 %v3960, %v4331
      %v4333 = vand.u32 %v459, 4294901760
      %4334 = vmatmul.f32.gmra.mxu0 %v4333
      %v4335 = vpop.f32.mrf.mxu0
      %v4336 = vadd.f32 %v3966, %v4335
      %v4337 = vand.u32 %v462, 4294901760
      %4338 = vmatmul.f32.gmra.mxu0 %v4337
      %v4339 = vpop.f32.mrf.mxu0
      %v4340 = vadd.f32 %v3972, %v4339
      %v4341 = vand.u32 %v465, 4294901760
      %4342 = vmatmul.f32.gmra.mxu0 %v4341
      %v4343 = vpop.f32.mrf.mxu0
      %v4344 = vadd.f32 %v3978, %v4343
      %v4345 = vand.u32 %v468, 4294901760
      %4346 = vmatmul.f32.gmra.mxu0 %v4345
      %v4347 = vpop.f32.mrf.mxu0
      %v4348 = vadd.f32 %v3984, %v4347
      %v4349 = vand.u32 %v471, 4294901760
      %4350 = vmatmul.f32.gmra.mxu0 %v4349
      %v4351 = vpop.f32.mrf.mxu0
      %v4352 = vadd.f32 %v3990, %v4351
      %v4353 = vand.u32 %v474, 4294901760
      %4354 = vmatmul.f32.gmra.mxu0 %v4353
      %v4355 = vpop.f32.mrf.mxu0
      %v4356 = vadd.f32 %v3996, %v4355
      %v4357 = vand.u32 %v477, 4294901760
      %4358 = vmatmul.f32.gmra.mxu0 %v4357
      %v4359 = vpop.f32.mrf.mxu0
      %v4360 = vadd.f32 %v4002, %v4359
      %v4361 = vand.u32 %v480, 4294901760
      %4362 = vmatmul.f32.gmra.mxu0 %v4361
      %v4363 = vpop.f32.mrf.mxu0
      %v4364 = vadd.f32 %v4008, %v4363
      %v4365 = vand.u32 %v483, 4294901760
      %4366 = vmatmul.f32.gmra.mxu0 %v4365
      %v4367 = vpop.f32.mrf.mxu0
      %v4368 = vadd.f32 %v4014, %v4367
      %v4369 = vand.u32 %v486, 4294901760
      %4370 = vmatmul.f32.gmra.mxu0 %v4369
      %v4371 = vpop.f32.mrf.mxu0
      %v4372 = vadd.f32 %v4020, %v4371
      %v4373 = vand.u32 %v489, 4294901760
      %4374 = vmatmul.f32.gmra.mxu0 %v4373
      %v4375 = vpop.f32.mrf.mxu0
      %v4376 = vadd.f32 %v4026, %v4375
      %v4377 = vand.u32 %v492, 4294901760
      %4378 = vmatmul.f32.gmra.mxu0 %v4377
      %v4379 = vpop.f32.mrf.mxu0
      %v4380 = vadd.f32 %v4032, %v4379
      %v4381 = vand.u32 %v495, 4294901760
      %4382 = vmatmul.f32.gmra.mxu0 %v4381
      %v4383 = vpop.f32.mrf.mxu0
      %v4384 = vadd.f32 %v4038, %v4383
      %v4385 = vand.u32 %v498, 4294901760
      %4386 = vmatmul.f32.gmra.mxu0 %v4385
      %v4387 = vpop.f32.mrf.mxu0
      %v4388 = vadd.f32 %v4044, %v4387
      %v4389 = vand.u32 %v501, 4294901760
      %4390 = vmatmul.f32.gmra.mxu0 %v4389
      %v4391 = vpop.f32.mrf.mxu0
      %v4392 = vadd.f32 %v4050, %v4391
      %v4393 = vand.u32 %v504, 4294901760
      %4394 = vmatmul.f32.gmra.mxu0 %v4393
      %v4395 = vpop.f32.mrf.mxu0
      %v4396 = vadd.f32 %v4056, %v4395
      %v4397 = vand.u32 %v507, 4294901760
      %4398 = vmatmul.f32.gmra.mxu0 %v4397
      %v4399 = vpop.f32.mrf.mxu0
      %v4400 = vadd.f32 %v4062, %v4399
      %v4401 = vand.u32 %v510, 4294901760
      %4402 = vmatmul.f32.gmra.mxu0 %v4401
      %v4403 = vpop.f32.mrf.mxu0
      %v4404 = vadd.f32 %v4068, %v4403
      %v4405 = vand.u32 %v513, 4294901760
      %4406 = vmatmul.f32.gmra.mxu0 %v4405
      %v4407 = vpop.f32.mrf.mxu0
      %v4408 = vadd.f32 %v4074, %v4407
      %v4409 = vand.u32 %v516, 4294901760
      %4410 = vmatmul.f32.gmra.mxu0 %v4409
      %v4411 = vpop.f32.mrf.mxu0
      %v4412 = vadd.f32 %v4080, %v4411
      %v4413 = vand.u32 %v519, 4294901760
      %4414 = vmatmul.f32.gmra.mxu0 %v4413
      %v4415 = vpop.f32.mrf.mxu0
      %v4416 = vadd.f32 %v4086, %v4415
      %v4417 = vand.u32 %v522, 4294901760
      %4418 = vmatmul.f32.gmra.mxu0 %v4417
      %v4419 = vpop.f32.mrf.mxu0
      %v4420 = vadd.f32 %v4092, %v4419
      %v4421 = vand.u32 %v525, 4294901760
      %4422 = vmatmul.f32.gmra.mxu0 %v4421
      %v4423 = vpop.f32.mrf.mxu0
      %v4424 = vadd.f32 %v4098, %v4423
      %v4425 = vand.u32 %v528, 4294901760
      %4426 = vmatmul.f32.gmra.mxu0 %v4425
      %v4427 = vpop.f32.mrf.mxu0
      %v4428 = vadd.f32 %v4104, %v4427
      %v4429 = vand.u32 %v531, 4294901760
      %4430 = vmatmul.f32.gmra.mxu0 %v4429
      %v4431 = vpop.f32.mrf.mxu0
      %v4432 = vadd.f32 %v4110, %v4431
      %v4433 = vand.u32 %v534, 4294901760
      %4434 = vmatmul.f32.gmra.mxu0 %v4433
      %v4435 = vpop.f32.mrf.mxu0
      %v4436 = vadd.f32 %v4116, %v4435
      %v4437 = vand.u32 %v537, 4294901760
      %4438 = vmatmul.f32.gmra.mxu0 %v4437
      %v4439 = vpop.f32.mrf.mxu0
      %v4440 = vadd.f32 %v4122, %v4439
      %v4441 = vand.u32 %v540, 4294901760
      %4442 = vmatmul.f32.gmra.mxu0 %v4441
      %v4443 = vpop.f32.mrf.mxu0
      %v4444 = vadd.f32 %v4128, %v4443
      %v4445 = vand.u32 %v543, 4294901760
      %4446 = vmatmul.f32.gmra.mxu0 %v4445
      %v4447 = vpop.f32.mrf.mxu0
      %v4448 = vadd.f32 %v4134, %v4447
      %v4449 = vand.u32 %v546, 4294901760
      %4450 = vmatmul.f32.gmra.mxu0 %v4449
      %v4451 = vpop.f32.mrf.mxu0
      %v4452 = vadd.f32 %v4140, %v4451
      %v4453 = vand.u32 %v549, 4294901760
      %4454 = vmatmul.f32.gmra.mxu0 %v4453
      %v4455 = vpop.f32.mrf.mxu0
      %v4456 = vadd.f32 %v4146, %v4455
      %v4457 = vand.u32 %v552, 4294901760
      %4458 = vmatmul.f32.gmra.mxu0 %v4457
      %v4459 = vpop.f32.mrf.mxu0
      %v4460 = vadd.f32 %v4152, %v4459
      %v4461 = vand.u32 %v555, 4294901760
      %4462 = vmatmul.f32.gmra.mxu0 %v4461
      %v4463 = vpop.f32.mrf.mxu0
      %v4464 = vadd.f32 %v4158, %v4463
      %v4465 = vand.u32 %v558, 4294901760
      %4466 = vmatmul.f32.gmra.mxu0 %v4465
      %v4467 = vpop.f32.mrf.mxu0
      %v4468 = vadd.f32 %v4164, %v4467
      %v4469 = vand.u32 %v561, 4294901760
      %4470 = vmatmul.f32.gmra.mxu0 %v4469
      %v4471 = vpop.f32.mrf.mxu0
      %v4472 = vadd.f32 %v4170, %v4471
      %v4473 = vand.u32 %v564, 4294901760
      %4474 = vmatmul.f32.gmra.mxu0 %v4473
      %v4475 = vpop.f32.mrf.mxu0
      %v4476 = vadd.f32 %v4176, %v4475
      %v4477 = vand.u32 %v567, 4294901760
      %4478 = vmatmul.f32.gmra.mxu0 %v4477
      %v4479 = vpop.f32.mrf.mxu0
      %v4480 = vadd.f32 %v4182, %v4479
      %v4481 = vand.u32 %v570, 4294901760
      %4482 = vmatmul.f32.gmra.mxu0 %v4481
      %v4483 = vpop.f32.mrf.mxu0
      %v4484 = vadd.f32 %v4188, %v4483
      %v4485 = vand.u32 %v573, 4294901760
      %4486 = vmatmul.f32.gmra.mxu0 %v4485
      %v4487 = vpop.f32.mrf.mxu0
      %v4488 = vadd.f32 %v4194, %v4487
      %v4489 = vand.u32 %v576, 4294901760
      %4490 = vmatmul.f32.gmra.mxu0 %v4489
      %v4491 = vpop.f32.mrf.mxu0
      %v4492 = vadd.f32 %v4200, %v4491
      %v4493 = vand.u32 %v579, 4294901760
      %4494 = vmatmul.f32.gmra.mxu0 %v4493
      %v4495 = vpop.f32.mrf.mxu0
      %v4496 = vadd.f32 %v4206, %v4495
      %v4497 = vand.u32 %v582, 4294901760
      %4498 = vmatmul.f32.gmra.mxu0 %v4497
      %v4499 = vpop.f32.mrf.mxu0
      %v4500 = vadd.f32 %v4212, %v4499
      %v4501 = vand.u32 %v585, 4294901760
      %4502 = vmatmul.f32.gmra.mxu0 %v4501
      %v4503 = vpop.f32.mrf.mxu0
      %v4504 = vadd.f32 %v4218, %v4503
      %v4505 = vand.u32 %v588, 4294901760
      %4506 = vmatmul.f32.gmra.mxu0 %v4505
      %v4507 = vpop.f32.mrf.mxu0
      %v4508 = vadd.f32 %v4224, %v4507
      %v4509 = vand.u32 %v591, 4294901760
      %4510 = vmatmul.f32.gmra.mxu0 %v4509
      %v4511 = vpop.f32.mrf.mxu0
      %v4512 = vadd.f32 %v4230, %v4511
      %v4513 = vand.u32 %v594, 4294901760
      %4514 = vmatmul.f32.gmra.mxu0 %v4513
      %v4515 = vpop.f32.mrf.mxu0
      %v4516 = vadd.f32 %v4236, %v4515
      %v4517 = vand.u32 %v597, 4294901760
      %4518 = vmatmul.f32.gmra.mxu0 %v4517
      %v4519 = vpop.f32.mrf.mxu0
      %v4520 = vadd.f32 %v4242, %v4519
      %v4521 = vand.u32 %v600, 4294901760
      %4522 = vmatmul.f32.gmra.mxu0 %v4521
      %v4523 = vpop.f32.mrf.mxu0
      %v4524 = vadd.f32 %v4248, %v4523
      %4525 = vdwg.mxu0
      %4526 = vmatpush.msra.mxu0 0.0
      %4527 = vmatpush.msra.mxu0 0.0
      %4528 = vmatpush.msra.mxu0 0.0
      %4529 = vmatpush.msra.mxu0 0.0
      %4530 = vmatpush.msra.mxu0 0.0
      %4531 = vmatpush.msra.mxu0 0.0
      %4532 = vmatpush.msra.mxu0 0.0
      %4533 = vmatpush.msra.mxu0 0.0
      %4534 = vmatpush.msra.mxu0 0.0
      %4535 = vmatpush.msra.mxu0 0.0
      %4536 = vmatpush.msra.mxu0 0.0
      %4537 = vmatpush.msra.mxu0 0.0
      %4538 = vmatpush.msra.mxu0 0.0
      %4539 = vmatpush.msra.mxu0 0.0
      %4540 = vmatpush.msra.mxu0 0.0
      %v4541 = vand.u32 %v270, 4294901760
      %4542 = vmatpush.msra.mxu0 %v4541
      %v4543 = vand.u32 %v411, 4294901760
      %4544 = vmatmul.f32.gmra.mxu0 %v4543
      %v4545 = vpop.f32.mrf.mxu0
      %v4546 = vadd.f32 %v4272, %v4545
      %v4547 = vand.u32 %v414, 4294901760
      %4548 = vmatmul.f32.gmra.mxu0 %v4547
      %v4549 = vpop.f32.mrf.mxu0
      %v4550 = vadd.f32 %v4276, %v4549
      %v4551 = vand.u32 %v417, 4294901760
      %4552 = vmatmul.f32.gmra.mxu0 %v4551
      %v4553 = vpop.f32.mrf.mxu0
      %v4554 = vadd.f32 %v4280, %v4553
      %v4555 = vand.u32 %v420, 4294901760
      %4556 = vmatmul.f32.gmra.mxu0 %v4555
      %v4557 = vpop.f32.mrf.mxu0
      %v4558 = vadd.f32 %v4284, %v4557
      %v4559 = vand.u32 %v423, 4294901760
      %4560 = vmatmul.f32.gmra.mxu0 %v4559
      %v4561 = vpop.f32.mrf.mxu0
      %v4562 = vadd.f32 %v4288, %v4561
      %v4563 = vand.u32 %v426, 4294901760
      %4564 = vmatmul.f32.gmra.mxu0 %v4563
      %v4565 = vpop.f32.mrf.mxu0
      %v4566 = vadd.f32 %v4292, %v4565
      %v4567 = vand.u32 %v429, 4294901760
      %4568 = vmatmul.f32.gmra.mxu0 %v4567
      %v4569 = vpop.f32.mrf.mxu0
      %v4570 = vadd.f32 %v4296, %v4569
      %v4571 = vand.u32 %v432, 4294901760
      %4572 = vmatmul.f32.gmra.mxu0 %v4571
      %v4573 = vpop.f32.mrf.mxu0
      %v4574 = vadd.f32 %v4300, %v4573
      %v4575 = vand.u32 %v435, 4294901760
      %4576 = vmatmul.f32.gmra.mxu0 %v4575
      %v4577 = vpop.f32.mrf.mxu0
      %v4578 = vadd.f32 %v4304, %v4577
      %v4579 = vand.u32 %v438, 4294901760
      %4580 = vmatmul.f32.gmra.mxu0 %v4579
      %v4581 = vpop.f32.mrf.mxu0
      %v4582 = vadd.f32 %v4308, %v4581
      %v4583 = vand.u32 %v441, 4294901760
      %4584 = vmatmul.f32.gmra.mxu0 %v4583
      %v4585 = vpop.f32.mrf.mxu0
      %v4586 = vadd.f32 %v4312, %v4585
      %v4587 = vand.u32 %v444, 4294901760
      %4588 = vmatmul.f32.gmra.mxu0 %v4587
      %v4589 = vpop.f32.mrf.mxu0
      %v4590 = vadd.f32 %v4316, %v4589
      %v4591 = vand.u32 %v447, 4294901760
      %4592 = vmatmul.f32.gmra.mxu0 %v4591
      %v4593 = vpop.f32.mrf.mxu0
      %v4594 = vadd.f32 %v4320, %v4593
      %v4595 = vand.u32 %v450, 4294901760
      %4596 = vmatmul.f32.gmra.mxu0 %v4595
      %v4597 = vpop.f32.mrf.mxu0
      %v4598 = vadd.f32 %v4324, %v4597
      %v4599 = vand.u32 %v453, 4294901760
      %4600 = vmatmul.f32.gmra.mxu0 %v4599
      %v4601 = vpop.f32.mrf.mxu0
      %v4602 = vadd.f32 %v4328, %v4601
      %v4603 = vand.u32 %v456, 4294901760
      %4604 = vmatmul.f32.gmra.mxu0 %v4603
      %v4605 = vpop.f32.mrf.mxu0
      %v4606 = vadd.f32 %v4332, %v4605
      %v4607 = vand.u32 %v459, 4294901760
      %4608 = vmatmul.f32.gmra.mxu0 %v4607
      %v4609 = vpop.f32.mrf.mxu0
      %v4610 = vadd.f32 %v4336, %v4609
      %v4611 = vand.u32 %v462, 4294901760
      %4612 = vmatmul.f32.gmra.mxu0 %v4611
      %v4613 = vpop.f32.mrf.mxu0
      %v4614 = vadd.f32 %v4340, %v4613
      %v4615 = vand.u32 %v465, 4294901760
      %4616 = vmatmul.f32.gmra.mxu0 %v4615
      %v4617 = vpop.f32.mrf.mxu0
      %v4618 = vadd.f32 %v4344, %v4617
      %v4619 = vand.u32 %v468, 4294901760
      %4620 = vmatmul.f32.gmra.mxu0 %v4619
      %v4621 = vpop.f32.mrf.mxu0
      %v4622 = vadd.f32 %v4348, %v4621
      %v4623 = vand.u32 %v471, 4294901760
      %4624 = vmatmul.f32.gmra.mxu0 %v4623
      %v4625 = vpop.f32.mrf.mxu0
      %v4626 = vadd.f32 %v4352, %v4625
      %v4627 = vand.u32 %v474, 4294901760
      %4628 = vmatmul.f32.gmra.mxu0 %v4627
      %v4629 = vpop.f32.mrf.mxu0
      %v4630 = vadd.f32 %v4356, %v4629
      %v4631 = vand.u32 %v477, 4294901760
      %4632 = vmatmul.f32.gmra.mxu0 %v4631
      %v4633 = vpop.f32.mrf.mxu0
      %v4634 = vadd.f32 %v4360, %v4633
      %v4635 = vand.u32 %v480, 4294901760
      %4636 = vmatmul.f32.gmra.mxu0 %v4635
      %v4637 = vpop.f32.mrf.mxu0
      %v4638 = vadd.f32 %v4364, %v4637
      %v4639 = vand.u32 %v483, 4294901760
      %4640 = vmatmul.f32.gmra.mxu0 %v4639
      %v4641 = vpop.f32.mrf.mxu0
      %v4642 = vadd.f32 %v4368, %v4641
      %v4643 = vand.u32 %v486, 4294901760
      %4644 = vmatmul.f32.gmra.mxu0 %v4643
      %v4645 = vpop.f32.mrf.mxu0
      %v4646 = vadd.f32 %v4372, %v4645
      %v4647 = vand.u32 %v489, 4294901760
      %4648 = vmatmul.f32.gmra.mxu0 %v4647
      %v4649 = vpop.f32.mrf.mxu0
      %v4650 = vadd.f32 %v4376, %v4649
      %v4651 = vand.u32 %v492, 4294901760
      %4652 = vmatmul.f32.gmra.mxu0 %v4651
      %v4653 = vpop.f32.mrf.mxu0
      %v4654 = vadd.f32 %v4380, %v4653
      %v4655 = vand.u32 %v495, 4294901760
      %4656 = vmatmul.f32.gmra.mxu0 %v4655
      %v4657 = vpop.f32.mrf.mxu0
      %v4658 = vadd.f32 %v4384, %v4657
      %v4659 = vand.u32 %v498, 4294901760
      %4660 = vmatmul.f32.gmra.mxu0 %v4659
      %v4661 = vpop.f32.mrf.mxu0
      %v4662 = vadd.f32 %v4388, %v4661
      %v4663 = vand.u32 %v501, 4294901760
      %4664 = vmatmul.f32.gmra.mxu0 %v4663
      %v4665 = vpop.f32.mrf.mxu0
      %v4666 = vadd.f32 %v4392, %v4665
      %v4667 = vand.u32 %v504, 4294901760
      %4668 = vmatmul.f32.gmra.mxu0 %v4667
      %v4669 = vpop.f32.mrf.mxu0
      %v4670 = vadd.f32 %v4396, %v4669
      %v4671 = vand.u32 %v507, 4294901760
      %4672 = vmatmul.f32.gmra.mxu0 %v4671
      %v4673 = vpop.f32.mrf.mxu0
      %v4674 = vadd.f32 %v4400, %v4673
      %v4675 = vand.u32 %v510, 4294901760
      %4676 = vmatmul.f32.gmra.mxu0 %v4675
      %v4677 = vpop.f32.mrf.mxu0
      %v4678 = vadd.f32 %v4404, %v4677
      %v4679 = vand.u32 %v513, 4294901760
      %4680 = vmatmul.f32.gmra.mxu0 %v4679
      %v4681 = vpop.f32.mrf.mxu0
      %v4682 = vadd.f32 %v4408, %v4681
      %v4683 = vand.u32 %v516, 4294901760
      %4684 = vmatmul.f32.gmra.mxu0 %v4683
      %v4685 = vpop.f32.mrf.mxu0
      %v4686 = vadd.f32 %v4412, %v4685
      %v4687 = vand.u32 %v519, 4294901760
      %4688 = vmatmul.f32.gmra.mxu0 %v4687
      %v4689 = vpop.f32.mrf.mxu0
      %v4690 = vadd.f32 %v4416, %v4689
      %v4691 = vand.u32 %v522, 4294901760
      %4692 = vmatmul.f32.gmra.mxu0 %v4691
      %v4693 = vpop.f32.mrf.mxu0
      %v4694 = vadd.f32 %v4420, %v4693
      %v4695 = vand.u32 %v525, 4294901760
      %4696 = vmatmul.f32.gmra.mxu0 %v4695
      %v4697 = vpop.f32.mrf.mxu0
      %v4698 = vadd.f32 %v4424, %v4697
      %v4699 = vand.u32 %v528, 4294901760
      %4700 = vmatmul.f32.gmra.mxu0 %v4699
      %v4701 = vpop.f32.mrf.mxu0
      %v4702 = vadd.f32 %v4428, %v4701
      %v4703 = vand.u32 %v531, 4294901760
      %4704 = vmatmul.f32.gmra.mxu0 %v4703
      %v4705 = vpop.f32.mrf.mxu0
      %v4706 = vadd.f32 %v4432, %v4705
      %v4707 = vand.u32 %v534, 4294901760
      %4708 = vmatmul.f32.gmra.mxu0 %v4707
      %v4709 = vpop.f32.mrf.mxu0
      %v4710 = vadd.f32 %v4436, %v4709
      %v4711 = vand.u32 %v537, 4294901760
      %4712 = vmatmul.f32.gmra.mxu0 %v4711
      %v4713 = vpop.f32.mrf.mxu0
      %v4714 = vadd.f32 %v4440, %v4713
      %v4715 = vand.u32 %v540, 4294901760
      %4716 = vmatmul.f32.gmra.mxu0 %v4715
      %v4717 = vpop.f32.mrf.mxu0
      %v4718 = vadd.f32 %v4444, %v4717
      %v4719 = vand.u32 %v543, 4294901760
      %4720 = vmatmul.f32.gmra.mxu0 %v4719
      %v4721 = vpop.f32.mrf.mxu0
      %v4722 = vadd.f32 %v4448, %v4721
      %v4723 = vand.u32 %v546, 4294901760
      %4724 = vmatmul.f32.gmra.mxu0 %v4723
      %v4725 = vpop.f32.mrf.mxu0
      %v4726 = vadd.f32 %v4452, %v4725
      %v4727 = vand.u32 %v549, 4294901760
      %4728 = vmatmul.f32.gmra.mxu0 %v4727
      %v4729 = vpop.f32.mrf.mxu0
      %v4730 = vadd.f32 %v4456, %v4729
      %v4731 = vand.u32 %v552, 4294901760
      %4732 = vmatmul.f32.gmra.mxu0 %v4731
      %v4733 = vpop.f32.mrf.mxu0
      %v4734 = vadd.f32 %v4460, %v4733
      %v4735 = vand.u32 %v555, 4294901760
      %4736 = vmatmul.f32.gmra.mxu0 %v4735
      %v4737 = vpop.f32.mrf.mxu0
      %v4738 = vadd.f32 %v4464, %v4737
      %v4739 = vand.u32 %v558, 4294901760
      %4740 = vmatmul.f32.gmra.mxu0 %v4739
      %v4741 = vpop.f32.mrf.mxu0
      %v4742 = vadd.f32 %v4468, %v4741
      %v4743 = vand.u32 %v561, 4294901760
      %4744 = vmatmul.f32.gmra.mxu0 %v4743
      %v4745 = vpop.f32.mrf.mxu0
      %v4746 = vadd.f32 %v4472, %v4745
      %v4747 = vand.u32 %v564, 4294901760
      %4748 = vmatmul.f32.gmra.mxu0 %v4747
      %v4749 = vpop.f32.mrf.mxu0
      %v4750 = vadd.f32 %v4476, %v4749
      %v4751 = vand.u32 %v567, 4294901760
      %4752 = vmatmul.f32.gmra.mxu0 %v4751
      %v4753 = vpop.f32.mrf.mxu0
      %v4754 = vadd.f32 %v4480, %v4753
      %v4755 = vand.u32 %v570, 4294901760
      %4756 = vmatmul.f32.gmra.mxu0 %v4755
      %v4757 = vpop.f32.mrf.mxu0
      %v4758 = vadd.f32 %v4484, %v4757
      %v4759 = vand.u32 %v573, 4294901760
      %4760 = vmatmul.f32.gmra.mxu0 %v4759
      %v4761 = vpop.f32.mrf.mxu0
      %v4762 = vadd.f32 %v4488, %v4761
      %v4763 = vand.u32 %v576, 4294901760
      %4764 = vmatmul.f32.gmra.mxu0 %v4763
      %v4765 = vpop.f32.mrf.mxu0
      %v4766 = vadd.f32 %v4492, %v4765
      %v4767 = vand.u32 %v579, 4294901760
      %4768 = vmatmul.f32.gmra.mxu0 %v4767
      %v4769 = vpop.f32.mrf.mxu0
      %v4770 = vadd.f32 %v4496, %v4769
      %v4771 = vand.u32 %v582, 4294901760
      %4772 = vmatmul.f32.gmra.mxu0 %v4771
      %v4773 = vpop.f32.mrf.mxu0
      %v4774 = vadd.f32 %v4500, %v4773
      %v4775 = vand.u32 %v585, 4294901760
      %4776 = vmatmul.f32.gmra.mxu0 %v4775
      %v4777 = vpop.f32.mrf.mxu0
      %v4778 = vadd.f32 %v4504, %v4777
      %v4779 = vand.u32 %v588, 4294901760
      %4780 = vmatmul.f32.gmra.mxu0 %v4779
      %v4781 = vpop.f32.mrf.mxu0
      %v4782 = vadd.f32 %v4508, %v4781
      %v4783 = vand.u32 %v591, 4294901760
      %4784 = vmatmul.f32.gmra.mxu0 %v4783
      %v4785 = vpop.f32.mrf.mxu0
      %v4786 = vadd.f32 %v4512, %v4785
      %v4787 = vand.u32 %v594, 4294901760
      %4788 = vmatmul.f32.gmra.mxu0 %v4787
      %v4789 = vpop.f32.mrf.mxu0
      %v4790 = vadd.f32 %v4516, %v4789
      %v4791 = vand.u32 %v597, 4294901760
      %4792 = vmatmul.f32.gmra.mxu0 %v4791
      %v4793 = vpop.f32.mrf.mxu0
      %v4794 = vadd.f32 %v4520, %v4793
      %v4795 = vand.u32 %v600, 4294901760
      %4796 = vmatmul.f32.gmra.mxu0 %v4795
      %v4797 = vpop.f32.mrf.mxu0
      %v4798 = vadd.f32 %v4524, %v4797
      %4799 = vdwg.mxu0
      %4800 = vmatpush.msra.mxu0 0.0
      %4801 = vmatpush.msra.mxu0 0.0
      %4802 = vmatpush.msra.mxu0 0.0
      %4803 = vmatpush.msra.mxu0 0.0
      %4804 = vmatpush.msra.mxu0 0.0
      %4805 = vmatpush.msra.mxu0 0.0
      %4806 = vmatpush.msra.mxu0 0.0
      %4807 = vmatpush.msra.mxu0 0.0
      %4808 = vmatpush.msra.mxu0 0.0
      %4809 = vmatpush.msra.mxu0 0.0
      %4810 = vmatpush.msra.mxu0 0.0
      %4811 = vmatpush.msra.mxu0 0.0
      %4812 = vmatpush.msra.mxu0 0.0
      %4813 = vmatpush.msra.mxu0 0.0
      %4814 = vmatpush.msra.mxu0 0.0
      %v4815 = vand.u32 %v271, 4294901760
      %4816 = vmatpush.msra.mxu0 %v4815
      %v4817 = vand.u32 %v411, 4294901760
      %v4818 = vsub.f32 %v411, %v4817
      %v4819 = vand.u32 %v4818, 4294901760
      %v4820 = vsub.f32 %v4818, %v4819
      %v4821 = vand.u32 %v4820, 4294901760
      %4822 = vmatmul.f32.gmra.mxu0 %v4821
      %v4823 = vpop.f32.mrf.mxu0
      %v4824 = vadd.f32 0.0, %v4823
      %v4825 = vand.u32 %v414, 4294901760
      %v4826 = vsub.f32 %v414, %v4825
      %v4827 = vand.u32 %v4826, 4294901760
      %v4828 = vsub.f32 %v4826, %v4827
      %v4829 = vand.u32 %v4828, 4294901760
      %4830 = vmatmul.f32.gmra.mxu0 %v4829
      %v4831 = vpop.f32.mrf.mxu0
      %v4832 = vadd.f32 0.0, %v4831
      %v4833 = vand.u32 %v417, 4294901760
      %v4834 = vsub.f32 %v417, %v4833
      %v4835 = vand.u32 %v4834, 4294901760
      %v4836 = vsub.f32 %v4834, %v4835
      %v4837 = vand.u32 %v4836, 4294901760
      %4838 = vmatmul.f32.gmra.mxu0 %v4837
      %v4839 = vpop.f32.mrf.mxu0
      %v4840 = vadd.f32 0.0, %v4839
      %v4841 = vand.u32 %v420, 4294901760
      %v4842 = vsub.f32 %v420, %v4841
      %v4843 = vand.u32 %v4842, 4294901760
      %v4844 = vsub.f32 %v4842, %v4843
      %v4845 = vand.u32 %v4844, 4294901760
      %4846 = vmatmul.f32.gmra.mxu0 %v4845
      %v4847 = vpop.f32.mrf.mxu0
      %v4848 = vadd.f32 0.0, %v4847
      %v4849 = vand.u32 %v423, 4294901760
      %v4850 = vsub.f32 %v423, %v4849
      %v4851 = vand.u32 %v4850, 4294901760
      %v4852 = vsub.f32 %v4850, %v4851
      %v4853 = vand.u32 %v4852, 4294901760
      %4854 = vmatmul.f32.gmra.mxu0 %v4853
      %v4855 = vpop.f32.mrf.mxu0
      %v4856 = vadd.f32 0.0, %v4855
      %v4857 = vand.u32 %v426, 4294901760
      %v4858 = vsub.f32 %v426, %v4857
      %v4859 = vand.u32 %v4858, 4294901760
      %v4860 = vsub.f32 %v4858, %v4859
      %v4861 = vand.u32 %v4860, 4294901760
      %4862 = vmatmul.f32.gmra.mxu0 %v4861
      %v4863 = vpop.f32.mrf.mxu0
      %v4864 = vadd.f32 0.0, %v4863
      %v4865 = vand.u32 %v429, 4294901760
      %v4866 = vsub.f32 %v429, %v4865
      %v4867 = vand.u32 %v4866, 4294901760
      %v4868 = vsub.f32 %v4866, %v4867
      %v4869 = vand.u32 %v4868, 4294901760
      %4870 = vmatmul.f32.gmra.mxu0 %v4869
      %v4871 = vpop.f32.mrf.mxu0
      %v4872 = vadd.f32 0.0, %v4871
      %v4873 = vand.u32 %v432, 4294901760
      %v4874 = vsub.f32 %v432, %v4873
      %v4875 = vand.u32 %v4874, 4294901760
      %v4876 = vsub.f32 %v4874, %v4875
      %v4877 = vand.u32 %v4876, 4294901760
      %4878 = vmatmul.f32.gmra.mxu0 %v4877
      %v4879 = vpop.f32.mrf.mxu0
      %v4880 = vadd.f32 0.0, %v4879
      %v4881 = vand.u32 %v435, 4294901760
      %v4882 = vsub.f32 %v435, %v4881
      %v4883 = vand.u32 %v4882, 4294901760
      %v4884 = vsub.f32 %v4882, %v4883
      %v4885 = vand.u32 %v4884, 4294901760
      %4886 = vmatmul.f32.gmra.mxu0 %v4885
      %v4887 = vpop.f32.mrf.mxu0
      %v4888 = vadd.f32 0.0, %v4887
      %v4889 = vand.u32 %v438, 4294901760
      %v4890 = vsub.f32 %v438, %v4889
      %v4891 = vand.u32 %v4890, 4294901760
      %v4892 = vsub.f32 %v4890, %v4891
      %v4893 = vand.u32 %v4892, 4294901760
      %4894 = vmatmul.f32.gmra.mxu0 %v4893
      %v4895 = vpop.f32.mrf.mxu0
      %v4896 = vadd.f32 0.0, %v4895
      %v4897 = vand.u32 %v441, 4294901760
      %v4898 = vsub.f32 %v441, %v4897
      %v4899 = vand.u32 %v4898, 4294901760
      %v4900 = vsub.f32 %v4898, %v4899
      %v4901 = vand.u32 %v4900, 4294901760
      %4902 = vmatmul.f32.gmra.mxu0 %v4901
      %v4903 = vpop.f32.mrf.mxu0
      %v4904 = vadd.f32 0.0, %v4903
      %v4905 = vand.u32 %v444, 4294901760
      %v4906 = vsub.f32 %v444, %v4905
      %v4907 = vand.u32 %v4906, 4294901760
      %v4908 = vsub.f32 %v4906, %v4907
      %v4909 = vand.u32 %v4908, 4294901760
      %4910 = vmatmul.f32.gmra.mxu0 %v4909
      %v4911 = vpop.f32.mrf.mxu0
      %v4912 = vadd.f32 0.0, %v4911
      %v4913 = vand.u32 %v447, 4294901760
      %v4914 = vsub.f32 %v447, %v4913
      %v4915 = vand.u32 %v4914, 4294901760
      %v4916 = vsub.f32 %v4914, %v4915
      %v4917 = vand.u32 %v4916, 4294901760
      %4918 = vmatmul.f32.gmra.mxu0 %v4917
      %v4919 = vpop.f32.mrf.mxu0
      %v4920 = vadd.f32 0.0, %v4919
      %v4921 = vand.u32 %v450, 4294901760
      %v4922 = vsub.f32 %v450, %v4921
      %v4923 = vand.u32 %v4922, 4294901760
      %v4924 = vsub.f32 %v4922, %v4923
      %v4925 = vand.u32 %v4924, 4294901760
      %4926 = vmatmul.f32.gmra.mxu0 %v4925
      %v4927 = vpop.f32.mrf.mxu0
      %v4928 = vadd.f32 0.0, %v4927
      %v4929 = vand.u32 %v453, 4294901760
      %v4930 = vsub.f32 %v453, %v4929
      %v4931 = vand.u32 %v4930, 4294901760
      %v4932 = vsub.f32 %v4930, %v4931
      %v4933 = vand.u32 %v4932, 4294901760
      %4934 = vmatmul.f32.gmra.mxu0 %v4933
      %v4935 = vpop.f32.mrf.mxu0
      %v4936 = vadd.f32 0.0, %v4935
      %v4937 = vand.u32 %v456, 4294901760
      %v4938 = vsub.f32 %v456, %v4937
      %v4939 = vand.u32 %v4938, 4294901760
      %v4940 = vsub.f32 %v4938, %v4939
      %v4941 = vand.u32 %v4940, 4294901760
      %4942 = vmatmul.f32.gmra.mxu0 %v4941
      %v4943 = vpop.f32.mrf.mxu0
      %v4944 = vadd.f32 0.0, %v4943
      %v4945 = vand.u32 %v459, 4294901760
      %v4946 = vsub.f32 %v459, %v4945
      %v4947 = vand.u32 %v4946, 4294901760
      %v4948 = vsub.f32 %v4946, %v4947
      %v4949 = vand.u32 %v4948, 4294901760
      %4950 = vmatmul.f32.gmra.mxu0 %v4949
      %v4951 = vpop.f32.mrf.mxu0
      %v4952 = vadd.f32 0.0, %v4951
      %v4953 = vand.u32 %v462, 4294901760
      %v4954 = vsub.f32 %v462, %v4953
      %v4955 = vand.u32 %v4954, 4294901760
      %v4956 = vsub.f32 %v4954, %v4955
      %v4957 = vand.u32 %v4956, 4294901760
      %4958 = vmatmul.f32.gmra.mxu0 %v4957
      %v4959 = vpop.f32.mrf.mxu0
      %v4960 = vadd.f32 0.0, %v4959
      %v4961 = vand.u32 %v465, 4294901760
      %v4962 = vsub.f32 %v465, %v4961
      %v4963 = vand.u32 %v4962, 4294901760
      %v4964 = vsub.f32 %v4962, %v4963
      %v4965 = vand.u32 %v4964, 4294901760
      %4966 = vmatmul.f32.gmra.mxu0 %v4965
      %v4967 = vpop.f32.mrf.mxu0
      %v4968 = vadd.f32 0.0, %v4967
      %v4969 = vand.u32 %v468, 4294901760
      %v4970 = vsub.f32 %v468, %v4969
      %v4971 = vand.u32 %v4970, 4294901760
      %v4972 = vsub.f32 %v4970, %v4971
      %v4973 = vand.u32 %v4972, 4294901760
      %4974 = vmatmul.f32.gmra.mxu0 %v4973
      %v4975 = vpop.f32.mrf.mxu0
      %v4976 = vadd.f32 0.0, %v4975
      %v4977 = vand.u32 %v471, 4294901760
      %v4978 = vsub.f32 %v471, %v4977
      %v4979 = vand.u32 %v4978, 4294901760
      %v4980 = vsub.f32 %v4978, %v4979
      %v4981 = vand.u32 %v4980, 4294901760
      %4982 = vmatmul.f32.gmra.mxu0 %v4981
      %v4983 = vpop.f32.mrf.mxu0
      %v4984 = vadd.f32 0.0, %v4983
      %v4985 = vand.u32 %v474, 4294901760
      %v4986 = vsub.f32 %v474, %v4985
      %v4987 = vand.u32 %v4986, 4294901760
      %v4988 = vsub.f32 %v4986, %v4987
      %v4989 = vand.u32 %v4988, 4294901760
      %4990 = vmatmul.f32.gmra.mxu0 %v4989
      %v4991 = vpop.f32.mrf.mxu0
      %v4992 = vadd.f32 0.0, %v4991
      %v4993 = vand.u32 %v477, 4294901760
      %v4994 = vsub.f32 %v477, %v4993
      %v4995 = vand.u32 %v4994, 4294901760
      %v4996 = vsub.f32 %v4994, %v4995
      %v4997 = vand.u32 %v4996, 4294901760
      %4998 = vmatmul.f32.gmra.mxu0 %v4997
      %v4999 = vpop.f32.mrf.mxu0
      %v5000 = vadd.f32 0.0, %v4999
      %v5001 = vand.u32 %v480, 4294901760
      %v5002 = vsub.f32 %v480, %v5001
      %v5003 = vand.u32 %v5002, 4294901760
      %v5004 = vsub.f32 %v5002, %v5003
      %v5005 = vand.u32 %v5004, 4294901760
      %5006 = vmatmul.f32.gmra.mxu0 %v5005
      %v5007 = vpop.f32.mrf.mxu0
      %v5008 = vadd.f32 0.0, %v5007
      %v5009 = vand.u32 %v483, 4294901760
      %v5010 = vsub.f32 %v483, %v5009
      %v5011 = vand.u32 %v5010, 4294901760
      %v5012 = vsub.f32 %v5010, %v5011
      %v5013 = vand.u32 %v5012, 4294901760
      %5014 = vmatmul.f32.gmra.mxu0 %v5013
      %v5015 = vpop.f32.mrf.mxu0
      %v5016 = vadd.f32 0.0, %v5015
      %v5017 = vand.u32 %v486, 4294901760
      %v5018 = vsub.f32 %v486, %v5017
      %v5019 = vand.u32 %v5018, 4294901760
      %v5020 = vsub.f32 %v5018, %v5019
      %v5021 = vand.u32 %v5020, 4294901760
      %5022 = vmatmul.f32.gmra.mxu0 %v5021
      %v5023 = vpop.f32.mrf.mxu0
      %v5024 = vadd.f32 0.0, %v5023
      %v5025 = vand.u32 %v489, 4294901760
      %v5026 = vsub.f32 %v489, %v5025
      %v5027 = vand.u32 %v5026, 4294901760
      %v5028 = vsub.f32 %v5026, %v5027
      %v5029 = vand.u32 %v5028, 4294901760
      %5030 = vmatmul.f32.gmra.mxu0 %v5029
      %v5031 = vpop.f32.mrf.mxu0
      %v5032 = vadd.f32 0.0, %v5031
      %v5033 = vand.u32 %v492, 4294901760
      %v5034 = vsub.f32 %v492, %v5033
      %v5035 = vand.u32 %v5034, 4294901760
      %v5036 = vsub.f32 %v5034, %v5035
      %v5037 = vand.u32 %v5036, 4294901760
      %5038 = vmatmul.f32.gmra.mxu0 %v5037
      %v5039 = vpop.f32.mrf.mxu0
      %v5040 = vadd.f32 0.0, %v5039
      %v5041 = vand.u32 %v495, 4294901760
      %v5042 = vsub.f32 %v495, %v5041
      %v5043 = vand.u32 %v5042, 4294901760
      %v5044 = vsub.f32 %v5042, %v5043
      %v5045 = vand.u32 %v5044, 4294901760
      %5046 = vmatmul.f32.gmra.mxu0 %v5045
      %v5047 = vpop.f32.mrf.mxu0
      %v5048 = vadd.f32 0.0, %v5047
      %v5049 = vand.u32 %v498, 4294901760
      %v5050 = vsub.f32 %v498, %v5049
      %v5051 = vand.u32 %v5050, 4294901760
      %v5052 = vsub.f32 %v5050, %v5051
      %v5053 = vand.u32 %v5052, 4294901760
      %5054 = vmatmul.f32.gmra.mxu0 %v5053
      %v5055 = vpop.f32.mrf.mxu0
      %v5056 = vadd.f32 0.0, %v5055
      %v5057 = vand.u32 %v501, 4294901760
      %v5058 = vsub.f32 %v501, %v5057
      %v5059 = vand.u32 %v5058, 4294901760
      %v5060 = vsub.f32 %v5058, %v5059
      %v5061 = vand.u32 %v5060, 4294901760
      %5062 = vmatmul.f32.gmra.mxu0 %v5061
      %v5063 = vpop.f32.mrf.mxu0
      %v5064 = vadd.f32 0.0, %v5063
      %v5065 = vand.u32 %v504, 4294901760
      %v5066 = vsub.f32 %v504, %v5065
      %v5067 = vand.u32 %v5066, 4294901760
      %v5068 = vsub.f32 %v5066, %v5067
      %v5069 = vand.u32 %v5068, 4294901760
      %5070 = vmatmul.f32.gmra.mxu0 %v5069
      %v5071 = vpop.f32.mrf.mxu0
      %v5072 = vadd.f32 0.0, %v5071
      %v5073 = vand.u32 %v507, 4294901760
      %v5074 = vsub.f32 %v507, %v5073
      %v5075 = vand.u32 %v5074, 4294901760
      %v5076 = vsub.f32 %v5074, %v5075
      %v5077 = vand.u32 %v5076, 4294901760
      %5078 = vmatmul.f32.gmra.mxu0 %v5077
      %v5079 = vpop.f32.mrf.mxu0
      %v5080 = vadd.f32 0.0, %v5079
      %v5081 = vand.u32 %v510, 4294901760
      %v5082 = vsub.f32 %v510, %v5081
      %v5083 = vand.u32 %v5082, 4294901760
      %v5084 = vsub.f32 %v5082, %v5083
      %v5085 = vand.u32 %v5084, 4294901760
      %5086 = vmatmul.f32.gmra.mxu0 %v5085
      %v5087 = vpop.f32.mrf.mxu0
      %v5088 = vadd.f32 0.0, %v5087
      %v5089 = vand.u32 %v513, 4294901760
      %v5090 = vsub.f32 %v513, %v5089
      %v5091 = vand.u32 %v5090, 4294901760
      %v5092 = vsub.f32 %v5090, %v5091
      %v5093 = vand.u32 %v5092, 4294901760
      %5094 = vmatmul.f32.gmra.mxu0 %v5093
      %v5095 = vpop.f32.mrf.mxu0
      %v5096 = vadd.f32 0.0, %v5095
      %v5097 = vand.u32 %v516, 4294901760
      %v5098 = vsub.f32 %v516, %v5097
      %v5099 = vand.u32 %v5098, 4294901760
      %v5100 = vsub.f32 %v5098, %v5099
      %v5101 = vand.u32 %v5100, 4294901760
      %5102 = vmatmul.f32.gmra.mxu0 %v5101
      %v5103 = vpop.f32.mrf.mxu0
      %v5104 = vadd.f32 0.0, %v5103
      %v5105 = vand.u32 %v519, 4294901760
      %v5106 = vsub.f32 %v519, %v5105
      %v5107 = vand.u32 %v5106, 4294901760
      %v5108 = vsub.f32 %v5106, %v5107
      %v5109 = vand.u32 %v5108, 4294901760
      %5110 = vmatmul.f32.gmra.mxu0 %v5109
      %v5111 = vpop.f32.mrf.mxu0
      %v5112 = vadd.f32 0.0, %v5111
      %v5113 = vand.u32 %v522, 4294901760
      %v5114 = vsub.f32 %v522, %v5113
      %v5115 = vand.u32 %v5114, 4294901760
      %v5116 = vsub.f32 %v5114, %v5115
      %v5117 = vand.u32 %v5116, 4294901760
      %5118 = vmatmul.f32.gmra.mxu0 %v5117
      %v5119 = vpop.f32.mrf.mxu0
      %v5120 = vadd.f32 0.0, %v5119
      %v5121 = vand.u32 %v525, 4294901760
      %v5122 = vsub.f32 %v525, %v5121
      %v5123 = vand.u32 %v5122, 4294901760
      %v5124 = vsub.f32 %v5122, %v5123
      %v5125 = vand.u32 %v5124, 4294901760
      %5126 = vmatmul.f32.gmra.mxu0 %v5125
      %v5127 = vpop.f32.mrf.mxu0
      %v5128 = vadd.f32 0.0, %v5127
      %v5129 = vand.u32 %v528, 4294901760
      %v5130 = vsub.f32 %v528, %v5129
      %v5131 = vand.u32 %v5130, 4294901760
      %v5132 = vsub.f32 %v5130, %v5131
      %v5133 = vand.u32 %v5132, 4294901760
      %5134 = vmatmul.f32.gmra.mxu0 %v5133
      %v5135 = vpop.f32.mrf.mxu0
      %v5136 = vadd.f32 0.0, %v5135
      %v5137 = vand.u32 %v531, 4294901760
      %v5138 = vsub.f32 %v531, %v5137
      %v5139 = vand.u32 %v5138, 4294901760
      %v5140 = vsub.f32 %v5138, %v5139
      %v5141 = vand.u32 %v5140, 4294901760
      %5142 = vmatmul.f32.gmra.mxu0 %v5141
      %v5143 = vpop.f32.mrf.mxu0
      %v5144 = vadd.f32 0.0, %v5143
      %v5145 = vand.u32 %v534, 4294901760
      %v5146 = vsub.f32 %v534, %v5145
      %v5147 = vand.u32 %v5146, 4294901760
      %v5148 = vsub.f32 %v5146, %v5147
      %v5149 = vand.u32 %v5148, 4294901760
      %5150 = vmatmul.f32.gmra.mxu0 %v5149
      %v5151 = vpop.f32.mrf.mxu0
      %v5152 = vadd.f32 0.0, %v5151
      %v5153 = vand.u32 %v537, 4294901760
      %v5154 = vsub.f32 %v537, %v5153
      %v5155 = vand.u32 %v5154, 4294901760
      %v5156 = vsub.f32 %v5154, %v5155
      %v5157 = vand.u32 %v5156, 4294901760
      %5158 = vmatmul.f32.gmra.mxu0 %v5157
      %v5159 = vpop.f32.mrf.mxu0
      %v5160 = vadd.f32 0.0, %v5159
      %v5161 = vand.u32 %v540, 4294901760
      %v5162 = vsub.f32 %v540, %v5161
      %v5163 = vand.u32 %v5162, 4294901760
      %v5164 = vsub.f32 %v5162, %v5163
      %v5165 = vand.u32 %v5164, 4294901760
      %5166 = vmatmul.f32.gmra.mxu0 %v5165
      %v5167 = vpop.f32.mrf.mxu0
      %v5168 = vadd.f32 0.0, %v5167
      %v5169 = vand.u32 %v543, 4294901760
      %v5170 = vsub.f32 %v543, %v5169
      %v5171 = vand.u32 %v5170, 4294901760
      %v5172 = vsub.f32 %v5170, %v5171
      %v5173 = vand.u32 %v5172, 4294901760
      %5174 = vmatmul.f32.gmra.mxu0 %v5173
      %v5175 = vpop.f32.mrf.mxu0
      %v5176 = vadd.f32 0.0, %v5175
      %v5177 = vand.u32 %v546, 4294901760
      %v5178 = vsub.f32 %v546, %v5177
      %v5179 = vand.u32 %v5178, 4294901760
      %v5180 = vsub.f32 %v5178, %v5179
      %v5181 = vand.u32 %v5180, 4294901760
      %5182 = vmatmul.f32.gmra.mxu0 %v5181
      %v5183 = vpop.f32.mrf.mxu0
      %v5184 = vadd.f32 0.0, %v5183
      %v5185 = vand.u32 %v549, 4294901760
      %v5186 = vsub.f32 %v549, %v5185
      %v5187 = vand.u32 %v5186, 4294901760
      %v5188 = vsub.f32 %v5186, %v5187
      %v5189 = vand.u32 %v5188, 4294901760
      %5190 = vmatmul.f32.gmra.mxu0 %v5189
      %v5191 = vpop.f32.mrf.mxu0
      %v5192 = vadd.f32 0.0, %v5191
      %v5193 = vand.u32 %v552, 4294901760
      %v5194 = vsub.f32 %v552, %v5193
      %v5195 = vand.u32 %v5194, 4294901760
      %v5196 = vsub.f32 %v5194, %v5195
      %v5197 = vand.u32 %v5196, 4294901760
      %5198 = vmatmul.f32.gmra.mxu0 %v5197
      %v5199 = vpop.f32.mrf.mxu0
      %v5200 = vadd.f32 0.0, %v5199
      %v5201 = vand.u32 %v555, 4294901760
      %v5202 = vsub.f32 %v555, %v5201
      %v5203 = vand.u32 %v5202, 4294901760
      %v5204 = vsub.f32 %v5202, %v5203
      %v5205 = vand.u32 %v5204, 4294901760
      %5206 = vmatmul.f32.gmra.mxu0 %v5205
      %v5207 = vpop.f32.mrf.mxu0
      %v5208 = vadd.f32 0.0, %v5207
      %v5209 = vand.u32 %v558, 4294901760
      %v5210 = vsub.f32 %v558, %v5209
      %v5211 = vand.u32 %v5210, 4294901760
      %v5212 = vsub.f32 %v5210, %v5211
      %v5213 = vand.u32 %v5212, 4294901760
      %5214 = vmatmul.f32.gmra.mxu0 %v5213
      %v5215 = vpop.f32.mrf.mxu0
      %v5216 = vadd.f32 0.0, %v5215
      %v5217 = vand.u32 %v561, 4294901760
      %v5218 = vsub.f32 %v561, %v5217
      %v5219 = vand.u32 %v5218, 4294901760
      %v5220 = vsub.f32 %v5218, %v5219
      %v5221 = vand.u32 %v5220, 4294901760
      %5222 = vmatmul.f32.gmra.mxu0 %v5221
      %v5223 = vpop.f32.mrf.mxu0
      %v5224 = vadd.f32 0.0, %v5223
      %v5225 = vand.u32 %v564, 4294901760
      %v5226 = vsub.f32 %v564, %v5225
      %v5227 = vand.u32 %v5226, 4294901760
      %v5228 = vsub.f32 %v5226, %v5227
      %v5229 = vand.u32 %v5228, 4294901760
      %5230 = vmatmul.f32.gmra.mxu0 %v5229
      %v5231 = vpop.f32.mrf.mxu0
      %v5232 = vadd.f32 0.0, %v5231
      %v5233 = vand.u32 %v567, 4294901760
      %v5234 = vsub.f32 %v567, %v5233
      %v5235 = vand.u32 %v5234, 4294901760
      %v5236 = vsub.f32 %v5234, %v5235
      %v5237 = vand.u32 %v5236, 4294901760
      %5238 = vmatmul.f32.gmra.mxu0 %v5237
      %v5239 = vpop.f32.mrf.mxu0
      %v5240 = vadd.f32 0.0, %v5239
      %v5241 = vand.u32 %v570, 4294901760
      %v5242 = vsub.f32 %v570, %v5241
      %v5243 = vand.u32 %v5242, 4294901760
      %v5244 = vsub.f32 %v5242, %v5243
      %v5245 = vand.u32 %v5244, 4294901760
      %5246 = vmatmul.f32.gmra.mxu0 %v5245
      %v5247 = vpop.f32.mrf.mxu0
      %v5248 = vadd.f32 0.0, %v5247
      %v5249 = vand.u32 %v573, 4294901760
      %v5250 = vsub.f32 %v573, %v5249
      %v5251 = vand.u32 %v5250, 4294901760
      %v5252 = vsub.f32 %v5250, %v5251
      %v5253 = vand.u32 %v5252, 4294901760
      %5254 = vmatmul.f32.gmra.mxu0 %v5253
      %v5255 = vpop.f32.mrf.mxu0
      %v5256 = vadd.f32 0.0, %v5255
      %v5257 = vand.u32 %v576, 4294901760
      %v5258 = vsub.f32 %v576, %v5257
      %v5259 = vand.u32 %v5258, 4294901760
      %v5260 = vsub.f32 %v5258, %v5259
      %v5261 = vand.u32 %v5260, 4294901760
      %5262 = vmatmul.f32.gmra.mxu0 %v5261
      %v5263 = vpop.f32.mrf.mxu0
      %v5264 = vadd.f32 0.0, %v5263
      %v5265 = vand.u32 %v579, 4294901760
      %v5266 = vsub.f32 %v579, %v5265
      %v5267 = vand.u32 %v5266, 4294901760
      %v5268 = vsub.f32 %v5266, %v5267
      %v5269 = vand.u32 %v5268, 4294901760
      %5270 = vmatmul.f32.gmra.mxu0 %v5269
      %v5271 = vpop.f32.mrf.mxu0
      %v5272 = vadd.f32 0.0, %v5271
      %v5273 = vand.u32 %v582, 4294901760
      %v5274 = vsub.f32 %v582, %v5273
      %v5275 = vand.u32 %v5274, 4294901760
      %v5276 = vsub.f32 %v5274, %v5275
      %v5277 = vand.u32 %v5276, 4294901760
      %5278 = vmatmul.f32.gmra.mxu0 %v5277
      %v5279 = vpop.f32.mrf.mxu0
      %v5280 = vadd.f32 0.0, %v5279
      %v5281 = vand.u32 %v585, 4294901760
      %v5282 = vsub.f32 %v585, %v5281
      %v5283 = vand.u32 %v5282, 4294901760
      %v5284 = vsub.f32 %v5282, %v5283
      %v5285 = vand.u32 %v5284, 4294901760
      %5286 = vmatmul.f32.gmra.mxu0 %v5285
      %v5287 = vpop.f32.mrf.mxu0
      %v5288 = vadd.f32 0.0, %v5287
      %v5289 = vand.u32 %v588, 4294901760
      %v5290 = vsub.f32 %v588, %v5289
      %v5291 = vand.u32 %v5290, 4294901760
      %v5292 = vsub.f32 %v5290, %v5291
      %v5293 = vand.u32 %v5292, 4294901760
      %5294 = vmatmul.f32.gmra.mxu0 %v5293
      %v5295 = vpop.f32.mrf.mxu0
      %v5296 = vadd.f32 0.0, %v5295
      %v5297 = vand.u32 %v591, 4294901760
      %v5298 = vsub.f32 %v591, %v5297
      %v5299 = vand.u32 %v5298, 4294901760
      %v5300 = vsub.f32 %v5298, %v5299
      %v5301 = vand.u32 %v5300, 4294901760
      %5302 = vmatmul.f32.gmra.mxu0 %v5301
      %v5303 = vpop.f32.mrf.mxu0
      %v5304 = vadd.f32 0.0, %v5303
      %v5305 = vand.u32 %v594, 4294901760
      %v5306 = vsub.f32 %v594, %v5305
      %v5307 = vand.u32 %v5306, 4294901760
      %v5308 = vsub.f32 %v5306, %v5307
      %v5309 = vand.u32 %v5308, 4294901760
      %5310 = vmatmul.f32.gmra.mxu0 %v5309
      %v5311 = vpop.f32.mrf.mxu0
      %v5312 = vadd.f32 0.0, %v5311
      %v5313 = vand.u32 %v597, 4294901760
      %v5314 = vsub.f32 %v597, %v5313
      %v5315 = vand.u32 %v5314, 4294901760
      %v5316 = vsub.f32 %v5314, %v5315
      %v5317 = vand.u32 %v5316, 4294901760
      %5318 = vmatmul.f32.gmra.mxu0 %v5317
      %v5319 = vpop.f32.mrf.mxu0
      %v5320 = vadd.f32 0.0, %v5319
      %v5321 = vand.u32 %v600, 4294901760
      %v5322 = vsub.f32 %v600, %v5321
      %v5323 = vand.u32 %v5322, 4294901760
      %v5324 = vsub.f32 %v5322, %v5323
      %v5325 = vand.u32 %v5324, 4294901760
      %5326 = vmatmul.f32.gmra.mxu0 %v5325
      %v5327 = vpop.f32.mrf.mxu0
      %v5328 = vadd.f32 0.0, %v5327
      %5329 = vdwg.mxu0
      %5330 = vmatpush.msra.mxu0 0.0
      %5331 = vmatpush.msra.mxu0 0.0
      %5332 = vmatpush.msra.mxu0 0.0
      %5333 = vmatpush.msra.mxu0 0.0
      %5334 = vmatpush.msra.mxu0 0.0
      %5335 = vmatpush.msra.mxu0 0.0
      %5336 = vmatpush.msra.mxu0 0.0
      %5337 = vmatpush.msra.mxu0 0.0
      %5338 = vmatpush.msra.mxu0 0.0
      %5339 = vmatpush.msra.mxu0 0.0
      %5340 = vmatpush.msra.mxu0 0.0
      %5341 = vmatpush.msra.mxu0 0.0
      %5342 = vmatpush.msra.mxu0 0.0
      %5343 = vmatpush.msra.mxu0 0.0
      %5344 = vmatpush.msra.mxu0 0.0
      %v5345 = vand.u32 %v271, 4294901760
      %v5346 = vsub.f32 %v271, %v5345
      %v5347 = vand.u32 %v5346, 4294901760
      %v5348 = vsub.f32 %v5346, %v5347
      %v5349 = vand.u32 %v5348, 4294901760
      %5350 = vmatpush.msra.mxu0 %v5349
      %v5351 = vand.u32 %v411, 4294901760
      %5352 = vmatmul.f32.gmra.mxu0 %v5351
      %v5353 = vpop.f32.mrf.mxu0
      %v5354 = vadd.f32 %v4824, %v5353
      %v5355 = vand.u32 %v414, 4294901760
      %5356 = vmatmul.f32.gmra.mxu0 %v5355
      %v5357 = vpop.f32.mrf.mxu0
      %v5358 = vadd.f32 %v4832, %v5357
      %v5359 = vand.u32 %v417, 4294901760
      %5360 = vmatmul.f32.gmra.mxu0 %v5359
      %v5361 = vpop.f32.mrf.mxu0
      %v5362 = vadd.f32 %v4840, %v5361
      %v5363 = vand.u32 %v420, 4294901760
      %5364 = vmatmul.f32.gmra.mxu0 %v5363
      %v5365 = vpop.f32.mrf.mxu0
      %v5366 = vadd.f32 %v4848, %v5365
      %v5367 = vand.u32 %v423, 4294901760
      %5368 = vmatmul.f32.gmra.mxu0 %v5367
      %v5369 = vpop.f32.mrf.mxu0
      %v5370 = vadd.f32 %v4856, %v5369
      %v5371 = vand.u32 %v426, 4294901760
      %5372 = vmatmul.f32.gmra.mxu0 %v5371
      %v5373 = vpop.f32.mrf.mxu0
      %v5374 = vadd.f32 %v4864, %v5373
      %v5375 = vand.u32 %v429, 4294901760
      %5376 = vmatmul.f32.gmra.mxu0 %v5375
      %v5377 = vpop.f32.mrf.mxu0
      %v5378 = vadd.f32 %v4872, %v5377
      %v5379 = vand.u32 %v432, 4294901760
      %5380 = vmatmul.f32.gmra.mxu0 %v5379
      %v5381 = vpop.f32.mrf.mxu0
      %v5382 = vadd.f32 %v4880, %v5381
      %v5383 = vand.u32 %v435, 4294901760
      %5384 = vmatmul.f32.gmra.mxu0 %v5383
      %v5385 = vpop.f32.mrf.mxu0
      %v5386 = vadd.f32 %v4888, %v5385
      %v5387 = vand.u32 %v438, 4294901760
      %5388 = vmatmul.f32.gmra.mxu0 %v5387
      %v5389 = vpop.f32.mrf.mxu0
      %v5390 = vadd.f32 %v4896, %v5389
      %v5391 = vand.u32 %v441, 4294901760
      %5392 = vmatmul.f32.gmra.mxu0 %v5391
      %v5393 = vpop.f32.mrf.mxu0
      %v5394 = vadd.f32 %v4904, %v5393
      %v5395 = vand.u32 %v444, 4294901760
      %5396 = vmatmul.f32.gmra.mxu0 %v5395
      %v5397 = vpop.f32.mrf.mxu0
      %v5398 = vadd.f32 %v4912, %v5397
      %v5399 = vand.u32 %v447, 4294901760
      %5400 = vmatmul.f32.gmra.mxu0 %v5399
      %v5401 = vpop.f32.mrf.mxu0
      %v5402 = vadd.f32 %v4920, %v5401
      %v5403 = vand.u32 %v450, 4294901760
      %5404 = vmatmul.f32.gmra.mxu0 %v5403
      %v5405 = vpop.f32.mrf.mxu0
      %v5406 = vadd.f32 %v4928, %v5405
      %v5407 = vand.u32 %v453, 4294901760
      %5408 = vmatmul.f32.gmra.mxu0 %v5407
      %v5409 = vpop.f32.mrf.mxu0
      %v5410 = vadd.f32 %v4936, %v5409
      %v5411 = vand.u32 %v456, 4294901760
      %5412 = vmatmul.f32.gmra.mxu0 %v5411
      %v5413 = vpop.f32.mrf.mxu0
      %v5414 = vadd.f32 %v4944, %v5413
      %v5415 = vand.u32 %v459, 4294901760
      %5416 = vmatmul.f32.gmra.mxu0 %v5415
      %v5417 = vpop.f32.mrf.mxu0
      %v5418 = vadd.f32 %v4952, %v5417
      %v5419 = vand.u32 %v462, 4294901760
      %5420 = vmatmul.f32.gmra.mxu0 %v5419
      %v5421 = vpop.f32.mrf.mxu0
      %v5422 = vadd.f32 %v4960, %v5421
      %v5423 = vand.u32 %v465, 4294901760
      %5424 = vmatmul.f32.gmra.mxu0 %v5423
      %v5425 = vpop.f32.mrf.mxu0
      %v5426 = vadd.f32 %v4968, %v5425
      %v5427 = vand.u32 %v468, 4294901760
      %5428 = vmatmul.f32.gmra.mxu0 %v5427
      %v5429 = vpop.f32.mrf.mxu0
      %v5430 = vadd.f32 %v4976, %v5429
      %v5431 = vand.u32 %v471, 4294901760
      %5432 = vmatmul.f32.gmra.mxu0 %v5431
      %v5433 = vpop.f32.mrf.mxu0
      %v5434 = vadd.f32 %v4984, %v5433
      %v5435 = vand.u32 %v474, 4294901760
      %5436 = vmatmul.f32.gmra.mxu0 %v5435
      %v5437 = vpop.f32.mrf.mxu0
      %v5438 = vadd.f32 %v4992, %v5437
      %v5439 = vand.u32 %v477, 4294901760
      %5440 = vmatmul.f32.gmra.mxu0 %v5439
      %v5441 = vpop.f32.mrf.mxu0
      %v5442 = vadd.f32 %v5000, %v5441
      %v5443 = vand.u32 %v480, 4294901760
      %5444 = vmatmul.f32.gmra.mxu0 %v5443
      %v5445 = vpop.f32.mrf.mxu0
      %v5446 = vadd.f32 %v5008, %v5445
      %v5447 = vand.u32 %v483, 4294901760
      %5448 = vmatmul.f32.gmra.mxu0 %v5447
      %v5449 = vpop.f32.mrf.mxu0
      %v5450 = vadd.f32 %v5016, %v5449
      %v5451 = vand.u32 %v486, 4294901760
      %5452 = vmatmul.f32.gmra.mxu0 %v5451
      %v5453 = vpop.f32.mrf.mxu0
      %v5454 = vadd.f32 %v5024, %v5453
      %v5455 = vand.u32 %v489, 4294901760
      %5456 = vmatmul.f32.gmra.mxu0 %v5455
      %v5457 = vpop.f32.mrf.mxu0
      %v5458 = vadd.f32 %v5032, %v5457
      %v5459 = vand.u32 %v492, 4294901760
      %5460 = vmatmul.f32.gmra.mxu0 %v5459
      %v5461 = vpop.f32.mrf.mxu0
      %v5462 = vadd.f32 %v5040, %v5461
      %v5463 = vand.u32 %v495, 4294901760
      %5464 = vmatmul.f32.gmra.mxu0 %v5463
      %v5465 = vpop.f32.mrf.mxu0
      %v5466 = vadd.f32 %v5048, %v5465
      %v5467 = vand.u32 %v498, 4294901760
      %5468 = vmatmul.f32.gmra.mxu0 %v5467
      %v5469 = vpop.f32.mrf.mxu0
      %v5470 = vadd.f32 %v5056, %v5469
      %v5471 = vand.u32 %v501, 4294901760
      %5472 = vmatmul.f32.gmra.mxu0 %v5471
      %v5473 = vpop.f32.mrf.mxu0
      %v5474 = vadd.f32 %v5064, %v5473
      %v5475 = vand.u32 %v504, 4294901760
      %5476 = vmatmul.f32.gmra.mxu0 %v5475
      %v5477 = vpop.f32.mrf.mxu0
      %v5478 = vadd.f32 %v5072, %v5477
      %v5479 = vand.u32 %v507, 4294901760
      %5480 = vmatmul.f32.gmra.mxu0 %v5479
      %v5481 = vpop.f32.mrf.mxu0
      %v5482 = vadd.f32 %v5080, %v5481
      %v5483 = vand.u32 %v510, 4294901760
      %5484 = vmatmul.f32.gmra.mxu0 %v5483
      %v5485 = vpop.f32.mrf.mxu0
      %v5486 = vadd.f32 %v5088, %v5485
      %v5487 = vand.u32 %v513, 4294901760
      %5488 = vmatmul.f32.gmra.mxu0 %v5487
      %v5489 = vpop.f32.mrf.mxu0
      %v5490 = vadd.f32 %v5096, %v5489
      %v5491 = vand.u32 %v516, 4294901760
      %5492 = vmatmul.f32.gmra.mxu0 %v5491
      %v5493 = vpop.f32.mrf.mxu0
      %v5494 = vadd.f32 %v5104, %v5493
      %v5495 = vand.u32 %v519, 4294901760
      %5496 = vmatmul.f32.gmra.mxu0 %v5495
      %v5497 = vpop.f32.mrf.mxu0
      %v5498 = vadd.f32 %v5112, %v5497
      %v5499 = vand.u32 %v522, 4294901760
      %5500 = vmatmul.f32.gmra.mxu0 %v5499
      %v5501 = vpop.f32.mrf.mxu0
      %v5502 = vadd.f32 %v5120, %v5501
      %v5503 = vand.u32 %v525, 4294901760
      %5504 = vmatmul.f32.gmra.mxu0 %v5503
      %v5505 = vpop.f32.mrf.mxu0
      %v5506 = vadd.f32 %v5128, %v5505
      %v5507 = vand.u32 %v528, 4294901760
      %5508 = vmatmul.f32.gmra.mxu0 %v5507
      %v5509 = vpop.f32.mrf.mxu0
      %v5510 = vadd.f32 %v5136, %v5509
      %v5511 = vand.u32 %v531, 4294901760
      %5512 = vmatmul.f32.gmra.mxu0 %v5511
      %v5513 = vpop.f32.mrf.mxu0
      %v5514 = vadd.f32 %v5144, %v5513
      %v5515 = vand.u32 %v534, 4294901760
      %5516 = vmatmul.f32.gmra.mxu0 %v5515
      %v5517 = vpop.f32.mrf.mxu0
      %v5518 = vadd.f32 %v5152, %v5517
      %v5519 = vand.u32 %v537, 4294901760
      %5520 = vmatmul.f32.gmra.mxu0 %v5519
      %v5521 = vpop.f32.mrf.mxu0
      %v5522 = vadd.f32 %v5160, %v5521
      %v5523 = vand.u32 %v540, 4294901760
      %5524 = vmatmul.f32.gmra.mxu0 %v5523
      %v5525 = vpop.f32.mrf.mxu0
      %v5526 = vadd.f32 %v5168, %v5525
      %v5527 = vand.u32 %v543, 4294901760
      %5528 = vmatmul.f32.gmra.mxu0 %v5527
      %v5529 = vpop.f32.mrf.mxu0
      %v5530 = vadd.f32 %v5176, %v5529
      %v5531 = vand.u32 %v546, 4294901760
      %5532 = vmatmul.f32.gmra.mxu0 %v5531
      %v5533 = vpop.f32.mrf.mxu0
      %v5534 = vadd.f32 %v5184, %v5533
      %v5535 = vand.u32 %v549, 4294901760
      %5536 = vmatmul.f32.gmra.mxu0 %v5535
      %v5537 = vpop.f32.mrf.mxu0
      %v5538 = vadd.f32 %v5192, %v5537
      %v5539 = vand.u32 %v552, 4294901760
      %5540 = vmatmul.f32.gmra.mxu0 %v5539
      %v5541 = vpop.f32.mrf.mxu0
      %v5542 = vadd.f32 %v5200, %v5541
      %v5543 = vand.u32 %v555, 4294901760
      %5544 = vmatmul.f32.gmra.mxu0 %v5543
      %v5545 = vpop.f32.mrf.mxu0
      %v5546 = vadd.f32 %v5208, %v5545
      %v5547 = vand.u32 %v558, 4294901760
      %5548 = vmatmul.f32.gmra.mxu0 %v5547
      %v5549 = vpop.f32.mrf.mxu0
      %v5550 = vadd.f32 %v5216, %v5549
      %v5551 = vand.u32 %v561, 4294901760
      %5552 = vmatmul.f32.gmra.mxu0 %v5551
      %v5553 = vpop.f32.mrf.mxu0
      %v5554 = vadd.f32 %v5224, %v5553
      %v5555 = vand.u32 %v564, 4294901760
      %5556 = vmatmul.f32.gmra.mxu0 %v5555
      %v5557 = vpop.f32.mrf.mxu0
      %v5558 = vadd.f32 %v5232, %v5557
      %v5559 = vand.u32 %v567, 4294901760
      %5560 = vmatmul.f32.gmra.mxu0 %v5559
      %v5561 = vpop.f32.mrf.mxu0
      %v5562 = vadd.f32 %v5240, %v5561
      %v5563 = vand.u32 %v570, 4294901760
      %5564 = vmatmul.f32.gmra.mxu0 %v5563
      %v5565 = vpop.f32.mrf.mxu0
      %v5566 = vadd.f32 %v5248, %v5565
      %v5567 = vand.u32 %v573, 4294901760
      %5568 = vmatmul.f32.gmra.mxu0 %v5567
      %v5569 = vpop.f32.mrf.mxu0
      %v5570 = vadd.f32 %v5256, %v5569
      %v5571 = vand.u32 %v576, 4294901760
      %5572 = vmatmul.f32.gmra.mxu0 %v5571
      %v5573 = vpop.f32.mrf.mxu0
      %v5574 = vadd.f32 %v5264, %v5573
      %v5575 = vand.u32 %v579, 4294901760
      %5576 = vmatmul.f32.gmra.mxu0 %v5575
      %v5577 = vpop.f32.mrf.mxu0
      %v5578 = vadd.f32 %v5272, %v5577
      %v5579 = vand.u32 %v582, 4294901760
      %5580 = vmatmul.f32.gmra.mxu0 %v5579
      %v5581 = vpop.f32.mrf.mxu0
      %v5582 = vadd.f32 %v5280, %v5581
      %v5583 = vand.u32 %v585, 4294901760
      %5584 = vmatmul.f32.gmra.mxu0 %v5583
      %v5585 = vpop.f32.mrf.mxu0
      %v5586 = vadd.f32 %v5288, %v5585
      %v5587 = vand.u32 %v588, 4294901760
      %5588 = vmatmul.f32.gmra.mxu0 %v5587
      %v5589 = vpop.f32.mrf.mxu0
      %v5590 = vadd.f32 %v5296, %v5589
      %v5591 = vand.u32 %v591, 4294901760
      %5592 = vmatmul.f32.gmra.mxu0 %v5591
      %v5593 = vpop.f32.mrf.mxu0
      %v5594 = vadd.f32 %v5304, %v5593
      %v5595 = vand.u32 %v594, 4294901760
      %5596 = vmatmul.f32.gmra.mxu0 %v5595
      %v5597 = vpop.f32.mrf.mxu0
      %v5598 = vadd.f32 %v5312, %v5597
      %v5599 = vand.u32 %v597, 4294901760
      %5600 = vmatmul.f32.gmra.mxu0 %v5599
      %v5601 = vpop.f32.mrf.mxu0
      %v5602 = vadd.f32 %v5320, %v5601
      %v5603 = vand.u32 %v600, 4294901760
      %5604 = vmatmul.f32.gmra.mxu0 %v5603
      %v5605 = vpop.f32.mrf.mxu0
      %v5606 = vadd.f32 %v5328, %v5605
      %5607 = vdwg.mxu0
      %5608 = vmatpush.msra.mxu0 0.0
      %5609 = vmatpush.msra.mxu0 0.0
      %5610 = vmatpush.msra.mxu0 0.0
      %5611 = vmatpush.msra.mxu0 0.0
      %5612 = vmatpush.msra.mxu0 0.0
      %5613 = vmatpush.msra.mxu0 0.0
      %5614 = vmatpush.msra.mxu0 0.0
      %5615 = vmatpush.msra.mxu0 0.0
      %5616 = vmatpush.msra.mxu0 0.0
      %5617 = vmatpush.msra.mxu0 0.0
      %5618 = vmatpush.msra.mxu0 0.0
      %5619 = vmatpush.msra.mxu0 0.0
      %5620 = vmatpush.msra.mxu0 0.0
      %5621 = vmatpush.msra.mxu0 0.0
      %5622 = vmatpush.msra.mxu0 0.0
      %v5623 = vand.u32 %v271, 4294901760
      %v5624 = vsub.f32 %v271, %v5623
      %5625 = vmatpush.msra.mxu0 %v5624
      %v5626 = vand.u32 %v411, 4294901760
      %v5627 = vsub.f32 %v411, %v5626
      %5628 = vmatmul.f32.gmra.mxu0 %v5627
      %v5629 = vpop.f32.mrf.mxu0
      %v5630 = vadd.f32 %v5354, %v5629
      %v5631 = vand.u32 %v414, 4294901760
      %v5632 = vsub.f32 %v414, %v5631
      %5633 = vmatmul.f32.gmra.mxu0 %v5632
      %v5634 = vpop.f32.mrf.mxu0
      %v5635 = vadd.f32 %v5358, %v5634
      %v5636 = vand.u32 %v417, 4294901760
      %v5637 = vsub.f32 %v417, %v5636
      %5638 = vmatmul.f32.gmra.mxu0 %v5637
      %v5639 = vpop.f32.mrf.mxu0
      %v5640 = vadd.f32 %v5362, %v5639
      %v5641 = vand.u32 %v420, 4294901760
      %v5642 = vsub.f32 %v420, %v5641
      %5643 = vmatmul.f32.gmra.mxu0 %v5642
      %v5644 = vpop.f32.mrf.mxu0
      %v5645 = vadd.f32 %v5366, %v5644
      %v5646 = vand.u32 %v423, 4294901760
      %v5647 = vsub.f32 %v423, %v5646
      %5648 = vmatmul.f32.gmra.mxu0 %v5647
      %v5649 = vpop.f32.mrf.mxu0
      %v5650 = vadd.f32 %v5370, %v5649
      %v5651 = vand.u32 %v426, 4294901760
      %v5652 = vsub.f32 %v426, %v5651
      %5653 = vmatmul.f32.gmra.mxu0 %v5652
      %v5654 = vpop.f32.mrf.mxu0
      %v5655 = vadd.f32 %v5374, %v5654
      %v5656 = vand.u32 %v429, 4294901760
      %v5657 = vsub.f32 %v429, %v5656
      %5658 = vmatmul.f32.gmra.mxu0 %v5657
      %v5659 = vpop.f32.mrf.mxu0
      %v5660 = vadd.f32 %v5378, %v5659
      %v5661 = vand.u32 %v432, 4294901760
      %v5662 = vsub.f32 %v432, %v5661
      %5663 = vmatmul.f32.gmra.mxu0 %v5662
      %v5664 = vpop.f32.mrf.mxu0
      %v5665 = vadd.f32 %v5382, %v5664
      %v5666 = vand.u32 %v435, 4294901760
      %v5667 = vsub.f32 %v435, %v5666
      %5668 = vmatmul.f32.gmra.mxu0 %v5667
      %v5669 = vpop.f32.mrf.mxu0
      %v5670 = vadd.f32 %v5386, %v5669
      %v5671 = vand.u32 %v438, 4294901760
      %v5672 = vsub.f32 %v438, %v5671
      %5673 = vmatmul.f32.gmra.mxu0 %v5672
      %v5674 = vpop.f32.mrf.mxu0
      %v5675 = vadd.f32 %v5390, %v5674
      %v5676 = vand.u32 %v441, 4294901760
      %v5677 = vsub.f32 %v441, %v5676
      %5678 = vmatmul.f32.gmra.mxu0 %v5677
      %v5679 = vpop.f32.mrf.mxu0
      %v5680 = vadd.f32 %v5394, %v5679
      %v5681 = vand.u32 %v444, 4294901760
      %v5682 = vsub.f32 %v444, %v5681
      %5683 = vmatmul.f32.gmra.mxu0 %v5682
      %v5684 = vpop.f32.mrf.mxu0
      %v5685 = vadd.f32 %v5398, %v5684
      %v5686 = vand.u32 %v447, 4294901760
      %v5687 = vsub.f32 %v447, %v5686
      %5688 = vmatmul.f32.gmra.mxu0 %v5687
      %v5689 = vpop.f32.mrf.mxu0
      %v5690 = vadd.f32 %v5402, %v5689
      %v5691 = vand.u32 %v450, 4294901760
      %v5692 = vsub.f32 %v450, %v5691
      %5693 = vmatmul.f32.gmra.mxu0 %v5692
      %v5694 = vpop.f32.mrf.mxu0
      %v5695 = vadd.f32 %v5406, %v5694
      %v5696 = vand.u32 %v453, 4294901760
      %v5697 = vsub.f32 %v453, %v5696
      %5698 = vmatmul.f32.gmra.mxu0 %v5697
      %v5699 = vpop.f32.mrf.mxu0
      %v5700 = vadd.f32 %v5410, %v5699
      %v5701 = vand.u32 %v456, 4294901760
      %v5702 = vsub.f32 %v456, %v5701
      %5703 = vmatmul.f32.gmra.mxu0 %v5702
      %v5704 = vpop.f32.mrf.mxu0
      %v5705 = vadd.f32 %v5414, %v5704
      %v5706 = vand.u32 %v459, 4294901760
      %v5707 = vsub.f32 %v459, %v5706
      %5708 = vmatmul.f32.gmra.mxu0 %v5707
      %v5709 = vpop.f32.mrf.mxu0
      %v5710 = vadd.f32 %v5418, %v5709
      %v5711 = vand.u32 %v462, 4294901760
      %v5712 = vsub.f32 %v462, %v5711
      %5713 = vmatmul.f32.gmra.mxu0 %v5712
      %v5714 = vpop.f32.mrf.mxu0
      %v5715 = vadd.f32 %v5422, %v5714
      %v5716 = vand.u32 %v465, 4294901760
      %v5717 = vsub.f32 %v465, %v5716
      %5718 = vmatmul.f32.gmra.mxu0 %v5717
      %v5719 = vpop.f32.mrf.mxu0
      %v5720 = vadd.f32 %v5426, %v5719
      %v5721 = vand.u32 %v468, 4294901760
      %v5722 = vsub.f32 %v468, %v5721
      %5723 = vmatmul.f32.gmra.mxu0 %v5722
      %v5724 = vpop.f32.mrf.mxu0
      %v5725 = vadd.f32 %v5430, %v5724
      %v5726 = vand.u32 %v471, 4294901760
      %v5727 = vsub.f32 %v471, %v5726
      %5728 = vmatmul.f32.gmra.mxu0 %v5727
      %v5729 = vpop.f32.mrf.mxu0
      %v5730 = vadd.f32 %v5434, %v5729
      %v5731 = vand.u32 %v474, 4294901760
      %v5732 = vsub.f32 %v474, %v5731
      %5733 = vmatmul.f32.gmra.mxu0 %v5732
      %v5734 = vpop.f32.mrf.mxu0
      %v5735 = vadd.f32 %v5438, %v5734
      %v5736 = vand.u32 %v477, 4294901760
      %v5737 = vsub.f32 %v477, %v5736
      %5738 = vmatmul.f32.gmra.mxu0 %v5737
      %v5739 = vpop.f32.mrf.mxu0
      %v5740 = vadd.f32 %v5442, %v5739
      %v5741 = vand.u32 %v480, 4294901760
      %v5742 = vsub.f32 %v480, %v5741
      %5743 = vmatmul.f32.gmra.mxu0 %v5742
      %v5744 = vpop.f32.mrf.mxu0
      %v5745 = vadd.f32 %v5446, %v5744
      %v5746 = vand.u32 %v483, 4294901760
      %v5747 = vsub.f32 %v483, %v5746
      %5748 = vmatmul.f32.gmra.mxu0 %v5747
      %v5749 = vpop.f32.mrf.mxu0
      %v5750 = vadd.f32 %v5450, %v5749
      %v5751 = vand.u32 %v486, 4294901760
      %v5752 = vsub.f32 %v486, %v5751
      %5753 = vmatmul.f32.gmra.mxu0 %v5752
      %v5754 = vpop.f32.mrf.mxu0
      %v5755 = vadd.f32 %v5454, %v5754
      %v5756 = vand.u32 %v489, 4294901760
      %v5757 = vsub.f32 %v489, %v5756
      %5758 = vmatmul.f32.gmra.mxu0 %v5757
      %v5759 = vpop.f32.mrf.mxu0
      %v5760 = vadd.f32 %v5458, %v5759
      %v5761 = vand.u32 %v492, 4294901760
      %v5762 = vsub.f32 %v492, %v5761
      %5763 = vmatmul.f32.gmra.mxu0 %v5762
      %v5764 = vpop.f32.mrf.mxu0
      %v5765 = vadd.f32 %v5462, %v5764
      %v5766 = vand.u32 %v495, 4294901760
      %v5767 = vsub.f32 %v495, %v5766
      %5768 = vmatmul.f32.gmra.mxu0 %v5767
      %v5769 = vpop.f32.mrf.mxu0
      %v5770 = vadd.f32 %v5466, %v5769
      %v5771 = vand.u32 %v498, 4294901760
      %v5772 = vsub.f32 %v498, %v5771
      %5773 = vmatmul.f32.gmra.mxu0 %v5772
      %v5774 = vpop.f32.mrf.mxu0
      %v5775 = vadd.f32 %v5470, %v5774
      %v5776 = vand.u32 %v501, 4294901760
      %v5777 = vsub.f32 %v501, %v5776
      %5778 = vmatmul.f32.gmra.mxu0 %v5777
      %v5779 = vpop.f32.mrf.mxu0
      %v5780 = vadd.f32 %v5474, %v5779
      %v5781 = vand.u32 %v504, 4294901760
      %v5782 = vsub.f32 %v504, %v5781
      %5783 = vmatmul.f32.gmra.mxu0 %v5782
      %v5784 = vpop.f32.mrf.mxu0
      %v5785 = vadd.f32 %v5478, %v5784
      %v5786 = vand.u32 %v507, 4294901760
      %v5787 = vsub.f32 %v507, %v5786
      %5788 = vmatmul.f32.gmra.mxu0 %v5787
      %v5789 = vpop.f32.mrf.mxu0
      %v5790 = vadd.f32 %v5482, %v5789
      %v5791 = vand.u32 %v510, 4294901760
      %v5792 = vsub.f32 %v510, %v5791
      %5793 = vmatmul.f32.gmra.mxu0 %v5792
      %v5794 = vpop.f32.mrf.mxu0
      %v5795 = vadd.f32 %v5486, %v5794
      %v5796 = vand.u32 %v513, 4294901760
      %v5797 = vsub.f32 %v513, %v5796
      %5798 = vmatmul.f32.gmra.mxu0 %v5797
      %v5799 = vpop.f32.mrf.mxu0
      %v5800 = vadd.f32 %v5490, %v5799
      %v5801 = vand.u32 %v516, 4294901760
      %v5802 = vsub.f32 %v516, %v5801
      %5803 = vmatmul.f32.gmra.mxu0 %v5802
      %v5804 = vpop.f32.mrf.mxu0
      %v5805 = vadd.f32 %v5494, %v5804
      %v5806 = vand.u32 %v519, 4294901760
      %v5807 = vsub.f32 %v519, %v5806
      %5808 = vmatmul.f32.gmra.mxu0 %v5807
      %v5809 = vpop.f32.mrf.mxu0
      %v5810 = vadd.f32 %v5498, %v5809
      %v5811 = vand.u32 %v522, 4294901760
      %v5812 = vsub.f32 %v522, %v5811
      %5813 = vmatmul.f32.gmra.mxu0 %v5812
      %v5814 = vpop.f32.mrf.mxu0
      %v5815 = vadd.f32 %v5502, %v5814
      %v5816 = vand.u32 %v525, 4294901760
      %v5817 = vsub.f32 %v525, %v5816
      %5818 = vmatmul.f32.gmra.mxu0 %v5817
      %v5819 = vpop.f32.mrf.mxu0
      %v5820 = vadd.f32 %v5506, %v5819
      %v5821 = vand.u32 %v528, 4294901760
      %v5822 = vsub.f32 %v528, %v5821
      %5823 = vmatmul.f32.gmra.mxu0 %v5822
      %v5824 = vpop.f32.mrf.mxu0
      %v5825 = vadd.f32 %v5510, %v5824
      %v5826 = vand.u32 %v531, 4294901760
      %v5827 = vsub.f32 %v531, %v5826
      %5828 = vmatmul.f32.gmra.mxu0 %v5827
      %v5829 = vpop.f32.mrf.mxu0
      %v5830 = vadd.f32 %v5514, %v5829
      %v5831 = vand.u32 %v534, 4294901760
      %v5832 = vsub.f32 %v534, %v5831
      %5833 = vmatmul.f32.gmra.mxu0 %v5832
      %v5834 = vpop.f32.mrf.mxu0
      %v5835 = vadd.f32 %v5518, %v5834
      %v5836 = vand.u32 %v537, 4294901760
      %v5837 = vsub.f32 %v537, %v5836
      %5838 = vmatmul.f32.gmra.mxu0 %v5837
      %v5839 = vpop.f32.mrf.mxu0
      %v5840 = vadd.f32 %v5522, %v5839
      %v5841 = vand.u32 %v540, 4294901760
      %v5842 = vsub.f32 %v540, %v5841
      %5843 = vmatmul.f32.gmra.mxu0 %v5842
      %v5844 = vpop.f32.mrf.mxu0
      %v5845 = vadd.f32 %v5526, %v5844
      %v5846 = vand.u32 %v543, 4294901760
      %v5847 = vsub.f32 %v543, %v5846
      %5848 = vmatmul.f32.gmra.mxu0 %v5847
      %v5849 = vpop.f32.mrf.mxu0
      %v5850 = vadd.f32 %v5530, %v5849
      %v5851 = vand.u32 %v546, 4294901760
      %v5852 = vsub.f32 %v546, %v5851
      %5853 = vmatmul.f32.gmra.mxu0 %v5852
      %v5854 = vpop.f32.mrf.mxu0
      %v5855 = vadd.f32 %v5534, %v5854
      %v5856 = vand.u32 %v549, 4294901760
      %v5857 = vsub.f32 %v549, %v5856
      %5858 = vmatmul.f32.gmra.mxu0 %v5857
      %v5859 = vpop.f32.mrf.mxu0
      %v5860 = vadd.f32 %v5538, %v5859
      %v5861 = vand.u32 %v552, 4294901760
      %v5862 = vsub.f32 %v552, %v5861
      %5863 = vmatmul.f32.gmra.mxu0 %v5862
      %v5864 = vpop.f32.mrf.mxu0
      %v5865 = vadd.f32 %v5542, %v5864
      %v5866 = vand.u32 %v555, 4294901760
      %v5867 = vsub.f32 %v555, %v5866
      %5868 = vmatmul.f32.gmra.mxu0 %v5867
      %v5869 = vpop.f32.mrf.mxu0
      %v5870 = vadd.f32 %v5546, %v5869
      %v5871 = vand.u32 %v558, 4294901760
      %v5872 = vsub.f32 %v558, %v5871
      %5873 = vmatmul.f32.gmra.mxu0 %v5872
      %v5874 = vpop.f32.mrf.mxu0
      %v5875 = vadd.f32 %v5550, %v5874
      %v5876 = vand.u32 %v561, 4294901760
      %v5877 = vsub.f32 %v561, %v5876
      %5878 = vmatmul.f32.gmra.mxu0 %v5877
      %v5879 = vpop.f32.mrf.mxu0
      %v5880 = vadd.f32 %v5554, %v5879
      %v5881 = vand.u32 %v564, 4294901760
      %v5882 = vsub.f32 %v564, %v5881
      %5883 = vmatmul.f32.gmra.mxu0 %v5882
      %v5884 = vpop.f32.mrf.mxu0
      %v5885 = vadd.f32 %v5558, %v5884
      %v5886 = vand.u32 %v567, 4294901760
      %v5887 = vsub.f32 %v567, %v5886
      %5888 = vmatmul.f32.gmra.mxu0 %v5887
      %v5889 = vpop.f32.mrf.mxu0
      %v5890 = vadd.f32 %v5562, %v5889
      %v5891 = vand.u32 %v570, 4294901760
      %v5892 = vsub.f32 %v570, %v5891
      %5893 = vmatmul.f32.gmra.mxu0 %v5892
      %v5894 = vpop.f32.mrf.mxu0
      %v5895 = vadd.f32 %v5566, %v5894
      %v5896 = vand.u32 %v573, 4294901760
      %v5897 = vsub.f32 %v573, %v5896
      %5898 = vmatmul.f32.gmra.mxu0 %v5897
      %v5899 = vpop.f32.mrf.mxu0
      %v5900 = vadd.f32 %v5570, %v5899
      %v5901 = vand.u32 %v576, 4294901760
      %v5902 = vsub.f32 %v576, %v5901
      %5903 = vmatmul.f32.gmra.mxu0 %v5902
      %v5904 = vpop.f32.mrf.mxu0
      %v5905 = vadd.f32 %v5574, %v5904
      %v5906 = vand.u32 %v579, 4294901760
      %v5907 = vsub.f32 %v579, %v5906
      %5908 = vmatmul.f32.gmra.mxu0 %v5907
      %v5909 = vpop.f32.mrf.mxu0
      %v5910 = vadd.f32 %v5578, %v5909
      %v5911 = vand.u32 %v582, 4294901760
      %v5912 = vsub.f32 %v582, %v5911
      %5913 = vmatmul.f32.gmra.mxu0 %v5912
      %v5914 = vpop.f32.mrf.mxu0
      %v5915 = vadd.f32 %v5582, %v5914
      %v5916 = vand.u32 %v585, 4294901760
      %v5917 = vsub.f32 %v585, %v5916
      %5918 = vmatmul.f32.gmra.mxu0 %v5917
      %v5919 = vpop.f32.mrf.mxu0
      %v5920 = vadd.f32 %v5586, %v5919
      %v5921 = vand.u32 %v588, 4294901760
      %v5922 = vsub.f32 %v588, %v5921
      %5923 = vmatmul.f32.gmra.mxu0 %v5922
      %v5924 = vpop.f32.mrf.mxu0
      %v5925 = vadd.f32 %v5590, %v5924
      %v5926 = vand.u32 %v591, 4294901760
      %v5927 = vsub.f32 %v591, %v5926
      %5928 = vmatmul.f32.gmra.mxu0 %v5927
      %v5929 = vpop.f32.mrf.mxu0
      %v5930 = vadd.f32 %v5594, %v5929
      %v5931 = vand.u32 %v594, 4294901760
      %v5932 = vsub.f32 %v594, %v5931
      %5933 = vmatmul.f32.gmra.mxu0 %v5932
      %v5934 = vpop.f32.mrf.mxu0
      %v5935 = vadd.f32 %v5598, %v5934
      %v5936 = vand.u32 %v597, 4294901760
      %v5937 = vsub.f32 %v597, %v5936
      %5938 = vmatmul.f32.gmra.mxu0 %v5937
      %v5939 = vpop.f32.mrf.mxu0
      %v5940 = vadd.f32 %v5602, %v5939
      %v5941 = vand.u32 %v600, 4294901760
      %v5942 = vsub.f32 %v600, %v5941
      %5943 = vmatmul.f32.gmra.mxu0 %v5942
      %v5944 = vpop.f32.mrf.mxu0
      %v5945 = vadd.f32 %v5606, %v5944
      %5946 = vdwg.mxu0
      %5947 = vmatpush.msra.mxu0 0.0
      %5948 = vmatpush.msra.mxu0 0.0
      %5949 = vmatpush.msra.mxu0 0.0
      %5950 = vmatpush.msra.mxu0 0.0
      %5951 = vmatpush.msra.mxu0 0.0
      %5952 = vmatpush.msra.mxu0 0.0
      %5953 = vmatpush.msra.mxu0 0.0
      %5954 = vmatpush.msra.mxu0 0.0
      %5955 = vmatpush.msra.mxu0 0.0
      %5956 = vmatpush.msra.mxu0 0.0
      %5957 = vmatpush.msra.mxu0 0.0
      %5958 = vmatpush.msra.mxu0 0.0
      %5959 = vmatpush.msra.mxu0 0.0
      %5960 = vmatpush.msra.mxu0 0.0
      %5961 = vmatpush.msra.mxu0 0.0
      %v5962 = vand.u32 %v271, 4294901760
      %5963 = vmatpush.msra.mxu0 %v5962
      %v5964 = vand.u32 %v411, 4294901760
      %v5965 = vsub.f32 %v411, %v5964
      %v5966 = vand.u32 %v5965, 4294901760
      %5967 = vmatmul.f32.gmra.mxu0 %v5966
      %v5968 = vpop.f32.mrf.mxu0
      %v5969 = vadd.f32 %v5630, %v5968
      %v5970 = vand.u32 %v414, 4294901760
      %v5971 = vsub.f32 %v414, %v5970
      %v5972 = vand.u32 %v5971, 4294901760
      %5973 = vmatmul.f32.gmra.mxu0 %v5972
      %v5974 = vpop.f32.mrf.mxu0
      %v5975 = vadd.f32 %v5635, %v5974
      %v5976 = vand.u32 %v417, 4294901760
      %v5977 = vsub.f32 %v417, %v5976
      %v5978 = vand.u32 %v5977, 4294901760
      %5979 = vmatmul.f32.gmra.mxu0 %v5978
      %v5980 = vpop.f32.mrf.mxu0
      %v5981 = vadd.f32 %v5640, %v5980
      %v5982 = vand.u32 %v420, 4294901760
      %v5983 = vsub.f32 %v420, %v5982
      %v5984 = vand.u32 %v5983, 4294901760
      %5985 = vmatmul.f32.gmra.mxu0 %v5984
      %v5986 = vpop.f32.mrf.mxu0
      %v5987 = vadd.f32 %v5645, %v5986
      %v5988 = vand.u32 %v423, 4294901760
      %v5989 = vsub.f32 %v423, %v5988
      %v5990 = vand.u32 %v5989, 4294901760
      %5991 = vmatmul.f32.gmra.mxu0 %v5990
      %v5992 = vpop.f32.mrf.mxu0
      %v5993 = vadd.f32 %v5650, %v5992
      %v5994 = vand.u32 %v426, 4294901760
      %v5995 = vsub.f32 %v426, %v5994
      %v5996 = vand.u32 %v5995, 4294901760
      %5997 = vmatmul.f32.gmra.mxu0 %v5996
      %v5998 = vpop.f32.mrf.mxu0
      %v5999 = vadd.f32 %v5655, %v5998
      %v6000 = vand.u32 %v429, 4294901760
      %v6001 = vsub.f32 %v429, %v6000
      %v6002 = vand.u32 %v6001, 4294901760
      %6003 = vmatmul.f32.gmra.mxu0 %v6002
      %v6004 = vpop.f32.mrf.mxu0
      %v6005 = vadd.f32 %v5660, %v6004
      %v6006 = vand.u32 %v432, 4294901760
      %v6007 = vsub.f32 %v432, %v6006
      %v6008 = vand.u32 %v6007, 4294901760
      %6009 = vmatmul.f32.gmra.mxu0 %v6008
      %v6010 = vpop.f32.mrf.mxu0
      %v6011 = vadd.f32 %v5665, %v6010
      %v6012 = vand.u32 %v435, 4294901760
      %v6013 = vsub.f32 %v435, %v6012
      %v6014 = vand.u32 %v6013, 4294901760
      %6015 = vmatmul.f32.gmra.mxu0 %v6014
      %v6016 = vpop.f32.mrf.mxu0
      %v6017 = vadd.f32 %v5670, %v6016
      %v6018 = vand.u32 %v438, 4294901760
      %v6019 = vsub.f32 %v438, %v6018
      %v6020 = vand.u32 %v6019, 4294901760
      %6021 = vmatmul.f32.gmra.mxu0 %v6020
      %v6022 = vpop.f32.mrf.mxu0
      %v6023 = vadd.f32 %v5675, %v6022
      %v6024 = vand.u32 %v441, 4294901760
      %v6025 = vsub.f32 %v441, %v6024
      %v6026 = vand.u32 %v6025, 4294901760
      %6027 = vmatmul.f32.gmra.mxu0 %v6026
      %v6028 = vpop.f32.mrf.mxu0
      %v6029 = vadd.f32 %v5680, %v6028
      %v6030 = vand.u32 %v444, 4294901760
      %v6031 = vsub.f32 %v444, %v6030
      %v6032 = vand.u32 %v6031, 4294901760
      %6033 = vmatmul.f32.gmra.mxu0 %v6032
      %v6034 = vpop.f32.mrf.mxu0
      %v6035 = vadd.f32 %v5685, %v6034
      %v6036 = vand.u32 %v447, 4294901760
      %v6037 = vsub.f32 %v447, %v6036
      %v6038 = vand.u32 %v6037, 4294901760
      %6039 = vmatmul.f32.gmra.mxu0 %v6038
      %v6040 = vpop.f32.mrf.mxu0
      %v6041 = vadd.f32 %v5690, %v6040
      %v6042 = vand.u32 %v450, 4294901760
      %v6043 = vsub.f32 %v450, %v6042
      %v6044 = vand.u32 %v6043, 4294901760
      %6045 = vmatmul.f32.gmra.mxu0 %v6044
      %v6046 = vpop.f32.mrf.mxu0
      %v6047 = vadd.f32 %v5695, %v6046
      %v6048 = vand.u32 %v453, 4294901760
      %v6049 = vsub.f32 %v453, %v6048
      %v6050 = vand.u32 %v6049, 4294901760
      %6051 = vmatmul.f32.gmra.mxu0 %v6050
      %v6052 = vpop.f32.mrf.mxu0
      %v6053 = vadd.f32 %v5700, %v6052
      %v6054 = vand.u32 %v456, 4294901760
      %v6055 = vsub.f32 %v456, %v6054
      %v6056 = vand.u32 %v6055, 4294901760
      %6057 = vmatmul.f32.gmra.mxu0 %v6056
      %v6058 = vpop.f32.mrf.mxu0
      %v6059 = vadd.f32 %v5705, %v6058
      %v6060 = vand.u32 %v459, 4294901760
      %v6061 = vsub.f32 %v459, %v6060
      %v6062 = vand.u32 %v6061, 4294901760
      %6063 = vmatmul.f32.gmra.mxu0 %v6062
      %v6064 = vpop.f32.mrf.mxu0
      %v6065 = vadd.f32 %v5710, %v6064
      %v6066 = vand.u32 %v462, 4294901760
      %v6067 = vsub.f32 %v462, %v6066
      %v6068 = vand.u32 %v6067, 4294901760
      %6069 = vmatmul.f32.gmra.mxu0 %v6068
      %v6070 = vpop.f32.mrf.mxu0
      %v6071 = vadd.f32 %v5715, %v6070
      %v6072 = vand.u32 %v465, 4294901760
      %v6073 = vsub.f32 %v465, %v6072
      %v6074 = vand.u32 %v6073, 4294901760
      %6075 = vmatmul.f32.gmra.mxu0 %v6074
      %v6076 = vpop.f32.mrf.mxu0
      %v6077 = vadd.f32 %v5720, %v6076
      %v6078 = vand.u32 %v468, 4294901760
      %v6079 = vsub.f32 %v468, %v6078
      %v6080 = vand.u32 %v6079, 4294901760
      %6081 = vmatmul.f32.gmra.mxu0 %v6080
      %v6082 = vpop.f32.mrf.mxu0
      %v6083 = vadd.f32 %v5725, %v6082
      %v6084 = vand.u32 %v471, 4294901760
      %v6085 = vsub.f32 %v471, %v6084
      %v6086 = vand.u32 %v6085, 4294901760
      %6087 = vmatmul.f32.gmra.mxu0 %v6086
      %v6088 = vpop.f32.mrf.mxu0
      %v6089 = vadd.f32 %v5730, %v6088
      %v6090 = vand.u32 %v474, 4294901760
      %v6091 = vsub.f32 %v474, %v6090
      %v6092 = vand.u32 %v6091, 4294901760
      %6093 = vmatmul.f32.gmra.mxu0 %v6092
      %v6094 = vpop.f32.mrf.mxu0
      %v6095 = vadd.f32 %v5735, %v6094
      %v6096 = vand.u32 %v477, 4294901760
      %v6097 = vsub.f32 %v477, %v6096
      %v6098 = vand.u32 %v6097, 4294901760
      %6099 = vmatmul.f32.gmra.mxu0 %v6098
      %v6100 = vpop.f32.mrf.mxu0
      %v6101 = vadd.f32 %v5740, %v6100
      %v6102 = vand.u32 %v480, 4294901760
      %v6103 = vsub.f32 %v480, %v6102
      %v6104 = vand.u32 %v6103, 4294901760
      %6105 = vmatmul.f32.gmra.mxu0 %v6104
      %v6106 = vpop.f32.mrf.mxu0
      %v6107 = vadd.f32 %v5745, %v6106
      %v6108 = vand.u32 %v483, 4294901760
      %v6109 = vsub.f32 %v483, %v6108
      %v6110 = vand.u32 %v6109, 4294901760
      %6111 = vmatmul.f32.gmra.mxu0 %v6110
      %v6112 = vpop.f32.mrf.mxu0
      %v6113 = vadd.f32 %v5750, %v6112
      %v6114 = vand.u32 %v486, 4294901760
      %v6115 = vsub.f32 %v486, %v6114
      %v6116 = vand.u32 %v6115, 4294901760
      %6117 = vmatmul.f32.gmra.mxu0 %v6116
      %v6118 = vpop.f32.mrf.mxu0
      %v6119 = vadd.f32 %v5755, %v6118
      %v6120 = vand.u32 %v489, 4294901760
      %v6121 = vsub.f32 %v489, %v6120
      %v6122 = vand.u32 %v6121, 4294901760
      %6123 = vmatmul.f32.gmra.mxu0 %v6122
      %v6124 = vpop.f32.mrf.mxu0
      %v6125 = vadd.f32 %v5760, %v6124
      %v6126 = vand.u32 %v492, 4294901760
      %v6127 = vsub.f32 %v492, %v6126
      %v6128 = vand.u32 %v6127, 4294901760
      %6129 = vmatmul.f32.gmra.mxu0 %v6128
      %v6130 = vpop.f32.mrf.mxu0
      %v6131 = vadd.f32 %v5765, %v6130
      %v6132 = vand.u32 %v495, 4294901760
      %v6133 = vsub.f32 %v495, %v6132
      %v6134 = vand.u32 %v6133, 4294901760
      %6135 = vmatmul.f32.gmra.mxu0 %v6134
      %v6136 = vpop.f32.mrf.mxu0
      %v6137 = vadd.f32 %v5770, %v6136
      %v6138 = vand.u32 %v498, 4294901760
      %v6139 = vsub.f32 %v498, %v6138
      %v6140 = vand.u32 %v6139, 4294901760
      %6141 = vmatmul.f32.gmra.mxu0 %v6140
      %v6142 = vpop.f32.mrf.mxu0
      %v6143 = vadd.f32 %v5775, %v6142
      %v6144 = vand.u32 %v501, 4294901760
      %v6145 = vsub.f32 %v501, %v6144
      %v6146 = vand.u32 %v6145, 4294901760
      %6147 = vmatmul.f32.gmra.mxu0 %v6146
      %v6148 = vpop.f32.mrf.mxu0
      %v6149 = vadd.f32 %v5780, %v6148
      %v6150 = vand.u32 %v504, 4294901760
      %v6151 = vsub.f32 %v504, %v6150
      %v6152 = vand.u32 %v6151, 4294901760
      %6153 = vmatmul.f32.gmra.mxu0 %v6152
      %v6154 = vpop.f32.mrf.mxu0
      %v6155 = vadd.f32 %v5785, %v6154
      %v6156 = vand.u32 %v507, 4294901760
      %v6157 = vsub.f32 %v507, %v6156
      %v6158 = vand.u32 %v6157, 4294901760
      %6159 = vmatmul.f32.gmra.mxu0 %v6158
      %v6160 = vpop.f32.mrf.mxu0
      %v6161 = vadd.f32 %v5790, %v6160
      %v6162 = vand.u32 %v510, 4294901760
      %v6163 = vsub.f32 %v510, %v6162
      %v6164 = vand.u32 %v6163, 4294901760
      %6165 = vmatmul.f32.gmra.mxu0 %v6164
      %v6166 = vpop.f32.mrf.mxu0
      %v6167 = vadd.f32 %v5795, %v6166
      %v6168 = vand.u32 %v513, 4294901760
      %v6169 = vsub.f32 %v513, %v6168
      %v6170 = vand.u32 %v6169, 4294901760
      %6171 = vmatmul.f32.gmra.mxu0 %v6170
      %v6172 = vpop.f32.mrf.mxu0
      %v6173 = vadd.f32 %v5800, %v6172
      %v6174 = vand.u32 %v516, 4294901760
      %v6175 = vsub.f32 %v516, %v6174
      %v6176 = vand.u32 %v6175, 4294901760
      %6177 = vmatmul.f32.gmra.mxu0 %v6176
      %v6178 = vpop.f32.mrf.mxu0
      %v6179 = vadd.f32 %v5805, %v6178
      %v6180 = vand.u32 %v519, 4294901760
      %v6181 = vsub.f32 %v519, %v6180
      %v6182 = vand.u32 %v6181, 4294901760
      %6183 = vmatmul.f32.gmra.mxu0 %v6182
      %v6184 = vpop.f32.mrf.mxu0
      %v6185 = vadd.f32 %v5810, %v6184
      %v6186 = vand.u32 %v522, 4294901760
      %v6187 = vsub.f32 %v522, %v6186
      %v6188 = vand.u32 %v6187, 4294901760
      %6189 = vmatmul.f32.gmra.mxu0 %v6188
      %v6190 = vpop.f32.mrf.mxu0
      %v6191 = vadd.f32 %v5815, %v6190
      %v6192 = vand.u32 %v525, 4294901760
      %v6193 = vsub.f32 %v525, %v6192
      %v6194 = vand.u32 %v6193, 4294901760
      %6195 = vmatmul.f32.gmra.mxu0 %v6194
      %v6196 = vpop.f32.mrf.mxu0
      %v6197 = vadd.f32 %v5820, %v6196
      %v6198 = vand.u32 %v528, 4294901760
      %v6199 = vsub.f32 %v528, %v6198
      %v6200 = vand.u32 %v6199, 4294901760
      %6201 = vmatmul.f32.gmra.mxu0 %v6200
      %v6202 = vpop.f32.mrf.mxu0
      %v6203 = vadd.f32 %v5825, %v6202
      %v6204 = vand.u32 %v531, 4294901760
      %v6205 = vsub.f32 %v531, %v6204
      %v6206 = vand.u32 %v6205, 4294901760
      %6207 = vmatmul.f32.gmra.mxu0 %v6206
      %v6208 = vpop.f32.mrf.mxu0
      %v6209 = vadd.f32 %v5830, %v6208
      %v6210 = vand.u32 %v534, 4294901760
      %v6211 = vsub.f32 %v534, %v6210
      %v6212 = vand.u32 %v6211, 4294901760
      %6213 = vmatmul.f32.gmra.mxu0 %v6212
      %v6214 = vpop.f32.mrf.mxu0
      %v6215 = vadd.f32 %v5835, %v6214
      %v6216 = vand.u32 %v537, 4294901760
      %v6217 = vsub.f32 %v537, %v6216
      %v6218 = vand.u32 %v6217, 4294901760
      %6219 = vmatmul.f32.gmra.mxu0 %v6218
      %v6220 = vpop.f32.mrf.mxu0
      %v6221 = vadd.f32 %v5840, %v6220
      %v6222 = vand.u32 %v540, 4294901760
      %v6223 = vsub.f32 %v540, %v6222
      %v6224 = vand.u32 %v6223, 4294901760
      %6225 = vmatmul.f32.gmra.mxu0 %v6224
      %v6226 = vpop.f32.mrf.mxu0
      %v6227 = vadd.f32 %v5845, %v6226
      %v6228 = vand.u32 %v543, 4294901760
      %v6229 = vsub.f32 %v543, %v6228
      %v6230 = vand.u32 %v6229, 4294901760
      %6231 = vmatmul.f32.gmra.mxu0 %v6230
      %v6232 = vpop.f32.mrf.mxu0
      %v6233 = vadd.f32 %v5850, %v6232
      %v6234 = vand.u32 %v546, 4294901760
      %v6235 = vsub.f32 %v546, %v6234
      %v6236 = vand.u32 %v6235, 4294901760
      %6237 = vmatmul.f32.gmra.mxu0 %v6236
      %v6238 = vpop.f32.mrf.mxu0
      %v6239 = vadd.f32 %v5855, %v6238
      %v6240 = vand.u32 %v549, 4294901760
      %v6241 = vsub.f32 %v549, %v6240
      %v6242 = vand.u32 %v6241, 4294901760
      %6243 = vmatmul.f32.gmra.mxu0 %v6242
      %v6244 = vpop.f32.mrf.mxu0
      %v6245 = vadd.f32 %v5860, %v6244
      %v6246 = vand.u32 %v552, 4294901760
      %v6247 = vsub.f32 %v552, %v6246
      %v6248 = vand.u32 %v6247, 4294901760
      %6249 = vmatmul.f32.gmra.mxu0 %v6248
      %v6250 = vpop.f32.mrf.mxu0
      %v6251 = vadd.f32 %v5865, %v6250
      %v6252 = vand.u32 %v555, 4294901760
      %v6253 = vsub.f32 %v555, %v6252
      %v6254 = vand.u32 %v6253, 4294901760
      %6255 = vmatmul.f32.gmra.mxu0 %v6254
      %v6256 = vpop.f32.mrf.mxu0
      %v6257 = vadd.f32 %v5870, %v6256
      %v6258 = vand.u32 %v558, 4294901760
      %v6259 = vsub.f32 %v558, %v6258
      %v6260 = vand.u32 %v6259, 4294901760
      %6261 = vmatmul.f32.gmra.mxu0 %v6260
      %v6262 = vpop.f32.mrf.mxu0
      %v6263 = vadd.f32 %v5875, %v6262
      %v6264 = vand.u32 %v561, 4294901760
      %v6265 = vsub.f32 %v561, %v6264
      %v6266 = vand.u32 %v6265, 4294901760
      %6267 = vmatmul.f32.gmra.mxu0 %v6266
      %v6268 = vpop.f32.mrf.mxu0
      %v6269 = vadd.f32 %v5880, %v6268
      %v6270 = vand.u32 %v564, 4294901760
      %v6271 = vsub.f32 %v564, %v6270
      %v6272 = vand.u32 %v6271, 4294901760
      %6273 = vmatmul.f32.gmra.mxu0 %v6272
      %v6274 = vpop.f32.mrf.mxu0
      %v6275 = vadd.f32 %v5885, %v6274
      %v6276 = vand.u32 %v567, 4294901760
      %v6277 = vsub.f32 %v567, %v6276
      %v6278 = vand.u32 %v6277, 4294901760
      %6279 = vmatmul.f32.gmra.mxu0 %v6278
      %v6280 = vpop.f32.mrf.mxu0
      %v6281 = vadd.f32 %v5890, %v6280
      %v6282 = vand.u32 %v570, 4294901760
      %v6283 = vsub.f32 %v570, %v6282
      %v6284 = vand.u32 %v6283, 4294901760
      %6285 = vmatmul.f32.gmra.mxu0 %v6284
      %v6286 = vpop.f32.mrf.mxu0
      %v6287 = vadd.f32 %v5895, %v6286
      %v6288 = vand.u32 %v573, 4294901760
      %v6289 = vsub.f32 %v573, %v6288
      %v6290 = vand.u32 %v6289, 4294901760
      %6291 = vmatmul.f32.gmra.mxu0 %v6290
      %v6292 = vpop.f32.mrf.mxu0
      %v6293 = vadd.f32 %v5900, %v6292
      %v6294 = vand.u32 %v576, 4294901760
      %v6295 = vsub.f32 %v576, %v6294
      %v6296 = vand.u32 %v6295, 4294901760
      %6297 = vmatmul.f32.gmra.mxu0 %v6296
      %v6298 = vpop.f32.mrf.mxu0
      %v6299 = vadd.f32 %v5905, %v6298
      %v6300 = vand.u32 %v579, 4294901760
      %v6301 = vsub.f32 %v579, %v6300
      %v6302 = vand.u32 %v6301, 4294901760
      %6303 = vmatmul.f32.gmra.mxu0 %v6302
      %v6304 = vpop.f32.mrf.mxu0
      %v6305 = vadd.f32 %v5910, %v6304
      %v6306 = vand.u32 %v582, 4294901760
      %v6307 = vsub.f32 %v582, %v6306
      %v6308 = vand.u32 %v6307, 4294901760
      %6309 = vmatmul.f32.gmra.mxu0 %v6308
      %v6310 = vpop.f32.mrf.mxu0
      %v6311 = vadd.f32 %v5915, %v6310
      %v6312 = vand.u32 %v585, 4294901760
      %v6313 = vsub.f32 %v585, %v6312
      %v6314 = vand.u32 %v6313, 4294901760
      %6315 = vmatmul.f32.gmra.mxu0 %v6314
      %v6316 = vpop.f32.mrf.mxu0
      %v6317 = vadd.f32 %v5920, %v6316
      %v6318 = vand.u32 %v588, 4294901760
      %v6319 = vsub.f32 %v588, %v6318
      %v6320 = vand.u32 %v6319, 4294901760
      %6321 = vmatmul.f32.gmra.mxu0 %v6320
      %v6322 = vpop.f32.mrf.mxu0
      %v6323 = vadd.f32 %v5925, %v6322
      %v6324 = vand.u32 %v591, 4294901760
      %v6325 = vsub.f32 %v591, %v6324
      %v6326 = vand.u32 %v6325, 4294901760
      %6327 = vmatmul.f32.gmra.mxu0 %v6326
      %v6328 = vpop.f32.mrf.mxu0
      %v6329 = vadd.f32 %v5930, %v6328
      %v6330 = vand.u32 %v594, 4294901760
      %v6331 = vsub.f32 %v594, %v6330
      %v6332 = vand.u32 %v6331, 4294901760
      %6333 = vmatmul.f32.gmra.mxu0 %v6332
      %v6334 = vpop.f32.mrf.mxu0
      %v6335 = vadd.f32 %v5935, %v6334
      %v6336 = vand.u32 %v597, 4294901760
      %v6337 = vsub.f32 %v597, %v6336
      %v6338 = vand.u32 %v6337, 4294901760
      %6339 = vmatmul.f32.gmra.mxu0 %v6338
      %v6340 = vpop.f32.mrf.mxu0
      %v6341 = vadd.f32 %v5940, %v6340
      %v6342 = vand.u32 %v600, 4294901760
      %v6343 = vsub.f32 %v600, %v6342
      %v6344 = vand.u32 %v6343, 4294901760
      %6345 = vmatmul.f32.gmra.mxu0 %v6344
      %v6346 = vpop.f32.mrf.mxu0
      %v6347 = vadd.f32 %v5945, %v6346
      %6348 = vdwg.mxu0
      %6349 = vmatpush.msra.mxu0 0.0
      %6350 = vmatpush.msra.mxu0 0.0
      %6351 = vmatpush.msra.mxu0 0.0
      %6352 = vmatpush.msra.mxu0 0.0
      %6353 = vmatpush.msra.mxu0 0.0
      %6354 = vmatpush.msra.mxu0 0.0
      %6355 = vmatpush.msra.mxu0 0.0
      %6356 = vmatpush.msra.mxu0 0.0
      %6357 = vmatpush.msra.mxu0 0.0
      %6358 = vmatpush.msra.mxu0 0.0
      %6359 = vmatpush.msra.mxu0 0.0
      %6360 = vmatpush.msra.mxu0 0.0
      %6361 = vmatpush.msra.mxu0 0.0
      %6362 = vmatpush.msra.mxu0 0.0
      %6363 = vmatpush.msra.mxu0 0.0
      %v6364 = vand.u32 %v271, 4294901760
      %v6365 = vsub.f32 %v271, %v6364
      %v6366 = vand.u32 %v6365, 4294901760
      %6367 = vmatpush.msra.mxu0 %v6366
      %v6368 = vand.u32 %v411, 4294901760
      %6369 = vmatmul.f32.gmra.mxu0 %v6368
      %v6370 = vpop.f32.mrf.mxu0
      %v6371 = vadd.f32 %v5969, %v6370
      %v6372 = vand.u32 %v414, 4294901760
      %6373 = vmatmul.f32.gmra.mxu0 %v6372
      %v6374 = vpop.f32.mrf.mxu0
      %v6375 = vadd.f32 %v5975, %v6374
      %v6376 = vand.u32 %v417, 4294901760
      %6377 = vmatmul.f32.gmra.mxu0 %v6376
      %v6378 = vpop.f32.mrf.mxu0
      %v6379 = vadd.f32 %v5981, %v6378
      %v6380 = vand.u32 %v420, 4294901760
      %6381 = vmatmul.f32.gmra.mxu0 %v6380
      %v6382 = vpop.f32.mrf.mxu0
      %v6383 = vadd.f32 %v5987, %v6382
      %v6384 = vand.u32 %v423, 4294901760
      %6385 = vmatmul.f32.gmra.mxu0 %v6384
      %v6386 = vpop.f32.mrf.mxu0
      %v6387 = vadd.f32 %v5993, %v6386
      %v6388 = vand.u32 %v426, 4294901760
      %6389 = vmatmul.f32.gmra.mxu0 %v6388
      %v6390 = vpop.f32.mrf.mxu0
      %v6391 = vadd.f32 %v5999, %v6390
      %v6392 = vand.u32 %v429, 4294901760
      %6393 = vmatmul.f32.gmra.mxu0 %v6392
      %v6394 = vpop.f32.mrf.mxu0
      %v6395 = vadd.f32 %v6005, %v6394
      %v6396 = vand.u32 %v432, 4294901760
      %6397 = vmatmul.f32.gmra.mxu0 %v6396
      %v6398 = vpop.f32.mrf.mxu0
      %v6399 = vadd.f32 %v6011, %v6398
      %v6400 = vand.u32 %v435, 4294901760
      %6401 = vmatmul.f32.gmra.mxu0 %v6400
      %v6402 = vpop.f32.mrf.mxu0
      %v6403 = vadd.f32 %v6017, %v6402
      %v6404 = vand.u32 %v438, 4294901760
      %6405 = vmatmul.f32.gmra.mxu0 %v6404
      %v6406 = vpop.f32.mrf.mxu0
      %v6407 = vadd.f32 %v6023, %v6406
      %v6408 = vand.u32 %v441, 4294901760
      %6409 = vmatmul.f32.gmra.mxu0 %v6408
      %v6410 = vpop.f32.mrf.mxu0
      %v6411 = vadd.f32 %v6029, %v6410
      %v6412 = vand.u32 %v444, 4294901760
      %6413 = vmatmul.f32.gmra.mxu0 %v6412
      %v6414 = vpop.f32.mrf.mxu0
      %v6415 = vadd.f32 %v6035, %v6414
      %v6416 = vand.u32 %v447, 4294901760
      %6417 = vmatmul.f32.gmra.mxu0 %v6416
      %v6418 = vpop.f32.mrf.mxu0
      %v6419 = vadd.f32 %v6041, %v6418
      %v6420 = vand.u32 %v450, 4294901760
      %6421 = vmatmul.f32.gmra.mxu0 %v6420
      %v6422 = vpop.f32.mrf.mxu0
      %v6423 = vadd.f32 %v6047, %v6422
      %v6424 = vand.u32 %v453, 4294901760
      %6425 = vmatmul.f32.gmra.mxu0 %v6424
      %v6426 = vpop.f32.mrf.mxu0
      %v6427 = vadd.f32 %v6053, %v6426
      %v6428 = vand.u32 %v456, 4294901760
      %6429 = vmatmul.f32.gmra.mxu0 %v6428
      %v6430 = vpop.f32.mrf.mxu0
      %v6431 = vadd.f32 %v6059, %v6430
      %v6432 = vand.u32 %v459, 4294901760
      %6433 = vmatmul.f32.gmra.mxu0 %v6432
      %v6434 = vpop.f32.mrf.mxu0
      %v6435 = vadd.f32 %v6065, %v6434
      %v6436 = vand.u32 %v462, 4294901760
      %6437 = vmatmul.f32.gmra.mxu0 %v6436
      %v6438 = vpop.f32.mrf.mxu0
      %v6439 = vadd.f32 %v6071, %v6438
      %v6440 = vand.u32 %v465, 4294901760
      %6441 = vmatmul.f32.gmra.mxu0 %v6440
      %v6442 = vpop.f32.mrf.mxu0
      %v6443 = vadd.f32 %v6077, %v6442
      %v6444 = vand.u32 %v468, 4294901760
      %6445 = vmatmul.f32.gmra.mxu0 %v6444
      %v6446 = vpop.f32.mrf.mxu0
      %v6447 = vadd.f32 %v6083, %v6446
      %v6448 = vand.u32 %v471, 4294901760
      %6449 = vmatmul.f32.gmra.mxu0 %v6448
      %v6450 = vpop.f32.mrf.mxu0
      %v6451 = vadd.f32 %v6089, %v6450
      %v6452 = vand.u32 %v474, 4294901760
      %6453 = vmatmul.f32.gmra.mxu0 %v6452
      %v6454 = vpop.f32.mrf.mxu0
      %v6455 = vadd.f32 %v6095, %v6454
      %v6456 = vand.u32 %v477, 4294901760
      %6457 = vmatmul.f32.gmra.mxu0 %v6456
      %v6458 = vpop.f32.mrf.mxu0
      %v6459 = vadd.f32 %v6101, %v6458
      %v6460 = vand.u32 %v480, 4294901760
      %6461 = vmatmul.f32.gmra.mxu0 %v6460
      %v6462 = vpop.f32.mrf.mxu0
      %v6463 = vadd.f32 %v6107, %v6462
      %v6464 = vand.u32 %v483, 4294901760
      %6465 = vmatmul.f32.gmra.mxu0 %v6464
      %v6466 = vpop.f32.mrf.mxu0
      %v6467 = vadd.f32 %v6113, %v6466
      %v6468 = vand.u32 %v486, 4294901760
      %6469 = vmatmul.f32.gmra.mxu0 %v6468
      %v6470 = vpop.f32.mrf.mxu0
      %v6471 = vadd.f32 %v6119, %v6470
      %v6472 = vand.u32 %v489, 4294901760
      %6473 = vmatmul.f32.gmra.mxu0 %v6472
      %v6474 = vpop.f32.mrf.mxu0
      %v6475 = vadd.f32 %v6125, %v6474
      %v6476 = vand.u32 %v492, 4294901760
      %6477 = vmatmul.f32.gmra.mxu0 %v6476
      %v6478 = vpop.f32.mrf.mxu0
      %v6479 = vadd.f32 %v6131, %v6478
      %v6480 = vand.u32 %v495, 4294901760
      %6481 = vmatmul.f32.gmra.mxu0 %v6480
      %v6482 = vpop.f32.mrf.mxu0
      %v6483 = vadd.f32 %v6137, %v6482
      %v6484 = vand.u32 %v498, 4294901760
      %6485 = vmatmul.f32.gmra.mxu0 %v6484
      %v6486 = vpop.f32.mrf.mxu0
      %v6487 = vadd.f32 %v6143, %v6486
      %v6488 = vand.u32 %v501, 4294901760
      %6489 = vmatmul.f32.gmra.mxu0 %v6488
      %v6490 = vpop.f32.mrf.mxu0
      %v6491 = vadd.f32 %v6149, %v6490
      %v6492 = vand.u32 %v504, 4294901760
      %6493 = vmatmul.f32.gmra.mxu0 %v6492
      %v6494 = vpop.f32.mrf.mxu0
      %v6495 = vadd.f32 %v6155, %v6494
      %v6496 = vand.u32 %v507, 4294901760
      %6497 = vmatmul.f32.gmra.mxu0 %v6496
      %v6498 = vpop.f32.mrf.mxu0
      %v6499 = vadd.f32 %v6161, %v6498
      %v6500 = vand.u32 %v510, 4294901760
      %6501 = vmatmul.f32.gmra.mxu0 %v6500
      %v6502 = vpop.f32.mrf.mxu0
      %v6503 = vadd.f32 %v6167, %v6502
      %v6504 = vand.u32 %v513, 4294901760
      %6505 = vmatmul.f32.gmra.mxu0 %v6504
      %v6506 = vpop.f32.mrf.mxu0
      %v6507 = vadd.f32 %v6173, %v6506
      %v6508 = vand.u32 %v516, 4294901760
      %6509 = vmatmul.f32.gmra.mxu0 %v6508
      %v6510 = vpop.f32.mrf.mxu0
      %v6511 = vadd.f32 %v6179, %v6510
      %v6512 = vand.u32 %v519, 4294901760
      %6513 = vmatmul.f32.gmra.mxu0 %v6512
      %v6514 = vpop.f32.mrf.mxu0
      %v6515 = vadd.f32 %v6185, %v6514
      %v6516 = vand.u32 %v522, 4294901760
      %6517 = vmatmul.f32.gmra.mxu0 %v6516
      %v6518 = vpop.f32.mrf.mxu0
      %v6519 = vadd.f32 %v6191, %v6518
      %v6520 = vand.u32 %v525, 4294901760
      %6521 = vmatmul.f32.gmra.mxu0 %v6520
      %v6522 = vpop.f32.mrf.mxu0
      %v6523 = vadd.f32 %v6197, %v6522
      %v6524 = vand.u32 %v528, 4294901760
      %6525 = vmatmul.f32.gmra.mxu0 %v6524
      %v6526 = vpop.f32.mrf.mxu0
      %v6527 = vadd.f32 %v6203, %v6526
      %v6528 = vand.u32 %v531, 4294901760
      %6529 = vmatmul.f32.gmra.mxu0 %v6528
      %v6530 = vpop.f32.mrf.mxu0
      %v6531 = vadd.f32 %v6209, %v6530
      %v6532 = vand.u32 %v534, 4294901760
      %6533 = vmatmul.f32.gmra.mxu0 %v6532
      %v6534 = vpop.f32.mrf.mxu0
      %v6535 = vadd.f32 %v6215, %v6534
      %v6536 = vand.u32 %v537, 4294901760
      %6537 = vmatmul.f32.gmra.mxu0 %v6536
      %v6538 = vpop.f32.mrf.mxu0
      %v6539 = vadd.f32 %v6221, %v6538
      %v6540 = vand.u32 %v540, 4294901760
      %6541 = vmatmul.f32.gmra.mxu0 %v6540
      %v6542 = vpop.f32.mrf.mxu0
      %v6543 = vadd.f32 %v6227, %v6542
      %v6544 = vand.u32 %v543, 4294901760
      %6545 = vmatmul.f32.gmra.mxu0 %v6544
      %v6546 = vpop.f32.mrf.mxu0
      %v6547 = vadd.f32 %v6233, %v6546
      %v6548 = vand.u32 %v546, 4294901760
      %6549 = vmatmul.f32.gmra.mxu0 %v6548
      %v6550 = vpop.f32.mrf.mxu0
      %v6551 = vadd.f32 %v6239, %v6550
      %v6552 = vand.u32 %v549, 4294901760
      %6553 = vmatmul.f32.gmra.mxu0 %v6552
      %v6554 = vpop.f32.mrf.mxu0
      %v6555 = vadd.f32 %v6245, %v6554
      %v6556 = vand.u32 %v552, 4294901760
      %6557 = vmatmul.f32.gmra.mxu0 %v6556
      %v6558 = vpop.f32.mrf.mxu0
      %v6559 = vadd.f32 %v6251, %v6558
      %v6560 = vand.u32 %v555, 4294901760
      %6561 = vmatmul.f32.gmra.mxu0 %v6560
      %v6562 = vpop.f32.mrf.mxu0
      %v6563 = vadd.f32 %v6257, %v6562
      %v6564 = vand.u32 %v558, 4294901760
      %6565 = vmatmul.f32.gmra.mxu0 %v6564
      %v6566 = vpop.f32.mrf.mxu0
      %v6567 = vadd.f32 %v6263, %v6566
      %v6568 = vand.u32 %v561, 4294901760
      %6569 = vmatmul.f32.gmra.mxu0 %v6568
      %v6570 = vpop.f32.mrf.mxu0
      %v6571 = vadd.f32 %v6269, %v6570
      %v6572 = vand.u32 %v564, 4294901760
      %6573 = vmatmul.f32.gmra.mxu0 %v6572
      %v6574 = vpop.f32.mrf.mxu0
      %v6575 = vadd.f32 %v6275, %v6574
      %v6576 = vand.u32 %v567, 4294901760
      %6577 = vmatmul.f32.gmra.mxu0 %v6576
      %v6578 = vpop.f32.mrf.mxu0
      %v6579 = vadd.f32 %v6281, %v6578
      %v6580 = vand.u32 %v570, 4294901760
      %6581 = vmatmul.f32.gmra.mxu0 %v6580
      %v6582 = vpop.f32.mrf.mxu0
      %v6583 = vadd.f32 %v6287, %v6582
      %v6584 = vand.u32 %v573, 4294901760
      %6585 = vmatmul.f32.gmra.mxu0 %v6584
      %v6586 = vpop.f32.mrf.mxu0
      %v6587 = vadd.f32 %v6293, %v6586
      %v6588 = vand.u32 %v576, 4294901760
      %6589 = vmatmul.f32.gmra.mxu0 %v6588
      %v6590 = vpop.f32.mrf.mxu0
      %v6591 = vadd.f32 %v6299, %v6590
      %v6592 = vand.u32 %v579, 4294901760
      %6593 = vmatmul.f32.gmra.mxu0 %v6592
      %v6594 = vpop.f32.mrf.mxu0
      %v6595 = vadd.f32 %v6305, %v6594
      %v6596 = vand.u32 %v582, 4294901760
      %6597 = vmatmul.f32.gmra.mxu0 %v6596
      %v6598 = vpop.f32.mrf.mxu0
      %v6599 = vadd.f32 %v6311, %v6598
      %v6600 = vand.u32 %v585, 4294901760
      %6601 = vmatmul.f32.gmra.mxu0 %v6600
      %v6602 = vpop.f32.mrf.mxu0
      %v6603 = vadd.f32 %v6317, %v6602
      %v6604 = vand.u32 %v588, 4294901760
      %6605 = vmatmul.f32.gmra.mxu0 %v6604
      %v6606 = vpop.f32.mrf.mxu0
      %v6607 = vadd.f32 %v6323, %v6606
      %v6608 = vand.u32 %v591, 4294901760
      %6609 = vmatmul.f32.gmra.mxu0 %v6608
      %v6610 = vpop.f32.mrf.mxu0
      %v6611 = vadd.f32 %v6329, %v6610
      %v6612 = vand.u32 %v594, 4294901760
      %6613 = vmatmul.f32.gmra.mxu0 %v6612
      %v6614 = vpop.f32.mrf.mxu0
      %v6615 = vadd.f32 %v6335, %v6614
      %v6616 = vand.u32 %v597, 4294901760
      %6617 = vmatmul.f32.gmra.mxu0 %v6616
      %v6618 = vpop.f32.mrf.mxu0
      %v6619 = vadd.f32 %v6341, %v6618
      %v6620 = vand.u32 %v600, 4294901760
      %6621 = vmatmul.f32.gmra.mxu0 %v6620
      %v6622 = vpop.f32.mrf.mxu0
      %v6623 = vadd.f32 %v6347, %v6622
      %6624 = vdwg.mxu0
      %6625 = vmatpush.msra.mxu0 0.0
      %6626 = vmatpush.msra.mxu0 0.0
      %6627 = vmatpush.msra.mxu0 0.0
      %6628 = vmatpush.msra.mxu0 0.0
      %6629 = vmatpush.msra.mxu0 0.0
      %6630 = vmatpush.msra.mxu0 0.0
      %6631 = vmatpush.msra.mxu0 0.0
      %6632 = vmatpush.msra.mxu0 0.0
      %6633 = vmatpush.msra.mxu0 0.0
      %6634 = vmatpush.msra.mxu0 0.0
      %6635 = vmatpush.msra.mxu0 0.0
      %6636 = vmatpush.msra.mxu0 0.0
      %6637 = vmatpush.msra.mxu0 0.0
      %6638 = vmatpush.msra.mxu0 0.0
      %6639 = vmatpush.msra.mxu0 0.0
      %v6640 = vand.u32 %v271, 4294901760
      %6641 = vmatpush.msra.mxu0 %v6640
      %v6642 = vand.u32 %v411, 4294901760
      %6643 = vmatmul.f32.gmra.mxu0 %v6642
      %v6644 = vpop.f32.mrf.mxu0
      %v6645 = vadd.f32 %v6371, %v6644
      %v6646 = vand.u32 %v414, 4294901760
      %6647 = vmatmul.f32.gmra.mxu0 %v6646
      %v6648 = vpop.f32.mrf.mxu0
      %v6649 = vadd.f32 %v6375, %v6648
      %v6650 = vand.u32 %v417, 4294901760
      %6651 = vmatmul.f32.gmra.mxu0 %v6650
      %v6652 = vpop.f32.mrf.mxu0
      %v6653 = vadd.f32 %v6379, %v6652
      %v6654 = vand.u32 %v420, 4294901760
      %6655 = vmatmul.f32.gmra.mxu0 %v6654
      %v6656 = vpop.f32.mrf.mxu0
      %v6657 = vadd.f32 %v6383, %v6656
      %v6658 = vand.u32 %v423, 4294901760
      %6659 = vmatmul.f32.gmra.mxu0 %v6658
      %v6660 = vpop.f32.mrf.mxu0
      %v6661 = vadd.f32 %v6387, %v6660
      %v6662 = vand.u32 %v426, 4294901760
      %6663 = vmatmul.f32.gmra.mxu0 %v6662
      %v6664 = vpop.f32.mrf.mxu0
      %v6665 = vadd.f32 %v6391, %v6664
      %v6666 = vand.u32 %v429, 4294901760
      %6667 = vmatmul.f32.gmra.mxu0 %v6666
      %v6668 = vpop.f32.mrf.mxu0
      %v6669 = vadd.f32 %v6395, %v6668
      %v6670 = vand.u32 %v432, 4294901760
      %6671 = vmatmul.f32.gmra.mxu0 %v6670
      %v6672 = vpop.f32.mrf.mxu0
      %v6673 = vadd.f32 %v6399, %v6672
      %v6674 = vand.u32 %v435, 4294901760
      %6675 = vmatmul.f32.gmra.mxu0 %v6674
      %v6676 = vpop.f32.mrf.mxu0
      %v6677 = vadd.f32 %v6403, %v6676
      %v6678 = vand.u32 %v438, 4294901760
      %6679 = vmatmul.f32.gmra.mxu0 %v6678
      %v6680 = vpop.f32.mrf.mxu0
      %v6681 = vadd.f32 %v6407, %v6680
      %v6682 = vand.u32 %v441, 4294901760
      %6683 = vmatmul.f32.gmra.mxu0 %v6682
      %v6684 = vpop.f32.mrf.mxu0
      %v6685 = vadd.f32 %v6411, %v6684
      %v6686 = vand.u32 %v444, 4294901760
      %6687 = vmatmul.f32.gmra.mxu0 %v6686
      %v6688 = vpop.f32.mrf.mxu0
      %v6689 = vadd.f32 %v6415, %v6688
      %v6690 = vand.u32 %v447, 4294901760
      %6691 = vmatmul.f32.gmra.mxu0 %v6690
      %v6692 = vpop.f32.mrf.mxu0
      %v6693 = vadd.f32 %v6419, %v6692
      %v6694 = vand.u32 %v450, 4294901760
      %6695 = vmatmul.f32.gmra.mxu0 %v6694
      %v6696 = vpop.f32.mrf.mxu0
      %v6697 = vadd.f32 %v6423, %v6696
      %v6698 = vand.u32 %v453, 4294901760
      %6699 = vmatmul.f32.gmra.mxu0 %v6698
      %v6700 = vpop.f32.mrf.mxu0
      %v6701 = vadd.f32 %v6427, %v6700
      %v6702 = vand.u32 %v456, 4294901760
      %6703 = vmatmul.f32.gmra.mxu0 %v6702
      %v6704 = vpop.f32.mrf.mxu0
      %v6705 = vadd.f32 %v6431, %v6704
      %v6706 = vand.u32 %v459, 4294901760
      %6707 = vmatmul.f32.gmra.mxu0 %v6706
      %v6708 = vpop.f32.mrf.mxu0
      %v6709 = vadd.f32 %v6435, %v6708
      %v6710 = vand.u32 %v462, 4294901760
      %6711 = vmatmul.f32.gmra.mxu0 %v6710
      %v6712 = vpop.f32.mrf.mxu0
      %v6713 = vadd.f32 %v6439, %v6712
      %v6714 = vand.u32 %v465, 4294901760
      %6715 = vmatmul.f32.gmra.mxu0 %v6714
      %v6716 = vpop.f32.mrf.mxu0
      %v6717 = vadd.f32 %v6443, %v6716
      %v6718 = vand.u32 %v468, 4294901760
      %6719 = vmatmul.f32.gmra.mxu0 %v6718
      %v6720 = vpop.f32.mrf.mxu0
      %v6721 = vadd.f32 %v6447, %v6720
      %v6722 = vand.u32 %v471, 4294901760
      %6723 = vmatmul.f32.gmra.mxu0 %v6722
      %v6724 = vpop.f32.mrf.mxu0
      %v6725 = vadd.f32 %v6451, %v6724
      %v6726 = vand.u32 %v474, 4294901760
      %6727 = vmatmul.f32.gmra.mxu0 %v6726
      %v6728 = vpop.f32.mrf.mxu0
      %v6729 = vadd.f32 %v6455, %v6728
      %v6730 = vand.u32 %v477, 4294901760
      %6731 = vmatmul.f32.gmra.mxu0 %v6730
      %v6732 = vpop.f32.mrf.mxu0
      %v6733 = vadd.f32 %v6459, %v6732
      %v6734 = vand.u32 %v480, 4294901760
      %6735 = vmatmul.f32.gmra.mxu0 %v6734
      %v6736 = vpop.f32.mrf.mxu0
      %v6737 = vadd.f32 %v6463, %v6736
      %v6738 = vand.u32 %v483, 4294901760
      %6739 = vmatmul.f32.gmra.mxu0 %v6738
      %v6740 = vpop.f32.mrf.mxu0
      %v6741 = vadd.f32 %v6467, %v6740
      %v6742 = vand.u32 %v486, 4294901760
      %6743 = vmatmul.f32.gmra.mxu0 %v6742
      %v6744 = vpop.f32.mrf.mxu0
      %v6745 = vadd.f32 %v6471, %v6744
      %v6746 = vand.u32 %v489, 4294901760
      %6747 = vmatmul.f32.gmra.mxu0 %v6746
      %v6748 = vpop.f32.mrf.mxu0
      %v6749 = vadd.f32 %v6475, %v6748
      %v6750 = vand.u32 %v492, 4294901760
      %6751 = vmatmul.f32.gmra.mxu0 %v6750
      %v6752 = vpop.f32.mrf.mxu0
      %v6753 = vadd.f32 %v6479, %v6752
      %v6754 = vand.u32 %v495, 4294901760
      %6755 = vmatmul.f32.gmra.mxu0 %v6754
      %v6756 = vpop.f32.mrf.mxu0
      %v6757 = vadd.f32 %v6483, %v6756
      %v6758 = vand.u32 %v498, 4294901760
      %6759 = vmatmul.f32.gmra.mxu0 %v6758
      %v6760 = vpop.f32.mrf.mxu0
      %v6761 = vadd.f32 %v6487, %v6760
      %v6762 = vand.u32 %v501, 4294901760
      %6763 = vmatmul.f32.gmra.mxu0 %v6762
      %v6764 = vpop.f32.mrf.mxu0
      %v6765 = vadd.f32 %v6491, %v6764
      %v6766 = vand.u32 %v504, 4294901760
      %6767 = vmatmul.f32.gmra.mxu0 %v6766
      %v6768 = vpop.f32.mrf.mxu0
      %v6769 = vadd.f32 %v6495, %v6768
      %v6770 = vand.u32 %v507, 4294901760
      %6771 = vmatmul.f32.gmra.mxu0 %v6770
      %v6772 = vpop.f32.mrf.mxu0
      %v6773 = vadd.f32 %v6499, %v6772
      %v6774 = vand.u32 %v510, 4294901760
      %6775 = vmatmul.f32.gmra.mxu0 %v6774
      %v6776 = vpop.f32.mrf.mxu0
      %v6777 = vadd.f32 %v6503, %v6776
      %v6778 = vand.u32 %v513, 4294901760
      %6779 = vmatmul.f32.gmra.mxu0 %v6778
      %v6780 = vpop.f32.mrf.mxu0
      %v6781 = vadd.f32 %v6507, %v6780
      %v6782 = vand.u32 %v516, 4294901760
      %6783 = vmatmul.f32.gmra.mxu0 %v6782
      %v6784 = vpop.f32.mrf.mxu0
      %v6785 = vadd.f32 %v6511, %v6784
      %v6786 = vand.u32 %v519, 4294901760
      %6787 = vmatmul.f32.gmra.mxu0 %v6786
      %v6788 = vpop.f32.mrf.mxu0
      %v6789 = vadd.f32 %v6515, %v6788
      %v6790 = vand.u32 %v522, 4294901760
      %6791 = vmatmul.f32.gmra.mxu0 %v6790
      %v6792 = vpop.f32.mrf.mxu0
      %v6793 = vadd.f32 %v6519, %v6792
      %v6794 = vand.u32 %v525, 4294901760
      %6795 = vmatmul.f32.gmra.mxu0 %v6794
      %v6796 = vpop.f32.mrf.mxu0
      %v6797 = vadd.f32 %v6523, %v6796
      %v6798 = vand.u32 %v528, 4294901760
      %6799 = vmatmul.f32.gmra.mxu0 %v6798
      %v6800 = vpop.f32.mrf.mxu0
      %v6801 = vadd.f32 %v6527, %v6800
      %v6802 = vand.u32 %v531, 4294901760
      %6803 = vmatmul.f32.gmra.mxu0 %v6802
      %v6804 = vpop.f32.mrf.mxu0
      %v6805 = vadd.f32 %v6531, %v6804
      %v6806 = vand.u32 %v534, 4294901760
      %6807 = vmatmul.f32.gmra.mxu0 %v6806
      %v6808 = vpop.f32.mrf.mxu0
      %v6809 = vadd.f32 %v6535, %v6808
      %v6810 = vand.u32 %v537, 4294901760
      %6811 = vmatmul.f32.gmra.mxu0 %v6810
      %v6812 = vpop.f32.mrf.mxu0
      %v6813 = vadd.f32 %v6539, %v6812
      %v6814 = vand.u32 %v540, 4294901760
      %6815 = vmatmul.f32.gmra.mxu0 %v6814
      %v6816 = vpop.f32.mrf.mxu0
      %v6817 = vadd.f32 %v6543, %v6816
      %v6818 = vand.u32 %v543, 4294901760
      %6819 = vmatmul.f32.gmra.mxu0 %v6818
      %v6820 = vpop.f32.mrf.mxu0
      %v6821 = vadd.f32 %v6547, %v6820
      %v6822 = vand.u32 %v546, 4294901760
      %6823 = vmatmul.f32.gmra.mxu0 %v6822
      %v6824 = vpop.f32.mrf.mxu0
      %v6825 = vadd.f32 %v6551, %v6824
      %v6826 = vand.u32 %v549, 4294901760
      %6827 = vmatmul.f32.gmra.mxu0 %v6826
      %v6828 = vpop.f32.mrf.mxu0
      %v6829 = vadd.f32 %v6555, %v6828
      %v6830 = vand.u32 %v552, 4294901760
      %6831 = vmatmul.f32.gmra.mxu0 %v6830
      %v6832 = vpop.f32.mrf.mxu0
      %v6833 = vadd.f32 %v6559, %v6832
      %v6834 = vand.u32 %v555, 4294901760
      %6835 = vmatmul.f32.gmra.mxu0 %v6834
      %v6836 = vpop.f32.mrf.mxu0
      %v6837 = vadd.f32 %v6563, %v6836
      %v6838 = vand.u32 %v558, 4294901760
      %6839 = vmatmul.f32.gmra.mxu0 %v6838
      %v6840 = vpop.f32.mrf.mxu0
      %v6841 = vadd.f32 %v6567, %v6840
      %v6842 = vand.u32 %v561, 4294901760
      %6843 = vmatmul.f32.gmra.mxu0 %v6842
      %v6844 = vpop.f32.mrf.mxu0
      %v6845 = vadd.f32 %v6571, %v6844
      %v6846 = vand.u32 %v564, 4294901760
      %6847 = vmatmul.f32.gmra.mxu0 %v6846
      %v6848 = vpop.f32.mrf.mxu0
      %v6849 = vadd.f32 %v6575, %v6848
      %v6850 = vand.u32 %v567, 4294901760
      %6851 = vmatmul.f32.gmra.mxu0 %v6850
      %v6852 = vpop.f32.mrf.mxu0
      %v6853 = vadd.f32 %v6579, %v6852
      %v6854 = vand.u32 %v570, 4294901760
      %6855 = vmatmul.f32.gmra.mxu0 %v6854
      %v6856 = vpop.f32.mrf.mxu0
      %v6857 = vadd.f32 %v6583, %v6856
      %v6858 = vand.u32 %v573, 4294901760
      %6859 = vmatmul.f32.gmra.mxu0 %v6858
      %v6860 = vpop.f32.mrf.mxu0
      %v6861 = vadd.f32 %v6587, %v6860
      %v6862 = vand.u32 %v576, 4294901760
      %6863 = vmatmul.f32.gmra.mxu0 %v6862
      %v6864 = vpop.f32.mrf.mxu0
      %v6865 = vadd.f32 %v6591, %v6864
      %v6866 = vand.u32 %v579, 4294901760
      %6867 = vmatmul.f32.gmra.mxu0 %v6866
      %v6868 = vpop.f32.mrf.mxu0
      %v6869 = vadd.f32 %v6595, %v6868
      %v6870 = vand.u32 %v582, 4294901760
      %6871 = vmatmul.f32.gmra.mxu0 %v6870
      %v6872 = vpop.f32.mrf.mxu0
      %v6873 = vadd.f32 %v6599, %v6872
      %v6874 = vand.u32 %v585, 4294901760
      %6875 = vmatmul.f32.gmra.mxu0 %v6874
      %v6876 = vpop.f32.mrf.mxu0
      %v6877 = vadd.f32 %v6603, %v6876
      %v6878 = vand.u32 %v588, 4294901760
      %6879 = vmatmul.f32.gmra.mxu0 %v6878
      %v6880 = vpop.f32.mrf.mxu0
      %v6881 = vadd.f32 %v6607, %v6880
      %v6882 = vand.u32 %v591, 4294901760
      %6883 = vmatmul.f32.gmra.mxu0 %v6882
      %v6884 = vpop.f32.mrf.mxu0
      %v6885 = vadd.f32 %v6611, %v6884
      %v6886 = vand.u32 %v594, 4294901760
      %6887 = vmatmul.f32.gmra.mxu0 %v6886
      %v6888 = vpop.f32.mrf.mxu0
      %v6889 = vadd.f32 %v6615, %v6888
      %v6890 = vand.u32 %v597, 4294901760
      %6891 = vmatmul.f32.gmra.mxu0 %v6890
      %v6892 = vpop.f32.mrf.mxu0
      %v6893 = vadd.f32 %v6619, %v6892
      %v6894 = vand.u32 %v600, 4294901760
      %6895 = vmatmul.f32.gmra.mxu0 %v6894
      %v6896 = vpop.f32.mrf.mxu0
      %v6897 = vadd.f32 %v6623, %v6896
      %6898 = vdwg.mxu0
      %6899 = vmatpush.msra.mxu0 0.0
      %6900 = vmatpush.msra.mxu0 0.0
      %6901 = vmatpush.msra.mxu0 0.0
      %6902 = vmatpush.msra.mxu0 0.0
      %6903 = vmatpush.msra.mxu0 0.0
      %6904 = vmatpush.msra.mxu0 0.0
      %6905 = vmatpush.msra.mxu0 0.0
      %6906 = vmatpush.msra.mxu0 0.0
      %6907 = vmatpush.msra.mxu0 0.0
      %6908 = vmatpush.msra.mxu0 0.0
      %6909 = vmatpush.msra.mxu0 0.0
      %6910 = vmatpush.msra.mxu0 0.0
      %6911 = vmatpush.msra.mxu0 0.0
      %6912 = vmatpush.msra.mxu0 0.0
      %6913 = vmatpush.msra.mxu0 0.0
      %v6914 = vand.u32 %v272, 4294901760
      %6915 = vmatpush.msra.mxu0 %v6914
      %v6916 = vand.u32 %v411, 4294901760
      %v6917 = vsub.f32 %v411, %v6916
      %v6918 = vand.u32 %v6917, 4294901760
      %v6919 = vsub.f32 %v6917, %v6918
      %v6920 = vand.u32 %v6919, 4294901760
      %6921 = vmatmul.f32.gmra.mxu0 %v6920
      %v6922 = vpop.f32.mrf.mxu0
      %v6923 = vadd.f32 0.0, %v6922
      %v6924 = vand.u32 %v414, 4294901760
      %v6925 = vsub.f32 %v414, %v6924
      %v6926 = vand.u32 %v6925, 4294901760
      %v6927 = vsub.f32 %v6925, %v6926
      %v6928 = vand.u32 %v6927, 4294901760
      %6929 = vmatmul.f32.gmra.mxu0 %v6928
      %v6930 = vpop.f32.mrf.mxu0
      %v6931 = vadd.f32 0.0, %v6930
      %v6932 = vand.u32 %v417, 4294901760
      %v6933 = vsub.f32 %v417, %v6932
      %v6934 = vand.u32 %v6933, 4294901760
      %v6935 = vsub.f32 %v6933, %v6934
      %v6936 = vand.u32 %v6935, 4294901760
      %6937 = vmatmul.f32.gmra.mxu0 %v6936
      %v6938 = vpop.f32.mrf.mxu0
      %v6939 = vadd.f32 0.0, %v6938
      %v6940 = vand.u32 %v420, 4294901760
      %v6941 = vsub.f32 %v420, %v6940
      %v6942 = vand.u32 %v6941, 4294901760
      %v6943 = vsub.f32 %v6941, %v6942
      %v6944 = vand.u32 %v6943, 4294901760
      %6945 = vmatmul.f32.gmra.mxu0 %v6944
      %v6946 = vpop.f32.mrf.mxu0
      %v6947 = vadd.f32 0.0, %v6946
      %v6948 = vand.u32 %v423, 4294901760
      %v6949 = vsub.f32 %v423, %v6948
      %v6950 = vand.u32 %v6949, 4294901760
      %v6951 = vsub.f32 %v6949, %v6950
      %v6952 = vand.u32 %v6951, 4294901760
      %6953 = vmatmul.f32.gmra.mxu0 %v6952
      %v6954 = vpop.f32.mrf.mxu0
      %v6955 = vadd.f32 0.0, %v6954
      %v6956 = vand.u32 %v426, 4294901760
      %v6957 = vsub.f32 %v426, %v6956
      %v6958 = vand.u32 %v6957, 4294901760
      %v6959 = vsub.f32 %v6957, %v6958
      %v6960 = vand.u32 %v6959, 4294901760
      %6961 = vmatmul.f32.gmra.mxu0 %v6960
      %v6962 = vpop.f32.mrf.mxu0
      %v6963 = vadd.f32 0.0, %v6962
      %v6964 = vand.u32 %v429, 4294901760
      %v6965 = vsub.f32 %v429, %v6964
      %v6966 = vand.u32 %v6965, 4294901760
      %v6967 = vsub.f32 %v6965, %v6966
      %v6968 = vand.u32 %v6967, 4294901760
      %6969 = vmatmul.f32.gmra.mxu0 %v6968
      %v6970 = vpop.f32.mrf.mxu0
      %v6971 = vadd.f32 0.0, %v6970
      %v6972 = vand.u32 %v432, 4294901760
      %v6973 = vsub.f32 %v432, %v6972
      %v6974 = vand.u32 %v6973, 4294901760
      %v6975 = vsub.f32 %v6973, %v6974
      %v6976 = vand.u32 %v6975, 4294901760
      %6977 = vmatmul.f32.gmra.mxu0 %v6976
      %v6978 = vpop.f32.mrf.mxu0
      %v6979 = vadd.f32 0.0, %v6978
      %v6980 = vand.u32 %v435, 4294901760
      %v6981 = vsub.f32 %v435, %v6980
      %v6982 = vand.u32 %v6981, 4294901760
      %v6983 = vsub.f32 %v6981, %v6982
      %v6984 = vand.u32 %v6983, 4294901760
      %6985 = vmatmul.f32.gmra.mxu0 %v6984
      %v6986 = vpop.f32.mrf.mxu0
      %v6987 = vadd.f32 0.0, %v6986
      %v6988 = vand.u32 %v438, 4294901760
      %v6989 = vsub.f32 %v438, %v6988
      %v6990 = vand.u32 %v6989, 4294901760
      %v6991 = vsub.f32 %v6989, %v6990
      %v6992 = vand.u32 %v6991, 4294901760
      %6993 = vmatmul.f32.gmra.mxu0 %v6992
      %v6994 = vpop.f32.mrf.mxu0
      %v6995 = vadd.f32 0.0, %v6994
      %v6996 = vand.u32 %v441, 4294901760
      %v6997 = vsub.f32 %v441, %v6996
      %v6998 = vand.u32 %v6997, 4294901760
      %v6999 = vsub.f32 %v6997, %v6998
      %v7000 = vand.u32 %v6999, 4294901760
      %7001 = vmatmul.f32.gmra.mxu0 %v7000
      %v7002 = vpop.f32.mrf.mxu0
      %v7003 = vadd.f32 0.0, %v7002
      %v7004 = vand.u32 %v444, 4294901760
      %v7005 = vsub.f32 %v444, %v7004
      %v7006 = vand.u32 %v7005, 4294901760
      %v7007 = vsub.f32 %v7005, %v7006
      %v7008 = vand.u32 %v7007, 4294901760
      %7009 = vmatmul.f32.gmra.mxu0 %v7008
      %v7010 = vpop.f32.mrf.mxu0
      %v7011 = vadd.f32 0.0, %v7010
      %v7012 = vand.u32 %v447, 4294901760
      %v7013 = vsub.f32 %v447, %v7012
      %v7014 = vand.u32 %v7013, 4294901760
      %v7015 = vsub.f32 %v7013, %v7014
      %v7016 = vand.u32 %v7015, 4294901760
      %7017 = vmatmul.f32.gmra.mxu0 %v7016
      %v7018 = vpop.f32.mrf.mxu0
      %v7019 = vadd.f32 0.0, %v7018
      %v7020 = vand.u32 %v450, 4294901760
      %v7021 = vsub.f32 %v450, %v7020
      %v7022 = vand.u32 %v7021, 4294901760
      %v7023 = vsub.f32 %v7021, %v7022
      %v7024 = vand.u32 %v7023, 4294901760
      %7025 = vmatmul.f32.gmra.mxu0 %v7024
      %v7026 = vpop.f32.mrf.mxu0
      %v7027 = vadd.f32 0.0, %v7026
      %v7028 = vand.u32 %v453, 4294901760
      %v7029 = vsub.f32 %v453, %v7028
      %v7030 = vand.u32 %v7029, 4294901760
      %v7031 = vsub.f32 %v7029, %v7030
      %v7032 = vand.u32 %v7031, 4294901760
      %7033 = vmatmul.f32.gmra.mxu0 %v7032
      %v7034 = vpop.f32.mrf.mxu0
      %v7035 = vadd.f32 0.0, %v7034
      %v7036 = vand.u32 %v456, 4294901760
      %v7037 = vsub.f32 %v456, %v7036
      %v7038 = vand.u32 %v7037, 4294901760
      %v7039 = vsub.f32 %v7037, %v7038
      %v7040 = vand.u32 %v7039, 4294901760
      %7041 = vmatmul.f32.gmra.mxu0 %v7040
      %v7042 = vpop.f32.mrf.mxu0
      %v7043 = vadd.f32 0.0, %v7042
      %v7044 = vand.u32 %v459, 4294901760
      %v7045 = vsub.f32 %v459, %v7044
      %v7046 = vand.u32 %v7045, 4294901760
      %v7047 = vsub.f32 %v7045, %v7046
      %v7048 = vand.u32 %v7047, 4294901760
      %7049 = vmatmul.f32.gmra.mxu0 %v7048
      %v7050 = vpop.f32.mrf.mxu0
      %v7051 = vadd.f32 0.0, %v7050
      %v7052 = vand.u32 %v462, 4294901760
      %v7053 = vsub.f32 %v462, %v7052
      %v7054 = vand.u32 %v7053, 4294901760
      %v7055 = vsub.f32 %v7053, %v7054
      %v7056 = vand.u32 %v7055, 4294901760
      %7057 = vmatmul.f32.gmra.mxu0 %v7056
      %v7058 = vpop.f32.mrf.mxu0
      %v7059 = vadd.f32 0.0, %v7058
      %v7060 = vand.u32 %v465, 4294901760
      %v7061 = vsub.f32 %v465, %v7060
      %v7062 = vand.u32 %v7061, 4294901760
      %v7063 = vsub.f32 %v7061, %v7062
      %v7064 = vand.u32 %v7063, 4294901760
      %7065 = vmatmul.f32.gmra.mxu0 %v7064
      %v7066 = vpop.f32.mrf.mxu0
      %v7067 = vadd.f32 0.0, %v7066
      %v7068 = vand.u32 %v468, 4294901760
      %v7069 = vsub.f32 %v468, %v7068
      %v7070 = vand.u32 %v7069, 4294901760
      %v7071 = vsub.f32 %v7069, %v7070
      %v7072 = vand.u32 %v7071, 4294901760
      %7073 = vmatmul.f32.gmra.mxu0 %v7072
      %v7074 = vpop.f32.mrf.mxu0
      %v7075 = vadd.f32 0.0, %v7074
      %v7076 = vand.u32 %v471, 4294901760
      %v7077 = vsub.f32 %v471, %v7076
      %v7078 = vand.u32 %v7077, 4294901760
      %v7079 = vsub.f32 %v7077, %v7078
      %v7080 = vand.u32 %v7079, 4294901760
      %7081 = vmatmul.f32.gmra.mxu0 %v7080
      %v7082 = vpop.f32.mrf.mxu0
      %v7083 = vadd.f32 0.0, %v7082
      %v7084 = vand.u32 %v474, 4294901760
      %v7085 = vsub.f32 %v474, %v7084
      %v7086 = vand.u32 %v7085, 4294901760
      %v7087 = vsub.f32 %v7085, %v7086
      %v7088 = vand.u32 %v7087, 4294901760
      %7089 = vmatmul.f32.gmra.mxu0 %v7088
      %v7090 = vpop.f32.mrf.mxu0
      %v7091 = vadd.f32 0.0, %v7090
      %v7092 = vand.u32 %v477, 4294901760
      %v7093 = vsub.f32 %v477, %v7092
      %v7094 = vand.u32 %v7093, 4294901760
      %v7095 = vsub.f32 %v7093, %v7094
      %v7096 = vand.u32 %v7095, 4294901760
      %7097 = vmatmul.f32.gmra.mxu0 %v7096
      %v7098 = vpop.f32.mrf.mxu0
      %v7099 = vadd.f32 0.0, %v7098
      %v7100 = vand.u32 %v480, 4294901760
      %v7101 = vsub.f32 %v480, %v7100
      %v7102 = vand.u32 %v7101, 4294901760
      %v7103 = vsub.f32 %v7101, %v7102
      %v7104 = vand.u32 %v7103, 4294901760
      %7105 = vmatmul.f32.gmra.mxu0 %v7104
      %v7106 = vpop.f32.mrf.mxu0
      %v7107 = vadd.f32 0.0, %v7106
      %v7108 = vand.u32 %v483, 4294901760
      %v7109 = vsub.f32 %v483, %v7108
      %v7110 = vand.u32 %v7109, 4294901760
      %v7111 = vsub.f32 %v7109, %v7110
      %v7112 = vand.u32 %v7111, 4294901760
      %7113 = vmatmul.f32.gmra.mxu0 %v7112
      %v7114 = vpop.f32.mrf.mxu0
      %v7115 = vadd.f32 0.0, %v7114
      %v7116 = vand.u32 %v486, 4294901760
      %v7117 = vsub.f32 %v486, %v7116
      %v7118 = vand.u32 %v7117, 4294901760
      %v7119 = vsub.f32 %v7117, %v7118
      %v7120 = vand.u32 %v7119, 4294901760
      %7121 = vmatmul.f32.gmra.mxu0 %v7120
      %v7122 = vpop.f32.mrf.mxu0
      %v7123 = vadd.f32 0.0, %v7122
      %v7124 = vand.u32 %v489, 4294901760
      %v7125 = vsub.f32 %v489, %v7124
      %v7126 = vand.u32 %v7125, 4294901760
      %v7127 = vsub.f32 %v7125, %v7126
      %v7128 = vand.u32 %v7127, 4294901760
      %7129 = vmatmul.f32.gmra.mxu0 %v7128
      %v7130 = vpop.f32.mrf.mxu0
      %v7131 = vadd.f32 0.0, %v7130
      %v7132 = vand.u32 %v492, 4294901760
      %v7133 = vsub.f32 %v492, %v7132
      %v7134 = vand.u32 %v7133, 4294901760
      %v7135 = vsub.f32 %v7133, %v7134
      %v7136 = vand.u32 %v7135, 4294901760
      %7137 = vmatmul.f32.gmra.mxu0 %v7136
      %v7138 = vpop.f32.mrf.mxu0
      %v7139 = vadd.f32 0.0, %v7138
      %v7140 = vand.u32 %v495, 4294901760
      %v7141 = vsub.f32 %v495, %v7140
      %v7142 = vand.u32 %v7141, 4294901760
      %v7143 = vsub.f32 %v7141, %v7142
      %v7144 = vand.u32 %v7143, 4294901760
      %7145 = vmatmul.f32.gmra.mxu0 %v7144
      %v7146 = vpop.f32.mrf.mxu0
      %v7147 = vadd.f32 0.0, %v7146
      %v7148 = vand.u32 %v498, 4294901760
      %v7149 = vsub.f32 %v498, %v7148
      %v7150 = vand.u32 %v7149, 4294901760
      %v7151 = vsub.f32 %v7149, %v7150
      %v7152 = vand.u32 %v7151, 4294901760
      %7153 = vmatmul.f32.gmra.mxu0 %v7152
      %v7154 = vpop.f32.mrf.mxu0
      %v7155 = vadd.f32 0.0, %v7154
      %v7156 = vand.u32 %v501, 4294901760
      %v7157 = vsub.f32 %v501, %v7156
      %v7158 = vand.u32 %v7157, 4294901760
      %v7159 = vsub.f32 %v7157, %v7158
      %v7160 = vand.u32 %v7159, 4294901760
      %7161 = vmatmul.f32.gmra.mxu0 %v7160
      %v7162 = vpop.f32.mrf.mxu0
      %v7163 = vadd.f32 0.0, %v7162
      %v7164 = vand.u32 %v504, 4294901760
      %v7165 = vsub.f32 %v504, %v7164
      %v7166 = vand.u32 %v7165, 4294901760
      %v7167 = vsub.f32 %v7165, %v7166
      %v7168 = vand.u32 %v7167, 4294901760
      %7169 = vmatmul.f32.gmra.mxu0 %v7168
      %v7170 = vpop.f32.mrf.mxu0
      %v7171 = vadd.f32 0.0, %v7170
      %v7172 = vand.u32 %v507, 4294901760
      %v7173 = vsub.f32 %v507, %v7172
      %v7174 = vand.u32 %v7173, 4294901760
      %v7175 = vsub.f32 %v7173, %v7174
      %v7176 = vand.u32 %v7175, 4294901760
      %7177 = vmatmul.f32.gmra.mxu0 %v7176
      %v7178 = vpop.f32.mrf.mxu0
      %v7179 = vadd.f32 0.0, %v7178
      %v7180 = vand.u32 %v510, 4294901760
      %v7181 = vsub.f32 %v510, %v7180
      %v7182 = vand.u32 %v7181, 4294901760
      %v7183 = vsub.f32 %v7181, %v7182
      %v7184 = vand.u32 %v7183, 4294901760
      %7185 = vmatmul.f32.gmra.mxu0 %v7184
      %v7186 = vpop.f32.mrf.mxu0
      %v7187 = vadd.f32 0.0, %v7186
      %v7188 = vand.u32 %v513, 4294901760
      %v7189 = vsub.f32 %v513, %v7188
      %v7190 = vand.u32 %v7189, 4294901760
      %v7191 = vsub.f32 %v7189, %v7190
      %v7192 = vand.u32 %v7191, 4294901760
      %7193 = vmatmul.f32.gmra.mxu0 %v7192
      %v7194 = vpop.f32.mrf.mxu0
      %v7195 = vadd.f32 0.0, %v7194
      %v7196 = vand.u32 %v516, 4294901760
      %v7197 = vsub.f32 %v516, %v7196
      %v7198 = vand.u32 %v7197, 4294901760
      %v7199 = vsub.f32 %v7197, %v7198
      %v7200 = vand.u32 %v7199, 4294901760
      %7201 = vmatmul.f32.gmra.mxu0 %v7200
      %v7202 = vpop.f32.mrf.mxu0
      %v7203 = vadd.f32 0.0, %v7202
      %v7204 = vand.u32 %v519, 4294901760
      %v7205 = vsub.f32 %v519, %v7204
      %v7206 = vand.u32 %v7205, 4294901760
      %v7207 = vsub.f32 %v7205, %v7206
      %v7208 = vand.u32 %v7207, 4294901760
      %7209 = vmatmul.f32.gmra.mxu0 %v7208
      %v7210 = vpop.f32.mrf.mxu0
      %v7211 = vadd.f32 0.0, %v7210
      %v7212 = vand.u32 %v522, 4294901760
      %v7213 = vsub.f32 %v522, %v7212
      %v7214 = vand.u32 %v7213, 4294901760
      %v7215 = vsub.f32 %v7213, %v7214
      %v7216 = vand.u32 %v7215, 4294901760
      %7217 = vmatmul.f32.gmra.mxu0 %v7216
      %v7218 = vpop.f32.mrf.mxu0
      %v7219 = vadd.f32 0.0, %v7218
      %v7220 = vand.u32 %v525, 4294901760
      %v7221 = vsub.f32 %v525, %v7220
      %v7222 = vand.u32 %v7221, 4294901760
      %v7223 = vsub.f32 %v7221, %v7222
      %v7224 = vand.u32 %v7223, 4294901760
      %7225 = vmatmul.f32.gmra.mxu0 %v7224
      %v7226 = vpop.f32.mrf.mxu0
      %v7227 = vadd.f32 0.0, %v7226
      %v7228 = vand.u32 %v528, 4294901760
      %v7229 = vsub.f32 %v528, %v7228
      %v7230 = vand.u32 %v7229, 4294901760
      %v7231 = vsub.f32 %v7229, %v7230
      %v7232 = vand.u32 %v7231, 4294901760
      %7233 = vmatmul.f32.gmra.mxu0 %v7232
      %v7234 = vpop.f32.mrf.mxu0
      %v7235 = vadd.f32 0.0, %v7234
      %v7236 = vand.u32 %v531, 4294901760
      %v7237 = vsub.f32 %v531, %v7236
      %v7238 = vand.u32 %v7237, 4294901760
      %v7239 = vsub.f32 %v7237, %v7238
      %v7240 = vand.u32 %v7239, 4294901760
      %7241 = vmatmul.f32.gmra.mxu0 %v7240
      %v7242 = vpop.f32.mrf.mxu0
      %v7243 = vadd.f32 0.0, %v7242
      %v7244 = vand.u32 %v534, 4294901760
      %v7245 = vsub.f32 %v534, %v7244
      %v7246 = vand.u32 %v7245, 4294901760
      %v7247 = vsub.f32 %v7245, %v7246
      %v7248 = vand.u32 %v7247, 4294901760
      %7249 = vmatmul.f32.gmra.mxu0 %v7248
      %v7250 = vpop.f32.mrf.mxu0
      %v7251 = vadd.f32 0.0, %v7250
      %v7252 = vand.u32 %v537, 4294901760
      %v7253 = vsub.f32 %v537, %v7252
      %v7254 = vand.u32 %v7253, 4294901760
      %v7255 = vsub.f32 %v7253, %v7254
      %v7256 = vand.u32 %v7255, 4294901760
      %7257 = vmatmul.f32.gmra.mxu0 %v7256
      %v7258 = vpop.f32.mrf.mxu0
      %v7259 = vadd.f32 0.0, %v7258
      %v7260 = vand.u32 %v540, 4294901760
      %v7261 = vsub.f32 %v540, %v7260
      %v7262 = vand.u32 %v7261, 4294901760
      %v7263 = vsub.f32 %v7261, %v7262
      %v7264 = vand.u32 %v7263, 4294901760
      %7265 = vmatmul.f32.gmra.mxu0 %v7264
      %v7266 = vpop.f32.mrf.mxu0
      %v7267 = vadd.f32 0.0, %v7266
      %v7268 = vand.u32 %v543, 4294901760
      %v7269 = vsub.f32 %v543, %v7268
      %v7270 = vand.u32 %v7269, 4294901760
      %v7271 = vsub.f32 %v7269, %v7270
      %v7272 = vand.u32 %v7271, 4294901760
      %7273 = vmatmul.f32.gmra.mxu0 %v7272
      %v7274 = vpop.f32.mrf.mxu0
      %v7275 = vadd.f32 0.0, %v7274
      %v7276 = vand.u32 %v546, 4294901760
      %v7277 = vsub.f32 %v546, %v7276
      %v7278 = vand.u32 %v7277, 4294901760
      %v7279 = vsub.f32 %v7277, %v7278
      %v7280 = vand.u32 %v7279, 4294901760
      %7281 = vmatmul.f32.gmra.mxu0 %v7280
      %v7282 = vpop.f32.mrf.mxu0
      %v7283 = vadd.f32 0.0, %v7282
      %v7284 = vand.u32 %v549, 4294901760
      %v7285 = vsub.f32 %v549, %v7284
      %v7286 = vand.u32 %v7285, 4294901760
      %v7287 = vsub.f32 %v7285, %v7286
      %v7288 = vand.u32 %v7287, 4294901760
      %7289 = vmatmul.f32.gmra.mxu0 %v7288
      %v7290 = vpop.f32.mrf.mxu0
      %v7291 = vadd.f32 0.0, %v7290
      %v7292 = vand.u32 %v552, 4294901760
      %v7293 = vsub.f32 %v552, %v7292
      %v7294 = vand.u32 %v7293, 4294901760
      %v7295 = vsub.f32 %v7293, %v7294
      %v7296 = vand.u32 %v7295, 4294901760
      %7297 = vmatmul.f32.gmra.mxu0 %v7296
      %v7298 = vpop.f32.mrf.mxu0
      %v7299 = vadd.f32 0.0, %v7298
      %v7300 = vand.u32 %v555, 4294901760
      %v7301 = vsub.f32 %v555, %v7300
      %v7302 = vand.u32 %v7301, 4294901760
      %v7303 = vsub.f32 %v7301, %v7302
      %v7304 = vand.u32 %v7303, 4294901760
      %7305 = vmatmul.f32.gmra.mxu0 %v7304
      %v7306 = vpop.f32.mrf.mxu0
      %v7307 = vadd.f32 0.0, %v7306
      %v7308 = vand.u32 %v558, 4294901760
      %v7309 = vsub.f32 %v558, %v7308
      %v7310 = vand.u32 %v7309, 4294901760
      %v7311 = vsub.f32 %v7309, %v7310
      %v7312 = vand.u32 %v7311, 4294901760
      %7313 = vmatmul.f32.gmra.mxu0 %v7312
      %v7314 = vpop.f32.mrf.mxu0
      %v7315 = vadd.f32 0.0, %v7314
      %v7316 = vand.u32 %v561, 4294901760
      %v7317 = vsub.f32 %v561, %v7316
      %v7318 = vand.u32 %v7317, 4294901760
      %v7319 = vsub.f32 %v7317, %v7318
      %v7320 = vand.u32 %v7319, 4294901760
      %7321 = vmatmul.f32.gmra.mxu0 %v7320
      %v7322 = vpop.f32.mrf.mxu0
      %v7323 = vadd.f32 0.0, %v7322
      %v7324 = vand.u32 %v564, 4294901760
      %v7325 = vsub.f32 %v564, %v7324
      %v7326 = vand.u32 %v7325, 4294901760
      %v7327 = vsub.f32 %v7325, %v7326
      %v7328 = vand.u32 %v7327, 4294901760
      %7329 = vmatmul.f32.gmra.mxu0 %v7328
      %v7330 = vpop.f32.mrf.mxu0
      %v7331 = vadd.f32 0.0, %v7330
      %v7332 = vand.u32 %v567, 4294901760
      %v7333 = vsub.f32 %v567, %v7332
      %v7334 = vand.u32 %v7333, 4294901760
      %v7335 = vsub.f32 %v7333, %v7334
      %v7336 = vand.u32 %v7335, 4294901760
      %7337 = vmatmul.f32.gmra.mxu0 %v7336
      %v7338 = vpop.f32.mrf.mxu0
      %v7339 = vadd.f32 0.0, %v7338
      %v7340 = vand.u32 %v570, 4294901760
      %v7341 = vsub.f32 %v570, %v7340
      %v7342 = vand.u32 %v7341, 4294901760
      %v7343 = vsub.f32 %v7341, %v7342
      %v7344 = vand.u32 %v7343, 4294901760
      %7345 = vmatmul.f32.gmra.mxu0 %v7344
      %v7346 = vpop.f32.mrf.mxu0
      %v7347 = vadd.f32 0.0, %v7346
      %v7348 = vand.u32 %v573, 4294901760
      %v7349 = vsub.f32 %v573, %v7348
      %v7350 = vand.u32 %v7349, 4294901760
      %v7351 = vsub.f32 %v7349, %v7350
      %v7352 = vand.u32 %v7351, 4294901760
      %7353 = vmatmul.f32.gmra.mxu0 %v7352
      %v7354 = vpop.f32.mrf.mxu0
      %v7355 = vadd.f32 0.0, %v7354
      %v7356 = vand.u32 %v576, 4294901760
      %v7357 = vsub.f32 %v576, %v7356
      %v7358 = vand.u32 %v7357, 4294901760
      %v7359 = vsub.f32 %v7357, %v7358
      %v7360 = vand.u32 %v7359, 4294901760
      %7361 = vmatmul.f32.gmra.mxu0 %v7360
      %v7362 = vpop.f32.mrf.mxu0
      %v7363 = vadd.f32 0.0, %v7362
      %v7364 = vand.u32 %v579, 4294901760
      %v7365 = vsub.f32 %v579, %v7364
      %v7366 = vand.u32 %v7365, 4294901760
      %v7367 = vsub.f32 %v7365, %v7366
      %v7368 = vand.u32 %v7367, 4294901760
      %7369 = vmatmul.f32.gmra.mxu0 %v7368
      %v7370 = vpop.f32.mrf.mxu0
      %v7371 = vadd.f32 0.0, %v7370
      %v7372 = vand.u32 %v582, 4294901760
      %v7373 = vsub.f32 %v582, %v7372
      %v7374 = vand.u32 %v7373, 4294901760
      %v7375 = vsub.f32 %v7373, %v7374
      %v7376 = vand.u32 %v7375, 4294901760
      %7377 = vmatmul.f32.gmra.mxu0 %v7376
      %v7378 = vpop.f32.mrf.mxu0
      %v7379 = vadd.f32 0.0, %v7378
      %v7380 = vand.u32 %v585, 4294901760
      %v7381 = vsub.f32 %v585, %v7380
      %v7382 = vand.u32 %v7381, 4294901760
      %v7383 = vsub.f32 %v7381, %v7382
      %v7384 = vand.u32 %v7383, 4294901760
      %7385 = vmatmul.f32.gmra.mxu0 %v7384
      %v7386 = vpop.f32.mrf.mxu0
      %v7387 = vadd.f32 0.0, %v7386
      %v7388 = vand.u32 %v588, 4294901760
      %v7389 = vsub.f32 %v588, %v7388
      %v7390 = vand.u32 %v7389, 4294901760
      %v7391 = vsub.f32 %v7389, %v7390
      %v7392 = vand.u32 %v7391, 4294901760
      %7393 = vmatmul.f32.gmra.mxu0 %v7392
      %v7394 = vpop.f32.mrf.mxu0
      %v7395 = vadd.f32 0.0, %v7394
      %v7396 = vand.u32 %v591, 4294901760
      %v7397 = vsub.f32 %v591, %v7396
      %v7398 = vand.u32 %v7397, 4294901760
      %v7399 = vsub.f32 %v7397, %v7398
      %v7400 = vand.u32 %v7399, 4294901760
      %7401 = vmatmul.f32.gmra.mxu0 %v7400
      %v7402 = vpop.f32.mrf.mxu0
      %v7403 = vadd.f32 0.0, %v7402
      %v7404 = vand.u32 %v594, 4294901760
      %v7405 = vsub.f32 %v594, %v7404
      %v7406 = vand.u32 %v7405, 4294901760
      %v7407 = vsub.f32 %v7405, %v7406
      %v7408 = vand.u32 %v7407, 4294901760
      %7409 = vmatmul.f32.gmra.mxu0 %v7408
      %v7410 = vpop.f32.mrf.mxu0
      %v7411 = vadd.f32 0.0, %v7410
      %v7412 = vand.u32 %v597, 4294901760
      %v7413 = vsub.f32 %v597, %v7412
      %v7414 = vand.u32 %v7413, 4294901760
      %v7415 = vsub.f32 %v7413, %v7414
      %v7416 = vand.u32 %v7415, 4294901760
      %7417 = vmatmul.f32.gmra.mxu0 %v7416
      %v7418 = vpop.f32.mrf.mxu0
      %v7419 = vadd.f32 0.0, %v7418
      %v7420 = vand.u32 %v600, 4294901760
      %v7421 = vsub.f32 %v600, %v7420
      %v7422 = vand.u32 %v7421, 4294901760
      %v7423 = vsub.f32 %v7421, %v7422
      %v7424 = vand.u32 %v7423, 4294901760
      %7425 = vmatmul.f32.gmra.mxu0 %v7424
      %v7426 = vpop.f32.mrf.mxu0
      %v7427 = vadd.f32 0.0, %v7426
      %7428 = vdwg.mxu0
      %7429 = vmatpush.msra.mxu0 0.0
      %7430 = vmatpush.msra.mxu0 0.0
      %7431 = vmatpush.msra.mxu0 0.0
      %7432 = vmatpush.msra.mxu0 0.0
      %7433 = vmatpush.msra.mxu0 0.0
      %7434 = vmatpush.msra.mxu0 0.0
      %7435 = vmatpush.msra.mxu0 0.0
      %7436 = vmatpush.msra.mxu0 0.0
      %7437 = vmatpush.msra.mxu0 0.0
      %7438 = vmatpush.msra.mxu0 0.0
      %7439 = vmatpush.msra.mxu0 0.0
      %7440 = vmatpush.msra.mxu0 0.0
      %7441 = vmatpush.msra.mxu0 0.0
      %7442 = vmatpush.msra.mxu0 0.0
      %7443 = vmatpush.msra.mxu0 0.0
      %v7444 = vand.u32 %v272, 4294901760
      %v7445 = vsub.f32 %v272, %v7444
      %v7446 = vand.u32 %v7445, 4294901760
      %v7447 = vsub.f32 %v7445, %v7446
      %v7448 = vand.u32 %v7447, 4294901760
      %7449 = vmatpush.msra.mxu0 %v7448
      %v7450 = vand.u32 %v411, 4294901760
      %7451 = vmatmul.f32.gmra.mxu0 %v7450
      %v7452 = vpop.f32.mrf.mxu0
      %v7453 = vadd.f32 %v6923, %v7452
      %v7454 = vand.u32 %v414, 4294901760
      %7455 = vmatmul.f32.gmra.mxu0 %v7454
      %v7456 = vpop.f32.mrf.mxu0
      %v7457 = vadd.f32 %v6931, %v7456
      %v7458 = vand.u32 %v417, 4294901760
      %7459 = vmatmul.f32.gmra.mxu0 %v7458
      %v7460 = vpop.f32.mrf.mxu0
      %v7461 = vadd.f32 %v6939, %v7460
      %v7462 = vand.u32 %v420, 4294901760
      %7463 = vmatmul.f32.gmra.mxu0 %v7462
      %v7464 = vpop.f32.mrf.mxu0
      %v7465 = vadd.f32 %v6947, %v7464
      %v7466 = vand.u32 %v423, 4294901760
      %7467 = vmatmul.f32.gmra.mxu0 %v7466
      %v7468 = vpop.f32.mrf.mxu0
      %v7469 = vadd.f32 %v6955, %v7468
      %v7470 = vand.u32 %v426, 4294901760
      %7471 = vmatmul.f32.gmra.mxu0 %v7470
      %v7472 = vpop.f32.mrf.mxu0
      %v7473 = vadd.f32 %v6963, %v7472
      %v7474 = vand.u32 %v429, 4294901760
      %7475 = vmatmul.f32.gmra.mxu0 %v7474
      %v7476 = vpop.f32.mrf.mxu0
      %v7477 = vadd.f32 %v6971, %v7476
      %v7478 = vand.u32 %v432, 4294901760
      %7479 = vmatmul.f32.gmra.mxu0 %v7478
      %v7480 = vpop.f32.mrf.mxu0
      %v7481 = vadd.f32 %v6979, %v7480
      %v7482 = vand.u32 %v435, 4294901760
      %7483 = vmatmul.f32.gmra.mxu0 %v7482
      %v7484 = vpop.f32.mrf.mxu0
      %v7485 = vadd.f32 %v6987, %v7484
      %v7486 = vand.u32 %v438, 4294901760
      %7487 = vmatmul.f32.gmra.mxu0 %v7486
      %v7488 = vpop.f32.mrf.mxu0
      %v7489 = vadd.f32 %v6995, %v7488
      %v7490 = vand.u32 %v441, 4294901760
      %7491 = vmatmul.f32.gmra.mxu0 %v7490
      %v7492 = vpop.f32.mrf.mxu0
      %v7493 = vadd.f32 %v7003, %v7492
      %v7494 = vand.u32 %v444, 4294901760
      %7495 = vmatmul.f32.gmra.mxu0 %v7494
      %v7496 = vpop.f32.mrf.mxu0
      %v7497 = vadd.f32 %v7011, %v7496
      %v7498 = vand.u32 %v447, 4294901760
      %7499 = vmatmul.f32.gmra.mxu0 %v7498
      %v7500 = vpop.f32.mrf.mxu0
      %v7501 = vadd.f32 %v7019, %v7500
      %v7502 = vand.u32 %v450, 4294901760
      %7503 = vmatmul.f32.gmra.mxu0 %v7502
      %v7504 = vpop.f32.mrf.mxu0
      %v7505 = vadd.f32 %v7027, %v7504
      %v7506 = vand.u32 %v453, 4294901760
      %7507 = vmatmul.f32.gmra.mxu0 %v7506
      %v7508 = vpop.f32.mrf.mxu0
      %v7509 = vadd.f32 %v7035, %v7508
      %v7510 = vand.u32 %v456, 4294901760
      %7511 = vmatmul.f32.gmra.mxu0 %v7510
      %v7512 = vpop.f32.mrf.mxu0
      %v7513 = vadd.f32 %v7043, %v7512
      %v7514 = vand.u32 %v459, 4294901760
      %7515 = vmatmul.f32.gmra.mxu0 %v7514
      %v7516 = vpop.f32.mrf.mxu0
      %v7517 = vadd.f32 %v7051, %v7516
      %v7518 = vand.u32 %v462, 4294901760
      %7519 = vmatmul.f32.gmra.mxu0 %v7518
      %v7520 = vpop.f32.mrf.mxu0
      %v7521 = vadd.f32 %v7059, %v7520
      %v7522 = vand.u32 %v465, 4294901760
      %7523 = vmatmul.f32.gmra.mxu0 %v7522
      %v7524 = vpop.f32.mrf.mxu0
      %v7525 = vadd.f32 %v7067, %v7524
      %v7526 = vand.u32 %v468, 4294901760
      %7527 = vmatmul.f32.gmra.mxu0 %v7526
      %v7528 = vpop.f32.mrf.mxu0
      %v7529 = vadd.f32 %v7075, %v7528
      %v7530 = vand.u32 %v471, 4294901760
      %7531 = vmatmul.f32.gmra.mxu0 %v7530
      %v7532 = vpop.f32.mrf.mxu0
      %v7533 = vadd.f32 %v7083, %v7532
      %v7534 = vand.u32 %v474, 4294901760
      %7535 = vmatmul.f32.gmra.mxu0 %v7534
      %v7536 = vpop.f32.mrf.mxu0
      %v7537 = vadd.f32 %v7091, %v7536
      %v7538 = vand.u32 %v477, 4294901760
      %7539 = vmatmul.f32.gmra.mxu0 %v7538
      %v7540 = vpop.f32.mrf.mxu0
      %v7541 = vadd.f32 %v7099, %v7540
      %v7542 = vand.u32 %v480, 4294901760
      %7543 = vmatmul.f32.gmra.mxu0 %v7542
      %v7544 = vpop.f32.mrf.mxu0
      %v7545 = vadd.f32 %v7107, %v7544
      %v7546 = vand.u32 %v483, 4294901760
      %7547 = vmatmul.f32.gmra.mxu0 %v7546
      %v7548 = vpop.f32.mrf.mxu0
      %v7549 = vadd.f32 %v7115, %v7548
      %v7550 = vand.u32 %v486, 4294901760
      %7551 = vmatmul.f32.gmra.mxu0 %v7550
      %v7552 = vpop.f32.mrf.mxu0
      %v7553 = vadd.f32 %v7123, %v7552
      %v7554 = vand.u32 %v489, 4294901760
      %7555 = vmatmul.f32.gmra.mxu0 %v7554
      %v7556 = vpop.f32.mrf.mxu0
      %v7557 = vadd.f32 %v7131, %v7556
      %v7558 = vand.u32 %v492, 4294901760
      %7559 = vmatmul.f32.gmra.mxu0 %v7558
      %v7560 = vpop.f32.mrf.mxu0
      %v7561 = vadd.f32 %v7139, %v7560
      %v7562 = vand.u32 %v495, 4294901760
      %7563 = vmatmul.f32.gmra.mxu0 %v7562
      %v7564 = vpop.f32.mrf.mxu0
      %v7565 = vadd.f32 %v7147, %v7564
      %v7566 = vand.u32 %v498, 4294901760
      %7567 = vmatmul.f32.gmra.mxu0 %v7566
      %v7568 = vpop.f32.mrf.mxu0
      %v7569 = vadd.f32 %v7155, %v7568
      %v7570 = vand.u32 %v501, 4294901760
      %7571 = vmatmul.f32.gmra.mxu0 %v7570
      %v7572 = vpop.f32.mrf.mxu0
      %v7573 = vadd.f32 %v7163, %v7572
      %v7574 = vand.u32 %v504, 4294901760
      %7575 = vmatmul.f32.gmra.mxu0 %v7574
      %v7576 = vpop.f32.mrf.mxu0
      %v7577 = vadd.f32 %v7171, %v7576
      %v7578 = vand.u32 %v507, 4294901760
      %7579 = vmatmul.f32.gmra.mxu0 %v7578
      %v7580 = vpop.f32.mrf.mxu0
      %v7581 = vadd.f32 %v7179, %v7580
      %v7582 = vand.u32 %v510, 4294901760
      %7583 = vmatmul.f32.gmra.mxu0 %v7582
      %v7584 = vpop.f32.mrf.mxu0
      %v7585 = vadd.f32 %v7187, %v7584
      %v7586 = vand.u32 %v513, 4294901760
      %7587 = vmatmul.f32.gmra.mxu0 %v7586
      %v7588 = vpop.f32.mrf.mxu0
      %v7589 = vadd.f32 %v7195, %v7588
      %v7590 = vand.u32 %v516, 4294901760
      %7591 = vmatmul.f32.gmra.mxu0 %v7590
      %v7592 = vpop.f32.mrf.mxu0
      %v7593 = vadd.f32 %v7203, %v7592
      %v7594 = vand.u32 %v519, 4294901760
      %7595 = vmatmul.f32.gmra.mxu0 %v7594
      %v7596 = vpop.f32.mrf.mxu0
      %v7597 = vadd.f32 %v7211, %v7596
      %v7598 = vand.u32 %v522, 4294901760
      %7599 = vmatmul.f32.gmra.mxu0 %v7598
      %v7600 = vpop.f32.mrf.mxu0
      %v7601 = vadd.f32 %v7219, %v7600
      %v7602 = vand.u32 %v525, 4294901760
      %7603 = vmatmul.f32.gmra.mxu0 %v7602
      %v7604 = vpop.f32.mrf.mxu0
      %v7605 = vadd.f32 %v7227, %v7604
      %v7606 = vand.u32 %v528, 4294901760
      %7607 = vmatmul.f32.gmra.mxu0 %v7606
      %v7608 = vpop.f32.mrf.mxu0
      %v7609 = vadd.f32 %v7235, %v7608
      %v7610 = vand.u32 %v531, 4294901760
      %7611 = vmatmul.f32.gmra.mxu0 %v7610
      %v7612 = vpop.f32.mrf.mxu0
      %v7613 = vadd.f32 %v7243, %v7612
      %v7614 = vand.u32 %v534, 4294901760
      %7615 = vmatmul.f32.gmra.mxu0 %v7614
      %v7616 = vpop.f32.mrf.mxu0
      %v7617 = vadd.f32 %v7251, %v7616
      %v7618 = vand.u32 %v537, 4294901760
      %7619 = vmatmul.f32.gmra.mxu0 %v7618
      %v7620 = vpop.f32.mrf.mxu0
      %v7621 = vadd.f32 %v7259, %v7620
      %v7622 = vand.u32 %v540, 4294901760
      %7623 = vmatmul.f32.gmra.mxu0 %v7622
      %v7624 = vpop.f32.mrf.mxu0
      %v7625 = vadd.f32 %v7267, %v7624
      %v7626 = vand.u32 %v543, 4294901760
      %7627 = vmatmul.f32.gmra.mxu0 %v7626
      %v7628 = vpop.f32.mrf.mxu0
      %v7629 = vadd.f32 %v7275, %v7628
      %v7630 = vand.u32 %v546, 4294901760
      %7631 = vmatmul.f32.gmra.mxu0 %v7630
      %v7632 = vpop.f32.mrf.mxu0
      %v7633 = vadd.f32 %v7283, %v7632
      %v7634 = vand.u32 %v549, 4294901760
      %7635 = vmatmul.f32.gmra.mxu0 %v7634
      %v7636 = vpop.f32.mrf.mxu0
      %v7637 = vadd.f32 %v7291, %v7636
      %v7638 = vand.u32 %v552, 4294901760
      %7639 = vmatmul.f32.gmra.mxu0 %v7638
      %v7640 = vpop.f32.mrf.mxu0
      %v7641 = vadd.f32 %v7299, %v7640
      %v7642 = vand.u32 %v555, 4294901760
      %7643 = vmatmul.f32.gmra.mxu0 %v7642
      %v7644 = vpop.f32.mrf.mxu0
      %v7645 = vadd.f32 %v7307, %v7644
      %v7646 = vand.u32 %v558, 4294901760
      %7647 = vmatmul.f32.gmra.mxu0 %v7646
      %v7648 = vpop.f32.mrf.mxu0
      %v7649 = vadd.f32 %v7315, %v7648
      %v7650 = vand.u32 %v561, 4294901760
      %7651 = vmatmul.f32.gmra.mxu0 %v7650
      %v7652 = vpop.f32.mrf.mxu0
      %v7653 = vadd.f32 %v7323, %v7652
      %v7654 = vand.u32 %v564, 4294901760
      %7655 = vmatmul.f32.gmra.mxu0 %v7654
      %v7656 = vpop.f32.mrf.mxu0
      %v7657 = vadd.f32 %v7331, %v7656
      %v7658 = vand.u32 %v567, 4294901760
      %7659 = vmatmul.f32.gmra.mxu0 %v7658
      %v7660 = vpop.f32.mrf.mxu0
      %v7661 = vadd.f32 %v7339, %v7660
      %v7662 = vand.u32 %v570, 4294901760
      %7663 = vmatmul.f32.gmra.mxu0 %v7662
      %v7664 = vpop.f32.mrf.mxu0
      %v7665 = vadd.f32 %v7347, %v7664
      %v7666 = vand.u32 %v573, 4294901760
      %7667 = vmatmul.f32.gmra.mxu0 %v7666
      %v7668 = vpop.f32.mrf.mxu0
      %v7669 = vadd.f32 %v7355, %v7668
      %v7670 = vand.u32 %v576, 4294901760
      %7671 = vmatmul.f32.gmra.mxu0 %v7670
      %v7672 = vpop.f32.mrf.mxu0
      %v7673 = vadd.f32 %v7363, %v7672
      %v7674 = vand.u32 %v579, 4294901760
      %7675 = vmatmul.f32.gmra.mxu0 %v7674
      %v7676 = vpop.f32.mrf.mxu0
      %v7677 = vadd.f32 %v7371, %v7676
      %v7678 = vand.u32 %v582, 4294901760
      %7679 = vmatmul.f32.gmra.mxu0 %v7678
      %v7680 = vpop.f32.mrf.mxu0
      %v7681 = vadd.f32 %v7379, %v7680
      %v7682 = vand.u32 %v585, 4294901760
      %7683 = vmatmul.f32.gmra.mxu0 %v7682
      %v7684 = vpop.f32.mrf.mxu0
      %v7685 = vadd.f32 %v7387, %v7684
      %v7686 = vand.u32 %v588, 4294901760
      %7687 = vmatmul.f32.gmra.mxu0 %v7686
      %v7688 = vpop.f32.mrf.mxu0
      %v7689 = vadd.f32 %v7395, %v7688
      %v7690 = vand.u32 %v591, 4294901760
      %7691 = vmatmul.f32.gmra.mxu0 %v7690
      %v7692 = vpop.f32.mrf.mxu0
      %v7693 = vadd.f32 %v7403, %v7692
      %v7694 = vand.u32 %v594, 4294901760
      %7695 = vmatmul.f32.gmra.mxu0 %v7694
      %v7696 = vpop.f32.mrf.mxu0
      %v7697 = vadd.f32 %v7411, %v7696
      %v7698 = vand.u32 %v597, 4294901760
      %7699 = vmatmul.f32.gmra.mxu0 %v7698
      %v7700 = vpop.f32.mrf.mxu0
      %v7701 = vadd.f32 %v7419, %v7700
      %v7702 = vand.u32 %v600, 4294901760
      %7703 = vmatmul.f32.gmra.mxu0 %v7702
      %v7704 = vpop.f32.mrf.mxu0
      %v7705 = vadd.f32 %v7427, %v7704
      %7706 = vdwg.mxu0
      %7707 = vmatpush.msra.mxu0 0.0
      %7708 = vmatpush.msra.mxu0 0.0
      %7709 = vmatpush.msra.mxu0 0.0
      %7710 = vmatpush.msra.mxu0 0.0
      %7711 = vmatpush.msra.mxu0 0.0
      %7712 = vmatpush.msra.mxu0 0.0
      %7713 = vmatpush.msra.mxu0 0.0
      %7714 = vmatpush.msra.mxu0 0.0
      %7715 = vmatpush.msra.mxu0 0.0
      %7716 = vmatpush.msra.mxu0 0.0
      %7717 = vmatpush.msra.mxu0 0.0
      %7718 = vmatpush.msra.mxu0 0.0
      %7719 = vmatpush.msra.mxu0 0.0
      %7720 = vmatpush.msra.mxu0 0.0
      %7721 = vmatpush.msra.mxu0 0.0
      %v7722 = vand.u32 %v272, 4294901760
      %v7723 = vsub.f32 %v272, %v7722
      %7724 = vmatpush.msra.mxu0 %v7723
      %v7725 = vand.u32 %v411, 4294901760
      %v7726 = vsub.f32 %v411, %v7725
      %7727 = vmatmul.f32.gmra.mxu0 %v7726
      %v7728 = vpop.f32.mrf.mxu0
      %v7729 = vadd.f32 %v7453, %v7728
      %v7730 = vand.u32 %v414, 4294901760
      %v7731 = vsub.f32 %v414, %v7730
      %7732 = vmatmul.f32.gmra.mxu0 %v7731
      %v7733 = vpop.f32.mrf.mxu0
      %v7734 = vadd.f32 %v7457, %v7733
      %v7735 = vand.u32 %v417, 4294901760
      %v7736 = vsub.f32 %v417, %v7735
      %7737 = vmatmul.f32.gmra.mxu0 %v7736
      %v7738 = vpop.f32.mrf.mxu0
      %v7739 = vadd.f32 %v7461, %v7738
      %v7740 = vand.u32 %v420, 4294901760
      %v7741 = vsub.f32 %v420, %v7740
      %7742 = vmatmul.f32.gmra.mxu0 %v7741
      %v7743 = vpop.f32.mrf.mxu0
      %v7744 = vadd.f32 %v7465, %v7743
      %v7745 = vand.u32 %v423, 4294901760
      %v7746 = vsub.f32 %v423, %v7745
      %7747 = vmatmul.f32.gmra.mxu0 %v7746
      %v7748 = vpop.f32.mrf.mxu0
      %v7749 = vadd.f32 %v7469, %v7748
      %v7750 = vand.u32 %v426, 4294901760
      %v7751 = vsub.f32 %v426, %v7750
      %7752 = vmatmul.f32.gmra.mxu0 %v7751
      %v7753 = vpop.f32.mrf.mxu0
      %v7754 = vadd.f32 %v7473, %v7753
      %v7755 = vand.u32 %v429, 4294901760
      %v7756 = vsub.f32 %v429, %v7755
      %7757 = vmatmul.f32.gmra.mxu0 %v7756
      %v7758 = vpop.f32.mrf.mxu0
      %v7759 = vadd.f32 %v7477, %v7758
      %v7760 = vand.u32 %v432, 4294901760
      %v7761 = vsub.f32 %v432, %v7760
      %7762 = vmatmul.f32.gmra.mxu0 %v7761
      %v7763 = vpop.f32.mrf.mxu0
      %v7764 = vadd.f32 %v7481, %v7763
      %v7765 = vand.u32 %v435, 4294901760
      %v7766 = vsub.f32 %v435, %v7765
      %7767 = vmatmul.f32.gmra.mxu0 %v7766
      %v7768 = vpop.f32.mrf.mxu0
      %v7769 = vadd.f32 %v7485, %v7768
      %v7770 = vand.u32 %v438, 4294901760
      %v7771 = vsub.f32 %v438, %v7770
      %7772 = vmatmul.f32.gmra.mxu0 %v7771
      %v7773 = vpop.f32.mrf.mxu0
      %v7774 = vadd.f32 %v7489, %v7773
      %v7775 = vand.u32 %v441, 4294901760
      %v7776 = vsub.f32 %v441, %v7775
      %7777 = vmatmul.f32.gmra.mxu0 %v7776
      %v7778 = vpop.f32.mrf.mxu0
      %v7779 = vadd.f32 %v7493, %v7778
      %v7780 = vand.u32 %v444, 4294901760
      %v7781 = vsub.f32 %v444, %v7780
      %7782 = vmatmul.f32.gmra.mxu0 %v7781
      %v7783 = vpop.f32.mrf.mxu0
      %v7784 = vadd.f32 %v7497, %v7783
      %v7785 = vand.u32 %v447, 4294901760
      %v7786 = vsub.f32 %v447, %v7785
      %7787 = vmatmul.f32.gmra.mxu0 %v7786
      %v7788 = vpop.f32.mrf.mxu0
      %v7789 = vadd.f32 %v7501, %v7788
      %v7790 = vand.u32 %v450, 4294901760
      %v7791 = vsub.f32 %v450, %v7790
      %7792 = vmatmul.f32.gmra.mxu0 %v7791
      %v7793 = vpop.f32.mrf.mxu0
      %v7794 = vadd.f32 %v7505, %v7793
      %v7795 = vand.u32 %v453, 4294901760
      %v7796 = vsub.f32 %v453, %v7795
      %7797 = vmatmul.f32.gmra.mxu0 %v7796
      %v7798 = vpop.f32.mrf.mxu0
      %v7799 = vadd.f32 %v7509, %v7798
      %v7800 = vand.u32 %v456, 4294901760
      %v7801 = vsub.f32 %v456, %v7800
      %7802 = vmatmul.f32.gmra.mxu0 %v7801
      %v7803 = vpop.f32.mrf.mxu0
      %v7804 = vadd.f32 %v7513, %v7803
      %v7805 = vand.u32 %v459, 4294901760
      %v7806 = vsub.f32 %v459, %v7805
      %7807 = vmatmul.f32.gmra.mxu0 %v7806
      %v7808 = vpop.f32.mrf.mxu0
      %v7809 = vadd.f32 %v7517, %v7808
      %v7810 = vand.u32 %v462, 4294901760
      %v7811 = vsub.f32 %v462, %v7810
      %7812 = vmatmul.f32.gmra.mxu0 %v7811
      %v7813 = vpop.f32.mrf.mxu0
      %v7814 = vadd.f32 %v7521, %v7813
      %v7815 = vand.u32 %v465, 4294901760
      %v7816 = vsub.f32 %v465, %v7815
      %7817 = vmatmul.f32.gmra.mxu0 %v7816
      %v7818 = vpop.f32.mrf.mxu0
      %v7819 = vadd.f32 %v7525, %v7818
      %v7820 = vand.u32 %v468, 4294901760
      %v7821 = vsub.f32 %v468, %v7820
      %7822 = vmatmul.f32.gmra.mxu0 %v7821
      %v7823 = vpop.f32.mrf.mxu0
      %v7824 = vadd.f32 %v7529, %v7823
      %v7825 = vand.u32 %v471, 4294901760
      %v7826 = vsub.f32 %v471, %v7825
      %7827 = vmatmul.f32.gmra.mxu0 %v7826
      %v7828 = vpop.f32.mrf.mxu0
      %v7829 = vadd.f32 %v7533, %v7828
      %v7830 = vand.u32 %v474, 4294901760
      %v7831 = vsub.f32 %v474, %v7830
      %7832 = vmatmul.f32.gmra.mxu0 %v7831
      %v7833 = vpop.f32.mrf.mxu0
      %v7834 = vadd.f32 %v7537, %v7833
      %v7835 = vand.u32 %v477, 4294901760
      %v7836 = vsub.f32 %v477, %v7835
      %7837 = vmatmul.f32.gmra.mxu0 %v7836
      %v7838 = vpop.f32.mrf.mxu0
      %v7839 = vadd.f32 %v7541, %v7838
      %v7840 = vand.u32 %v480, 4294901760
      %v7841 = vsub.f32 %v480, %v7840
      %7842 = vmatmul.f32.gmra.mxu0 %v7841
      %v7843 = vpop.f32.mrf.mxu0
      %v7844 = vadd.f32 %v7545, %v7843
      %v7845 = vand.u32 %v483, 4294901760
      %v7846 = vsub.f32 %v483, %v7845
      %7847 = vmatmul.f32.gmra.mxu0 %v7846
      %v7848 = vpop.f32.mrf.mxu0
      %v7849 = vadd.f32 %v7549, %v7848
      %v7850 = vand.u32 %v486, 4294901760
      %v7851 = vsub.f32 %v486, %v7850
      %7852 = vmatmul.f32.gmra.mxu0 %v7851
      %v7853 = vpop.f32.mrf.mxu0
      %v7854 = vadd.f32 %v7553, %v7853
      %v7855 = vand.u32 %v489, 4294901760
      %v7856 = vsub.f32 %v489, %v7855
      %7857 = vmatmul.f32.gmra.mxu0 %v7856
      %v7858 = vpop.f32.mrf.mxu0
      %v7859 = vadd.f32 %v7557, %v7858
      %v7860 = vand.u32 %v492, 4294901760
      %v7861 = vsub.f32 %v492, %v7860
      %7862 = vmatmul.f32.gmra.mxu0 %v7861
      %v7863 = vpop.f32.mrf.mxu0
      %v7864 = vadd.f32 %v7561, %v7863
      %v7865 = vand.u32 %v495, 4294901760
      %v7866 = vsub.f32 %v495, %v7865
      %7867 = vmatmul.f32.gmra.mxu0 %v7866
      %v7868 = vpop.f32.mrf.mxu0
      %v7869 = vadd.f32 %v7565, %v7868
      %v7870 = vand.u32 %v498, 4294901760
      %v7871 = vsub.f32 %v498, %v7870
      %7872 = vmatmul.f32.gmra.mxu0 %v7871
      %v7873 = vpop.f32.mrf.mxu0
      %v7874 = vadd.f32 %v7569, %v7873
      %v7875 = vand.u32 %v501, 4294901760
      %v7876 = vsub.f32 %v501, %v7875
      %7877 = vmatmul.f32.gmra.mxu0 %v7876
      %v7878 = vpop.f32.mrf.mxu0
      %v7879 = vadd.f32 %v7573, %v7878
      %v7880 = vand.u32 %v504, 4294901760
      %v7881 = vsub.f32 %v504, %v7880
      %7882 = vmatmul.f32.gmra.mxu0 %v7881
      %v7883 = vpop.f32.mrf.mxu0
      %v7884 = vadd.f32 %v7577, %v7883
      %v7885 = vand.u32 %v507, 4294901760
      %v7886 = vsub.f32 %v507, %v7885
      %7887 = vmatmul.f32.gmra.mxu0 %v7886
      %v7888 = vpop.f32.mrf.mxu0
      %v7889 = vadd.f32 %v7581, %v7888
      %v7890 = vand.u32 %v510, 4294901760
      %v7891 = vsub.f32 %v510, %v7890
      %7892 = vmatmul.f32.gmra.mxu0 %v7891
      %v7893 = vpop.f32.mrf.mxu0
      %v7894 = vadd.f32 %v7585, %v7893
      %v7895 = vand.u32 %v513, 4294901760
      %v7896 = vsub.f32 %v513, %v7895
      %7897 = vmatmul.f32.gmra.mxu0 %v7896
      %v7898 = vpop.f32.mrf.mxu0
      %v7899 = vadd.f32 %v7589, %v7898
      %v7900 = vand.u32 %v516, 4294901760
      %v7901 = vsub.f32 %v516, %v7900
      %7902 = vmatmul.f32.gmra.mxu0 %v7901
      %v7903 = vpop.f32.mrf.mxu0
      %v7904 = vadd.f32 %v7593, %v7903
      %v7905 = vand.u32 %v519, 4294901760
      %v7906 = vsub.f32 %v519, %v7905
      %7907 = vmatmul.f32.gmra.mxu0 %v7906
      %v7908 = vpop.f32.mrf.mxu0
      %v7909 = vadd.f32 %v7597, %v7908
      %v7910 = vand.u32 %v522, 4294901760
      %v7911 = vsub.f32 %v522, %v7910
      %7912 = vmatmul.f32.gmra.mxu0 %v7911
      %v7913 = vpop.f32.mrf.mxu0
      %v7914 = vadd.f32 %v7601, %v7913
      %v7915 = vand.u32 %v525, 4294901760
      %v7916 = vsub.f32 %v525, %v7915
      %7917 = vmatmul.f32.gmra.mxu0 %v7916
      %v7918 = vpop.f32.mrf.mxu0
      %v7919 = vadd.f32 %v7605, %v7918
      %v7920 = vand.u32 %v528, 4294901760
      %v7921 = vsub.f32 %v528, %v7920
      %7922 = vmatmul.f32.gmra.mxu0 %v7921
      %v7923 = vpop.f32.mrf.mxu0
      %v7924 = vadd.f32 %v7609, %v7923
      %v7925 = vand.u32 %v531, 4294901760
      %v7926 = vsub.f32 %v531, %v7925
      %7927 = vmatmul.f32.gmra.mxu0 %v7926
      %v7928 = vpop.f32.mrf.mxu0
      %v7929 = vadd.f32 %v7613, %v7928
      %v7930 = vand.u32 %v534, 4294901760
      %v7931 = vsub.f32 %v534, %v7930
      %7932 = vmatmul.f32.gmra.mxu0 %v7931
      %v7933 = vpop.f32.mrf.mxu0
      %v7934 = vadd.f32 %v7617, %v7933
      %v7935 = vand.u32 %v537, 4294901760
      %v7936 = vsub.f32 %v537, %v7935
      %7937 = vmatmul.f32.gmra.mxu0 %v7936
      %v7938 = vpop.f32.mrf.mxu0
      %v7939 = vadd.f32 %v7621, %v7938
      %v7940 = vand.u32 %v540, 4294901760
      %v7941 = vsub.f32 %v540, %v7940
      %7942 = vmatmul.f32.gmra.mxu0 %v7941
      %v7943 = vpop.f32.mrf.mxu0
      %v7944 = vadd.f32 %v7625, %v7943
      %v7945 = vand.u32 %v543, 4294901760
      %v7946 = vsub.f32 %v543, %v7945
      %7947 = vmatmul.f32.gmra.mxu0 %v7946
      %v7948 = vpop.f32.mrf.mxu0
      %v7949 = vadd.f32 %v7629, %v7948
      %v7950 = vand.u32 %v546, 4294901760
      %v7951 = vsub.f32 %v546, %v7950
      %7952 = vmatmul.f32.gmra.mxu0 %v7951
      %v7953 = vpop.f32.mrf.mxu0
      %v7954 = vadd.f32 %v7633, %v7953
      %v7955 = vand.u32 %v549, 4294901760
      %v7956 = vsub.f32 %v549, %v7955
      %7957 = vmatmul.f32.gmra.mxu0 %v7956
      %v7958 = vpop.f32.mrf.mxu0
      %v7959 = vadd.f32 %v7637, %v7958
      %v7960 = vand.u32 %v552, 4294901760
      %v7961 = vsub.f32 %v552, %v7960
      %7962 = vmatmul.f32.gmra.mxu0 %v7961
      %v7963 = vpop.f32.mrf.mxu0
      %v7964 = vadd.f32 %v7641, %v7963
      %v7965 = vand.u32 %v555, 4294901760
      %v7966 = vsub.f32 %v555, %v7965
      %7967 = vmatmul.f32.gmra.mxu0 %v7966
      %v7968 = vpop.f32.mrf.mxu0
      %v7969 = vadd.f32 %v7645, %v7968
      %v7970 = vand.u32 %v558, 4294901760
      %v7971 = vsub.f32 %v558, %v7970
      %7972 = vmatmul.f32.gmra.mxu0 %v7971
      %v7973 = vpop.f32.mrf.mxu0
      %v7974 = vadd.f32 %v7649, %v7973
      %v7975 = vand.u32 %v561, 4294901760
      %v7976 = vsub.f32 %v561, %v7975
      %7977 = vmatmul.f32.gmra.mxu0 %v7976
      %v7978 = vpop.f32.mrf.mxu0
      %v7979 = vadd.f32 %v7653, %v7978
      %v7980 = vand.u32 %v564, 4294901760
      %v7981 = vsub.f32 %v564, %v7980
      %7982 = vmatmul.f32.gmra.mxu0 %v7981
      %v7983 = vpop.f32.mrf.mxu0
      %v7984 = vadd.f32 %v7657, %v7983
      %v7985 = vand.u32 %v567, 4294901760
      %v7986 = vsub.f32 %v567, %v7985
      %7987 = vmatmul.f32.gmra.mxu0 %v7986
      %v7988 = vpop.f32.mrf.mxu0
      %v7989 = vadd.f32 %v7661, %v7988
      %v7990 = vand.u32 %v570, 4294901760
      %v7991 = vsub.f32 %v570, %v7990
      %7992 = vmatmul.f32.gmra.mxu0 %v7991
      %v7993 = vpop.f32.mrf.mxu0
      %v7994 = vadd.f32 %v7665, %v7993
      %v7995 = vand.u32 %v573, 4294901760
      %v7996 = vsub.f32 %v573, %v7995
      %7997 = vmatmul.f32.gmra.mxu0 %v7996
      %v7998 = vpop.f32.mrf.mxu0
      %v7999 = vadd.f32 %v7669, %v7998
      %v8000 = vand.u32 %v576, 4294901760
      %v8001 = vsub.f32 %v576, %v8000
      %8002 = vmatmul.f32.gmra.mxu0 %v8001
      %v8003 = vpop.f32.mrf.mxu0
      %v8004 = vadd.f32 %v7673, %v8003
      %v8005 = vand.u32 %v579, 4294901760
      %v8006 = vsub.f32 %v579, %v8005
      %8007 = vmatmul.f32.gmra.mxu0 %v8006
      %v8008 = vpop.f32.mrf.mxu0
      %v8009 = vadd.f32 %v7677, %v8008
      %v8010 = vand.u32 %v582, 4294901760
      %v8011 = vsub.f32 %v582, %v8010
      %8012 = vmatmul.f32.gmra.mxu0 %v8011
      %v8013 = vpop.f32.mrf.mxu0
      %v8014 = vadd.f32 %v7681, %v8013
      %v8015 = vand.u32 %v585, 4294901760
      %v8016 = vsub.f32 %v585, %v8015
      %8017 = vmatmul.f32.gmra.mxu0 %v8016
      %v8018 = vpop.f32.mrf.mxu0
      %v8019 = vadd.f32 %v7685, %v8018
      %v8020 = vand.u32 %v588, 4294901760
      %v8021 = vsub.f32 %v588, %v8020
      %8022 = vmatmul.f32.gmra.mxu0 %v8021
      %v8023 = vpop.f32.mrf.mxu0
      %v8024 = vadd.f32 %v7689, %v8023
      %v8025 = vand.u32 %v591, 4294901760
      %v8026 = vsub.f32 %v591, %v8025
      %8027 = vmatmul.f32.gmra.mxu0 %v8026
      %v8028 = vpop.f32.mrf.mxu0
      %v8029 = vadd.f32 %v7693, %v8028
      %v8030 = vand.u32 %v594, 4294901760
      %v8031 = vsub.f32 %v594, %v8030
      %8032 = vmatmul.f32.gmra.mxu0 %v8031
      %v8033 = vpop.f32.mrf.mxu0
      %v8034 = vadd.f32 %v7697, %v8033
      %v8035 = vand.u32 %v597, 4294901760
      %v8036 = vsub.f32 %v597, %v8035
      %8037 = vmatmul.f32.gmra.mxu0 %v8036
      %v8038 = vpop.f32.mrf.mxu0
      %v8039 = vadd.f32 %v7701, %v8038
      %v8040 = vand.u32 %v600, 4294901760
      %v8041 = vsub.f32 %v600, %v8040
      %8042 = vmatmul.f32.gmra.mxu0 %v8041
      %v8043 = vpop.f32.mrf.mxu0
      %v8044 = vadd.f32 %v7705, %v8043
      %8045 = vdwg.mxu0
      %8046 = vmatpush.msra.mxu0 0.0
      %8047 = vmatpush.msra.mxu0 0.0
      %8048 = vmatpush.msra.mxu0 0.0
      %8049 = vmatpush.msra.mxu0 0.0
      %8050 = vmatpush.msra.mxu0 0.0
      %8051 = vmatpush.msra.mxu0 0.0
      %8052 = vmatpush.msra.mxu0 0.0
      %8053 = vmatpush.msra.mxu0 0.0
      %8054 = vmatpush.msra.mxu0 0.0
      %8055 = vmatpush.msra.mxu0 0.0
      %8056 = vmatpush.msra.mxu0 0.0
      %8057 = vmatpush.msra.mxu0 0.0
      %8058 = vmatpush.msra.mxu0 0.0
      %8059 = vmatpush.msra.mxu0 0.0
      %8060 = vmatpush.msra.mxu0 0.0
      %v8061 = vand.u32 %v272, 4294901760
      %8062 = vmatpush.msra.mxu0 %v8061
      %v8063 = vand.u32 %v411, 4294901760
      %v8064 = vsub.f32 %v411, %v8063
      %v8065 = vand.u32 %v8064, 4294901760
      %8066 = vmatmul.f32.gmra.mxu0 %v8065
      %v8067 = vpop.f32.mrf.mxu0
      %v8068 = vadd.f32 %v7729, %v8067
      %v8069 = vand.u32 %v414, 4294901760
      %v8070 = vsub.f32 %v414, %v8069
      %v8071 = vand.u32 %v8070, 4294901760
      %8072 = vmatmul.f32.gmra.mxu0 %v8071
      %v8073 = vpop.f32.mrf.mxu0
      %v8074 = vadd.f32 %v7734, %v8073
      %v8075 = vand.u32 %v417, 4294901760
      %v8076 = vsub.f32 %v417, %v8075
      %v8077 = vand.u32 %v8076, 4294901760
      %8078 = vmatmul.f32.gmra.mxu0 %v8077
      %v8079 = vpop.f32.mrf.mxu0
      %v8080 = vadd.f32 %v7739, %v8079
      %v8081 = vand.u32 %v420, 4294901760
      %v8082 = vsub.f32 %v420, %v8081
      %v8083 = vand.u32 %v8082, 4294901760
      %8084 = vmatmul.f32.gmra.mxu0 %v8083
      %v8085 = vpop.f32.mrf.mxu0
      %v8086 = vadd.f32 %v7744, %v8085
      %v8087 = vand.u32 %v423, 4294901760
      %v8088 = vsub.f32 %v423, %v8087
      %v8089 = vand.u32 %v8088, 4294901760
      %8090 = vmatmul.f32.gmra.mxu0 %v8089
      %v8091 = vpop.f32.mrf.mxu0
      %v8092 = vadd.f32 %v7749, %v8091
      %v8093 = vand.u32 %v426, 4294901760
      %v8094 = vsub.f32 %v426, %v8093
      %v8095 = vand.u32 %v8094, 4294901760
      %8096 = vmatmul.f32.gmra.mxu0 %v8095
      %v8097 = vpop.f32.mrf.mxu0
      %v8098 = vadd.f32 %v7754, %v8097
      %v8099 = vand.u32 %v429, 4294901760
      %v8100 = vsub.f32 %v429, %v8099
      %v8101 = vand.u32 %v8100, 4294901760
      %8102 = vmatmul.f32.gmra.mxu0 %v8101
      %v8103 = vpop.f32.mrf.mxu0
      %v8104 = vadd.f32 %v7759, %v8103
      %v8105 = vand.u32 %v432, 4294901760
      %v8106 = vsub.f32 %v432, %v8105
      %v8107 = vand.u32 %v8106, 4294901760
      %8108 = vmatmul.f32.gmra.mxu0 %v8107
      %v8109 = vpop.f32.mrf.mxu0
      %v8110 = vadd.f32 %v7764, %v8109
      %v8111 = vand.u32 %v435, 4294901760
      %v8112 = vsub.f32 %v435, %v8111
      %v8113 = vand.u32 %v8112, 4294901760
      %8114 = vmatmul.f32.gmra.mxu0 %v8113
      %v8115 = vpop.f32.mrf.mxu0
      %v8116 = vadd.f32 %v7769, %v8115
      %v8117 = vand.u32 %v438, 4294901760
      %v8118 = vsub.f32 %v438, %v8117
      %v8119 = vand.u32 %v8118, 4294901760
      %8120 = vmatmul.f32.gmra.mxu0 %v8119
      %v8121 = vpop.f32.mrf.mxu0
      %v8122 = vadd.f32 %v7774, %v8121
      %v8123 = vand.u32 %v441, 4294901760
      %v8124 = vsub.f32 %v441, %v8123
      %v8125 = vand.u32 %v8124, 4294901760
      %8126 = vmatmul.f32.gmra.mxu0 %v8125
      %v8127 = vpop.f32.mrf.mxu0
      %v8128 = vadd.f32 %v7779, %v8127
      %v8129 = vand.u32 %v444, 4294901760
      %v8130 = vsub.f32 %v444, %v8129
      %v8131 = vand.u32 %v8130, 4294901760
      %8132 = vmatmul.f32.gmra.mxu0 %v8131
      %v8133 = vpop.f32.mrf.mxu0
      %v8134 = vadd.f32 %v7784, %v8133
      %v8135 = vand.u32 %v447, 4294901760
      %v8136 = vsub.f32 %v447, %v8135
      %v8137 = vand.u32 %v8136, 4294901760
      %8138 = vmatmul.f32.gmra.mxu0 %v8137
      %v8139 = vpop.f32.mrf.mxu0
      %v8140 = vadd.f32 %v7789, %v8139
      %v8141 = vand.u32 %v450, 4294901760
      %v8142 = vsub.f32 %v450, %v8141
      %v8143 = vand.u32 %v8142, 4294901760
      %8144 = vmatmul.f32.gmra.mxu0 %v8143
      %v8145 = vpop.f32.mrf.mxu0
      %v8146 = vadd.f32 %v7794, %v8145
      %v8147 = vand.u32 %v453, 4294901760
      %v8148 = vsub.f32 %v453, %v8147
      %v8149 = vand.u32 %v8148, 4294901760
      %8150 = vmatmul.f32.gmra.mxu0 %v8149
      %v8151 = vpop.f32.mrf.mxu0
      %v8152 = vadd.f32 %v7799, %v8151
      %v8153 = vand.u32 %v456, 4294901760
      %v8154 = vsub.f32 %v456, %v8153
      %v8155 = vand.u32 %v8154, 4294901760
      %8156 = vmatmul.f32.gmra.mxu0 %v8155
      %v8157 = vpop.f32.mrf.mxu0
      %v8158 = vadd.f32 %v7804, %v8157
      %v8159 = vand.u32 %v459, 4294901760
      %v8160 = vsub.f32 %v459, %v8159
      %v8161 = vand.u32 %v8160, 4294901760
      %8162 = vmatmul.f32.gmra.mxu0 %v8161
      %v8163 = vpop.f32.mrf.mxu0
      %v8164 = vadd.f32 %v7809, %v8163
      %v8165 = vand.u32 %v462, 4294901760
      %v8166 = vsub.f32 %v462, %v8165
      %v8167 = vand.u32 %v8166, 4294901760
      %8168 = vmatmul.f32.gmra.mxu0 %v8167
      %v8169 = vpop.f32.mrf.mxu0
      %v8170 = vadd.f32 %v7814, %v8169
      %v8171 = vand.u32 %v465, 4294901760
      %v8172 = vsub.f32 %v465, %v8171
      %v8173 = vand.u32 %v8172, 4294901760
      %8174 = vmatmul.f32.gmra.mxu0 %v8173
      %v8175 = vpop.f32.mrf.mxu0
      %v8176 = vadd.f32 %v7819, %v8175
      %v8177 = vand.u32 %v468, 4294901760
      %v8178 = vsub.f32 %v468, %v8177
      %v8179 = vand.u32 %v8178, 4294901760
      %8180 = vmatmul.f32.gmra.mxu0 %v8179
      %v8181 = vpop.f32.mrf.mxu0
      %v8182 = vadd.f32 %v7824, %v8181
      %v8183 = vand.u32 %v471, 4294901760
      %v8184 = vsub.f32 %v471, %v8183
      %v8185 = vand.u32 %v8184, 4294901760
      %8186 = vmatmul.f32.gmra.mxu0 %v8185
      %v8187 = vpop.f32.mrf.mxu0
      %v8188 = vadd.f32 %v7829, %v8187
      %v8189 = vand.u32 %v474, 4294901760
      %v8190 = vsub.f32 %v474, %v8189
      %v8191 = vand.u32 %v8190, 4294901760
      %8192 = vmatmul.f32.gmra.mxu0 %v8191
      %v8193 = vpop.f32.mrf.mxu0
      %v8194 = vadd.f32 %v7834, %v8193
      %v8195 = vand.u32 %v477, 4294901760
      %v8196 = vsub.f32 %v477, %v8195
      %v8197 = vand.u32 %v8196, 4294901760
      %8198 = vmatmul.f32.gmra.mxu0 %v8197
      %v8199 = vpop.f32.mrf.mxu0
      %v8200 = vadd.f32 %v7839, %v8199
      %v8201 = vand.u32 %v480, 4294901760
      %v8202 = vsub.f32 %v480, %v8201
      %v8203 = vand.u32 %v8202, 4294901760
      %8204 = vmatmul.f32.gmra.mxu0 %v8203
      %v8205 = vpop.f32.mrf.mxu0
      %v8206 = vadd.f32 %v7844, %v8205
      %v8207 = vand.u32 %v483, 4294901760
      %v8208 = vsub.f32 %v483, %v8207
      %v8209 = vand.u32 %v8208, 4294901760
      %8210 = vmatmul.f32.gmra.mxu0 %v8209
      %v8211 = vpop.f32.mrf.mxu0
      %v8212 = vadd.f32 %v7849, %v8211
      %v8213 = vand.u32 %v486, 4294901760
      %v8214 = vsub.f32 %v486, %v8213
      %v8215 = vand.u32 %v8214, 4294901760
      %8216 = vmatmul.f32.gmra.mxu0 %v8215
      %v8217 = vpop.f32.mrf.mxu0
      %v8218 = vadd.f32 %v7854, %v8217
      %v8219 = vand.u32 %v489, 4294901760
      %v8220 = vsub.f32 %v489, %v8219
      %v8221 = vand.u32 %v8220, 4294901760
      %8222 = vmatmul.f32.gmra.mxu0 %v8221
      %v8223 = vpop.f32.mrf.mxu0
      %v8224 = vadd.f32 %v7859, %v8223
      %v8225 = vand.u32 %v492, 4294901760
      %v8226 = vsub.f32 %v492, %v8225
      %v8227 = vand.u32 %v8226, 4294901760
      %8228 = vmatmul.f32.gmra.mxu0 %v8227
      %v8229 = vpop.f32.mrf.mxu0
      %v8230 = vadd.f32 %v7864, %v8229
      %v8231 = vand.u32 %v495, 4294901760
      %v8232 = vsub.f32 %v495, %v8231
      %v8233 = vand.u32 %v8232, 4294901760
      %8234 = vmatmul.f32.gmra.mxu0 %v8233
      %v8235 = vpop.f32.mrf.mxu0
      %v8236 = vadd.f32 %v7869, %v8235
      %v8237 = vand.u32 %v498, 4294901760
      %v8238 = vsub.f32 %v498, %v8237
      %v8239 = vand.u32 %v8238, 4294901760
      %8240 = vmatmul.f32.gmra.mxu0 %v8239
      %v8241 = vpop.f32.mrf.mxu0
      %v8242 = vadd.f32 %v7874, %v8241
      %v8243 = vand.u32 %v501, 4294901760
      %v8244 = vsub.f32 %v501, %v8243
      %v8245 = vand.u32 %v8244, 4294901760
      %8246 = vmatmul.f32.gmra.mxu0 %v8245
      %v8247 = vpop.f32.mrf.mxu0
      %v8248 = vadd.f32 %v7879, %v8247
      %v8249 = vand.u32 %v504, 4294901760
      %v8250 = vsub.f32 %v504, %v8249
      %v8251 = vand.u32 %v8250, 4294901760
      %8252 = vmatmul.f32.gmra.mxu0 %v8251
      %v8253 = vpop.f32.mrf.mxu0
      %v8254 = vadd.f32 %v7884, %v8253
      %v8255 = vand.u32 %v507, 4294901760
      %v8256 = vsub.f32 %v507, %v8255
      %v8257 = vand.u32 %v8256, 4294901760
      %8258 = vmatmul.f32.gmra.mxu0 %v8257
      %v8259 = vpop.f32.mrf.mxu0
      %v8260 = vadd.f32 %v7889, %v8259
      %v8261 = vand.u32 %v510, 4294901760
      %v8262 = vsub.f32 %v510, %v8261
      %v8263 = vand.u32 %v8262, 4294901760
      %8264 = vmatmul.f32.gmra.mxu0 %v8263
      %v8265 = vpop.f32.mrf.mxu0
      %v8266 = vadd.f32 %v7894, %v8265
      %v8267 = vand.u32 %v513, 4294901760
      %v8268 = vsub.f32 %v513, %v8267
      %v8269 = vand.u32 %v8268, 4294901760
      %8270 = vmatmul.f32.gmra.mxu0 %v8269
      %v8271 = vpop.f32.mrf.mxu0
      %v8272 = vadd.f32 %v7899, %v8271
      %v8273 = vand.u32 %v516, 4294901760
      %v8274 = vsub.f32 %v516, %v8273
      %v8275 = vand.u32 %v8274, 4294901760
      %8276 = vmatmul.f32.gmra.mxu0 %v8275
      %v8277 = vpop.f32.mrf.mxu0
      %v8278 = vadd.f32 %v7904, %v8277
      %v8279 = vand.u32 %v519, 4294901760
      %v8280 = vsub.f32 %v519, %v8279
      %v8281 = vand.u32 %v8280, 4294901760
      %8282 = vmatmul.f32.gmra.mxu0 %v8281
      %v8283 = vpop.f32.mrf.mxu0
      %v8284 = vadd.f32 %v7909, %v8283
      %v8285 = vand.u32 %v522, 4294901760
      %v8286 = vsub.f32 %v522, %v8285
      %v8287 = vand.u32 %v8286, 4294901760
      %8288 = vmatmul.f32.gmra.mxu0 %v8287
      %v8289 = vpop.f32.mrf.mxu0
      %v8290 = vadd.f32 %v7914, %v8289
      %v8291 = vand.u32 %v525, 4294901760
      %v8292 = vsub.f32 %v525, %v8291
      %v8293 = vand.u32 %v8292, 4294901760
      %8294 = vmatmul.f32.gmra.mxu0 %v8293
      %v8295 = vpop.f32.mrf.mxu0
      %v8296 = vadd.f32 %v7919, %v8295
      %v8297 = vand.u32 %v528, 4294901760
      %v8298 = vsub.f32 %v528, %v8297
      %v8299 = vand.u32 %v8298, 4294901760
      %8300 = vmatmul.f32.gmra.mxu0 %v8299
      %v8301 = vpop.f32.mrf.mxu0
      %v8302 = vadd.f32 %v7924, %v8301
      %v8303 = vand.u32 %v531, 4294901760
      %v8304 = vsub.f32 %v531, %v8303
      %v8305 = vand.u32 %v8304, 4294901760
      %8306 = vmatmul.f32.gmra.mxu0 %v8305
      %v8307 = vpop.f32.mrf.mxu0
      %v8308 = vadd.f32 %v7929, %v8307
      %v8309 = vand.u32 %v534, 4294901760
      %v8310 = vsub.f32 %v534, %v8309
      %v8311 = vand.u32 %v8310, 4294901760
      %8312 = vmatmul.f32.gmra.mxu0 %v8311
      %v8313 = vpop.f32.mrf.mxu0
      %v8314 = vadd.f32 %v7934, %v8313
      %v8315 = vand.u32 %v537, 4294901760
      %v8316 = vsub.f32 %v537, %v8315
      %v8317 = vand.u32 %v8316, 4294901760
      %8318 = vmatmul.f32.gmra.mxu0 %v8317
      %v8319 = vpop.f32.mrf.mxu0
      %v8320 = vadd.f32 %v7939, %v8319
      %v8321 = vand.u32 %v540, 4294901760
      %v8322 = vsub.f32 %v540, %v8321
      %v8323 = vand.u32 %v8322, 4294901760
      %8324 = vmatmul.f32.gmra.mxu0 %v8323
      %v8325 = vpop.f32.mrf.mxu0
      %v8326 = vadd.f32 %v7944, %v8325
      %v8327 = vand.u32 %v543, 4294901760
      %v8328 = vsub.f32 %v543, %v8327
      %v8329 = vand.u32 %v8328, 4294901760
      %8330 = vmatmul.f32.gmra.mxu0 %v8329
      %v8331 = vpop.f32.mrf.mxu0
      %v8332 = vadd.f32 %v7949, %v8331
      %v8333 = vand.u32 %v546, 4294901760
      %v8334 = vsub.f32 %v546, %v8333
      %v8335 = vand.u32 %v8334, 4294901760
      %8336 = vmatmul.f32.gmra.mxu0 %v8335
      %v8337 = vpop.f32.mrf.mxu0
      %v8338 = vadd.f32 %v7954, %v8337
      %v8339 = vand.u32 %v549, 4294901760
      %v8340 = vsub.f32 %v549, %v8339
      %v8341 = vand.u32 %v8340, 4294901760
      %8342 = vmatmul.f32.gmra.mxu0 %v8341
      %v8343 = vpop.f32.mrf.mxu0
      %v8344 = vadd.f32 %v7959, %v8343
      %v8345 = vand.u32 %v552, 4294901760
      %v8346 = vsub.f32 %v552, %v8345
      %v8347 = vand.u32 %v8346, 4294901760
      %8348 = vmatmul.f32.gmra.mxu0 %v8347
      %v8349 = vpop.f32.mrf.mxu0
      %v8350 = vadd.f32 %v7964, %v8349
      %v8351 = vand.u32 %v555, 4294901760
      %v8352 = vsub.f32 %v555, %v8351
      %v8353 = vand.u32 %v8352, 4294901760
      %8354 = vmatmul.f32.gmra.mxu0 %v8353
      %v8355 = vpop.f32.mrf.mxu0
      %v8356 = vadd.f32 %v7969, %v8355
      %v8357 = vand.u32 %v558, 4294901760
      %v8358 = vsub.f32 %v558, %v8357
      %v8359 = vand.u32 %v8358, 4294901760
      %8360 = vmatmul.f32.gmra.mxu0 %v8359
      %v8361 = vpop.f32.mrf.mxu0
      %v8362 = vadd.f32 %v7974, %v8361
      %v8363 = vand.u32 %v561, 4294901760
      %v8364 = vsub.f32 %v561, %v8363
      %v8365 = vand.u32 %v8364, 4294901760
      %8366 = vmatmul.f32.gmra.mxu0 %v8365
      %v8367 = vpop.f32.mrf.mxu0
      %v8368 = vadd.f32 %v7979, %v8367
      %v8369 = vand.u32 %v564, 4294901760
      %v8370 = vsub.f32 %v564, %v8369
      %v8371 = vand.u32 %v8370, 4294901760
      %8372 = vmatmul.f32.gmra.mxu0 %v8371
      %v8373 = vpop.f32.mrf.mxu0
      %v8374 = vadd.f32 %v7984, %v8373
      %v8375 = vand.u32 %v567, 4294901760
      %v8376 = vsub.f32 %v567, %v8375
      %v8377 = vand.u32 %v8376, 4294901760
      %8378 = vmatmul.f32.gmra.mxu0 %v8377
      %v8379 = vpop.f32.mrf.mxu0
      %v8380 = vadd.f32 %v7989, %v8379
      %v8381 = vand.u32 %v570, 4294901760
      %v8382 = vsub.f32 %v570, %v8381
      %v8383 = vand.u32 %v8382, 4294901760
      %8384 = vmatmul.f32.gmra.mxu0 %v8383
      %v8385 = vpop.f32.mrf.mxu0
      %v8386 = vadd.f32 %v7994, %v8385
      %v8387 = vand.u32 %v573, 4294901760
      %v8388 = vsub.f32 %v573, %v8387
      %v8389 = vand.u32 %v8388, 4294901760
      %8390 = vmatmul.f32.gmra.mxu0 %v8389
      %v8391 = vpop.f32.mrf.mxu0
      %v8392 = vadd.f32 %v7999, %v8391
      %v8393 = vand.u32 %v576, 4294901760
      %v8394 = vsub.f32 %v576, %v8393
      %v8395 = vand.u32 %v8394, 4294901760
      %8396 = vmatmul.f32.gmra.mxu0 %v8395
      %v8397 = vpop.f32.mrf.mxu0
      %v8398 = vadd.f32 %v8004, %v8397
      %v8399 = vand.u32 %v579, 4294901760
      %v8400 = vsub.f32 %v579, %v8399
      %v8401 = vand.u32 %v8400, 4294901760
      %8402 = vmatmul.f32.gmra.mxu0 %v8401
      %v8403 = vpop.f32.mrf.mxu0
      %v8404 = vadd.f32 %v8009, %v8403
      %v8405 = vand.u32 %v582, 4294901760
      %v8406 = vsub.f32 %v582, %v8405
      %v8407 = vand.u32 %v8406, 4294901760
      %8408 = vmatmul.f32.gmra.mxu0 %v8407
      %v8409 = vpop.f32.mrf.mxu0
      %v8410 = vadd.f32 %v8014, %v8409
      %v8411 = vand.u32 %v585, 4294901760
      %v8412 = vsub.f32 %v585, %v8411
      %v8413 = vand.u32 %v8412, 4294901760
      %8414 = vmatmul.f32.gmra.mxu0 %v8413
      %v8415 = vpop.f32.mrf.mxu0
      %v8416 = vadd.f32 %v8019, %v8415
      %v8417 = vand.u32 %v588, 4294901760
      %v8418 = vsub.f32 %v588, %v8417
      %v8419 = vand.u32 %v8418, 4294901760
      %8420 = vmatmul.f32.gmra.mxu0 %v8419
      %v8421 = vpop.f32.mrf.mxu0
      %v8422 = vadd.f32 %v8024, %v8421
      %v8423 = vand.u32 %v591, 4294901760
      %v8424 = vsub.f32 %v591, %v8423
      %v8425 = vand.u32 %v8424, 4294901760
      %8426 = vmatmul.f32.gmra.mxu0 %v8425
      %v8427 = vpop.f32.mrf.mxu0
      %v8428 = vadd.f32 %v8029, %v8427
      %v8429 = vand.u32 %v594, 4294901760
      %v8430 = vsub.f32 %v594, %v8429
      %v8431 = vand.u32 %v8430, 4294901760
      %8432 = vmatmul.f32.gmra.mxu0 %v8431
      %v8433 = vpop.f32.mrf.mxu0
      %v8434 = vadd.f32 %v8034, %v8433
      %v8435 = vand.u32 %v597, 4294901760
      %v8436 = vsub.f32 %v597, %v8435
      %v8437 = vand.u32 %v8436, 4294901760
      %8438 = vmatmul.f32.gmra.mxu0 %v8437
      %v8439 = vpop.f32.mrf.mxu0
      %v8440 = vadd.f32 %v8039, %v8439
      %v8441 = vand.u32 %v600, 4294901760
      %v8442 = vsub.f32 %v600, %v8441
      %v8443 = vand.u32 %v8442, 4294901760
      %8444 = vmatmul.f32.gmra.mxu0 %v8443
      %v8445 = vpop.f32.mrf.mxu0
      %v8446 = vadd.f32 %v8044, %v8445
      %8447 = vdwg.mxu0
      %8448 = vmatpush.msra.mxu0 0.0
      %8449 = vmatpush.msra.mxu0 0.0
      %8450 = vmatpush.msra.mxu0 0.0
      %8451 = vmatpush.msra.mxu0 0.0
      %8452 = vmatpush.msra.mxu0 0.0
      %8453 = vmatpush.msra.mxu0 0.0
      %8454 = vmatpush.msra.mxu0 0.0
      %8455 = vmatpush.msra.mxu0 0.0
      %8456 = vmatpush.msra.mxu0 0.0
      %8457 = vmatpush.msra.mxu0 0.0
      %8458 = vmatpush.msra.mxu0 0.0
      %8459 = vmatpush.msra.mxu0 0.0
      %8460 = vmatpush.msra.mxu0 0.0
      %8461 = vmatpush.msra.mxu0 0.0
      %8462 = vmatpush.msra.mxu0 0.0
      %v8463 = vand.u32 %v272, 4294901760
      %v8464 = vsub.f32 %v272, %v8463
      %v8465 = vand.u32 %v8464, 4294901760
      %8466 = vmatpush.msra.mxu0 %v8465
      %v8467 = vand.u32 %v411, 4294901760
      %8468 = vmatmul.f32.gmra.mxu0 %v8467
      %v8469 = vpop.f32.mrf.mxu0
      %v8470 = vadd.f32 %v8068, %v8469
      %v8471 = vand.u32 %v414, 4294901760
      %8472 = vmatmul.f32.gmra.mxu0 %v8471
      %v8473 = vpop.f32.mrf.mxu0
      %v8474 = vadd.f32 %v8074, %v8473
      %v8475 = vand.u32 %v417, 4294901760
      %8476 = vmatmul.f32.gmra.mxu0 %v8475
      %v8477 = vpop.f32.mrf.mxu0
      %v8478 = vadd.f32 %v8080, %v8477
      %v8479 = vand.u32 %v420, 4294901760
      %8480 = vmatmul.f32.gmra.mxu0 %v8479
      %v8481 = vpop.f32.mrf.mxu0
      %v8482 = vadd.f32 %v8086, %v8481
      %v8483 = vand.u32 %v423, 4294901760
      %8484 = vmatmul.f32.gmra.mxu0 %v8483
      %v8485 = vpop.f32.mrf.mxu0
      %v8486 = vadd.f32 %v8092, %v8485
      %v8487 = vand.u32 %v426, 4294901760
      %8488 = vmatmul.f32.gmra.mxu0 %v8487
      %v8489 = vpop.f32.mrf.mxu0
      %v8490 = vadd.f32 %v8098, %v8489
      %v8491 = vand.u32 %v429, 4294901760
      %8492 = vmatmul.f32.gmra.mxu0 %v8491
      %v8493 = vpop.f32.mrf.mxu0
      %v8494 = vadd.f32 %v8104, %v8493
      %v8495 = vand.u32 %v432, 4294901760
      %8496 = vmatmul.f32.gmra.mxu0 %v8495
      %v8497 = vpop.f32.mrf.mxu0
      %v8498 = vadd.f32 %v8110, %v8497
      %v8499 = vand.u32 %v435, 4294901760
      %8500 = vmatmul.f32.gmra.mxu0 %v8499
      %v8501 = vpop.f32.mrf.mxu0
      %v8502 = vadd.f32 %v8116, %v8501
      %v8503 = vand.u32 %v438, 4294901760
      %8504 = vmatmul.f32.gmra.mxu0 %v8503
      %v8505 = vpop.f32.mrf.mxu0
      %v8506 = vadd.f32 %v8122, %v8505
      %v8507 = vand.u32 %v441, 4294901760
      %8508 = vmatmul.f32.gmra.mxu0 %v8507
      %v8509 = vpop.f32.mrf.mxu0
      %v8510 = vadd.f32 %v8128, %v8509
      %v8511 = vand.u32 %v444, 4294901760
      %8512 = vmatmul.f32.gmra.mxu0 %v8511
      %v8513 = vpop.f32.mrf.mxu0
      %v8514 = vadd.f32 %v8134, %v8513
      %v8515 = vand.u32 %v447, 4294901760
      %8516 = vmatmul.f32.gmra.mxu0 %v8515
      %v8517 = vpop.f32.mrf.mxu0
      %v8518 = vadd.f32 %v8140, %v8517
      %v8519 = vand.u32 %v450, 4294901760
      %8520 = vmatmul.f32.gmra.mxu0 %v8519
      %v8521 = vpop.f32.mrf.mxu0
      %v8522 = vadd.f32 %v8146, %v8521
      %v8523 = vand.u32 %v453, 4294901760
      %8524 = vmatmul.f32.gmra.mxu0 %v8523
      %v8525 = vpop.f32.mrf.mxu0
      %v8526 = vadd.f32 %v8152, %v8525
      %v8527 = vand.u32 %v456, 4294901760
      %8528 = vmatmul.f32.gmra.mxu0 %v8527
      %v8529 = vpop.f32.mrf.mxu0
      %v8530 = vadd.f32 %v8158, %v8529
      %v8531 = vand.u32 %v459, 4294901760
      %8532 = vmatmul.f32.gmra.mxu0 %v8531
      %v8533 = vpop.f32.mrf.mxu0
      %v8534 = vadd.f32 %v8164, %v8533
      %v8535 = vand.u32 %v462, 4294901760
      %8536 = vmatmul.f32.gmra.mxu0 %v8535
      %v8537 = vpop.f32.mrf.mxu0
      %v8538 = vadd.f32 %v8170, %v8537
      %v8539 = vand.u32 %v465, 4294901760
      %8540 = vmatmul.f32.gmra.mxu0 %v8539
      %v8541 = vpop.f32.mrf.mxu0
      %v8542 = vadd.f32 %v8176, %v8541
      %v8543 = vand.u32 %v468, 4294901760
      %8544 = vmatmul.f32.gmra.mxu0 %v8543
      %v8545 = vpop.f32.mrf.mxu0
      %v8546 = vadd.f32 %v8182, %v8545
      %v8547 = vand.u32 %v471, 4294901760
      %8548 = vmatmul.f32.gmra.mxu0 %v8547
      %v8549 = vpop.f32.mrf.mxu0
      %v8550 = vadd.f32 %v8188, %v8549
      %v8551 = vand.u32 %v474, 4294901760
      %8552 = vmatmul.f32.gmra.mxu0 %v8551
      %v8553 = vpop.f32.mrf.mxu0
      %v8554 = vadd.f32 %v8194, %v8553
      %v8555 = vand.u32 %v477, 4294901760
      %8556 = vmatmul.f32.gmra.mxu0 %v8555
      %v8557 = vpop.f32.mrf.mxu0
      %v8558 = vadd.f32 %v8200, %v8557
      %v8559 = vand.u32 %v480, 4294901760
      %8560 = vmatmul.f32.gmra.mxu0 %v8559
      %v8561 = vpop.f32.mrf.mxu0
      %v8562 = vadd.f32 %v8206, %v8561
      %v8563 = vand.u32 %v483, 4294901760
      %8564 = vmatmul.f32.gmra.mxu0 %v8563
      %v8565 = vpop.f32.mrf.mxu0
      %v8566 = vadd.f32 %v8212, %v8565
      %v8567 = vand.u32 %v486, 4294901760
      %8568 = vmatmul.f32.gmra.mxu0 %v8567
      %v8569 = vpop.f32.mrf.mxu0
      %v8570 = vadd.f32 %v8218, %v8569
      %v8571 = vand.u32 %v489, 4294901760
      %8572 = vmatmul.f32.gmra.mxu0 %v8571
      %v8573 = vpop.f32.mrf.mxu0
      %v8574 = vadd.f32 %v8224, %v8573
      %v8575 = vand.u32 %v492, 4294901760
      %8576 = vmatmul.f32.gmra.mxu0 %v8575
      %v8577 = vpop.f32.mrf.mxu0
      %v8578 = vadd.f32 %v8230, %v8577
      %v8579 = vand.u32 %v495, 4294901760
      %8580 = vmatmul.f32.gmra.mxu0 %v8579
      %v8581 = vpop.f32.mrf.mxu0
      %v8582 = vadd.f32 %v8236, %v8581
      %v8583 = vand.u32 %v498, 4294901760
      %8584 = vmatmul.f32.gmra.mxu0 %v8583
      %v8585 = vpop.f32.mrf.mxu0
      %v8586 = vadd.f32 %v8242, %v8585
      %v8587 = vand.u32 %v501, 4294901760
      %8588 = vmatmul.f32.gmra.mxu0 %v8587
      %v8589 = vpop.f32.mrf.mxu0
      %v8590 = vadd.f32 %v8248, %v8589
      %v8591 = vand.u32 %v504, 4294901760
      %8592 = vmatmul.f32.gmra.mxu0 %v8591
      %v8593 = vpop.f32.mrf.mxu0
      %v8594 = vadd.f32 %v8254, %v8593
      %v8595 = vand.u32 %v507, 4294901760
      %8596 = vmatmul.f32.gmra.mxu0 %v8595
      %v8597 = vpop.f32.mrf.mxu0
      %v8598 = vadd.f32 %v8260, %v8597
      %v8599 = vand.u32 %v510, 4294901760
      %8600 = vmatmul.f32.gmra.mxu0 %v8599
      %v8601 = vpop.f32.mrf.mxu0
      %v8602 = vadd.f32 %v8266, %v8601
      %v8603 = vand.u32 %v513, 4294901760
      %8604 = vmatmul.f32.gmra.mxu0 %v8603
      %v8605 = vpop.f32.mrf.mxu0
      %v8606 = vadd.f32 %v8272, %v8605
      %v8607 = vand.u32 %v516, 4294901760
      %8608 = vmatmul.f32.gmra.mxu0 %v8607
      %v8609 = vpop.f32.mrf.mxu0
      %v8610 = vadd.f32 %v8278, %v8609
      %v8611 = vand.u32 %v519, 4294901760
      %8612 = vmatmul.f32.gmra.mxu0 %v8611
      %v8613 = vpop.f32.mrf.mxu0
      %v8614 = vadd.f32 %v8284, %v8613
      %v8615 = vand.u32 %v522, 4294901760
      %8616 = vmatmul.f32.gmra.mxu0 %v8615
      %v8617 = vpop.f32.mrf.mxu0
      %v8618 = vadd.f32 %v8290, %v8617
      %v8619 = vand.u32 %v525, 4294901760
      %8620 = vmatmul.f32.gmra.mxu0 %v8619
      %v8621 = vpop.f32.mrf.mxu0
      %v8622 = vadd.f32 %v8296, %v8621
      %v8623 = vand.u32 %v528, 4294901760
      %8624 = vmatmul.f32.gmra.mxu0 %v8623
      %v8625 = vpop.f32.mrf.mxu0
      %v8626 = vadd.f32 %v8302, %v8625
      %v8627 = vand.u32 %v531, 4294901760
      %8628 = vmatmul.f32.gmra.mxu0 %v8627
      %v8629 = vpop.f32.mrf.mxu0
      %v8630 = vadd.f32 %v8308, %v8629
      %v8631 = vand.u32 %v534, 4294901760
      %8632 = vmatmul.f32.gmra.mxu0 %v8631
      %v8633 = vpop.f32.mrf.mxu0
      %v8634 = vadd.f32 %v8314, %v8633
      %v8635 = vand.u32 %v537, 4294901760
      %8636 = vmatmul.f32.gmra.mxu0 %v8635
      %v8637 = vpop.f32.mrf.mxu0
      %v8638 = vadd.f32 %v8320, %v8637
      %v8639 = vand.u32 %v540, 4294901760
      %8640 = vmatmul.f32.gmra.mxu0 %v8639
      %v8641 = vpop.f32.mrf.mxu0
      %v8642 = vadd.f32 %v8326, %v8641
      %v8643 = vand.u32 %v543, 4294901760
      %8644 = vmatmul.f32.gmra.mxu0 %v8643
      %v8645 = vpop.f32.mrf.mxu0
      %v8646 = vadd.f32 %v8332, %v8645
      %v8647 = vand.u32 %v546, 4294901760
      %8648 = vmatmul.f32.gmra.mxu0 %v8647
      %v8649 = vpop.f32.mrf.mxu0
      %v8650 = vadd.f32 %v8338, %v8649
      %v8651 = vand.u32 %v549, 4294901760
      %8652 = vmatmul.f32.gmra.mxu0 %v8651
      %v8653 = vpop.f32.mrf.mxu0
      %v8654 = vadd.f32 %v8344, %v8653
      %v8655 = vand.u32 %v552, 4294901760
      %8656 = vmatmul.f32.gmra.mxu0 %v8655
      %v8657 = vpop.f32.mrf.mxu0
      %v8658 = vadd.f32 %v8350, %v8657
      %v8659 = vand.u32 %v555, 4294901760
      %8660 = vmatmul.f32.gmra.mxu0 %v8659
      %v8661 = vpop.f32.mrf.mxu0
      %v8662 = vadd.f32 %v8356, %v8661
      %v8663 = vand.u32 %v558, 4294901760
      %8664 = vmatmul.f32.gmra.mxu0 %v8663
      %v8665 = vpop.f32.mrf.mxu0
      %v8666 = vadd.f32 %v8362, %v8665
      %v8667 = vand.u32 %v561, 4294901760
      %8668 = vmatmul.f32.gmra.mxu0 %v8667
      %v8669 = vpop.f32.mrf.mxu0
      %v8670 = vadd.f32 %v8368, %v8669
      %v8671 = vand.u32 %v564, 4294901760
      %8672 = vmatmul.f32.gmra.mxu0 %v8671
      %v8673 = vpop.f32.mrf.mxu0
      %v8674 = vadd.f32 %v8374, %v8673
      %v8675 = vand.u32 %v567, 4294901760
      %8676 = vmatmul.f32.gmra.mxu0 %v8675
      %v8677 = vpop.f32.mrf.mxu0
      %v8678 = vadd.f32 %v8380, %v8677
      %v8679 = vand.u32 %v570, 4294901760
      %8680 = vmatmul.f32.gmra.mxu0 %v8679
      %v8681 = vpop.f32.mrf.mxu0
      %v8682 = vadd.f32 %v8386, %v8681
      %v8683 = vand.u32 %v573, 4294901760
      %8684 = vmatmul.f32.gmra.mxu0 %v8683
      %v8685 = vpop.f32.mrf.mxu0
      %v8686 = vadd.f32 %v8392, %v8685
      %v8687 = vand.u32 %v576, 4294901760
      %8688 = vmatmul.f32.gmra.mxu0 %v8687
      %v8689 = vpop.f32.mrf.mxu0
      %v8690 = vadd.f32 %v8398, %v8689
      %v8691 = vand.u32 %v579, 4294901760
      %8692 = vmatmul.f32.gmra.mxu0 %v8691
      %v8693 = vpop.f32.mrf.mxu0
      %v8694 = vadd.f32 %v8404, %v8693
      %v8695 = vand.u32 %v582, 4294901760
      %8696 = vmatmul.f32.gmra.mxu0 %v8695
      %v8697 = vpop.f32.mrf.mxu0
      %v8698 = vadd.f32 %v8410, %v8697
      %v8699 = vand.u32 %v585, 4294901760
      %8700 = vmatmul.f32.gmra.mxu0 %v8699
      %v8701 = vpop.f32.mrf.mxu0
      %v8702 = vadd.f32 %v8416, %v8701
      %v8703 = vand.u32 %v588, 4294901760
      %8704 = vmatmul.f32.gmra.mxu0 %v8703
      %v8705 = vpop.f32.mrf.mxu0
      %v8706 = vadd.f32 %v8422, %v8705
      %v8707 = vand.u32 %v591, 4294901760
      %8708 = vmatmul.f32.gmra.mxu0 %v8707
      %v8709 = vpop.f32.mrf.mxu0
      %v8710 = vadd.f32 %v8428, %v8709
      %v8711 = vand.u32 %v594, 4294901760
      %8712 = vmatmul.f32.gmra.mxu0 %v8711
      %v8713 = vpop.f32.mrf.mxu0
      %v8714 = vadd.f32 %v8434, %v8713
      %v8715 = vand.u32 %v597, 4294901760
      %8716 = vmatmul.f32.gmra.mxu0 %v8715
      %v8717 = vpop.f32.mrf.mxu0
      %v8718 = vadd.f32 %v8440, %v8717
      %v8719 = vand.u32 %v600, 4294901760
      %8720 = vmatmul.f32.gmra.mxu0 %v8719
      %v8721 = vpop.f32.mrf.mxu0
      %v8722 = vadd.f32 %v8446, %v8721
      %8723 = vdwg.mxu0
      %8724 = vmatpush.msra.mxu0 0.0
      %8725 = vmatpush.msra.mxu0 0.0
      %8726 = vmatpush.msra.mxu0 0.0
      %8727 = vmatpush.msra.mxu0 0.0
      %8728 = vmatpush.msra.mxu0 0.0
      %8729 = vmatpush.msra.mxu0 0.0
      %8730 = vmatpush.msra.mxu0 0.0
      %8731 = vmatpush.msra.mxu0 0.0
      %8732 = vmatpush.msra.mxu0 0.0
      %8733 = vmatpush.msra.mxu0 0.0
      %8734 = vmatpush.msra.mxu0 0.0
      %8735 = vmatpush.msra.mxu0 0.0
      %8736 = vmatpush.msra.mxu0 0.0
      %8737 = vmatpush.msra.mxu0 0.0
      %8738 = vmatpush.msra.mxu0 0.0
      %v8739 = vand.u32 %v272, 4294901760
      %8740 = vmatpush.msra.mxu0 %v8739
      %v8741 = vand.u32 %v411, 4294901760
      %8742 = vmatmul.f32.gmra.mxu0 %v8741
      %v8743 = vpop.f32.mrf.mxu0
      %v8744 = vadd.f32 %v8470, %v8743
      %v8745 = vand.u32 %v414, 4294901760
      %8746 = vmatmul.f32.gmra.mxu0 %v8745
      %v8747 = vpop.f32.mrf.mxu0
      %v8748 = vadd.f32 %v8474, %v8747
      %v8749 = vand.u32 %v417, 4294901760
      %8750 = vmatmul.f32.gmra.mxu0 %v8749
      %v8751 = vpop.f32.mrf.mxu0
      %v8752 = vadd.f32 %v8478, %v8751
      %v8753 = vand.u32 %v420, 4294901760
      %8754 = vmatmul.f32.gmra.mxu0 %v8753
      %v8755 = vpop.f32.mrf.mxu0
      %v8756 = vadd.f32 %v8482, %v8755
      %v8757 = vand.u32 %v423, 4294901760
      %8758 = vmatmul.f32.gmra.mxu0 %v8757
      %v8759 = vpop.f32.mrf.mxu0
      %v8760 = vadd.f32 %v8486, %v8759
      %v8761 = vand.u32 %v426, 4294901760
      %8762 = vmatmul.f32.gmra.mxu0 %v8761
      %v8763 = vpop.f32.mrf.mxu0
      %v8764 = vadd.f32 %v8490, %v8763
      %v8765 = vand.u32 %v429, 4294901760
      %8766 = vmatmul.f32.gmra.mxu0 %v8765
      %v8767 = vpop.f32.mrf.mxu0
      %v8768 = vadd.f32 %v8494, %v8767
      %v8769 = vand.u32 %v432, 4294901760
      %8770 = vmatmul.f32.gmra.mxu0 %v8769
      %v8771 = vpop.f32.mrf.mxu0
      %v8772 = vadd.f32 %v8498, %v8771
      %v8773 = vand.u32 %v435, 4294901760
      %8774 = vmatmul.f32.gmra.mxu0 %v8773
      %v8775 = vpop.f32.mrf.mxu0
      %v8776 = vadd.f32 %v8502, %v8775
      %v8777 = vand.u32 %v438, 4294901760
      %8778 = vmatmul.f32.gmra.mxu0 %v8777
      %v8779 = vpop.f32.mrf.mxu0
      %v8780 = vadd.f32 %v8506, %v8779
      %v8781 = vand.u32 %v441, 4294901760
      %8782 = vmatmul.f32.gmra.mxu0 %v8781
      %v8783 = vpop.f32.mrf.mxu0
      %v8784 = vadd.f32 %v8510, %v8783
      %v8785 = vand.u32 %v444, 4294901760
      %8786 = vmatmul.f32.gmra.mxu0 %v8785
      %v8787 = vpop.f32.mrf.mxu0
      %v8788 = vadd.f32 %v8514, %v8787
      %v8789 = vand.u32 %v447, 4294901760
      %8790 = vmatmul.f32.gmra.mxu0 %v8789
      %v8791 = vpop.f32.mrf.mxu0
      %v8792 = vadd.f32 %v8518, %v8791
      %v8793 = vand.u32 %v450, 4294901760
      %8794 = vmatmul.f32.gmra.mxu0 %v8793
      %v8795 = vpop.f32.mrf.mxu0
      %v8796 = vadd.f32 %v8522, %v8795
      %v8797 = vand.u32 %v453, 4294901760
      %8798 = vmatmul.f32.gmra.mxu0 %v8797
      %v8799 = vpop.f32.mrf.mxu0
      %v8800 = vadd.f32 %v8526, %v8799
      %v8801 = vand.u32 %v456, 4294901760
      %8802 = vmatmul.f32.gmra.mxu0 %v8801
      %v8803 = vpop.f32.mrf.mxu0
      %v8804 = vadd.f32 %v8530, %v8803
      %v8805 = vand.u32 %v459, 4294901760
      %8806 = vmatmul.f32.gmra.mxu0 %v8805
      %v8807 = vpop.f32.mrf.mxu0
      %v8808 = vadd.f32 %v8534, %v8807
      %v8809 = vand.u32 %v462, 4294901760
      %8810 = vmatmul.f32.gmra.mxu0 %v8809
      %v8811 = vpop.f32.mrf.mxu0
      %v8812 = vadd.f32 %v8538, %v8811
      %v8813 = vand.u32 %v465, 4294901760
      %8814 = vmatmul.f32.gmra.mxu0 %v8813
      %v8815 = vpop.f32.mrf.mxu0
      %v8816 = vadd.f32 %v8542, %v8815
      %v8817 = vand.u32 %v468, 4294901760
      %8818 = vmatmul.f32.gmra.mxu0 %v8817
      %v8819 = vpop.f32.mrf.mxu0
      %v8820 = vadd.f32 %v8546, %v8819
      %v8821 = vand.u32 %v471, 4294901760
      %8822 = vmatmul.f32.gmra.mxu0 %v8821
      %v8823 = vpop.f32.mrf.mxu0
      %v8824 = vadd.f32 %v8550, %v8823
      %v8825 = vand.u32 %v474, 4294901760
      %8826 = vmatmul.f32.gmra.mxu0 %v8825
      %v8827 = vpop.f32.mrf.mxu0
      %v8828 = vadd.f32 %v8554, %v8827
      %v8829 = vand.u32 %v477, 4294901760
      %8830 = vmatmul.f32.gmra.mxu0 %v8829
      %v8831 = vpop.f32.mrf.mxu0
      %v8832 = vadd.f32 %v8558, %v8831
      %v8833 = vand.u32 %v480, 4294901760
      %8834 = vmatmul.f32.gmra.mxu0 %v8833
      %v8835 = vpop.f32.mrf.mxu0
      %v8836 = vadd.f32 %v8562, %v8835
      %v8837 = vand.u32 %v483, 4294901760
      %8838 = vmatmul.f32.gmra.mxu0 %v8837
      %v8839 = vpop.f32.mrf.mxu0
      %v8840 = vadd.f32 %v8566, %v8839
      %v8841 = vand.u32 %v486, 4294901760
      %8842 = vmatmul.f32.gmra.mxu0 %v8841
      %v8843 = vpop.f32.mrf.mxu0
      %v8844 = vadd.f32 %v8570, %v8843
      %v8845 = vand.u32 %v489, 4294901760
      %8846 = vmatmul.f32.gmra.mxu0 %v8845
      %v8847 = vpop.f32.mrf.mxu0
      %v8848 = vadd.f32 %v8574, %v8847
      %v8849 = vand.u32 %v492, 4294901760
      %8850 = vmatmul.f32.gmra.mxu0 %v8849
      %v8851 = vpop.f32.mrf.mxu0
      %v8852 = vadd.f32 %v8578, %v8851
      %v8853 = vand.u32 %v495, 4294901760
      %8854 = vmatmul.f32.gmra.mxu0 %v8853
      %v8855 = vpop.f32.mrf.mxu0
      %v8856 = vadd.f32 %v8582, %v8855
      %v8857 = vand.u32 %v498, 4294901760
      %8858 = vmatmul.f32.gmra.mxu0 %v8857
      %v8859 = vpop.f32.mrf.mxu0
      %v8860 = vadd.f32 %v8586, %v8859
      %v8861 = vand.u32 %v501, 4294901760
      %8862 = vmatmul.f32.gmra.mxu0 %v8861
      %v8863 = vpop.f32.mrf.mxu0
      %v8864 = vadd.f32 %v8590, %v8863
      %v8865 = vand.u32 %v504, 4294901760
      %8866 = vmatmul.f32.gmra.mxu0 %v8865
      %v8867 = vpop.f32.mrf.mxu0
      %v8868 = vadd.f32 %v8594, %v8867
      %v8869 = vand.u32 %v507, 4294901760
      %8870 = vmatmul.f32.gmra.mxu0 %v8869
      %v8871 = vpop.f32.mrf.mxu0
      %v8872 = vadd.f32 %v8598, %v8871
      %v8873 = vand.u32 %v510, 4294901760
      %8874 = vmatmul.f32.gmra.mxu0 %v8873
      %v8875 = vpop.f32.mrf.mxu0
      %v8876 = vadd.f32 %v8602, %v8875
      %v8877 = vand.u32 %v513, 4294901760
      %8878 = vmatmul.f32.gmra.mxu0 %v8877
      %v8879 = vpop.f32.mrf.mxu0
      %v8880 = vadd.f32 %v8606, %v8879
      %v8881 = vand.u32 %v516, 4294901760
      %8882 = vmatmul.f32.gmra.mxu0 %v8881
      %v8883 = vpop.f32.mrf.mxu0
      %v8884 = vadd.f32 %v8610, %v8883
      %v8885 = vand.u32 %v519, 4294901760
      %8886 = vmatmul.f32.gmra.mxu0 %v8885
      %v8887 = vpop.f32.mrf.mxu0
      %v8888 = vadd.f32 %v8614, %v8887
      %v8889 = vand.u32 %v522, 4294901760
      %8890 = vmatmul.f32.gmra.mxu0 %v8889
      %v8891 = vpop.f32.mrf.mxu0
      %v8892 = vadd.f32 %v8618, %v8891
      %v8893 = vand.u32 %v525, 4294901760
      %8894 = vmatmul.f32.gmra.mxu0 %v8893
      %v8895 = vpop.f32.mrf.mxu0
      %v8896 = vadd.f32 %v8622, %v8895
      %v8897 = vand.u32 %v528, 4294901760
      %8898 = vmatmul.f32.gmra.mxu0 %v8897
      %v8899 = vpop.f32.mrf.mxu0
      %v8900 = vadd.f32 %v8626, %v8899
      %v8901 = vand.u32 %v531, 4294901760
      %8902 = vmatmul.f32.gmra.mxu0 %v8901
      %v8903 = vpop.f32.mrf.mxu0
      %v8904 = vadd.f32 %v8630, %v8903
      %v8905 = vand.u32 %v534, 4294901760
      %8906 = vmatmul.f32.gmra.mxu0 %v8905
      %v8907 = vpop.f32.mrf.mxu0
      %v8908 = vadd.f32 %v8634, %v8907
      %v8909 = vand.u32 %v537, 4294901760
      %8910 = vmatmul.f32.gmra.mxu0 %v8909
      %v8911 = vpop.f32.mrf.mxu0
      %v8912 = vadd.f32 %v8638, %v8911
      %v8913 = vand.u32 %v540, 4294901760
      %8914 = vmatmul.f32.gmra.mxu0 %v8913
      %v8915 = vpop.f32.mrf.mxu0
      %v8916 = vadd.f32 %v8642, %v8915
      %v8917 = vand.u32 %v543, 4294901760
      %8918 = vmatmul.f32.gmra.mxu0 %v8917
      %v8919 = vpop.f32.mrf.mxu0
      %v8920 = vadd.f32 %v8646, %v8919
      %v8921 = vand.u32 %v546, 4294901760
      %8922 = vmatmul.f32.gmra.mxu0 %v8921
      %v8923 = vpop.f32.mrf.mxu0
      %v8924 = vadd.f32 %v8650, %v8923
      %v8925 = vand.u32 %v549, 4294901760
      %8926 = vmatmul.f32.gmra.mxu0 %v8925
      %v8927 = vpop.f32.mrf.mxu0
      %v8928 = vadd.f32 %v8654, %v8927
      %v8929 = vand.u32 %v552, 4294901760
      %8930 = vmatmul.f32.gmra.mxu0 %v8929
      %v8931 = vpop.f32.mrf.mxu0
      %v8932 = vadd.f32 %v8658, %v8931
      %v8933 = vand.u32 %v555, 4294901760
      %8934 = vmatmul.f32.gmra.mxu0 %v8933
      %v8935 = vpop.f32.mrf.mxu0
      %v8936 = vadd.f32 %v8662, %v8935
      %v8937 = vand.u32 %v558, 4294901760
      %8938 = vmatmul.f32.gmra.mxu0 %v8937
      %v8939 = vpop.f32.mrf.mxu0
      %v8940 = vadd.f32 %v8666, %v8939
      %v8941 = vand.u32 %v561, 4294901760
      %8942 = vmatmul.f32.gmra.mxu0 %v8941
      %v8943 = vpop.f32.mrf.mxu0
      %v8944 = vadd.f32 %v8670, %v8943
      %v8945 = vand.u32 %v564, 4294901760
      %8946 = vmatmul.f32.gmra.mxu0 %v8945
      %v8947 = vpop.f32.mrf.mxu0
      %v8948 = vadd.f32 %v8674, %v8947
      %v8949 = vand.u32 %v567, 4294901760
      %8950 = vmatmul.f32.gmra.mxu0 %v8949
      %v8951 = vpop.f32.mrf.mxu0
      %v8952 = vadd.f32 %v8678, %v8951
      %v8953 = vand.u32 %v570, 4294901760
      %8954 = vmatmul.f32.gmra.mxu0 %v8953
      %v8955 = vpop.f32.mrf.mxu0
      %v8956 = vadd.f32 %v8682, %v8955
      %v8957 = vand.u32 %v573, 4294901760
      %8958 = vmatmul.f32.gmra.mxu0 %v8957
      %v8959 = vpop.f32.mrf.mxu0
      %v8960 = vadd.f32 %v8686, %v8959
      %v8961 = vand.u32 %v576, 4294901760
      %8962 = vmatmul.f32.gmra.mxu0 %v8961
      %v8963 = vpop.f32.mrf.mxu0
      %v8964 = vadd.f32 %v8690, %v8963
      %v8965 = vand.u32 %v579, 4294901760
      %8966 = vmatmul.f32.gmra.mxu0 %v8965
      %v8967 = vpop.f32.mrf.mxu0
      %v8968 = vadd.f32 %v8694, %v8967
      %v8969 = vand.u32 %v582, 4294901760
      %8970 = vmatmul.f32.gmra.mxu0 %v8969
      %v8971 = vpop.f32.mrf.mxu0
      %v8972 = vadd.f32 %v8698, %v8971
      %v8973 = vand.u32 %v585, 4294901760
      %8974 = vmatmul.f32.gmra.mxu0 %v8973
      %v8975 = vpop.f32.mrf.mxu0
      %v8976 = vadd.f32 %v8702, %v8975
      %v8977 = vand.u32 %v588, 4294901760
      %8978 = vmatmul.f32.gmra.mxu0 %v8977
      %v8979 = vpop.f32.mrf.mxu0
      %v8980 = vadd.f32 %v8706, %v8979
      %v8981 = vand.u32 %v591, 4294901760
      %8982 = vmatmul.f32.gmra.mxu0 %v8981
      %v8983 = vpop.f32.mrf.mxu0
      %v8984 = vadd.f32 %v8710, %v8983
      %v8985 = vand.u32 %v594, 4294901760
      %8986 = vmatmul.f32.gmra.mxu0 %v8985
      %v8987 = vpop.f32.mrf.mxu0
      %v8988 = vadd.f32 %v8714, %v8987
      %v8989 = vand.u32 %v597, 4294901760
      %8990 = vmatmul.f32.gmra.mxu0 %v8989
      %v8991 = vpop.f32.mrf.mxu0
      %v8992 = vadd.f32 %v8718, %v8991
      %v8993 = vand.u32 %v600, 4294901760
      %8994 = vmatmul.f32.gmra.mxu0 %v8993
      %v8995 = vpop.f32.mrf.mxu0
      %v8996 = vadd.f32 %v8722, %v8995
      %8997 = vdwg.mxu0
      %v8998 = vmul.f32 %v2447, %v305
      %v8999 = vmul.f32 %v4546, %v306
      %v9000 = vmul.f32 %v6645, %v307
      %v9001 = vmul.f32 %v8744, %v308
      %v9002 = vmul.f32 %v2451, %v305
      %v9003 = vmul.f32 %v4550, %v306
      %v9004 = vmul.f32 %v6649, %v307
      %v9005 = vmul.f32 %v8748, %v308
      %v9006 = vmul.f32 %v2455, %v305
      %v9007 = vmul.f32 %v4554, %v306
      %v9008 = vmul.f32 %v6653, %v307
      %v9009 = vmul.f32 %v8752, %v308
      %v9010 = vmul.f32 %v2459, %v305
      %v9011 = vmul.f32 %v4558, %v306
      %v9012 = vmul.f32 %v6657, %v307
      %v9013 = vmul.f32 %v8756, %v308
      %v9014 = vmul.f32 %v2463, %v305
      %v9015 = vmul.f32 %v4562, %v306
      %v9016 = vmul.f32 %v6661, %v307
      %v9017 = vmul.f32 %v8760, %v308
      %v9018 = vmul.f32 %v2467, %v305
      %v9019 = vmul.f32 %v4566, %v306
      %v9020 = vmul.f32 %v6665, %v307
      %v9021 = vmul.f32 %v8764, %v308
      %v9022 = vmul.f32 %v2471, %v305
      %v9023 = vmul.f32 %v4570, %v306
      %v9024 = vmul.f32 %v6669, %v307
      %v9025 = vmul.f32 %v8768, %v308
      %v9026 = vmul.f32 %v2475, %v305
      %v9027 = vmul.f32 %v4574, %v306
      %v9028 = vmul.f32 %v6673, %v307
      %v9029 = vmul.f32 %v8772, %v308
      %v9030 = vmul.f32 %v2479, %v305
      %v9031 = vmul.f32 %v4578, %v306
      %v9032 = vmul.f32 %v6677, %v307
      %v9033 = vmul.f32 %v8776, %v308
      %v9034 = vmul.f32 %v2483, %v305
      %v9035 = vmul.f32 %v4582, %v306
      %v9036 = vmul.f32 %v6681, %v307
      %v9037 = vmul.f32 %v8780, %v308
      %v9038 = vmul.f32 %v2487, %v305
      %v9039 = vmul.f32 %v4586, %v306
      %v9040 = vmul.f32 %v6685, %v307
      %v9041 = vmul.f32 %v8784, %v308
      %v9042 = vmul.f32 %v2491, %v305
      %v9043 = vmul.f32 %v4590, %v306
      %v9044 = vmul.f32 %v6689, %v307
      %v9045 = vmul.f32 %v8788, %v308
      %v9046 = vmul.f32 %v2495, %v305
      %v9047 = vmul.f32 %v4594, %v306
      %v9048 = vmul.f32 %v6693, %v307
      %v9049 = vmul.f32 %v8792, %v308
      %v9050 = vmul.f32 %v2499, %v305
      %v9051 = vmul.f32 %v4598, %v306
      %v9052 = vmul.f32 %v6697, %v307
      %v9053 = vmul.f32 %v8796, %v308
      %v9054 = vmul.f32 %v2503, %v305
      %v9055 = vmul.f32 %v4602, %v306
      %v9056 = vmul.f32 %v6701, %v307
      %v9057 = vmul.f32 %v8800, %v308
      %v9058 = vmul.f32 %v2507, %v305
      %v9059 = vmul.f32 %v4606, %v306
      %v9060 = vmul.f32 %v6705, %v307
      %v9061 = vmul.f32 %v8804, %v308
      %v9062 = vmul.f32 %v2511, %v305
      %v9063 = vmul.f32 %v4610, %v306
      %v9064 = vmul.f32 %v6709, %v307
      %v9065 = vmul.f32 %v8808, %v308
      %v9066 = vmul.f32 %v2515, %v305
      %v9067 = vmul.f32 %v4614, %v306
      %v9068 = vmul.f32 %v6713, %v307
      %v9069 = vmul.f32 %v8812, %v308
      %v9070 = vmul.f32 %v2519, %v305
      %v9071 = vmul.f32 %v4618, %v306
      %v9072 = vmul.f32 %v6717, %v307
      %v9073 = vmul.f32 %v8816, %v308
      %v9074 = vmul.f32 %v2523, %v305
      %v9075 = vmul.f32 %v4622, %v306
      %v9076 = vmul.f32 %v6721, %v307
      %v9077 = vmul.f32 %v8820, %v308
      %v9078 = vmul.f32 %v2527, %v305
      %v9079 = vmul.f32 %v4626, %v306
      %v9080 = vmul.f32 %v6725, %v307
      %v9081 = vmul.f32 %v8824, %v308
      %v9082 = vmul.f32 %v2531, %v305
      %v9083 = vmul.f32 %v4630, %v306
      %v9084 = vmul.f32 %v6729, %v307
      %v9085 = vmul.f32 %v8828, %v308
      %v9086 = vmul.f32 %v2535, %v305
      %v9087 = vmul.f32 %v4634, %v306
      %v9088 = vmul.f32 %v6733, %v307
      %v9089 = vmul.f32 %v8832, %v308
      %v9090 = vmul.f32 %v2539, %v305
      %v9091 = vmul.f32 %v4638, %v306
      %v9092 = vmul.f32 %v6737, %v307
      %v9093 = vmul.f32 %v8836, %v308
      %v9094 = vmul.f32 %v2543, %v305
      %v9095 = vmul.f32 %v4642, %v306
      %v9096 = vmul.f32 %v6741, %v307
      %v9097 = vmul.f32 %v8840, %v308
      %v9098 = vmul.f32 %v2547, %v305
      %v9099 = vmul.f32 %v4646, %v306
      %v9100 = vmul.f32 %v6745, %v307
      %v9101 = vmul.f32 %v8844, %v308
      %v9102 = vmul.f32 %v2551, %v305
      %v9103 = vmul.f32 %v4650, %v306
      %v9104 = vmul.f32 %v6749, %v307
      %v9105 = vmul.f32 %v8848, %v308
      %v9106 = vmul.f32 %v2555, %v305
      %v9107 = vmul.f32 %v4654, %v306
      %v9108 = vmul.f32 %v6753, %v307
      %v9109 = vmul.f32 %v8852, %v308
      %v9110 = vmul.f32 %v2559, %v305
      %v9111 = vmul.f32 %v4658, %v306
      %v9112 = vmul.f32 %v6757, %v307
      %v9113 = vmul.f32 %v8856, %v308
      %v9114 = vmul.f32 %v2563, %v305
      %v9115 = vmul.f32 %v4662, %v306
      %v9116 = vmul.f32 %v6761, %v307
      %v9117 = vmul.f32 %v8860, %v308
      %v9118 = vmul.f32 %v2567, %v305
      %v9119 = vmul.f32 %v4666, %v306
      %v9120 = vmul.f32 %v6765, %v307
      %v9121 = vmul.f32 %v8864, %v308
      %v9122 = vmul.f32 %v2571, %v305
      %v9123 = vmul.f32 %v4670, %v306
      %v9124 = vmul.f32 %v6769, %v307
      %v9125 = vmul.f32 %v8868, %v308
      %v9126 = vmul.f32 %v2575, %v305
      %v9127 = vmul.f32 %v4674, %v306
      %v9128 = vmul.f32 %v6773, %v307
      %v9129 = vmul.f32 %v8872, %v308
      %v9130 = vmul.f32 %v2579, %v305
      %v9131 = vmul.f32 %v4678, %v306
      %v9132 = vmul.f32 %v6777, %v307
      %v9133 = vmul.f32 %v8876, %v308
      %v9134 = vmul.f32 %v2583, %v305
      %v9135 = vmul.f32 %v4682, %v306
      %v9136 = vmul.f32 %v6781, %v307
      %v9137 = vmul.f32 %v8880, %v308
      %v9138 = vmul.f32 %v2587, %v305
      %v9139 = vmul.f32 %v4686, %v306
      %v9140 = vmul.f32 %v6785, %v307
      %v9141 = vmul.f32 %v8884, %v308
      %v9142 = vmul.f32 %v2591, %v305
      %v9143 = vmul.f32 %v4690, %v306
      %v9144 = vmul.f32 %v6789, %v307
      %v9145 = vmul.f32 %v8888, %v308
      %v9146 = vmul.f32 %v2595, %v305
      %v9147 = vmul.f32 %v4694, %v306
      %v9148 = vmul.f32 %v6793, %v307
      %v9149 = vmul.f32 %v8892, %v308
      %v9150 = vmul.f32 %v2599, %v305
      %v9151 = vmul.f32 %v4698, %v306
      %v9152 = vmul.f32 %v6797, %v307
      %v9153 = vmul.f32 %v8896, %v308
      %v9154 = vmul.f32 %v2603, %v305
      %v9155 = vmul.f32 %v4702, %v306
      %v9156 = vmul.f32 %v6801, %v307
      %v9157 = vmul.f32 %v8900, %v308
      %v9158 = vmul.f32 %v2607, %v305
      %v9159 = vmul.f32 %v4706, %v306
      %v9160 = vmul.f32 %v6805, %v307
      %v9161 = vmul.f32 %v8904, %v308
      %v9162 = vmul.f32 %v2611, %v305
      %v9163 = vmul.f32 %v4710, %v306
      %v9164 = vmul.f32 %v6809, %v307
      %v9165 = vmul.f32 %v8908, %v308
      %v9166 = vmul.f32 %v2615, %v305
      %v9167 = vmul.f32 %v4714, %v306
      %v9168 = vmul.f32 %v6813, %v307
      %v9169 = vmul.f32 %v8912, %v308
      %v9170 = vmul.f32 %v2619, %v305
      %v9171 = vmul.f32 %v4718, %v306
      %v9172 = vmul.f32 %v6817, %v307
      %v9173 = vmul.f32 %v8916, %v308
      %v9174 = vmul.f32 %v2623, %v305
      %v9175 = vmul.f32 %v4722, %v306
      %v9176 = vmul.f32 %v6821, %v307
      %v9177 = vmul.f32 %v8920, %v308
      %v9178 = vmul.f32 %v2627, %v305
      %v9179 = vmul.f32 %v4726, %v306
      %v9180 = vmul.f32 %v6825, %v307
      %v9181 = vmul.f32 %v8924, %v308
      %v9182 = vmul.f32 %v2631, %v305
      %v9183 = vmul.f32 %v4730, %v306
      %v9184 = vmul.f32 %v6829, %v307
      %v9185 = vmul.f32 %v8928, %v308
      %v9186 = vmul.f32 %v2635, %v305
      %v9187 = vmul.f32 %v4734, %v306
      %v9188 = vmul.f32 %v6833, %v307
      %v9189 = vmul.f32 %v8932, %v308
      %v9190 = vmul.f32 %v2639, %v305
      %v9191 = vmul.f32 %v4738, %v306
      %v9192 = vmul.f32 %v6837, %v307
      %v9193 = vmul.f32 %v8936, %v308
      %v9194 = vmul.f32 %v2643, %v305
      %v9195 = vmul.f32 %v4742, %v306
      %v9196 = vmul.f32 %v6841, %v307
      %v9197 = vmul.f32 %v8940, %v308
      %v9198 = vmul.f32 %v2647, %v305
      %v9199 = vmul.f32 %v4746, %v306
      %v9200 = vmul.f32 %v6845, %v307
      %v9201 = vmul.f32 %v8944, %v308
      %v9202 = vmul.f32 %v2651, %v305
      %v9203 = vmul.f32 %v4750, %v306
      %v9204 = vmul.f32 %v6849, %v307
      %v9205 = vmul.f32 %v8948, %v308
      %v9206 = vmul.f32 %v2655, %v305
      %v9207 = vmul.f32 %v4754, %v306
      %v9208 = vmul.f32 %v6853, %v307
      %v9209 = vmul.f32 %v8952, %v308
      %v9210 = vmul.f32 %v2659, %v305
      %v9211 = vmul.f32 %v4758, %v306
      %v9212 = vmul.f32 %v6857, %v307
      %v9213 = vmul.f32 %v8956, %v308
      %v9214 = vmul.f32 %v2663, %v305
      %v9215 = vmul.f32 %v4762, %v306
      %v9216 = vmul.f32 %v6861, %v307
      %v9217 = vmul.f32 %v8960, %v308
      %v9218 = vmul.f32 %v2667, %v305
      %v9219 = vmul.f32 %v4766, %v306
      %v9220 = vmul.f32 %v6865, %v307
      %v9221 = vmul.f32 %v8964, %v308
      %v9222 = vmul.f32 %v2671, %v305
      %v9223 = vmul.f32 %v4770, %v306
      %v9224 = vmul.f32 %v6869, %v307
      %v9225 = vmul.f32 %v8968, %v308
      %v9226 = vmul.f32 %v2675, %v305
      %v9227 = vmul.f32 %v4774, %v306
      %v9228 = vmul.f32 %v6873, %v307
      %v9229 = vmul.f32 %v8972, %v308
      %v9230 = vmul.f32 %v2679, %v305
      %v9231 = vmul.f32 %v4778, %v306
      %v9232 = vmul.f32 %v6877, %v307
      %v9233 = vmul.f32 %v8976, %v308
      %v9234 = vmul.f32 %v2683, %v305
      %v9235 = vmul.f32 %v4782, %v306
      %v9236 = vmul.f32 %v6881, %v307
      %v9237 = vmul.f32 %v8980, %v308
      %v9238 = vmul.f32 %v2687, %v305
      %v9239 = vmul.f32 %v4786, %v306
      %v9240 = vmul.f32 %v6885, %v307
      %v9241 = vmul.f32 %v8984, %v308
      %v9242 = vmul.f32 %v2691, %v305
      %v9243 = vmul.f32 %v4790, %v306
      %v9244 = vmul.f32 %v6889, %v307
      %v9245 = vmul.f32 %v8988, %v308
      %v9246 = vmul.f32 %v2695, %v305
      %v9247 = vmul.f32 %v4794, %v306
      %v9248 = vmul.f32 %v6893, %v307
      %v9249 = vmul.f32 %v8992, %v308
      %v9250 = vmul.f32 %v2699, %v305
      %v9251 = vmul.f32 %v4798, %v306
      %v9252 = vmul.f32 %v6897, %v307
      %v9253 = vmul.f32 %v8996, %v308
      %v9254 = vrot.slane %v8998, 4
      %v9255 = vadd.f32 %v8998, %v9254
      %v9256 = vrot.slane %v9255, 2
      %v9257 = vadd.f32 %v9255, %v9256
      %v9258 = vrot.slane %v9257, 1
      %v9259 = vadd.f32 %v9257, %v9258
      %v9260 = vrot.slane %v8999, 4
      %v9261 = vadd.f32 %v8999, %v9260
      %v9262 = vrot.slane %v9261, 2
      %v9263 = vadd.f32 %v9261, %v9262
      %v9264 = vrot.slane %v9263, 1
      %v9265 = vadd.f32 %v9263, %v9264
      %v9266 = vrot.slane %v9000, 4
      %v9267 = vadd.f32 %v9000, %v9266
      %v9268 = vrot.slane %v9267, 2
      %v9269 = vadd.f32 %v9267, %v9268
      %v9270 = vrot.slane %v9269, 1
      %v9271 = vadd.f32 %v9269, %v9270
      %v9272 = vrot.slane %v9001, 4
      %v9273 = vadd.f32 %v9001, %v9272
      %v9274 = vrot.slane %v9273, 2
      %v9275 = vadd.f32 %v9273, %v9274
      %v9276 = vrot.slane %v9275, 1
      %v9277 = vadd.f32 %v9275, %v9276
      %v9278 = vrot.slane %v9002, 4
      %v9279 = vadd.f32 %v9002, %v9278
      %v9280 = vrot.slane %v9279, 2
      %v9281 = vadd.f32 %v9279, %v9280
      %v9282 = vrot.slane %v9281, 1
      %v9283 = vadd.f32 %v9281, %v9282
      %v9284 = vrot.slane %v9003, 4
      %v9285 = vadd.f32 %v9003, %v9284
      %v9286 = vrot.slane %v9285, 2
      %v9287 = vadd.f32 %v9285, %v9286
      %v9288 = vrot.slane %v9287, 1
      %v9289 = vadd.f32 %v9287, %v9288
      %v9290 = vrot.slane %v9004, 4
      %v9291 = vadd.f32 %v9004, %v9290
      %v9292 = vrot.slane %v9291, 2
      %v9293 = vadd.f32 %v9291, %v9292
      %v9294 = vrot.slane %v9293, 1
      %v9295 = vadd.f32 %v9293, %v9294
      %v9296 = vrot.slane %v9005, 4
      %v9297 = vadd.f32 %v9005, %v9296
      %v9298 = vrot.slane %v9297, 2
      %v9299 = vadd.f32 %v9297, %v9298
      %v9300 = vrot.slane %v9299, 1
      %v9301 = vadd.f32 %v9299, %v9300
      %v9302 = vrot.slane %v9006, 4
      %v9303 = vadd.f32 %v9006, %v9302
      %v9304 = vrot.slane %v9303, 2
      %v9305 = vadd.f32 %v9303, %v9304
      %v9306 = vrot.slane %v9305, 1
      %v9307 = vadd.f32 %v9305, %v9306
      %v9308 = vrot.slane %v9007, 4
      %v9309 = vadd.f32 %v9007, %v9308
      %v9310 = vrot.slane %v9309, 2
      %v9311 = vadd.f32 %v9309, %v9310
      %v9312 = vrot.slane %v9311, 1
      %v9313 = vadd.f32 %v9311, %v9312
      %v9314 = vrot.slane %v9008, 4
      %v9315 = vadd.f32 %v9008, %v9314
      %v9316 = vrot.slane %v9315, 2
      %v9317 = vadd.f32 %v9315, %v9316
      %v9318 = vrot.slane %v9317, 1
      %v9319 = vadd.f32 %v9317, %v9318
      %v9320 = vrot.slane %v9009, 4
      %v9321 = vadd.f32 %v9009, %v9320
      %v9322 = vrot.slane %v9321, 2
      %v9323 = vadd.f32 %v9321, %v9322
      %v9324 = vrot.slane %v9323, 1
      %v9325 = vadd.f32 %v9323, %v9324
      %v9326 = vrot.slane %v9010, 4
      %v9327 = vadd.f32 %v9010, %v9326
      %v9328 = vrot.slane %v9327, 2
      %v9329 = vadd.f32 %v9327, %v9328
      %v9330 = vrot.slane %v9329, 1
      %v9331 = vadd.f32 %v9329, %v9330
      %v9332 = vrot.slane %v9011, 4
      %v9333 = vadd.f32 %v9011, %v9332
      %v9334 = vrot.slane %v9333, 2
      %v9335 = vadd.f32 %v9333, %v9334
      %v9336 = vrot.slane %v9335, 1
      %v9337 = vadd.f32 %v9335, %v9336
      %v9338 = vrot.slane %v9012, 4
      %v9339 = vadd.f32 %v9012, %v9338
      %v9340 = vrot.slane %v9339, 2
      %v9341 = vadd.f32 %v9339, %v9340
      %v9342 = vrot.slane %v9341, 1
      %v9343 = vadd.f32 %v9341, %v9342
      %v9344 = vrot.slane %v9013, 4
      %v9345 = vadd.f32 %v9013, %v9344
      %v9346 = vrot.slane %v9345, 2
      %v9347 = vadd.f32 %v9345, %v9346
      %v9348 = vrot.slane %v9347, 1
      %v9349 = vadd.f32 %v9347, %v9348
      %v9350 = vrot.slane %v9014, 4
      %v9351 = vadd.f32 %v9014, %v9350
      %v9352 = vrot.slane %v9351, 2
      %v9353 = vadd.f32 %v9351, %v9352
      %v9354 = vrot.slane %v9353, 1
      %v9355 = vadd.f32 %v9353, %v9354
      %v9356 = vrot.slane %v9015, 4
      %v9357 = vadd.f32 %v9015, %v9356
      %v9358 = vrot.slane %v9357, 2
      %v9359 = vadd.f32 %v9357, %v9358
      %v9360 = vrot.slane %v9359, 1
      %v9361 = vadd.f32 %v9359, %v9360
      %v9362 = vrot.slane %v9016, 4
      %v9363 = vadd.f32 %v9016, %v9362
      %v9364 = vrot.slane %v9363, 2
      %v9365 = vadd.f32 %v9363, %v9364
      %v9366 = vrot.slane %v9365, 1
      %v9367 = vadd.f32 %v9365, %v9366
      %v9368 = vrot.slane %v9017, 4
      %v9369 = vadd.f32 %v9017, %v9368
      %v9370 = vrot.slane %v9369, 2
      %v9371 = vadd.f32 %v9369, %v9370
      %v9372 = vrot.slane %v9371, 1
      %v9373 = vadd.f32 %v9371, %v9372
      %v9374 = vrot.slane %v9018, 4
      %v9375 = vadd.f32 %v9018, %v9374
      %v9376 = vrot.slane %v9375, 2
      %v9377 = vadd.f32 %v9375, %v9376
      %v9378 = vrot.slane %v9377, 1
      %v9379 = vadd.f32 %v9377, %v9378
      %v9380 = vrot.slane %v9019, 4
      %v9381 = vadd.f32 %v9019, %v9380
      %v9382 = vrot.slane %v9381, 2
      %v9383 = vadd.f32 %v9381, %v9382
      %v9384 = vrot.slane %v9383, 1
      %v9385 = vadd.f32 %v9383, %v9384
      %v9386 = vrot.slane %v9020, 4
      %v9387 = vadd.f32 %v9020, %v9386
      %v9388 = vrot.slane %v9387, 2
      %v9389 = vadd.f32 %v9387, %v9388
      %v9390 = vrot.slane %v9389, 1
      %v9391 = vadd.f32 %v9389, %v9390
      %v9392 = vrot.slane %v9021, 4
      %v9393 = vadd.f32 %v9021, %v9392
      %v9394 = vrot.slane %v9393, 2
      %v9395 = vadd.f32 %v9393, %v9394
      %v9396 = vrot.slane %v9395, 1
      %v9397 = vadd.f32 %v9395, %v9396
      %v9398 = vrot.slane %v9022, 4
      %v9399 = vadd.f32 %v9022, %v9398
      %v9400 = vrot.slane %v9399, 2
      %v9401 = vadd.f32 %v9399, %v9400
      %v9402 = vrot.slane %v9401, 1
      %v9403 = vadd.f32 %v9401, %v9402
      %v9404 = vrot.slane %v9023, 4
      %v9405 = vadd.f32 %v9023, %v9404
      %v9406 = vrot.slane %v9405, 2
      %v9407 = vadd.f32 %v9405, %v9406
      %v9408 = vrot.slane %v9407, 1
      %v9409 = vadd.f32 %v9407, %v9408
      %v9410 = vrot.slane %v9024, 4
      %v9411 = vadd.f32 %v9024, %v9410
      %v9412 = vrot.slane %v9411, 2
      %v9413 = vadd.f32 %v9411, %v9412
      %v9414 = vrot.slane %v9413, 1
      %v9415 = vadd.f32 %v9413, %v9414
      %v9416 = vrot.slane %v9025, 4
      %v9417 = vadd.f32 %v9025, %v9416
      %v9418 = vrot.slane %v9417, 2
      %v9419 = vadd.f32 %v9417, %v9418
      %v9420 = vrot.slane %v9419, 1
      %v9421 = vadd.f32 %v9419, %v9420
      %v9422 = vrot.slane %v9026, 4
      %v9423 = vadd.f32 %v9026, %v9422
      %v9424 = vrot.slane %v9423, 2
      %v9425 = vadd.f32 %v9423, %v9424
      %v9426 = vrot.slane %v9425, 1
      %v9427 = vadd.f32 %v9425, %v9426
      %v9428 = vrot.slane %v9027, 4
      %v9429 = vadd.f32 %v9027, %v9428
      %v9430 = vrot.slane %v9429, 2
      %v9431 = vadd.f32 %v9429, %v9430
      %v9432 = vrot.slane %v9431, 1
      %v9433 = vadd.f32 %v9431, %v9432
      %v9434 = vrot.slane %v9028, 4
      %v9435 = vadd.f32 %v9028, %v9434
      %v9436 = vrot.slane %v9435, 2
      %v9437 = vadd.f32 %v9435, %v9436
      %v9438 = vrot.slane %v9437, 1
      %v9439 = vadd.f32 %v9437, %v9438
      %v9440 = vrot.slane %v9029, 4
      %v9441 = vadd.f32 %v9029, %v9440
      %v9442 = vrot.slane %v9441, 2
      %v9443 = vadd.f32 %v9441, %v9442
      %v9444 = vrot.slane %v9443, 1
      %v9445 = vadd.f32 %v9443, %v9444
      %v9446 = vrot.slane %v9030, 4
      %v9447 = vadd.f32 %v9030, %v9446
      %v9448 = vrot.slane %v9447, 2
      %v9449 = vadd.f32 %v9447, %v9448
      %v9450 = vrot.slane %v9449, 1
      %v9451 = vadd.f32 %v9449, %v9450
      %v9452 = vrot.slane %v9031, 4
      %v9453 = vadd.f32 %v9031, %v9452
      %v9454 = vrot.slane %v9453, 2
      %v9455 = vadd.f32 %v9453, %v9454
      %v9456 = vrot.slane %v9455, 1
      %v9457 = vadd.f32 %v9455, %v9456
      %v9458 = vrot.slane %v9032, 4
      %v9459 = vadd.f32 %v9032, %v9458
      %v9460 = vrot.slane %v9459, 2
      %v9461 = vadd.f32 %v9459, %v9460
      %v9462 = vrot.slane %v9461, 1
      %v9463 = vadd.f32 %v9461, %v9462
      %v9464 = vrot.slane %v9033, 4
      %v9465 = vadd.f32 %v9033, %v9464
      %v9466 = vrot.slane %v9465, 2
      %v9467 = vadd.f32 %v9465, %v9466
      %v9468 = vrot.slane %v9467, 1
      %v9469 = vadd.f32 %v9467, %v9468
      %v9470 = vrot.slane %v9034, 4
      %v9471 = vadd.f32 %v9034, %v9470
      %v9472 = vrot.slane %v9471, 2
      %v9473 = vadd.f32 %v9471, %v9472
      %v9474 = vrot.slane %v9473, 1
      %v9475 = vadd.f32 %v9473, %v9474
      %v9476 = vrot.slane %v9035, 4
      %v9477 = vadd.f32 %v9035, %v9476
      %v9478 = vrot.slane %v9477, 2
      %v9479 = vadd.f32 %v9477, %v9478
      %v9480 = vrot.slane %v9479, 1
      %v9481 = vadd.f32 %v9479, %v9480
      %v9482 = vrot.slane %v9036, 4
      %v9483 = vadd.f32 %v9036, %v9482
      %v9484 = vrot.slane %v9483, 2
      %v9485 = vadd.f32 %v9483, %v9484
      %v9486 = vrot.slane %v9485, 1
      %v9487 = vadd.f32 %v9485, %v9486
      %v9488 = vrot.slane %v9037, 4
      %v9489 = vadd.f32 %v9037, %v9488
      %v9490 = vrot.slane %v9489, 2
      %v9491 = vadd.f32 %v9489, %v9490
      %v9492 = vrot.slane %v9491, 1
      %v9493 = vadd.f32 %v9491, %v9492
      %v9494 = vrot.slane %v9038, 4
      %v9495 = vadd.f32 %v9038, %v9494
      %v9496 = vrot.slane %v9495, 2
      %v9497 = vadd.f32 %v9495, %v9496
      %v9498 = vrot.slane %v9497, 1
      %v9499 = vadd.f32 %v9497, %v9498
      %v9500 = vrot.slane %v9039, 4
      %v9501 = vadd.f32 %v9039, %v9500
      %v9502 = vrot.slane %v9501, 2
      %v9503 = vadd.f32 %v9501, %v9502
      %v9504 = vrot.slane %v9503, 1
      %v9505 = vadd.f32 %v9503, %v9504
      %v9506 = vrot.slane %v9040, 4
      %v9507 = vadd.f32 %v9040, %v9506
      %v9508 = vrot.slane %v9507, 2
      %v9509 = vadd.f32 %v9507, %v9508
      %v9510 = vrot.slane %v9509, 1
      %v9511 = vadd.f32 %v9509, %v9510
      %v9512 = vrot.slane %v9041, 4
      %v9513 = vadd.f32 %v9041, %v9512
      %v9514 = vrot.slane %v9513, 2
      %v9515 = vadd.f32 %v9513, %v9514
      %v9516 = vrot.slane %v9515, 1
      %v9517 = vadd.f32 %v9515, %v9516
      %v9518 = vrot.slane %v9042, 4
      %v9519 = vadd.f32 %v9042, %v9518
      %v9520 = vrot.slane %v9519, 2
      %v9521 = vadd.f32 %v9519, %v9520
      %v9522 = vrot.slane %v9521, 1
      %v9523 = vadd.f32 %v9521, %v9522
      %v9524 = vrot.slane %v9043, 4
      %v9525 = vadd.f32 %v9043, %v9524
      %v9526 = vrot.slane %v9525, 2
      %v9527 = vadd.f32 %v9525, %v9526
      %v9528 = vrot.slane %v9527, 1
      %v9529 = vadd.f32 %v9527, %v9528
      %v9530 = vrot.slane %v9044, 4
      %v9531 = vadd.f32 %v9044, %v9530
      %v9532 = vrot.slane %v9531, 2
      %v9533 = vadd.f32 %v9531, %v9532
      %v9534 = vrot.slane %v9533, 1
      %v9535 = vadd.f32 %v9533, %v9534
      %v9536 = vrot.slane %v9045, 4
      %v9537 = vadd.f32 %v9045, %v9536
      %v9538 = vrot.slane %v9537, 2
      %v9539 = vadd.f32 %v9537, %v9538
      %v9540 = vrot.slane %v9539, 1
      %v9541 = vadd.f32 %v9539, %v9540
      %v9542 = vrot.slane %v9046, 4
      %v9543 = vadd.f32 %v9046, %v9542
      %v9544 = vrot.slane %v9543, 2
      %v9545 = vadd.f32 %v9543, %v9544
      %v9546 = vrot.slane %v9545, 1
      %v9547 = vadd.f32 %v9545, %v9546
      %v9548 = vrot.slane %v9047, 4
      %v9549 = vadd.f32 %v9047, %v9548
      %v9550 = vrot.slane %v9549, 2
      %v9551 = vadd.f32 %v9549, %v9550
      %v9552 = vrot.slane %v9551, 1
      %v9553 = vadd.f32 %v9551, %v9552
      %v9554 = vrot.slane %v9048, 4
      %v9555 = vadd.f32 %v9048, %v9554
      %v9556 = vrot.slane %v9555, 2
      %v9557 = vadd.f32 %v9555, %v9556
      %v9558 = vrot.slane %v9557, 1
      %v9559 = vadd.f32 %v9557, %v9558
      %v9560 = vrot.slane %v9049, 4
      %v9561 = vadd.f32 %v9049, %v9560
      %v9562 = vrot.slane %v9561, 2
      %v9563 = vadd.f32 %v9561, %v9562
      %v9564 = vrot.slane %v9563, 1
      %v9565 = vadd.f32 %v9563, %v9564
      %v9566 = vrot.slane %v9050, 4
      %v9567 = vadd.f32 %v9050, %v9566
      %v9568 = vrot.slane %v9567, 2
      %v9569 = vadd.f32 %v9567, %v9568
      %v9570 = vrot.slane %v9569, 1
      %v9571 = vadd.f32 %v9569, %v9570
      %v9572 = vrot.slane %v9051, 4
      %v9573 = vadd.f32 %v9051, %v9572
      %v9574 = vrot.slane %v9573, 2
      %v9575 = vadd.f32 %v9573, %v9574
      %v9576 = vrot.slane %v9575, 1
      %v9577 = vadd.f32 %v9575, %v9576
      %v9578 = vrot.slane %v9052, 4
      %v9579 = vadd.f32 %v9052, %v9578
      %v9580 = vrot.slane %v9579, 2
      %v9581 = vadd.f32 %v9579, %v9580
      %v9582 = vrot.slane %v9581, 1
      %v9583 = vadd.f32 %v9581, %v9582
      %v9584 = vrot.slane %v9053, 4
      %v9585 = vadd.f32 %v9053, %v9584
      %v9586 = vrot.slane %v9585, 2
      %v9587 = vadd.f32 %v9585, %v9586
      %v9588 = vrot.slane %v9587, 1
      %v9589 = vadd.f32 %v9587, %v9588
      %v9590 = vrot.slane %v9054, 4
      %v9591 = vadd.f32 %v9054, %v9590
      %v9592 = vrot.slane %v9591, 2
      %v9593 = vadd.f32 %v9591, %v9592
      %v9594 = vrot.slane %v9593, 1
      %v9595 = vadd.f32 %v9593, %v9594
      %v9596 = vrot.slane %v9055, 4
      %v9597 = vadd.f32 %v9055, %v9596
      %v9598 = vrot.slane %v9597, 2
      %v9599 = vadd.f32 %v9597, %v9598
      %v9600 = vrot.slane %v9599, 1
      %v9601 = vadd.f32 %v9599, %v9600
      %v9602 = vrot.slane %v9056, 4
      %v9603 = vadd.f32 %v9056, %v9602
      %v9604 = vrot.slane %v9603, 2
      %v9605 = vadd.f32 %v9603, %v9604
      %v9606 = vrot.slane %v9605, 1
      %v9607 = vadd.f32 %v9605, %v9606
      %v9608 = vrot.slane %v9057, 4
      %v9609 = vadd.f32 %v9057, %v9608
      %v9610 = vrot.slane %v9609, 2
      %v9611 = vadd.f32 %v9609, %v9610
      %v9612 = vrot.slane %v9611, 1
      %v9613 = vadd.f32 %v9611, %v9612
      %v9614 = vrot.slane %v9058, 4
      %v9615 = vadd.f32 %v9058, %v9614
      %v9616 = vrot.slane %v9615, 2
      %v9617 = vadd.f32 %v9615, %v9616
      %v9618 = vrot.slane %v9617, 1
      %v9619 = vadd.f32 %v9617, %v9618
      %v9620 = vrot.slane %v9059, 4
      %v9621 = vadd.f32 %v9059, %v9620
      %v9622 = vrot.slane %v9621, 2
      %v9623 = vadd.f32 %v9621, %v9622
      %v9624 = vrot.slane %v9623, 1
      %v9625 = vadd.f32 %v9623, %v9624
      %v9626 = vrot.slane %v9060, 4
      %v9627 = vadd.f32 %v9060, %v9626
      %v9628 = vrot.slane %v9627, 2
      %v9629 = vadd.f32 %v9627, %v9628
      %v9630 = vrot.slane %v9629, 1
      %v9631 = vadd.f32 %v9629, %v9630
      %v9632 = vrot.slane %v9061, 4
      %v9633 = vadd.f32 %v9061, %v9632
      %v9634 = vrot.slane %v9633, 2
      %v9635 = vadd.f32 %v9633, %v9634
      %v9636 = vrot.slane %v9635, 1
      %v9637 = vadd.f32 %v9635, %v9636
      %v9638 = vrot.slane %v9062, 4
      %v9639 = vadd.f32 %v9062, %v9638
      %v9640 = vrot.slane %v9639, 2
      %v9641 = vadd.f32 %v9639, %v9640
      %v9642 = vrot.slane %v9641, 1
      %v9643 = vadd.f32 %v9641, %v9642
      %v9644 = vrot.slane %v9063, 4
      %v9645 = vadd.f32 %v9063, %v9644
      %v9646 = vrot.slane %v9645, 2
      %v9647 = vadd.f32 %v9645, %v9646
      %v9648 = vrot.slane %v9647, 1
      %v9649 = vadd.f32 %v9647, %v9648
      %v9650 = vrot.slane %v9064, 4
      %v9651 = vadd.f32 %v9064, %v9650
      %v9652 = vrot.slane %v9651, 2
      %v9653 = vadd.f32 %v9651, %v9652
      %v9654 = vrot.slane %v9653, 1
      %v9655 = vadd.f32 %v9653, %v9654
      %v9656 = vrot.slane %v9065, 4
      %v9657 = vadd.f32 %v9065, %v9656
      %v9658 = vrot.slane %v9657, 2
      %v9659 = vadd.f32 %v9657, %v9658
      %v9660 = vrot.slane %v9659, 1
      %v9661 = vadd.f32 %v9659, %v9660
      %v9662 = vrot.slane %v9066, 4
      %v9663 = vadd.f32 %v9066, %v9662
      %v9664 = vrot.slane %v9663, 2
      %v9665 = vadd.f32 %v9663, %v9664
      %v9666 = vrot.slane %v9665, 1
      %v9667 = vadd.f32 %v9665, %v9666
      %v9668 = vrot.slane %v9067, 4
      %v9669 = vadd.f32 %v9067, %v9668
      %v9670 = vrot.slane %v9669, 2
      %v9671 = vadd.f32 %v9669, %v9670
      %v9672 = vrot.slane %v9671, 1
      %v9673 = vadd.f32 %v9671, %v9672
      %v9674 = vrot.slane %v9068, 4
      %v9675 = vadd.f32 %v9068, %v9674
      %v9676 = vrot.slane %v9675, 2
      %v9677 = vadd.f32 %v9675, %v9676
      %v9678 = vrot.slane %v9677, 1
      %v9679 = vadd.f32 %v9677, %v9678
      %v9680 = vrot.slane %v9069, 4
      %v9681 = vadd.f32 %v9069, %v9680
      %v9682 = vrot.slane %v9681, 2
      %v9683 = vadd.f32 %v9681, %v9682
      %v9684 = vrot.slane %v9683, 1
      %v9685 = vadd.f32 %v9683, %v9684
      %v9686 = vrot.slane %v9070, 4
      %v9687 = vadd.f32 %v9070, %v9686
      %v9688 = vrot.slane %v9687, 2
      %v9689 = vadd.f32 %v9687, %v9688
      %v9690 = vrot.slane %v9689, 1
      %v9691 = vadd.f32 %v9689, %v9690
      %v9692 = vrot.slane %v9071, 4
      %v9693 = vadd.f32 %v9071, %v9692
      %v9694 = vrot.slane %v9693, 2
      %v9695 = vadd.f32 %v9693, %v9694
      %v9696 = vrot.slane %v9695, 1
      %v9697 = vadd.f32 %v9695, %v9696
      %v9698 = vrot.slane %v9072, 4
      %v9699 = vadd.f32 %v9072, %v9698
      %v9700 = vrot.slane %v9699, 2
      %v9701 = vadd.f32 %v9699, %v9700
      %v9702 = vrot.slane %v9701, 1
      %v9703 = vadd.f32 %v9701, %v9702
      %v9704 = vrot.slane %v9073, 4
      %v9705 = vadd.f32 %v9073, %v9704
      %v9706 = vrot.slane %v9705, 2
      %v9707 = vadd.f32 %v9705, %v9706
      %v9708 = vrot.slane %v9707, 1
      %v9709 = vadd.f32 %v9707, %v9708
      %v9710 = vrot.slane %v9074, 4
      %v9711 = vadd.f32 %v9074, %v9710
      %v9712 = vrot.slane %v9711, 2
      %v9713 = vadd.f32 %v9711, %v9712
      %v9714 = vrot.slane %v9713, 1
      %v9715 = vadd.f32 %v9713, %v9714
      %v9716 = vrot.slane %v9075, 4
      %v9717 = vadd.f32 %v9075, %v9716
      %v9718 = vrot.slane %v9717, 2
      %v9719 = vadd.f32 %v9717, %v9718
      %v9720 = vrot.slane %v9719, 1
      %v9721 = vadd.f32 %v9719, %v9720
      %v9722 = vrot.slane %v9076, 4
      %v9723 = vadd.f32 %v9076, %v9722
      %v9724 = vrot.slane %v9723, 2
      %v9725 = vadd.f32 %v9723, %v9724
      %v9726 = vrot.slane %v9725, 1
      %v9727 = vadd.f32 %v9725, %v9726
      %v9728 = vrot.slane %v9077, 4
      %v9729 = vadd.f32 %v9077, %v9728
      %v9730 = vrot.slane %v9729, 2
      %v9731 = vadd.f32 %v9729, %v9730
      %v9732 = vrot.slane %v9731, 1
      %v9733 = vadd.f32 %v9731, %v9732
      %v9734 = vrot.slane %v9078, 4
      %v9735 = vadd.f32 %v9078, %v9734
      %v9736 = vrot.slane %v9735, 2
      %v9737 = vadd.f32 %v9735, %v9736
      %v9738 = vrot.slane %v9737, 1
      %v9739 = vadd.f32 %v9737, %v9738
      %v9740 = vrot.slane %v9079, 4
      %v9741 = vadd.f32 %v9079, %v9740
      %v9742 = vrot.slane %v9741, 2
      %v9743 = vadd.f32 %v9741, %v9742
      %v9744 = vrot.slane %v9743, 1
      %v9745 = vadd.f32 %v9743, %v9744
      %v9746 = vrot.slane %v9080, 4
      %v9747 = vadd.f32 %v9080, %v9746
      %v9748 = vrot.slane %v9747, 2
      %v9749 = vadd.f32 %v9747, %v9748
      %v9750 = vrot.slane %v9749, 1
      %v9751 = vadd.f32 %v9749, %v9750
      %v9752 = vrot.slane %v9081, 4
      %v9753 = vadd.f32 %v9081, %v9752
      %v9754 = vrot.slane %v9753, 2
      %v9755 = vadd.f32 %v9753, %v9754
      %v9756 = vrot.slane %v9755, 1
      %v9757 = vadd.f32 %v9755, %v9756
      %v9758 = vrot.slane %v9082, 4
      %v9759 = vadd.f32 %v9082, %v9758
      %v9760 = vrot.slane %v9759, 2
      %v9761 = vadd.f32 %v9759, %v9760
      %v9762 = vrot.slane %v9761, 1
      %v9763 = vadd.f32 %v9761, %v9762
      %v9764 = vrot.slane %v9083, 4
      %v9765 = vadd.f32 %v9083, %v9764
      %v9766 = vrot.slane %v9765, 2
      %v9767 = vadd.f32 %v9765, %v9766
      %v9768 = vrot.slane %v9767, 1
      %v9769 = vadd.f32 %v9767, %v9768
      %v9770 = vrot.slane %v9084, 4
      %v9771 = vadd.f32 %v9084, %v9770
      %v9772 = vrot.slane %v9771, 2
      %v9773 = vadd.f32 %v9771, %v9772
      %v9774 = vrot.slane %v9773, 1
      %v9775 = vadd.f32 %v9773, %v9774
      %v9776 = vrot.slane %v9085, 4
      %v9777 = vadd.f32 %v9085, %v9776
      %v9778 = vrot.slane %v9777, 2
      %v9779 = vadd.f32 %v9777, %v9778
      %v9780 = vrot.slane %v9779, 1
      %v9781 = vadd.f32 %v9779, %v9780
      %v9782 = vrot.slane %v9086, 4
      %v9783 = vadd.f32 %v9086, %v9782
      %v9784 = vrot.slane %v9783, 2
      %v9785 = vadd.f32 %v9783, %v9784
      %v9786 = vrot.slane %v9785, 1
      %v9787 = vadd.f32 %v9785, %v9786
      %v9788 = vrot.slane %v9087, 4
      %v9789 = vadd.f32 %v9087, %v9788
      %v9790 = vrot.slane %v9789, 2
      %v9791 = vadd.f32 %v9789, %v9790
      %v9792 = vrot.slane %v9791, 1
      %v9793 = vadd.f32 %v9791, %v9792
      %v9794 = vrot.slane %v9088, 4
      %v9795 = vadd.f32 %v9088, %v9794
      %v9796 = vrot.slane %v9795, 2
      %v9797 = vadd.f32 %v9795, %v9796
      %v9798 = vrot.slane %v9797, 1
      %v9799 = vadd.f32 %v9797, %v9798
      %v9800 = vrot.slane %v9089, 4
      %v9801 = vadd.f32 %v9089, %v9800
      %v9802 = vrot.slane %v9801, 2
      %v9803 = vadd.f32 %v9801, %v9802
      %v9804 = vrot.slane %v9803, 1
      %v9805 = vadd.f32 %v9803, %v9804
      %v9806 = vrot.slane %v9090, 4
      %v9807 = vadd.f32 %v9090, %v9806
      %v9808 = vrot.slane %v9807, 2
      %v9809 = vadd.f32 %v9807, %v9808
      %v9810 = vrot.slane %v9809, 1
      %v9811 = vadd.f32 %v9809, %v9810
      %v9812 = vrot.slane %v9091, 4
      %v9813 = vadd.f32 %v9091, %v9812
      %v9814 = vrot.slane %v9813, 2
      %v9815 = vadd.f32 %v9813, %v9814
      %v9816 = vrot.slane %v9815, 1
      %v9817 = vadd.f32 %v9815, %v9816
      %v9818 = vrot.slane %v9092, 4
      %v9819 = vadd.f32 %v9092, %v9818
      %v9820 = vrot.slane %v9819, 2
      %v9821 = vadd.f32 %v9819, %v9820
      %v9822 = vrot.slane %v9821, 1
      %v9823 = vadd.f32 %v9821, %v9822
      %v9824 = vrot.slane %v9093, 4
      %v9825 = vadd.f32 %v9093, %v9824
      %v9826 = vrot.slane %v9825, 2
      %v9827 = vadd.f32 %v9825, %v9826
      %v9828 = vrot.slane %v9827, 1
      %v9829 = vadd.f32 %v9827, %v9828
      %v9830 = vrot.slane %v9094, 4
      %v9831 = vadd.f32 %v9094, %v9830
      %v9832 = vrot.slane %v9831, 2
      %v9833 = vadd.f32 %v9831, %v9832
      %v9834 = vrot.slane %v9833, 1
      %v9835 = vadd.f32 %v9833, %v9834
      %v9836 = vrot.slane %v9095, 4
      %v9837 = vadd.f32 %v9095, %v9836
      %v9838 = vrot.slane %v9837, 2
      %v9839 = vadd.f32 %v9837, %v9838
      %v9840 = vrot.slane %v9839, 1
      %v9841 = vadd.f32 %v9839, %v9840
      %v9842 = vrot.slane %v9096, 4
      %v9843 = vadd.f32 %v9096, %v9842
      %v9844 = vrot.slane %v9843, 2
      %v9845 = vadd.f32 %v9843, %v9844
      %v9846 = vrot.slane %v9845, 1
      %v9847 = vadd.f32 %v9845, %v9846
      %v9848 = vrot.slane %v9097, 4
      %v9849 = vadd.f32 %v9097, %v9848
      %v9850 = vrot.slane %v9849, 2
      %v9851 = vadd.f32 %v9849, %v9850
      %v9852 = vrot.slane %v9851, 1
      %v9853 = vadd.f32 %v9851, %v9852
      %v9854 = vrot.slane %v9098, 4
      %v9855 = vadd.f32 %v9098, %v9854
      %v9856 = vrot.slane %v9855, 2
      %v9857 = vadd.f32 %v9855, %v9856
      %v9858 = vrot.slane %v9857, 1
      %v9859 = vadd.f32 %v9857, %v9858
      %v9860 = vrot.slane %v9099, 4
      %v9861 = vadd.f32 %v9099, %v9860
      %v9862 = vrot.slane %v9861, 2
      %v9863 = vadd.f32 %v9861, %v9862
      %v9864 = vrot.slane %v9863, 1
      %v9865 = vadd.f32 %v9863, %v9864
      %v9866 = vrot.slane %v9100, 4
      %v9867 = vadd.f32 %v9100, %v9866
      %v9868 = vrot.slane %v9867, 2
      %v9869 = vadd.f32 %v9867, %v9868
      %v9870 = vrot.slane %v9869, 1
      %v9871 = vadd.f32 %v9869, %v9870
      %v9872 = vrot.slane %v9101, 4
      %v9873 = vadd.f32 %v9101, %v9872
      %v9874 = vrot.slane %v9873, 2
      %v9875 = vadd.f32 %v9873, %v9874
      %v9876 = vrot.slane %v9875, 1
      %v9877 = vadd.f32 %v9875, %v9876
      %v9878 = vrot.slane %v9102, 4
      %v9879 = vadd.f32 %v9102, %v9878
      %v9880 = vrot.slane %v9879, 2
      %v9881 = vadd.f32 %v9879, %v9880
      %v9882 = vrot.slane %v9881, 1
      %v9883 = vadd.f32 %v9881, %v9882
      %v9884 = vrot.slane %v9103, 4
      %v9885 = vadd.f32 %v9103, %v9884
      %v9886 = vrot.slane %v9885, 2
      %v9887 = vadd.f32 %v9885, %v9886
      %v9888 = vrot.slane %v9887, 1
      %v9889 = vadd.f32 %v9887, %v9888
      %v9890 = vrot.slane %v9104, 4
      %v9891 = vadd.f32 %v9104, %v9890
      %v9892 = vrot.slane %v9891, 2
      %v9893 = vadd.f32 %v9891, %v9892
      %v9894 = vrot.slane %v9893, 1
      %v9895 = vadd.f32 %v9893, %v9894
      %v9896 = vrot.slane %v9105, 4
      %v9897 = vadd.f32 %v9105, %v9896
      %v9898 = vrot.slane %v9897, 2
      %v9899 = vadd.f32 %v9897, %v9898
      %v9900 = vrot.slane %v9899, 1
      %v9901 = vadd.f32 %v9899, %v9900
      %v9902 = vrot.slane %v9106, 4
      %v9903 = vadd.f32 %v9106, %v9902
      %v9904 = vrot.slane %v9903, 2
      %v9905 = vadd.f32 %v9903, %v9904
      %v9906 = vrot.slane %v9905, 1
      %v9907 = vadd.f32 %v9905, %v9906
      %v9908 = vrot.slane %v9107, 4
      %v9909 = vadd.f32 %v9107, %v9908
      %v9910 = vrot.slane %v9909, 2
      %v9911 = vadd.f32 %v9909, %v9910
      %v9912 = vrot.slane %v9911, 1
      %v9913 = vadd.f32 %v9911, %v9912
      %v9914 = vrot.slane %v9108, 4
      %v9915 = vadd.f32 %v9108, %v9914
      %v9916 = vrot.slane %v9915, 2
      %v9917 = vadd.f32 %v9915, %v9916
      %v9918 = vrot.slane %v9917, 1
      %v9919 = vadd.f32 %v9917, %v9918
      %v9920 = vrot.slane %v9109, 4
      %v9921 = vadd.f32 %v9109, %v9920
      %v9922 = vrot.slane %v9921, 2
      %v9923 = vadd.f32 %v9921, %v9922
      %v9924 = vrot.slane %v9923, 1
      %v9925 = vadd.f32 %v9923, %v9924
      %v9926 = vrot.slane %v9110, 4
      %v9927 = vadd.f32 %v9110, %v9926
      %v9928 = vrot.slane %v9927, 2
      %v9929 = vadd.f32 %v9927, %v9928
      %v9930 = vrot.slane %v9929, 1
      %v9931 = vadd.f32 %v9929, %v9930
      %v9932 = vrot.slane %v9111, 4
      %v9933 = vadd.f32 %v9111, %v9932
      %v9934 = vrot.slane %v9933, 2
      %v9935 = vadd.f32 %v9933, %v9934
      %v9936 = vrot.slane %v9935, 1
      %v9937 = vadd.f32 %v9935, %v9936
      %v9938 = vrot.slane %v9112, 4
      %v9939 = vadd.f32 %v9112, %v9938
      %v9940 = vrot.slane %v9939, 2
      %v9941 = vadd.f32 %v9939, %v9940
      %v9942 = vrot.slane %v9941, 1
      %v9943 = vadd.f32 %v9941, %v9942
      %v9944 = vrot.slane %v9113, 4
      %v9945 = vadd.f32 %v9113, %v9944
      %v9946 = vrot.slane %v9945, 2
      %v9947 = vadd.f32 %v9945, %v9946
      %v9948 = vrot.slane %v9947, 1
      %v9949 = vadd.f32 %v9947, %v9948
      %v9950 = vrot.slane %v9114, 4
      %v9951 = vadd.f32 %v9114, %v9950
      %v9952 = vrot.slane %v9951, 2
      %v9953 = vadd.f32 %v9951, %v9952
      %v9954 = vrot.slane %v9953, 1
      %v9955 = vadd.f32 %v9953, %v9954
      %v9956 = vrot.slane %v9115, 4
      %v9957 = vadd.f32 %v9115, %v9956
      %v9958 = vrot.slane %v9957, 2
      %v9959 = vadd.f32 %v9957, %v9958
      %v9960 = vrot.slane %v9959, 1
      %v9961 = vadd.f32 %v9959, %v9960
      %v9962 = vrot.slane %v9116, 4
      %v9963 = vadd.f32 %v9116, %v9962
      %v9964 = vrot.slane %v9963, 2
      %v9965 = vadd.f32 %v9963, %v9964
      %v9966 = vrot.slane %v9965, 1
      %v9967 = vadd.f32 %v9965, %v9966
      %v9968 = vrot.slane %v9117, 4
      %v9969 = vadd.f32 %v9117, %v9968
      %v9970 = vrot.slane %v9969, 2
      %v9971 = vadd.f32 %v9969, %v9970
      %v9972 = vrot.slane %v9971, 1
      %v9973 = vadd.f32 %v9971, %v9972
      %v9974 = vrot.slane %v9118, 4
      %v9975 = vadd.f32 %v9118, %v9974
      %v9976 = vrot.slane %v9975, 2
      %v9977 = vadd.f32 %v9975, %v9976
      %v9978 = vrot.slane %v9977, 1
      %v9979 = vadd.f32 %v9977, %v9978
      %v9980 = vrot.slane %v9119, 4
      %v9981 = vadd.f32 %v9119, %v9980
      %v9982 = vrot.slane %v9981, 2
      %v9983 = vadd.f32 %v9981, %v9982
      %v9984 = vrot.slane %v9983, 1
      %v9985 = vadd.f32 %v9983, %v9984
      %v9986 = vrot.slane %v9120, 4
      %v9987 = vadd.f32 %v9120, %v9986
      %v9988 = vrot.slane %v9987, 2
      %v9989 = vadd.f32 %v9987, %v9988
      %v9990 = vrot.slane %v9989, 1
      %v9991 = vadd.f32 %v9989, %v9990
      %v9992 = vrot.slane %v9121, 4
      %v9993 = vadd.f32 %v9121, %v9992
      %v9994 = vrot.slane %v9993, 2
      %v9995 = vadd.f32 %v9993, %v9994
      %v9996 = vrot.slane %v9995, 1
      %v9997 = vadd.f32 %v9995, %v9996
      %v9998 = vrot.slane %v9122, 4
      %v9999 = vadd.f32 %v9122, %v9998
      %v10000 = vrot.slane %v9999, 2
      %v10001 = vadd.f32 %v9999, %v10000
      %v10002 = vrot.slane %v10001, 1
      %v10003 = vadd.f32 %v10001, %v10002
      %v10004 = vrot.slane %v9123, 4
      %v10005 = vadd.f32 %v9123, %v10004
      %v10006 = vrot.slane %v10005, 2
      %v10007 = vadd.f32 %v10005, %v10006
      %v10008 = vrot.slane %v10007, 1
      %v10009 = vadd.f32 %v10007, %v10008
      %v10010 = vrot.slane %v9124, 4
      %v10011 = vadd.f32 %v9124, %v10010
      %v10012 = vrot.slane %v10011, 2
      %v10013 = vadd.f32 %v10011, %v10012
      %v10014 = vrot.slane %v10013, 1
      %v10015 = vadd.f32 %v10013, %v10014
      %v10016 = vrot.slane %v9125, 4
      %v10017 = vadd.f32 %v9125, %v10016
      %v10018 = vrot.slane %v10017, 2
      %v10019 = vadd.f32 %v10017, %v10018
      %v10020 = vrot.slane %v10019, 1
      %v10021 = vadd.f32 %v10019, %v10020
      %v10022 = vrot.slane %v9126, 4
      %v10023 = vadd.f32 %v9126, %v10022
      %v10024 = vrot.slane %v10023, 2
      %v10025 = vadd.f32 %v10023, %v10024
      %v10026 = vrot.slane %v10025, 1
      %v10027 = vadd.f32 %v10025, %v10026
      %v10028 = vrot.slane %v9127, 4
      %v10029 = vadd.f32 %v9127, %v10028
      %v10030 = vrot.slane %v10029, 2
      %v10031 = vadd.f32 %v10029, %v10030
      %v10032 = vrot.slane %v10031, 1
      %v10033 = vadd.f32 %v10031, %v10032
      %v10034 = vrot.slane %v9128, 4
      %v10035 = vadd.f32 %v9128, %v10034
      %v10036 = vrot.slane %v10035, 2
      %v10037 = vadd.f32 %v10035, %v10036
      %v10038 = vrot.slane %v10037, 1
      %v10039 = vadd.f32 %v10037, %v10038
      %v10040 = vrot.slane %v9129, 4
      %v10041 = vadd.f32 %v9129, %v10040
      %v10042 = vrot.slane %v10041, 2
      %v10043 = vadd.f32 %v10041, %v10042
      %v10044 = vrot.slane %v10043, 1
      %v10045 = vadd.f32 %v10043, %v10044
      %v10046 = vrot.slane %v9130, 4
      %v10047 = vadd.f32 %v9130, %v10046
      %v10048 = vrot.slane %v10047, 2
      %v10049 = vadd.f32 %v10047, %v10048
      %v10050 = vrot.slane %v10049, 1
      %v10051 = vadd.f32 %v10049, %v10050
      %v10052 = vrot.slane %v9131, 4
      %v10053 = vadd.f32 %v9131, %v10052
      %v10054 = vrot.slane %v10053, 2
      %v10055 = vadd.f32 %v10053, %v10054
      %v10056 = vrot.slane %v10055, 1
      %v10057 = vadd.f32 %v10055, %v10056
      %v10058 = vrot.slane %v9132, 4
      %v10059 = vadd.f32 %v9132, %v10058
      %v10060 = vrot.slane %v10059, 2
      %v10061 = vadd.f32 %v10059, %v10060
      %v10062 = vrot.slane %v10061, 1
      %v10063 = vadd.f32 %v10061, %v10062
      %v10064 = vrot.slane %v9133, 4
      %v10065 = vadd.f32 %v9133, %v10064
      %v10066 = vrot.slane %v10065, 2
      %v10067 = vadd.f32 %v10065, %v10066
      %v10068 = vrot.slane %v10067, 1
      %v10069 = vadd.f32 %v10067, %v10068
      %v10070 = vrot.slane %v9134, 4
      %v10071 = vadd.f32 %v9134, %v10070
      %v10072 = vrot.slane %v10071, 2
      %v10073 = vadd.f32 %v10071, %v10072
      %v10074 = vrot.slane %v10073, 1
      %v10075 = vadd.f32 %v10073, %v10074
      %v10076 = vrot.slane %v9135, 4
      %v10077 = vadd.f32 %v9135, %v10076
      %v10078 = vrot.slane %v10077, 2
      %v10079 = vadd.f32 %v10077, %v10078
      %v10080 = vrot.slane %v10079, 1
      %v10081 = vadd.f32 %v10079, %v10080
      %v10082 = vrot.slane %v9136, 4
      %v10083 = vadd.f32 %v9136, %v10082
      %v10084 = vrot.slane %v10083, 2
      %v10085 = vadd.f32 %v10083, %v10084
      %v10086 = vrot.slane %v10085, 1
      %v10087 = vadd.f32 %v10085, %v10086
      %v10088 = vrot.slane %v9137, 4
      %v10089 = vadd.f32 %v9137, %v10088
      %v10090 = vrot.slane %v10089, 2
      %v10091 = vadd.f32 %v10089, %v10090
      %v10092 = vrot.slane %v10091, 1
      %v10093 = vadd.f32 %v10091, %v10092
      %v10094 = vrot.slane %v9138, 4
      %v10095 = vadd.f32 %v9138, %v10094
      %v10096 = vrot.slane %v10095, 2
      %v10097 = vadd.f32 %v10095, %v10096
      %v10098 = vrot.slane %v10097, 1
      %v10099 = vadd.f32 %v10097, %v10098
      %v10100 = vrot.slane %v9139, 4
      %v10101 = vadd.f32 %v9139, %v10100
      %v10102 = vrot.slane %v10101, 2
      %v10103 = vadd.f32 %v10101, %v10102
      %v10104 = vrot.slane %v10103, 1
      %v10105 = vadd.f32 %v10103, %v10104
      %v10106 = vrot.slane %v9140, 4
      %v10107 = vadd.f32 %v9140, %v10106
      %v10108 = vrot.slane %v10107, 2
      %v10109 = vadd.f32 %v10107, %v10108
      %v10110 = vrot.slane %v10109, 1
      %v10111 = vadd.f32 %v10109, %v10110
      %v10112 = vrot.slane %v9141, 4
      %v10113 = vadd.f32 %v9141, %v10112
      %v10114 = vrot.slane %v10113, 2
      %v10115 = vadd.f32 %v10113, %v10114
      %v10116 = vrot.slane %v10115, 1
      %v10117 = vadd.f32 %v10115, %v10116
      %v10118 = vrot.slane %v9142, 4
      %v10119 = vadd.f32 %v9142, %v10118
      %v10120 = vrot.slane %v10119, 2
      %v10121 = vadd.f32 %v10119, %v10120
      %v10122 = vrot.slane %v10121, 1
      %v10123 = vadd.f32 %v10121, %v10122
      %v10124 = vrot.slane %v9143, 4
      %v10125 = vadd.f32 %v9143, %v10124
      %v10126 = vrot.slane %v10125, 2
      %v10127 = vadd.f32 %v10125, %v10126
      %v10128 = vrot.slane %v10127, 1
      %v10129 = vadd.f32 %v10127, %v10128
      %v10130 = vrot.slane %v9144, 4
      %v10131 = vadd.f32 %v9144, %v10130
      %v10132 = vrot.slane %v10131, 2
      %v10133 = vadd.f32 %v10131, %v10132
      %v10134 = vrot.slane %v10133, 1
      %v10135 = vadd.f32 %v10133, %v10134
      %v10136 = vrot.slane %v9145, 4
      %v10137 = vadd.f32 %v9145, %v10136
      %v10138 = vrot.slane %v10137, 2
      %v10139 = vadd.f32 %v10137, %v10138
      %v10140 = vrot.slane %v10139, 1
      %v10141 = vadd.f32 %v10139, %v10140
      %v10142 = vrot.slane %v9146, 4
      %v10143 = vadd.f32 %v9146, %v10142
      %v10144 = vrot.slane %v10143, 2
      %v10145 = vadd.f32 %v10143, %v10144
      %v10146 = vrot.slane %v10145, 1
      %v10147 = vadd.f32 %v10145, %v10146
      %v10148 = vrot.slane %v9147, 4
      %v10149 = vadd.f32 %v9147, %v10148
      %v10150 = vrot.slane %v10149, 2
      %v10151 = vadd.f32 %v10149, %v10150
      %v10152 = vrot.slane %v10151, 1
      %v10153 = vadd.f32 %v10151, %v10152
      %v10154 = vrot.slane %v9148, 4
      %v10155 = vadd.f32 %v9148, %v10154
      %v10156 = vrot.slane %v10155, 2
      %v10157 = vadd.f32 %v10155, %v10156
      %v10158 = vrot.slane %v10157, 1
      %v10159 = vadd.f32 %v10157, %v10158
      %v10160 = vrot.slane %v9149, 4
      %v10161 = vadd.f32 %v9149, %v10160
      %v10162 = vrot.slane %v10161, 2
      %v10163 = vadd.f32 %v10161, %v10162
      %v10164 = vrot.slane %v10163, 1
      %v10165 = vadd.f32 %v10163, %v10164
      %v10166 = vrot.slane %v9150, 4
      %v10167 = vadd.f32 %v9150, %v10166
      %v10168 = vrot.slane %v10167, 2
      %v10169 = vadd.f32 %v10167, %v10168
      %v10170 = vrot.slane %v10169, 1
      %v10171 = vadd.f32 %v10169, %v10170
      %v10172 = vrot.slane %v9151, 4
      %v10173 = vadd.f32 %v9151, %v10172
      %v10174 = vrot.slane %v10173, 2
      %v10175 = vadd.f32 %v10173, %v10174
      %v10176 = vrot.slane %v10175, 1
      %v10177 = vadd.f32 %v10175, %v10176
      %v10178 = vrot.slane %v9152, 4
      %v10179 = vadd.f32 %v9152, %v10178
      %v10180 = vrot.slane %v10179, 2
      %v10181 = vadd.f32 %v10179, %v10180
      %v10182 = vrot.slane %v10181, 1
      %v10183 = vadd.f32 %v10181, %v10182
      %v10184 = vrot.slane %v9153, 4
      %v10185 = vadd.f32 %v9153, %v10184
      %v10186 = vrot.slane %v10185, 2
      %v10187 = vadd.f32 %v10185, %v10186
      %v10188 = vrot.slane %v10187, 1
      %v10189 = vadd.f32 %v10187, %v10188
      %v10190 = vrot.slane %v9154, 4
      %v10191 = vadd.f32 %v9154, %v10190
      %v10192 = vrot.slane %v10191, 2
      %v10193 = vadd.f32 %v10191, %v10192
      %v10194 = vrot.slane %v10193, 1
      %v10195 = vadd.f32 %v10193, %v10194
      %v10196 = vrot.slane %v9155, 4
      %v10197 = vadd.f32 %v9155, %v10196
      %v10198 = vrot.slane %v10197, 2
      %v10199 = vadd.f32 %v10197, %v10198
      %v10200 = vrot.slane %v10199, 1
      %v10201 = vadd.f32 %v10199, %v10200
      %v10202 = vrot.slane %v9156, 4
      %v10203 = vadd.f32 %v9156, %v10202
      %v10204 = vrot.slane %v10203, 2
      %v10205 = vadd.f32 %v10203, %v10204
      %v10206 = vrot.slane %v10205, 1
      %v10207 = vadd.f32 %v10205, %v10206
      %v10208 = vrot.slane %v9157, 4
      %v10209 = vadd.f32 %v9157, %v10208
      %v10210 = vrot.slane %v10209, 2
      %v10211 = vadd.f32 %v10209, %v10210
      %v10212 = vrot.slane %v10211, 1
      %v10213 = vadd.f32 %v10211, %v10212
      %v10214 = vrot.slane %v9158, 4
      %v10215 = vadd.f32 %v9158, %v10214
      %v10216 = vrot.slane %v10215, 2
      %v10217 = vadd.f32 %v10215, %v10216
      %v10218 = vrot.slane %v10217, 1
      %v10219 = vadd.f32 %v10217, %v10218
      %v10220 = vrot.slane %v9159, 4
      %v10221 = vadd.f32 %v9159, %v10220
      %v10222 = vrot.slane %v10221, 2
      %v10223 = vadd.f32 %v10221, %v10222
      %v10224 = vrot.slane %v10223, 1
      %v10225 = vadd.f32 %v10223, %v10224
      %v10226 = vrot.slane %v9160, 4
      %v10227 = vadd.f32 %v9160, %v10226
      %v10228 = vrot.slane %v10227, 2
      %v10229 = vadd.f32 %v10227, %v10228
      %v10230 = vrot.slane %v10229, 1
      %v10231 = vadd.f32 %v10229, %v10230
      %v10232 = vrot.slane %v9161, 4
      %v10233 = vadd.f32 %v9161, %v10232
      %v10234 = vrot.slane %v10233, 2
      %v10235 = vadd.f32 %v10233, %v10234
      %v10236 = vrot.slane %v10235, 1
      %v10237 = vadd.f32 %v10235, %v10236
      %v10238 = vrot.slane %v9162, 4
      %v10239 = vadd.f32 %v9162, %v10238
      %v10240 = vrot.slane %v10239, 2
      %v10241 = vadd.f32 %v10239, %v10240
      %v10242 = vrot.slane %v10241, 1
      %v10243 = vadd.f32 %v10241, %v10242
      %v10244 = vrot.slane %v9163, 4
      %v10245 = vadd.f32 %v9163, %v10244
      %v10246 = vrot.slane %v10245, 2
      %v10247 = vadd.f32 %v10245, %v10246
      %v10248 = vrot.slane %v10247, 1
      %v10249 = vadd.f32 %v10247, %v10248
      %v10250 = vrot.slane %v9164, 4
      %v10251 = vadd.f32 %v9164, %v10250
      %v10252 = vrot.slane %v10251, 2
      %v10253 = vadd.f32 %v10251, %v10252
      %v10254 = vrot.slane %v10253, 1
      %v10255 = vadd.f32 %v10253, %v10254
      %v10256 = vrot.slane %v9165, 4
      %v10257 = vadd.f32 %v9165, %v10256
      %v10258 = vrot.slane %v10257, 2
      %v10259 = vadd.f32 %v10257, %v10258
      %v10260 = vrot.slane %v10259, 1
      %v10261 = vadd.f32 %v10259, %v10260
      %v10262 = vrot.slane %v9166, 4
      %v10263 = vadd.f32 %v9166, %v10262
      %v10264 = vrot.slane %v10263, 2
      %v10265 = vadd.f32 %v10263, %v10264
      %v10266 = vrot.slane %v10265, 1
      %v10267 = vadd.f32 %v10265, %v10266
      %v10268 = vrot.slane %v9167, 4
      %v10269 = vadd.f32 %v9167, %v10268
      %v10270 = vrot.slane %v10269, 2
      %v10271 = vadd.f32 %v10269, %v10270
      %v10272 = vrot.slane %v10271, 1
      %v10273 = vadd.f32 %v10271, %v10272
      %v10274 = vrot.slane %v9168, 4
      %v10275 = vadd.f32 %v9168, %v10274
      %v10276 = vrot.slane %v10275, 2
      %v10277 = vadd.f32 %v10275, %v10276
      %v10278 = vrot.slane %v10277, 1
      %v10279 = vadd.f32 %v10277, %v10278
      %v10280 = vrot.slane %v9169, 4
      %v10281 = vadd.f32 %v9169, %v10280
      %v10282 = vrot.slane %v10281, 2
      %v10283 = vadd.f32 %v10281, %v10282
      %v10284 = vrot.slane %v10283, 1
      %v10285 = vadd.f32 %v10283, %v10284
      %v10286 = vrot.slane %v9170, 4
      %v10287 = vadd.f32 %v9170, %v10286
      %v10288 = vrot.slane %v10287, 2
      %v10289 = vadd.f32 %v10287, %v10288
      %v10290 = vrot.slane %v10289, 1
      %v10291 = vadd.f32 %v10289, %v10290
      %v10292 = vrot.slane %v9171, 4
      %v10293 = vadd.f32 %v9171, %v10292
      %v10294 = vrot.slane %v10293, 2
      %v10295 = vadd.f32 %v10293, %v10294
      %v10296 = vrot.slane %v10295, 1
      %v10297 = vadd.f32 %v10295, %v10296
      %v10298 = vrot.slane %v9172, 4
      %v10299 = vadd.f32 %v9172, %v10298
      %v10300 = vrot.slane %v10299, 2
      %v10301 = vadd.f32 %v10299, %v10300
      %v10302 = vrot.slane %v10301, 1
      %v10303 = vadd.f32 %v10301, %v10302
      %v10304 = vrot.slane %v9173, 4
      %v10305 = vadd.f32 %v9173, %v10304
      %v10306 = vrot.slane %v10305, 2
      %v10307 = vadd.f32 %v10305, %v10306
      %v10308 = vrot.slane %v10307, 1
      %v10309 = vadd.f32 %v10307, %v10308
      %v10310 = vrot.slane %v9174, 4
      %v10311 = vadd.f32 %v9174, %v10310
      %v10312 = vrot.slane %v10311, 2
      %v10313 = vadd.f32 %v10311, %v10312
      %v10314 = vrot.slane %v10313, 1
      %v10315 = vadd.f32 %v10313, %v10314
      %v10316 = vrot.slane %v9175, 4
      %v10317 = vadd.f32 %v9175, %v10316
      %v10318 = vrot.slane %v10317, 2
      %v10319 = vadd.f32 %v10317, %v10318
      %v10320 = vrot.slane %v10319, 1
      %v10321 = vadd.f32 %v10319, %v10320
      %v10322 = vrot.slane %v9176, 4
      %v10323 = vadd.f32 %v9176, %v10322
      %v10324 = vrot.slane %v10323, 2
      %v10325 = vadd.f32 %v10323, %v10324
      %v10326 = vrot.slane %v10325, 1
      %v10327 = vadd.f32 %v10325, %v10326
      %v10328 = vrot.slane %v9177, 4
      %v10329 = vadd.f32 %v9177, %v10328
      %v10330 = vrot.slane %v10329, 2
      %v10331 = vadd.f32 %v10329, %v10330
      %v10332 = vrot.slane %v10331, 1
      %v10333 = vadd.f32 %v10331, %v10332
      %v10334 = vrot.slane %v9178, 4
      %v10335 = vadd.f32 %v9178, %v10334
      %v10336 = vrot.slane %v10335, 2
      %v10337 = vadd.f32 %v10335, %v10336
      %v10338 = vrot.slane %v10337, 1
      %v10339 = vadd.f32 %v10337, %v10338
      %v10340 = vrot.slane %v9179, 4
      %v10341 = vadd.f32 %v9179, %v10340
      %v10342 = vrot.slane %v10341, 2
      %v10343 = vadd.f32 %v10341, %v10342
      %v10344 = vrot.slane %v10343, 1
      %v10345 = vadd.f32 %v10343, %v10344
      %v10346 = vrot.slane %v9180, 4
      %v10347 = vadd.f32 %v9180, %v10346
      %v10348 = vrot.slane %v10347, 2
      %v10349 = vadd.f32 %v10347, %v10348
      %v10350 = vrot.slane %v10349, 1
      %v10351 = vadd.f32 %v10349, %v10350
      %v10352 = vrot.slane %v9181, 4
      %v10353 = vadd.f32 %v9181, %v10352
      %v10354 = vrot.slane %v10353, 2
      %v10355 = vadd.f32 %v10353, %v10354
      %v10356 = vrot.slane %v10355, 1
      %v10357 = vadd.f32 %v10355, %v10356
      %v10358 = vrot.slane %v9182, 4
      %v10359 = vadd.f32 %v9182, %v10358
      %v10360 = vrot.slane %v10359, 2
      %v10361 = vadd.f32 %v10359, %v10360
      %v10362 = vrot.slane %v10361, 1
      %v10363 = vadd.f32 %v10361, %v10362
      %v10364 = vrot.slane %v9183, 4
      %v10365 = vadd.f32 %v9183, %v10364
      %v10366 = vrot.slane %v10365, 2
      %v10367 = vadd.f32 %v10365, %v10366
      %v10368 = vrot.slane %v10367, 1
      %v10369 = vadd.f32 %v10367, %v10368
      %v10370 = vrot.slane %v9184, 4
      %v10371 = vadd.f32 %v9184, %v10370
      %v10372 = vrot.slane %v10371, 2
      %v10373 = vadd.f32 %v10371, %v10372
      %v10374 = vrot.slane %v10373, 1
      %v10375 = vadd.f32 %v10373, %v10374
      %v10376 = vrot.slane %v9185, 4
      %v10377 = vadd.f32 %v9185, %v10376
      %v10378 = vrot.slane %v10377, 2
      %v10379 = vadd.f32 %v10377, %v10378
      %v10380 = vrot.slane %v10379, 1
      %v10381 = vadd.f32 %v10379, %v10380
      %v10382 = vrot.slane %v9186, 4
      %v10383 = vadd.f32 %v9186, %v10382
      %v10384 = vrot.slane %v10383, 2
      %v10385 = vadd.f32 %v10383, %v10384
      %v10386 = vrot.slane %v10385, 1
      %v10387 = vadd.f32 %v10385, %v10386
      %v10388 = vrot.slane %v9187, 4
      %v10389 = vadd.f32 %v9187, %v10388
      %v10390 = vrot.slane %v10389, 2
      %v10391 = vadd.f32 %v10389, %v10390
      %v10392 = vrot.slane %v10391, 1
      %v10393 = vadd.f32 %v10391, %v10392
      %v10394 = vrot.slane %v9188, 4
      %v10395 = vadd.f32 %v9188, %v10394
      %v10396 = vrot.slane %v10395, 2
      %v10397 = vadd.f32 %v10395, %v10396
      %v10398 = vrot.slane %v10397, 1
      %v10399 = vadd.f32 %v10397, %v10398
      %v10400 = vrot.slane %v9189, 4
      %v10401 = vadd.f32 %v9189, %v10400
      %v10402 = vrot.slane %v10401, 2
      %v10403 = vadd.f32 %v10401, %v10402
      %v10404 = vrot.slane %v10403, 1
      %v10405 = vadd.f32 %v10403, %v10404
      %v10406 = vrot.slane %v9190, 4
      %v10407 = vadd.f32 %v9190, %v10406
      %v10408 = vrot.slane %v10407, 2
      %v10409 = vadd.f32 %v10407, %v10408
      %v10410 = vrot.slane %v10409, 1
      %v10411 = vadd.f32 %v10409, %v10410
      %v10412 = vrot.slane %v9191, 4
      %v10413 = vadd.f32 %v9191, %v10412
      %v10414 = vrot.slane %v10413, 2
      %v10415 = vadd.f32 %v10413, %v10414
      %v10416 = vrot.slane %v10415, 1
      %v10417 = vadd.f32 %v10415, %v10416
      %v10418 = vrot.slane %v9192, 4
      %v10419 = vadd.f32 %v9192, %v10418
      %v10420 = vrot.slane %v10419, 2
      %v10421 = vadd.f32 %v10419, %v10420
      %v10422 = vrot.slane %v10421, 1
      %v10423 = vadd.f32 %v10421, %v10422
      %v10424 = vrot.slane %v9193, 4
      %v10425 = vadd.f32 %v9193, %v10424
      %v10426 = vrot.slane %v10425, 2
      %v10427 = vadd.f32 %v10425, %v10426
      %v10428 = vrot.slane %v10427, 1
      %v10429 = vadd.f32 %v10427, %v10428
      %v10430 = vrot.slane %v9194, 4
      %v10431 = vadd.f32 %v9194, %v10430
      %v10432 = vrot.slane %v10431, 2
      %v10433 = vadd.f32 %v10431, %v10432
      %v10434 = vrot.slane %v10433, 1
      %v10435 = vadd.f32 %v10433, %v10434
      %v10436 = vrot.slane %v9195, 4
      %v10437 = vadd.f32 %v9195, %v10436
      %v10438 = vrot.slane %v10437, 2
      %v10439 = vadd.f32 %v10437, %v10438
      %v10440 = vrot.slane %v10439, 1
      %v10441 = vadd.f32 %v10439, %v10440
      %v10442 = vrot.slane %v9196, 4
      %v10443 = vadd.f32 %v9196, %v10442
      %v10444 = vrot.slane %v10443, 2
      %v10445 = vadd.f32 %v10443, %v10444
      %v10446 = vrot.slane %v10445, 1
      %v10447 = vadd.f32 %v10445, %v10446
      %v10448 = vrot.slane %v9197, 4
      %v10449 = vadd.f32 %v9197, %v10448
      %v10450 = vrot.slane %v10449, 2
      %v10451 = vadd.f32 %v10449, %v10450
      %v10452 = vrot.slane %v10451, 1
      %v10453 = vadd.f32 %v10451, %v10452
      %v10454 = vrot.slane %v9198, 4
      %v10455 = vadd.f32 %v9198, %v10454
      %v10456 = vrot.slane %v10455, 2
      %v10457 = vadd.f32 %v10455, %v10456
      %v10458 = vrot.slane %v10457, 1
      %v10459 = vadd.f32 %v10457, %v10458
      %v10460 = vrot.slane %v9199, 4
      %v10461 = vadd.f32 %v9199, %v10460
      %v10462 = vrot.slane %v10461, 2
      %v10463 = vadd.f32 %v10461, %v10462
      %v10464 = vrot.slane %v10463, 1
      %v10465 = vadd.f32 %v10463, %v10464
      %v10466 = vrot.slane %v9200, 4
      %v10467 = vadd.f32 %v9200, %v10466
      %v10468 = vrot.slane %v10467, 2
      %v10469 = vadd.f32 %v10467, %v10468
      %v10470 = vrot.slane %v10469, 1
      %v10471 = vadd.f32 %v10469, %v10470
      %v10472 = vrot.slane %v9201, 4
      %v10473 = vadd.f32 %v9201, %v10472
      %v10474 = vrot.slane %v10473, 2
      %v10475 = vadd.f32 %v10473, %v10474
      %v10476 = vrot.slane %v10475, 1
      %v10477 = vadd.f32 %v10475, %v10476
      %v10478 = vrot.slane %v9202, 4
      %v10479 = vadd.f32 %v9202, %v10478
      %v10480 = vrot.slane %v10479, 2
      %v10481 = vadd.f32 %v10479, %v10480
      %v10482 = vrot.slane %v10481, 1
      %v10483 = vadd.f32 %v10481, %v10482
      %v10484 = vrot.slane %v9203, 4
      %v10485 = vadd.f32 %v9203, %v10484
      %v10486 = vrot.slane %v10485, 2
      %v10487 = vadd.f32 %v10485, %v10486
      %v10488 = vrot.slane %v10487, 1
      %v10489 = vadd.f32 %v10487, %v10488
      %v10490 = vrot.slane %v9204, 4
      %v10491 = vadd.f32 %v9204, %v10490
      %v10492 = vrot.slane %v10491, 2
      %v10493 = vadd.f32 %v10491, %v10492
      %v10494 = vrot.slane %v10493, 1
      %v10495 = vadd.f32 %v10493, %v10494
      %v10496 = vrot.slane %v9205, 4
      %v10497 = vadd.f32 %v9205, %v10496
      %v10498 = vrot.slane %v10497, 2
      %v10499 = vadd.f32 %v10497, %v10498
      %v10500 = vrot.slane %v10499, 1
      %v10501 = vadd.f32 %v10499, %v10500
      %v10502 = vrot.slane %v9206, 4
      %v10503 = vadd.f32 %v9206, %v10502
      %v10504 = vrot.slane %v10503, 2
      %v10505 = vadd.f32 %v10503, %v10504
      %v10506 = vrot.slane %v10505, 1
      %v10507 = vadd.f32 %v10505, %v10506
      %v10508 = vrot.slane %v9207, 4
      %v10509 = vadd.f32 %v9207, %v10508
      %v10510 = vrot.slane %v10509, 2
      %v10511 = vadd.f32 %v10509, %v10510
      %v10512 = vrot.slane %v10511, 1
      %v10513 = vadd.f32 %v10511, %v10512
      %v10514 = vrot.slane %v9208, 4
      %v10515 = vadd.f32 %v9208, %v10514
      %v10516 = vrot.slane %v10515, 2
      %v10517 = vadd.f32 %v10515, %v10516
      %v10518 = vrot.slane %v10517, 1
      %v10519 = vadd.f32 %v10517, %v10518
      %v10520 = vrot.slane %v9209, 4
      %v10521 = vadd.f32 %v9209, %v10520
      %v10522 = vrot.slane %v10521, 2
      %v10523 = vadd.f32 %v10521, %v10522
      %v10524 = vrot.slane %v10523, 1
      %v10525 = vadd.f32 %v10523, %v10524
      %v10526 = vrot.slane %v9210, 4
      %v10527 = vadd.f32 %v9210, %v10526
      %v10528 = vrot.slane %v10527, 2
      %v10529 = vadd.f32 %v10527, %v10528
      %v10530 = vrot.slane %v10529, 1
      %v10531 = vadd.f32 %v10529, %v10530
      %v10532 = vrot.slane %v9211, 4
      %v10533 = vadd.f32 %v9211, %v10532
      %v10534 = vrot.slane %v10533, 2
      %v10535 = vadd.f32 %v10533, %v10534
      %v10536 = vrot.slane %v10535, 1
      %v10537 = vadd.f32 %v10535, %v10536
      %v10538 = vrot.slane %v9212, 4
      %v10539 = vadd.f32 %v9212, %v10538
      %v10540 = vrot.slane %v10539, 2
      %v10541 = vadd.f32 %v10539, %v10540
      %v10542 = vrot.slane %v10541, 1
      %v10543 = vadd.f32 %v10541, %v10542
      %v10544 = vrot.slane %v9213, 4
      %v10545 = vadd.f32 %v9213, %v10544
      %v10546 = vrot.slane %v10545, 2
      %v10547 = vadd.f32 %v10545, %v10546
      %v10548 = vrot.slane %v10547, 1
      %v10549 = vadd.f32 %v10547, %v10548
      %v10550 = vrot.slane %v9214, 4
      %v10551 = vadd.f32 %v9214, %v10550
      %v10552 = vrot.slane %v10551, 2
      %v10553 = vadd.f32 %v10551, %v10552
      %v10554 = vrot.slane %v10553, 1
      %v10555 = vadd.f32 %v10553, %v10554
      %v10556 = vrot.slane %v9215, 4
      %v10557 = vadd.f32 %v9215, %v10556
      %v10558 = vrot.slane %v10557, 2
      %v10559 = vadd.f32 %v10557, %v10558
      %v10560 = vrot.slane %v10559, 1
      %v10561 = vadd.f32 %v10559, %v10560
      %v10562 = vrot.slane %v9216, 4
      %v10563 = vadd.f32 %v9216, %v10562
      %v10564 = vrot.slane %v10563, 2
      %v10565 = vadd.f32 %v10563, %v10564
      %v10566 = vrot.slane %v10565, 1
      %v10567 = vadd.f32 %v10565, %v10566
      %v10568 = vrot.slane %v9217, 4
      %v10569 = vadd.f32 %v9217, %v10568
      %v10570 = vrot.slane %v10569, 2
      %v10571 = vadd.f32 %v10569, %v10570
      %v10572 = vrot.slane %v10571, 1
      %v10573 = vadd.f32 %v10571, %v10572
      %v10574 = vrot.slane %v9218, 4
      %v10575 = vadd.f32 %v9218, %v10574
      %v10576 = vrot.slane %v10575, 2
      %v10577 = vadd.f32 %v10575, %v10576
      %v10578 = vrot.slane %v10577, 1
      %v10579 = vadd.f32 %v10577, %v10578
      %v10580 = vrot.slane %v9219, 4
      %v10581 = vadd.f32 %v9219, %v10580
      %v10582 = vrot.slane %v10581, 2
      %v10583 = vadd.f32 %v10581, %v10582
      %v10584 = vrot.slane %v10583, 1
      %v10585 = vadd.f32 %v10583, %v10584
      %v10586 = vrot.slane %v9220, 4
      %v10587 = vadd.f32 %v9220, %v10586
      %v10588 = vrot.slane %v10587, 2
      %v10589 = vadd.f32 %v10587, %v10588
      %v10590 = vrot.slane %v10589, 1
      %v10591 = vadd.f32 %v10589, %v10590
      %v10592 = vrot.slane %v9221, 4
      %v10593 = vadd.f32 %v9221, %v10592
      %v10594 = vrot.slane %v10593, 2
      %v10595 = vadd.f32 %v10593, %v10594
      %v10596 = vrot.slane %v10595, 1
      %v10597 = vadd.f32 %v10595, %v10596
      %v10598 = vrot.slane %v9222, 4
      %v10599 = vadd.f32 %v9222, %v10598
      %v10600 = vrot.slane %v10599, 2
      %v10601 = vadd.f32 %v10599, %v10600
      %v10602 = vrot.slane %v10601, 1
      %v10603 = vadd.f32 %v10601, %v10602
      %v10604 = vrot.slane %v9223, 4
      %v10605 = vadd.f32 %v9223, %v10604
      %v10606 = vrot.slane %v10605, 2
      %v10607 = vadd.f32 %v10605, %v10606
      %v10608 = vrot.slane %v10607, 1
      %v10609 = vadd.f32 %v10607, %v10608
      %v10610 = vrot.slane %v9224, 4
      %v10611 = vadd.f32 %v9224, %v10610
      %v10612 = vrot.slane %v10611, 2
      %v10613 = vadd.f32 %v10611, %v10612
      %v10614 = vrot.slane %v10613, 1
      %v10615 = vadd.f32 %v10613, %v10614
      %v10616 = vrot.slane %v9225, 4
      %v10617 = vadd.f32 %v9225, %v10616
      %v10618 = vrot.slane %v10617, 2
      %v10619 = vadd.f32 %v10617, %v10618
      %v10620 = vrot.slane %v10619, 1
      %v10621 = vadd.f32 %v10619, %v10620
      %v10622 = vrot.slane %v9226, 4
      %v10623 = vadd.f32 %v9226, %v10622
      %v10624 = vrot.slane %v10623, 2
      %v10625 = vadd.f32 %v10623, %v10624
      %v10626 = vrot.slane %v10625, 1
      %v10627 = vadd.f32 %v10625, %v10626
      %v10628 = vrot.slane %v9227, 4
      %v10629 = vadd.f32 %v9227, %v10628
      %v10630 = vrot.slane %v10629, 2
      %v10631 = vadd.f32 %v10629, %v10630
      %v10632 = vrot.slane %v10631, 1
      %v10633 = vadd.f32 %v10631, %v10632
      %v10634 = vrot.slane %v9228, 4
      %v10635 = vadd.f32 %v9228, %v10634
      %v10636 = vrot.slane %v10635, 2
      %v10637 = vadd.f32 %v10635, %v10636
      %v10638 = vrot.slane %v10637, 1
      %v10639 = vadd.f32 %v10637, %v10638
      %v10640 = vrot.slane %v9229, 4
      %v10641 = vadd.f32 %v9229, %v10640
      %v10642 = vrot.slane %v10641, 2
      %v10643 = vadd.f32 %v10641, %v10642
      %v10644 = vrot.slane %v10643, 1
      %v10645 = vadd.f32 %v10643, %v10644
      %v10646 = vrot.slane %v9230, 4
      %v10647 = vadd.f32 %v9230, %v10646
      %v10648 = vrot.slane %v10647, 2
      %v10649 = vadd.f32 %v10647, %v10648
      %v10650 = vrot.slane %v10649, 1
      %v10651 = vadd.f32 %v10649, %v10650
      %v10652 = vrot.slane %v9231, 4
      %v10653 = vadd.f32 %v9231, %v10652
      %v10654 = vrot.slane %v10653, 2
      %v10655 = vadd.f32 %v10653, %v10654
      %v10656 = vrot.slane %v10655, 1
      %v10657 = vadd.f32 %v10655, %v10656
      %v10658 = vrot.slane %v9232, 4
      %v10659 = vadd.f32 %v9232, %v10658
      %v10660 = vrot.slane %v10659, 2
      %v10661 = vadd.f32 %v10659, %v10660
      %v10662 = vrot.slane %v10661, 1
      %v10663 = vadd.f32 %v10661, %v10662
      %v10664 = vrot.slane %v9233, 4
      %v10665 = vadd.f32 %v9233, %v10664
      %v10666 = vrot.slane %v10665, 2
      %v10667 = vadd.f32 %v10665, %v10666
      %v10668 = vrot.slane %v10667, 1
      %v10669 = vadd.f32 %v10667, %v10668
      %v10670 = vrot.slane %v9234, 4
      %v10671 = vadd.f32 %v9234, %v10670
      %v10672 = vrot.slane %v10671, 2
      %v10673 = vadd.f32 %v10671, %v10672
      %v10674 = vrot.slane %v10673, 1
      %v10675 = vadd.f32 %v10673, %v10674
      %v10676 = vrot.slane %v9235, 4
      %v10677 = vadd.f32 %v9235, %v10676
      %v10678 = vrot.slane %v10677, 2
      %v10679 = vadd.f32 %v10677, %v10678
      %v10680 = vrot.slane %v10679, 1
      %v10681 = vadd.f32 %v10679, %v10680
      %v10682 = vrot.slane %v9236, 4
      %v10683 = vadd.f32 %v9236, %v10682
      %v10684 = vrot.slane %v10683, 2
      %v10685 = vadd.f32 %v10683, %v10684
      %v10686 = vrot.slane %v10685, 1
      %v10687 = vadd.f32 %v10685, %v10686
      %v10688 = vrot.slane %v9237, 4
      %v10689 = vadd.f32 %v9237, %v10688
      %v10690 = vrot.slane %v10689, 2
      %v10691 = vadd.f32 %v10689, %v10690
      %v10692 = vrot.slane %v10691, 1
      %v10693 = vadd.f32 %v10691, %v10692
      %v10694 = vrot.slane %v9238, 4
      %v10695 = vadd.f32 %v9238, %v10694
      %v10696 = vrot.slane %v10695, 2
      %v10697 = vadd.f32 %v10695, %v10696
      %v10698 = vrot.slane %v10697, 1
      %v10699 = vadd.f32 %v10697, %v10698
      %v10700 = vrot.slane %v9239, 4
      %v10701 = vadd.f32 %v9239, %v10700
      %v10702 = vrot.slane %v10701, 2
      %v10703 = vadd.f32 %v10701, %v10702
      %v10704 = vrot.slane %v10703, 1
      %v10705 = vadd.f32 %v10703, %v10704
      %v10706 = vrot.slane %v9240, 4
      %v10707 = vadd.f32 %v9240, %v10706
      %v10708 = vrot.slane %v10707, 2
      %v10709 = vadd.f32 %v10707, %v10708
      %v10710 = vrot.slane %v10709, 1
      %v10711 = vadd.f32 %v10709, %v10710
      %v10712 = vrot.slane %v9241, 4
      %v10713 = vadd.f32 %v9241, %v10712
      %v10714 = vrot.slane %v10713, 2
      %v10715 = vadd.f32 %v10713, %v10714
      %v10716 = vrot.slane %v10715, 1
      %v10717 = vadd.f32 %v10715, %v10716
      %v10718 = vrot.slane %v9242, 4
      %v10719 = vadd.f32 %v9242, %v10718
      %v10720 = vrot.slane %v10719, 2
      %v10721 = vadd.f32 %v10719, %v10720
      %v10722 = vrot.slane %v10721, 1
      %v10723 = vadd.f32 %v10721, %v10722
      %v10724 = vrot.slane %v9243, 4
      %v10725 = vadd.f32 %v9243, %v10724
      %v10726 = vrot.slane %v10725, 2
      %v10727 = vadd.f32 %v10725, %v10726
      %v10728 = vrot.slane %v10727, 1
      %v10729 = vadd.f32 %v10727, %v10728
      %v10730 = vrot.slane %v9244, 4
      %v10731 = vadd.f32 %v9244, %v10730
      %v10732 = vrot.slane %v10731, 2
      %v10733 = vadd.f32 %v10731, %v10732
      %v10734 = vrot.slane %v10733, 1
      %v10735 = vadd.f32 %v10733, %v10734
      %v10736 = vrot.slane %v9245, 4
      %v10737 = vadd.f32 %v9245, %v10736
      %v10738 = vrot.slane %v10737, 2
      %v10739 = vadd.f32 %v10737, %v10738
      %v10740 = vrot.slane %v10739, 1
      %v10741 = vadd.f32 %v10739, %v10740
      %v10742 = vrot.slane %v9246, 4
      %v10743 = vadd.f32 %v9246, %v10742
      %v10744 = vrot.slane %v10743, 2
      %v10745 = vadd.f32 %v10743, %v10744
      %v10746 = vrot.slane %v10745, 1
      %v10747 = vadd.f32 %v10745, %v10746
      %v10748 = vrot.slane %v9247, 4
      %v10749 = vadd.f32 %v9247, %v10748
      %v10750 = vrot.slane %v10749, 2
      %v10751 = vadd.f32 %v10749, %v10750
      %v10752 = vrot.slane %v10751, 1
      %v10753 = vadd.f32 %v10751, %v10752
      %v10754 = vrot.slane %v9248, 4
      %v10755 = vadd.f32 %v9248, %v10754
      %v10756 = vrot.slane %v10755, 2
      %v10757 = vadd.f32 %v10755, %v10756
      %v10758 = vrot.slane %v10757, 1
      %v10759 = vadd.f32 %v10757, %v10758
      %v10760 = vrot.slane %v9249, 4
      %v10761 = vadd.f32 %v9249, %v10760
      %v10762 = vrot.slane %v10761, 2
      %v10763 = vadd.f32 %v10761, %v10762
      %v10764 = vrot.slane %v10763, 1
      %v10765 = vadd.f32 %v10763, %v10764
      %v10766 = vrot.slane %v9250, 4
      %v10767 = vadd.f32 %v9250, %v10766
      %v10768 = vrot.slane %v10767, 2
      %v10769 = vadd.f32 %v10767, %v10768
      %v10770 = vrot.slane %v10769, 1
      %v10771 = vadd.f32 %v10769, %v10770
      %v10772 = vrot.slane %v9251, 4
      %v10773 = vadd.f32 %v9251, %v10772
      %v10774 = vrot.slane %v10773, 2
      %v10775 = vadd.f32 %v10773, %v10774
      %v10776 = vrot.slane %v10775, 1
      %v10777 = vadd.f32 %v10775, %v10776
      %v10778 = vrot.slane %v9252, 4
      %v10779 = vadd.f32 %v9252, %v10778
      %v10780 = vrot.slane %v10779, 2
      %v10781 = vadd.f32 %v10779, %v10780
      %v10782 = vrot.slane %v10781, 1
      %v10783 = vadd.f32 %v10781, %v10782
      %v10784 = vrot.slane %v9253, 4
      %v10785 = vadd.f32 %v9253, %v10784
      %v10786 = vrot.slane %v10785, 2
      %v10787 = vadd.f32 %v10785, %v10786
      %v10788 = vrot.slane %v10787, 1
      %v10789 = vadd.f32 %v10787, %v10788
      %v10794 = vrot.slane %v341, 1
      %v10795 = vrot.slane %v342, 1
      %v10796 = vrot.slane %v343, 1
      %v10797 = vrot.slane %v344, 1
      %v10798 = vrot.slane %v341, 2
      %v10799 = vrot.slane %v342, 2
      %v10800 = vrot.slane %v343, 2
      %v10801 = vrot.slane %v344, 2
      %v10802 = vrot.slane %v341, 3
      %v10803 = vrot.slane %v342, 3
      %v10804 = vrot.slane %v343, 3
      %v10805 = vrot.slane %v344, 3
      %v10806 = vrot.slane %v341, 4
      %v10807 = vrot.slane %v342, 4
      %v10808 = vrot.slane %v343, 4
      %v10809 = vrot.slane %v344, 4
      %v10810 = vrot.slane %v341, 5
      %v10811 = vrot.slane %v342, 5
      %v10812 = vrot.slane %v343, 5
      %v10813 = vrot.slane %v344, 5
      %v10814 = vrot.slane %v341, 6
      %v10815 = vrot.slane %v342, 6
      %v10816 = vrot.slane %v343, 6
      %v10817 = vrot.slane %v344, 6
      %v10818 = vrot.slane %v341, 7
      %v10819 = vrot.slane %v342, 7
      %v10820 = vrot.slane %v343, 7
      %v10821 = vrot.slane %v344, 7
      %v10854 = vmul.f32 %v9259, %v341
      %v10855 = vmul.f32 %v9265, %v342
      %v10856 = vmul.f32 %v9271, %v343
      %v10857 = vmul.f32 %v9277, %v344
      %v10858 = vmul.f32 %v9283, %v10794
      %v10859 = vmul.f32 %v9289, %v10795
      %v10860 = vmul.f32 %v9295, %v10796
      %v10861 = vmul.f32 %v9301, %v10797
      %v10862 = vmul.f32 %v9307, %v10798
      %v10863 = vmul.f32 %v9313, %v10799
      %v10864 = vmul.f32 %v9319, %v10800
      %v10865 = vmul.f32 %v9325, %v10801
      %v10866 = vmul.f32 %v9331, %v10802
      %v10867 = vmul.f32 %v9337, %v10803
      %v10868 = vmul.f32 %v9343, %v10804
      %v10869 = vmul.f32 %v9349, %v10805
      %v10870 = vmul.f32 %v9355, %v10806
      %v10871 = vmul.f32 %v9361, %v10807
      %v10872 = vmul.f32 %v9367, %v10808
      %v10873 = vmul.f32 %v9373, %v10809
      %v10874 = vmul.f32 %v9379, %v10810
      %v10875 = vmul.f32 %v9385, %v10811
      %v10876 = vmul.f32 %v9391, %v10812
      %v10877 = vmul.f32 %v9397, %v10813
      %v10878 = vmul.f32 %v9403, %v10814
      %v10879 = vmul.f32 %v9409, %v10815
      %v10880 = vmul.f32 %v9415, %v10816
      %v10881 = vmul.f32 %v9421, %v10817
      %v10882 = vmul.f32 %v9427, %v10818
      %v10883 = vmul.f32 %v9433, %v10819
      %v10884 = vmul.f32 %v9439, %v10820
      %v10885 = vmul.f32 %v9445, %v10821
      %v10886 = vmul.f32 %v9451, %v341
      %v10887 = vmul.f32 %v9457, %v342
      %v10888 = vmul.f32 %v9463, %v343
      %v10889 = vmul.f32 %v9469, %v344
      %v10890 = vmul.f32 %v9475, %v10794
      %v10891 = vmul.f32 %v9481, %v10795
      %v10892 = vmul.f32 %v9487, %v10796
      %v10893 = vmul.f32 %v9493, %v10797
      %v10894 = vmul.f32 %v9499, %v10798
      %v10895 = vmul.f32 %v9505, %v10799
      %v10896 = vmul.f32 %v9511, %v10800
      %v10897 = vmul.f32 %v9517, %v10801
      %v10898 = vmul.f32 %v9523, %v10802
      %v10899 = vmul.f32 %v9529, %v10803
      %v10900 = vmul.f32 %v9535, %v10804
      %v10901 = vmul.f32 %v9541, %v10805
      %v10902 = vmul.f32 %v9547, %v10806
      %v10903 = vmul.f32 %v9553, %v10807
      %v10904 = vmul.f32 %v9559, %v10808
      %v10905 = vmul.f32 %v9565, %v10809
      %v10906 = vmul.f32 %v9571, %v10810
      %v10907 = vmul.f32 %v9577, %v10811
      %v10908 = vmul.f32 %v9583, %v10812
      %v10909 = vmul.f32 %v9589, %v10813
      %v10910 = vmul.f32 %v9595, %v10814
      %v10911 = vmul.f32 %v9601, %v10815
      %v10912 = vmul.f32 %v9607, %v10816
      %v10913 = vmul.f32 %v9613, %v10817
      %v10914 = vmul.f32 %v9619, %v10818
      %v10915 = vmul.f32 %v9625, %v10819
      %v10916 = vmul.f32 %v9631, %v10820
      %v10917 = vmul.f32 %v9637, %v10821
      %v10918 = vmul.f32 %v9643, %v341
      %v10919 = vmul.f32 %v9649, %v342
      %v10920 = vmul.f32 %v9655, %v343
      %v10921 = vmul.f32 %v9661, %v344
      %v10922 = vmul.f32 %v9667, %v10794
      %v10923 = vmul.f32 %v9673, %v10795
      %v10924 = vmul.f32 %v9679, %v10796
      %v10925 = vmul.f32 %v9685, %v10797
      %v10926 = vmul.f32 %v9691, %v10798
      %v10927 = vmul.f32 %v9697, %v10799
      %v10928 = vmul.f32 %v9703, %v10800
      %v10929 = vmul.f32 %v9709, %v10801
      %v10930 = vmul.f32 %v9715, %v10802
      %v10931 = vmul.f32 %v9721, %v10803
      %v10932 = vmul.f32 %v9727, %v10804
      %v10933 = vmul.f32 %v9733, %v10805
      %v10934 = vmul.f32 %v9739, %v10806
      %v10935 = vmul.f32 %v9745, %v10807
      %v10936 = vmul.f32 %v9751, %v10808
      %v10937 = vmul.f32 %v9757, %v10809
      %v10938 = vmul.f32 %v9763, %v10810
      %v10939 = vmul.f32 %v9769, %v10811
      %v10940 = vmul.f32 %v9775, %v10812
      %v10941 = vmul.f32 %v9781, %v10813
      %v10942 = vmul.f32 %v9787, %v10814
      %v10943 = vmul.f32 %v9793, %v10815
      %v10944 = vmul.f32 %v9799, %v10816
      %v10945 = vmul.f32 %v9805, %v10817
      %v10946 = vmul.f32 %v9811, %v10818
      %v10947 = vmul.f32 %v9817, %v10819
      %v10948 = vmul.f32 %v9823, %v10820
      %v10949 = vmul.f32 %v9829, %v10821
      %v10950 = vmul.f32 %v9835, %v341
      %v10951 = vmul.f32 %v9841, %v342
      %v10952 = vmul.f32 %v9847, %v343
      %v10953 = vmul.f32 %v9853, %v344
      %v10954 = vmul.f32 %v9859, %v10794
      %v10955 = vmul.f32 %v9865, %v10795
      %v10956 = vmul.f32 %v9871, %v10796
      %v10957 = vmul.f32 %v9877, %v10797
      %v10958 = vmul.f32 %v9883, %v10798
      %v10959 = vmul.f32 %v9889, %v10799
      %v10960 = vmul.f32 %v9895, %v10800
      %v10961 = vmul.f32 %v9901, %v10801
      %v10962 = vmul.f32 %v9907, %v10802
      %v10963 = vmul.f32 %v9913, %v10803
      %v10964 = vmul.f32 %v9919, %v10804
      %v10965 = vmul.f32 %v9925, %v10805
      %v10966 = vmul.f32 %v9931, %v10806
      %v10967 = vmul.f32 %v9937, %v10807
      %v10968 = vmul.f32 %v9943, %v10808
      %v10969 = vmul.f32 %v9949, %v10809
      %v10970 = vmul.f32 %v9955, %v10810
      %v10971 = vmul.f32 %v9961, %v10811
      %v10972 = vmul.f32 %v9967, %v10812
      %v10973 = vmul.f32 %v9973, %v10813
      %v10974 = vmul.f32 %v9979, %v10814
      %v10975 = vmul.f32 %v9985, %v10815
      %v10976 = vmul.f32 %v9991, %v10816
      %v10977 = vmul.f32 %v9997, %v10817
      %v10978 = vmul.f32 %v10003, %v10818
      %v10979 = vmul.f32 %v10009, %v10819
      %v10980 = vmul.f32 %v10015, %v10820
      %v10981 = vmul.f32 %v10021, %v10821
      %v10982 = vmul.f32 %v10027, %v341
      %v10983 = vmul.f32 %v10033, %v342
      %v10984 = vmul.f32 %v10039, %v343
      %v10985 = vmul.f32 %v10045, %v344
      %v10986 = vmul.f32 %v10051, %v10794
      %v10987 = vmul.f32 %v10057, %v10795
      %v10988 = vmul.f32 %v10063, %v10796
      %v10989 = vmul.f32 %v10069, %v10797
      %v10990 = vmul.f32 %v10075, %v10798
      %v10991 = vmul.f32 %v10081, %v10799
      %v10992 = vmul.f32 %v10087, %v10800
      %v10993 = vmul.f32 %v10093, %v10801
      %v10994 = vmul.f32 %v10099, %v10802
      %v10995 = vmul.f32 %v10105, %v10803
      %v10996 = vmul.f32 %v10111, %v10804
      %v10997 = vmul.f32 %v10117, %v10805
      %v10998 = vmul.f32 %v10123, %v10806
      %v10999 = vmul.f32 %v10129, %v10807
      %v11000 = vmul.f32 %v10135, %v10808
      %v11001 = vmul.f32 %v10141, %v10809
      %v11002 = vmul.f32 %v10147, %v10810
      %v11003 = vmul.f32 %v10153, %v10811
      %v11004 = vmul.f32 %v10159, %v10812
      %v11005 = vmul.f32 %v10165, %v10813
      %v11006 = vmul.f32 %v10171, %v10814
      %v11007 = vmul.f32 %v10177, %v10815
      %v11008 = vmul.f32 %v10183, %v10816
      %v11009 = vmul.f32 %v10189, %v10817
      %v11010 = vmul.f32 %v10195, %v10818
      %v11011 = vmul.f32 %v10201, %v10819
      %v11012 = vmul.f32 %v10207, %v10820
      %v11013 = vmul.f32 %v10213, %v10821
      %v11014 = vmul.f32 %v10219, %v341
      %v11015 = vmul.f32 %v10225, %v342
      %v11016 = vmul.f32 %v10231, %v343
      %v11017 = vmul.f32 %v10237, %v344
      %v11018 = vmul.f32 %v10243, %v10794
      %v11019 = vmul.f32 %v10249, %v10795
      %v11020 = vmul.f32 %v10255, %v10796
      %v11021 = vmul.f32 %v10261, %v10797
      %v11022 = vmul.f32 %v10267, %v10798
      %v11023 = vmul.f32 %v10273, %v10799
      %v11024 = vmul.f32 %v10279, %v10800
      %v11025 = vmul.f32 %v10285, %v10801
      %v11026 = vmul.f32 %v10291, %v10802
      %v11027 = vmul.f32 %v10297, %v10803
      %v11028 = vmul.f32 %v10303, %v10804
      %v11029 = vmul.f32 %v10309, %v10805
      %v11030 = vmul.f32 %v10315, %v10806
      %v11031 = vmul.f32 %v10321, %v10807
      %v11032 = vmul.f32 %v10327, %v10808
      %v11033 = vmul.f32 %v10333, %v10809
      %v11034 = vmul.f32 %v10339, %v10810
      %v11035 = vmul.f32 %v10345, %v10811
      %v11036 = vmul.f32 %v10351, %v10812
      %v11037 = vmul.f32 %v10357, %v10813
      %v11038 = vmul.f32 %v10363, %v10814
      %v11039 = vmul.f32 %v10369, %v10815
      %v11040 = vmul.f32 %v10375, %v10816
      %v11041 = vmul.f32 %v10381, %v10817
      %v11042 = vmul.f32 %v10387, %v10818
      %v11043 = vmul.f32 %v10393, %v10819
      %v11044 = vmul.f32 %v10399, %v10820
      %v11045 = vmul.f32 %v10405, %v10821
      %v11046 = vmul.f32 %v10411, %v341
      %v11047 = vmul.f32 %v10417, %v342
      %v11048 = vmul.f32 %v10423, %v343
      %v11049 = vmul.f32 %v10429, %v344
      %v11050 = vmul.f32 %v10435, %v10794
      %v11051 = vmul.f32 %v10441, %v10795
      %v11052 = vmul.f32 %v10447, %v10796
      %v11053 = vmul.f32 %v10453, %v10797
      %v11054 = vmul.f32 %v10459, %v10798
      %v11055 = vmul.f32 %v10465, %v10799
      %v11056 = vmul.f32 %v10471, %v10800
      %v11057 = vmul.f32 %v10477, %v10801
      %v11058 = vmul.f32 %v10483, %v10802
      %v11059 = vmul.f32 %v10489, %v10803
      %v11060 = vmul.f32 %v10495, %v10804
      %v11061 = vmul.f32 %v10501, %v10805
      %v11062 = vmul.f32 %v10507, %v10806
      %v11063 = vmul.f32 %v10513, %v10807
      %v11064 = vmul.f32 %v10519, %v10808
      %v11065 = vmul.f32 %v10525, %v10809
      %v11066 = vmul.f32 %v10531, %v10810
      %v11067 = vmul.f32 %v10537, %v10811
      %v11068 = vmul.f32 %v10543, %v10812
      %v11069 = vmul.f32 %v10549, %v10813
      %v11070 = vmul.f32 %v10555, %v10814
      %v11071 = vmul.f32 %v10561, %v10815
      %v11072 = vmul.f32 %v10567, %v10816
      %v11073 = vmul.f32 %v10573, %v10817
      %v11074 = vmul.f32 %v10579, %v10818
      %v11075 = vmul.f32 %v10585, %v10819
      %v11076 = vmul.f32 %v10591, %v10820
      %v11077 = vmul.f32 %v10597, %v10821
      %v11078 = vmul.f32 %v10603, %v341
      %v11079 = vmul.f32 %v10609, %v342
      %v11080 = vmul.f32 %v10615, %v343
      %v11081 = vmul.f32 %v10621, %v344
      %v11082 = vmul.f32 %v10627, %v10794
      %v11083 = vmul.f32 %v10633, %v10795
      %v11084 = vmul.f32 %v10639, %v10796
      %v11085 = vmul.f32 %v10645, %v10797
      %v11086 = vmul.f32 %v10651, %v10798
      %v11087 = vmul.f32 %v10657, %v10799
      %v11088 = vmul.f32 %v10663, %v10800
      %v11089 = vmul.f32 %v10669, %v10801
      %v11090 = vmul.f32 %v10675, %v10802
      %v11091 = vmul.f32 %v10681, %v10803
      %v11092 = vmul.f32 %v10687, %v10804
      %v11093 = vmul.f32 %v10693, %v10805
      %v11094 = vmul.f32 %v10699, %v10806
      %v11095 = vmul.f32 %v10705, %v10807
      %v11096 = vmul.f32 %v10711, %v10808
      %v11097 = vmul.f32 %v10717, %v10809
      %v11098 = vmul.f32 %v10723, %v10810
      %v11099 = vmul.f32 %v10729, %v10811
      %v11100 = vmul.f32 %v10735, %v10812
      %v11101 = vmul.f32 %v10741, %v10813
      %v11102 = vmul.f32 %v10747, %v10814
      %v11103 = vmul.f32 %v10753, %v10815
      %v11104 = vmul.f32 %v10759, %v10816
      %v11105 = vmul.f32 %v10765, %v10817
      %v11106 = vmul.f32 %v10771, %v10818
      %v11107 = vmul.f32 %v10777, %v10819
      %v11108 = vmul.f32 %v10783, %v10820
      %v11109 = vmul.f32 %v10789, %v10821
      %v11366 = vrot.slane %v10858, 7
      %vm11367 = vcmask 1041409
      %v11368 = vsel %vm11367, %v11366, %v10854
      %v11369 = vrot.slane %v10862, 6
      %vm11370 = vcmask 1042434
      %v11371 = vsel %vm11370, %v11369, %v11368
      %v11372 = vrot.slane %v10866, 5
      %vm11373 = vcmask 1043459
      %v11374 = vsel %vm11373, %v11372, %v11371
      %v11375 = vrot.slane %v10870, 4
      %vm11376 = vcmask 1044484
      %v11377 = vsel %vm11376, %v11375, %v11374
      %v11378 = vrot.slane %v10874, 3
      %vm11379 = vcmask 1045509
      %v11380 = vsel %vm11379, %v11378, %v11377
      %v11381 = vrot.slane %v10878, 2
      %vm11382 = vcmask 1046534
      %v11383 = vsel %vm11382, %v11381, %v11380
      %v11384 = vrot.slane %v10882, 1
      %vm11385 = vcmask 1047559
      %v11386 = vsel %vm11385, %v11384, %v11383
      %v11387 = vrot.slane %v10859, 7
      %v11388 = vsel %vm11367, %v11387, %v10855
      %v11389 = vrot.slane %v10863, 6
      %v11390 = vsel %vm11370, %v11389, %v11388
      %v11391 = vrot.slane %v10867, 5
      %v11392 = vsel %vm11373, %v11391, %v11390
      %v11393 = vrot.slane %v10871, 4
      %v11394 = vsel %vm11376, %v11393, %v11392
      %v11395 = vrot.slane %v10875, 3
      %v11396 = vsel %vm11379, %v11395, %v11394
      %v11397 = vrot.slane %v10879, 2
      %v11398 = vsel %vm11382, %v11397, %v11396
      %v11399 = vrot.slane %v10883, 1
      %v11400 = vsel %vm11385, %v11399, %v11398
      %v11401 = vrot.slane %v10860, 7
      %v11402 = vsel %vm11367, %v11401, %v10856
      %v11403 = vrot.slane %v10864, 6
      %v11404 = vsel %vm11370, %v11403, %v11402
      %v11405 = vrot.slane %v10868, 5
      %v11406 = vsel %vm11373, %v11405, %v11404
      %v11407 = vrot.slane %v10872, 4
      %v11408 = vsel %vm11376, %v11407, %v11406
      %v11409 = vrot.slane %v10876, 3
      %v11410 = vsel %vm11379, %v11409, %v11408
      %v11411 = vrot.slane %v10880, 2
      %v11412 = vsel %vm11382, %v11411, %v11410
      %v11413 = vrot.slane %v10884, 1
      %v11414 = vsel %vm11385, %v11413, %v11412
      %v11415 = vrot.slane %v10861, 7
      %v11416 = vsel %vm11367, %v11415, %v10857
      %v11417 = vrot.slane %v10865, 6
      %v11418 = vsel %vm11370, %v11417, %v11416
      %v11419 = vrot.slane %v10869, 5
      %v11420 = vsel %vm11373, %v11419, %v11418
      %v11421 = vrot.slane %v10873, 4
      %v11422 = vsel %vm11376, %v11421, %v11420
      %v11423 = vrot.slane %v10877, 3
      %v11424 = vsel %vm11379, %v11423, %v11422
      %v11425 = vrot.slane %v10881, 2
      %v11426 = vsel %vm11382, %v11425, %v11424
      %v11427 = vrot.slane %v10885, 1
      %v11428 = vsel %vm11385, %v11427, %v11426
      %v11429 = vrot.slane %v10890, 7
      %v11430 = vsel %vm11367, %v11429, %v10886
      %v11431 = vrot.slane %v10894, 6
      %v11432 = vsel %vm11370, %v11431, %v11430
      %v11433 = vrot.slane %v10898, 5
      %v11434 = vsel %vm11373, %v11433, %v11432
      %v11435 = vrot.slane %v10902, 4
      %v11436 = vsel %vm11376, %v11435, %v11434
      %v11437 = vrot.slane %v10906, 3
      %v11438 = vsel %vm11379, %v11437, %v11436
      %v11439 = vrot.slane %v10910, 2
      %v11440 = vsel %vm11382, %v11439, %v11438
      %v11441 = vrot.slane %v10914, 1
      %v11442 = vsel %vm11385, %v11441, %v11440
      %v11443 = vrot.slane %v10891, 7
      %v11444 = vsel %vm11367, %v11443, %v10887
      %v11445 = vrot.slane %v10895, 6
      %v11446 = vsel %vm11370, %v11445, %v11444
      %v11447 = vrot.slane %v10899, 5
      %v11448 = vsel %vm11373, %v11447, %v11446
      %v11449 = vrot.slane %v10903, 4
      %v11450 = vsel %vm11376, %v11449, %v11448
      %v11451 = vrot.slane %v10907, 3
      %v11452 = vsel %vm11379, %v11451, %v11450
      %v11453 = vrot.slane %v10911, 2
      %v11454 = vsel %vm11382, %v11453, %v11452
      %v11455 = vrot.slane %v10915, 1
      %v11456 = vsel %vm11385, %v11455, %v11454
      %v11457 = vrot.slane %v10892, 7
      %v11458 = vsel %vm11367, %v11457, %v10888
      %v11459 = vrot.slane %v10896, 6
      %v11460 = vsel %vm11370, %v11459, %v11458
      %v11461 = vrot.slane %v10900, 5
      %v11462 = vsel %vm11373, %v11461, %v11460
      %v11463 = vrot.slane %v10904, 4
      %v11464 = vsel %vm11376, %v11463, %v11462
      %v11465 = vrot.slane %v10908, 3
      %v11466 = vsel %vm11379, %v11465, %v11464
      %v11467 = vrot.slane %v10912, 2
      %v11468 = vsel %vm11382, %v11467, %v11466
      %v11469 = vrot.slane %v10916, 1
      %v11470 = vsel %vm11385, %v11469, %v11468
      %v11471 = vrot.slane %v10893, 7
      %v11472 = vsel %vm11367, %v11471, %v10889
      %v11473 = vrot.slane %v10897, 6
      %v11474 = vsel %vm11370, %v11473, %v11472
      %v11475 = vrot.slane %v10901, 5
      %v11476 = vsel %vm11373, %v11475, %v11474
      %v11477 = vrot.slane %v10905, 4
      %v11478 = vsel %vm11376, %v11477, %v11476
      %v11479 = vrot.slane %v10909, 3
      %v11480 = vsel %vm11379, %v11479, %v11478
      %v11481 = vrot.slane %v10913, 2
      %v11482 = vsel %vm11382, %v11481, %v11480
      %v11483 = vrot.slane %v10917, 1
      %v11484 = vsel %vm11385, %v11483, %v11482
      %v11485 = vrot.slane %v10922, 7
      %v11486 = vsel %vm11367, %v11485, %v10918
      %v11487 = vrot.slane %v10926, 6
      %v11488 = vsel %vm11370, %v11487, %v11486
      %v11489 = vrot.slane %v10930, 5
      %v11490 = vsel %vm11373, %v11489, %v11488
      %v11491 = vrot.slane %v10934, 4
      %v11492 = vsel %vm11376, %v11491, %v11490
      %v11493 = vrot.slane %v10938, 3
      %v11494 = vsel %vm11379, %v11493, %v11492
      %v11495 = vrot.slane %v10942, 2
      %v11496 = vsel %vm11382, %v11495, %v11494
      %v11497 = vrot.slane %v10946, 1
      %v11498 = vsel %vm11385, %v11497, %v11496
      %v11499 = vrot.slane %v10923, 7
      %v11500 = vsel %vm11367, %v11499, %v10919
      %v11501 = vrot.slane %v10927, 6
      %v11502 = vsel %vm11370, %v11501, %v11500
      %v11503 = vrot.slane %v10931, 5
      %v11504 = vsel %vm11373, %v11503, %v11502
      %v11505 = vrot.slane %v10935, 4
      %v11506 = vsel %vm11376, %v11505, %v11504
      %v11507 = vrot.slane %v10939, 3
      %v11508 = vsel %vm11379, %v11507, %v11506
      %v11509 = vrot.slane %v10943, 2
      %v11510 = vsel %vm11382, %v11509, %v11508
      %v11511 = vrot.slane %v10947, 1
      %v11512 = vsel %vm11385, %v11511, %v11510
      %v11513 = vrot.slane %v10924, 7
      %v11514 = vsel %vm11367, %v11513, %v10920
      %v11515 = vrot.slane %v10928, 6
      %v11516 = vsel %vm11370, %v11515, %v11514
      %v11517 = vrot.slane %v10932, 5
      %v11518 = vsel %vm11373, %v11517, %v11516
      %v11519 = vrot.slane %v10936, 4
      %v11520 = vsel %vm11376, %v11519, %v11518
      %v11521 = vrot.slane %v10940, 3
      %v11522 = vsel %vm11379, %v11521, %v11520
      %v11523 = vrot.slane %v10944, 2
      %v11524 = vsel %vm11382, %v11523, %v11522
      %v11525 = vrot.slane %v10948, 1
      %v11526 = vsel %vm11385, %v11525, %v11524
      %v11527 = vrot.slane %v10925, 7
      %v11528 = vsel %vm11367, %v11527, %v10921
      %v11529 = vrot.slane %v10929, 6
      %v11530 = vsel %vm11370, %v11529, %v11528
      %v11531 = vrot.slane %v10933, 5
      %v11532 = vsel %vm11373, %v11531, %v11530
      %v11533 = vrot.slane %v10937, 4
      %v11534 = vsel %vm11376, %v11533, %v11532
      %v11535 = vrot.slane %v10941, 3
      %v11536 = vsel %vm11379, %v11535, %v11534
      %v11537 = vrot.slane %v10945, 2
      %v11538 = vsel %vm11382, %v11537, %v11536
      %v11539 = vrot.slane %v10949, 1
      %v11540 = vsel %vm11385, %v11539, %v11538
      %v11541 = vrot.slane %v10954, 7
      %v11542 = vsel %vm11367, %v11541, %v10950
      %v11543 = vrot.slane %v10958, 6
      %v11544 = vsel %vm11370, %v11543, %v11542
      %v11545 = vrot.slane %v10962, 5
      %v11546 = vsel %vm11373, %v11545, %v11544
      %v11547 = vrot.slane %v10966, 4
      %v11548 = vsel %vm11376, %v11547, %v11546
      %v11549 = vrot.slane %v10970, 3
      %v11550 = vsel %vm11379, %v11549, %v11548
      %v11551 = vrot.slane %v10974, 2
      %v11552 = vsel %vm11382, %v11551, %v11550
      %v11553 = vrot.slane %v10978, 1
      %v11554 = vsel %vm11385, %v11553, %v11552
      %v11555 = vrot.slane %v10955, 7
      %v11556 = vsel %vm11367, %v11555, %v10951
      %v11557 = vrot.slane %v10959, 6
      %v11558 = vsel %vm11370, %v11557, %v11556
      %v11559 = vrot.slane %v10963, 5
      %v11560 = vsel %vm11373, %v11559, %v11558
      %v11561 = vrot.slane %v10967, 4
      %v11562 = vsel %vm11376, %v11561, %v11560
      %v11563 = vrot.slane %v10971, 3
      %v11564 = vsel %vm11379, %v11563, %v11562
      %v11565 = vrot.slane %v10975, 2
      %v11566 = vsel %vm11382, %v11565, %v11564
      %v11567 = vrot.slane %v10979, 1
      %v11568 = vsel %vm11385, %v11567, %v11566
      %v11569 = vrot.slane %v10956, 7
      %v11570 = vsel %vm11367, %v11569, %v10952
      %v11571 = vrot.slane %v10960, 6
      %v11572 = vsel %vm11370, %v11571, %v11570
      %v11573 = vrot.slane %v10964, 5
      %v11574 = vsel %vm11373, %v11573, %v11572
      %v11575 = vrot.slane %v10968, 4
      %v11576 = vsel %vm11376, %v11575, %v11574
      %v11577 = vrot.slane %v10972, 3
      %v11578 = vsel %vm11379, %v11577, %v11576
      %v11579 = vrot.slane %v10976, 2
      %v11580 = vsel %vm11382, %v11579, %v11578
      %v11581 = vrot.slane %v10980, 1
      %v11582 = vsel %vm11385, %v11581, %v11580
      %v11583 = vrot.slane %v10957, 7
      %v11584 = vsel %vm11367, %v11583, %v10953
      %v11585 = vrot.slane %v10961, 6
      %v11586 = vsel %vm11370, %v11585, %v11584
      %v11587 = vrot.slane %v10965, 5
      %v11588 = vsel %vm11373, %v11587, %v11586
      %v11589 = vrot.slane %v10969, 4
      %v11590 = vsel %vm11376, %v11589, %v11588
      %v11591 = vrot.slane %v10973, 3
      %v11592 = vsel %vm11379, %v11591, %v11590
      %v11593 = vrot.slane %v10977, 2
      %v11594 = vsel %vm11382, %v11593, %v11592
      %v11595 = vrot.slane %v10981, 1
      %v11596 = vsel %vm11385, %v11595, %v11594
      %v11597 = vrot.slane %v10986, 7
      %v11598 = vsel %vm11367, %v11597, %v10982
      %v11599 = vrot.slane %v10990, 6
      %v11600 = vsel %vm11370, %v11599, %v11598
      %v11601 = vrot.slane %v10994, 5
      %v11602 = vsel %vm11373, %v11601, %v11600
      %v11603 = vrot.slane %v10998, 4
      %v11604 = vsel %vm11376, %v11603, %v11602
      %v11605 = vrot.slane %v11002, 3
      %v11606 = vsel %vm11379, %v11605, %v11604
      %v11607 = vrot.slane %v11006, 2
      %v11608 = vsel %vm11382, %v11607, %v11606
      %v11609 = vrot.slane %v11010, 1
      %v11610 = vsel %vm11385, %v11609, %v11608
      %v11611 = vrot.slane %v10987, 7
      %v11612 = vsel %vm11367, %v11611, %v10983
      %v11613 = vrot.slane %v10991, 6
      %v11614 = vsel %vm11370, %v11613, %v11612
      %v11615 = vrot.slane %v10995, 5
      %v11616 = vsel %vm11373, %v11615, %v11614
      %v11617 = vrot.slane %v10999, 4
      %v11618 = vsel %vm11376, %v11617, %v11616
      %v11619 = vrot.slane %v11003, 3
      %v11620 = vsel %vm11379, %v11619, %v11618
      %v11621 = vrot.slane %v11007, 2
      %v11622 = vsel %vm11382, %v11621, %v11620
      %v11623 = vrot.slane %v11011, 1
      %v11624 = vsel %vm11385, %v11623, %v11622
      %v11625 = vrot.slane %v10988, 7
      %v11626 = vsel %vm11367, %v11625, %v10984
      %v11627 = vrot.slane %v10992, 6
      %v11628 = vsel %vm11370, %v11627, %v11626
      %v11629 = vrot.slane %v10996, 5
      %v11630 = vsel %vm11373, %v11629, %v11628
      %v11631 = vrot.slane %v11000, 4
      %v11632 = vsel %vm11376, %v11631, %v11630
      %v11633 = vrot.slane %v11004, 3
      %v11634 = vsel %vm11379, %v11633, %v11632
      %v11635 = vrot.slane %v11008, 2
      %v11636 = vsel %vm11382, %v11635, %v11634
      %v11637 = vrot.slane %v11012, 1
      %v11638 = vsel %vm11385, %v11637, %v11636
      %v11639 = vrot.slane %v10989, 7
      %v11640 = vsel %vm11367, %v11639, %v10985
      %v11641 = vrot.slane %v10993, 6
      %v11642 = vsel %vm11370, %v11641, %v11640
      %v11643 = vrot.slane %v10997, 5
      %v11644 = vsel %vm11373, %v11643, %v11642
      %v11645 = vrot.slane %v11001, 4
      %v11646 = vsel %vm11376, %v11645, %v11644
      %v11647 = vrot.slane %v11005, 3
      %v11648 = vsel %vm11379, %v11647, %v11646
      %v11649 = vrot.slane %v11009, 2
      %v11650 = vsel %vm11382, %v11649, %v11648
      %v11651 = vrot.slane %v11013, 1
      %v11652 = vsel %vm11385, %v11651, %v11650
      %v11653 = vrot.slane %v11018, 7
      %v11654 = vsel %vm11367, %v11653, %v11014
      %v11655 = vrot.slane %v11022, 6
      %v11656 = vsel %vm11370, %v11655, %v11654
      %v11657 = vrot.slane %v11026, 5
      %v11658 = vsel %vm11373, %v11657, %v11656
      %v11659 = vrot.slane %v11030, 4
      %v11660 = vsel %vm11376, %v11659, %v11658
      %v11661 = vrot.slane %v11034, 3
      %v11662 = vsel %vm11379, %v11661, %v11660
      %v11663 = vrot.slane %v11038, 2
      %v11664 = vsel %vm11382, %v11663, %v11662
      %v11665 = vrot.slane %v11042, 1
      %v11666 = vsel %vm11385, %v11665, %v11664
      %v11667 = vrot.slane %v11019, 7
      %v11668 = vsel %vm11367, %v11667, %v11015
      %v11669 = vrot.slane %v11023, 6
      %v11670 = vsel %vm11370, %v11669, %v11668
      %v11671 = vrot.slane %v11027, 5
      %v11672 = vsel %vm11373, %v11671, %v11670
      %v11673 = vrot.slane %v11031, 4
      %v11674 = vsel %vm11376, %v11673, %v11672
      %v11675 = vrot.slane %v11035, 3
      %v11676 = vsel %vm11379, %v11675, %v11674
      %v11677 = vrot.slane %v11039, 2
      %v11678 = vsel %vm11382, %v11677, %v11676
      %v11679 = vrot.slane %v11043, 1
      %v11680 = vsel %vm11385, %v11679, %v11678
      %v11681 = vrot.slane %v11020, 7
      %v11682 = vsel %vm11367, %v11681, %v11016
      %v11683 = vrot.slane %v11024, 6
      %v11684 = vsel %vm11370, %v11683, %v11682
      %v11685 = vrot.slane %v11028, 5
      %v11686 = vsel %vm11373, %v11685, %v11684
      %v11687 = vrot.slane %v11032, 4
      %v11688 = vsel %vm11376, %v11687, %v11686
      %v11689 = vrot.slane %v11036, 3
      %v11690 = vsel %vm11379, %v11689, %v11688
      %v11691 = vrot.slane %v11040, 2
      %v11692 = vsel %vm11382, %v11691, %v11690
      %v11693 = vrot.slane %v11044, 1
      %v11694 = vsel %vm11385, %v11693, %v11692
      %v11695 = vrot.slane %v11021, 7
      %v11696 = vsel %vm11367, %v11695, %v11017
      %v11697 = vrot.slane %v11025, 6
      %v11698 = vsel %vm11370, %v11697, %v11696
      %v11699 = vrot.slane %v11029, 5
      %v11700 = vsel %vm11373, %v11699, %v11698
      %v11701 = vrot.slane %v11033, 4
      %v11702 = vsel %vm11376, %v11701, %v11700
      %v11703 = vrot.slane %v11037, 3
      %v11704 = vsel %vm11379, %v11703, %v11702
      %v11705 = vrot.slane %v11041, 2
      %v11706 = vsel %vm11382, %v11705, %v11704
      %v11707 = vrot.slane %v11045, 1
      %v11708 = vsel %vm11385, %v11707, %v11706
      %v11709 = vrot.slane %v11050, 7
      %v11710 = vsel %vm11367, %v11709, %v11046
      %v11711 = vrot.slane %v11054, 6
      %v11712 = vsel %vm11370, %v11711, %v11710
      %v11713 = vrot.slane %v11058, 5
      %v11714 = vsel %vm11373, %v11713, %v11712
      %v11715 = vrot.slane %v11062, 4
      %v11716 = vsel %vm11376, %v11715, %v11714
      %v11717 = vrot.slane %v11066, 3
      %v11718 = vsel %vm11379, %v11717, %v11716
      %v11719 = vrot.slane %v11070, 2
      %v11720 = vsel %vm11382, %v11719, %v11718
      %v11721 = vrot.slane %v11074, 1
      %v11722 = vsel %vm11385, %v11721, %v11720
      %v11723 = vrot.slane %v11051, 7
      %v11724 = vsel %vm11367, %v11723, %v11047
      %v11725 = vrot.slane %v11055, 6
      %v11726 = vsel %vm11370, %v11725, %v11724
      %v11727 = vrot.slane %v11059, 5
      %v11728 = vsel %vm11373, %v11727, %v11726
      %v11729 = vrot.slane %v11063, 4
      %v11730 = vsel %vm11376, %v11729, %v11728
      %v11731 = vrot.slane %v11067, 3
      %v11732 = vsel %vm11379, %v11731, %v11730
      %v11733 = vrot.slane %v11071, 2
      %v11734 = vsel %vm11382, %v11733, %v11732
      %v11735 = vrot.slane %v11075, 1
      %v11736 = vsel %vm11385, %v11735, %v11734
      %v11737 = vrot.slane %v11052, 7
      %v11738 = vsel %vm11367, %v11737, %v11048
      %v11739 = vrot.slane %v11056, 6
      %v11740 = vsel %vm11370, %v11739, %v11738
      %v11741 = vrot.slane %v11060, 5
      %v11742 = vsel %vm11373, %v11741, %v11740
      %v11743 = vrot.slane %v11064, 4
      %v11744 = vsel %vm11376, %v11743, %v11742
      %v11745 = vrot.slane %v11068, 3
      %v11746 = vsel %vm11379, %v11745, %v11744
      %v11747 = vrot.slane %v11072, 2
      %v11748 = vsel %vm11382, %v11747, %v11746
      %v11749 = vrot.slane %v11076, 1
      %v11750 = vsel %vm11385, %v11749, %v11748
      %v11751 = vrot.slane %v11053, 7
      %v11752 = vsel %vm11367, %v11751, %v11049
      %v11753 = vrot.slane %v11057, 6
      %v11754 = vsel %vm11370, %v11753, %v11752
      %v11755 = vrot.slane %v11061, 5
      %v11756 = vsel %vm11373, %v11755, %v11754
      %v11757 = vrot.slane %v11065, 4
      %v11758 = vsel %vm11376, %v11757, %v11756
      %v11759 = vrot.slane %v11069, 3
      %v11760 = vsel %vm11379, %v11759, %v11758
      %v11761 = vrot.slane %v11073, 2
      %v11762 = vsel %vm11382, %v11761, %v11760
      %v11763 = vrot.slane %v11077, 1
      %v11764 = vsel %vm11385, %v11763, %v11762
      %v11765 = vrot.slane %v11082, 7
      %v11766 = vsel %vm11367, %v11765, %v11078
      %v11767 = vrot.slane %v11086, 6
      %v11768 = vsel %vm11370, %v11767, %v11766
      %v11769 = vrot.slane %v11090, 5
      %v11770 = vsel %vm11373, %v11769, %v11768
      %v11771 = vrot.slane %v11094, 4
      %v11772 = vsel %vm11376, %v11771, %v11770
      %v11773 = vrot.slane %v11098, 3
      %v11774 = vsel %vm11379, %v11773, %v11772
      %v11775 = vrot.slane %v11102, 2
      %v11776 = vsel %vm11382, %v11775, %v11774
      %v11777 = vrot.slane %v11106, 1
      %v11778 = vsel %vm11385, %v11777, %v11776
      %v11779 = vrot.slane %v11083, 7
      %v11780 = vsel %vm11367, %v11779, %v11079
      %v11781 = vrot.slane %v11087, 6
      %v11782 = vsel %vm11370, %v11781, %v11780
      %v11783 = vrot.slane %v11091, 5
      %v11784 = vsel %vm11373, %v11783, %v11782
      %v11785 = vrot.slane %v11095, 4
      %v11786 = vsel %vm11376, %v11785, %v11784
      %v11787 = vrot.slane %v11099, 3
      %v11788 = vsel %vm11379, %v11787, %v11786
      %v11789 = vrot.slane %v11103, 2
      %v11790 = vsel %vm11382, %v11789, %v11788
      %v11791 = vrot.slane %v11107, 1
      %v11792 = vsel %vm11385, %v11791, %v11790
      %v11793 = vrot.slane %v11084, 7
      %v11794 = vsel %vm11367, %v11793, %v11080
      %v11795 = vrot.slane %v11088, 6
      %v11796 = vsel %vm11370, %v11795, %v11794
      %v11797 = vrot.slane %v11092, 5
      %v11798 = vsel %vm11373, %v11797, %v11796
      %v11799 = vrot.slane %v11096, 4
      %v11800 = vsel %vm11376, %v11799, %v11798
      %v11801 = vrot.slane %v11100, 3
      %v11802 = vsel %vm11379, %v11801, %v11800
      %v11803 = vrot.slane %v11104, 2
      %v11804 = vsel %vm11382, %v11803, %v11802
      %v11805 = vrot.slane %v11108, 1
      %v11806 = vsel %vm11385, %v11805, %v11804
      %v11807 = vrot.slane %v11085, 7
      %v11808 = vsel %vm11367, %v11807, %v11081
      %v11809 = vrot.slane %v11089, 6
      %v11810 = vsel %vm11370, %v11809, %v11808
      %v11811 = vrot.slane %v11093, 5
      %v11812 = vsel %vm11373, %v11811, %v11810
      %v11813 = vrot.slane %v11097, 4
      %v11814 = vsel %vm11376, %v11813, %v11812
      %v11815 = vrot.slane %v11101, 3
      %v11816 = vsel %vm11379, %v11815, %v11814
      %v11817 = vrot.slane %v11105, 2
      %v11818 = vsel %vm11382, %v11817, %v11816
      %v11819 = vrot.slane %v11109, 1
      %v11820 = vsel %vm11385, %v11819, %v11818
      %v11853 = vrot.slane %v11386, 4
      %v11854 = vadd.f32 %v11386, %v11853
      %v11855 = vrot.slane %v11854, 2
      %v11856 = vadd.f32 %v11854, %v11855
      %v11857 = vrot.slane %v11856, 1
      %v11858 = vadd.f32 %v11856, %v11857
      %v11859 = vrot.slane %v11400, 4
      %v11860 = vadd.f32 %v11400, %v11859
      %v11861 = vrot.slane %v11860, 2
      %v11862 = vadd.f32 %v11860, %v11861
      %v11863 = vrot.slane %v11862, 1
      %v11864 = vadd.f32 %v11862, %v11863
      %v11865 = vrot.slane %v11414, 4
      %v11866 = vadd.f32 %v11414, %v11865
      %v11867 = vrot.slane %v11866, 2
      %v11868 = vadd.f32 %v11866, %v11867
      %v11869 = vrot.slane %v11868, 1
      %v11870 = vadd.f32 %v11868, %v11869
      %v11871 = vrot.slane %v11428, 4
      %v11872 = vadd.f32 %v11428, %v11871
      %v11873 = vrot.slane %v11872, 2
      %v11874 = vadd.f32 %v11872, %v11873
      %v11875 = vrot.slane %v11874, 1
      %v11876 = vadd.f32 %v11874, %v11875
      %v11877 = vrot.slane %v11442, 4
      %v11878 = vadd.f32 %v11442, %v11877
      %v11879 = vrot.slane %v11878, 2
      %v11880 = vadd.f32 %v11878, %v11879
      %v11881 = vrot.slane %v11880, 1
      %v11882 = vadd.f32 %v11880, %v11881
      %v11883 = vrot.slane %v11456, 4
      %v11884 = vadd.f32 %v11456, %v11883
      %v11885 = vrot.slane %v11884, 2
      %v11886 = vadd.f32 %v11884, %v11885
      %v11887 = vrot.slane %v11886, 1
      %v11888 = vadd.f32 %v11886, %v11887
      %v11889 = vrot.slane %v11470, 4
      %v11890 = vadd.f32 %v11470, %v11889
      %v11891 = vrot.slane %v11890, 2
      %v11892 = vadd.f32 %v11890, %v11891
      %v11893 = vrot.slane %v11892, 1
      %v11894 = vadd.f32 %v11892, %v11893
      %v11895 = vrot.slane %v11484, 4
      %v11896 = vadd.f32 %v11484, %v11895
      %v11897 = vrot.slane %v11896, 2
      %v11898 = vadd.f32 %v11896, %v11897
      %v11899 = vrot.slane %v11898, 1
      %v11900 = vadd.f32 %v11898, %v11899
      %v11901 = vrot.slane %v11498, 4
      %v11902 = vadd.f32 %v11498, %v11901
      %v11903 = vrot.slane %v11902, 2
      %v11904 = vadd.f32 %v11902, %v11903
      %v11905 = vrot.slane %v11904, 1
      %v11906 = vadd.f32 %v11904, %v11905
      %v11907 = vrot.slane %v11512, 4
      %v11908 = vadd.f32 %v11512, %v11907
      %v11909 = vrot.slane %v11908, 2
      %v11910 = vadd.f32 %v11908, %v11909
      %v11911 = vrot.slane %v11910, 1
      %v11912 = vadd.f32 %v11910, %v11911
      %v11913 = vrot.slane %v11526, 4
      %v11914 = vadd.f32 %v11526, %v11913
      %v11915 = vrot.slane %v11914, 2
      %v11916 = vadd.f32 %v11914, %v11915
      %v11917 = vrot.slane %v11916, 1
      %v11918 = vadd.f32 %v11916, %v11917
      %v11919 = vrot.slane %v11540, 4
      %v11920 = vadd.f32 %v11540, %v11919
      %v11921 = vrot.slane %v11920, 2
      %v11922 = vadd.f32 %v11920, %v11921
      %v11923 = vrot.slane %v11922, 1
      %v11924 = vadd.f32 %v11922, %v11923
      %v11925 = vrot.slane %v11554, 4
      %v11926 = vadd.f32 %v11554, %v11925
      %v11927 = vrot.slane %v11926, 2
      %v11928 = vadd.f32 %v11926, %v11927
      %v11929 = vrot.slane %v11928, 1
      %v11930 = vadd.f32 %v11928, %v11929
      %v11931 = vrot.slane %v11568, 4
      %v11932 = vadd.f32 %v11568, %v11931
      %v11933 = vrot.slane %v11932, 2
      %v11934 = vadd.f32 %v11932, %v11933
      %v11935 = vrot.slane %v11934, 1
      %v11936 = vadd.f32 %v11934, %v11935
      %v11937 = vrot.slane %v11582, 4
      %v11938 = vadd.f32 %v11582, %v11937
      %v11939 = vrot.slane %v11938, 2
      %v11940 = vadd.f32 %v11938, %v11939
      %v11941 = vrot.slane %v11940, 1
      %v11942 = vadd.f32 %v11940, %v11941
      %v11943 = vrot.slane %v11596, 4
      %v11944 = vadd.f32 %v11596, %v11943
      %v11945 = vrot.slane %v11944, 2
      %v11946 = vadd.f32 %v11944, %v11945
      %v11947 = vrot.slane %v11946, 1
      %v11948 = vadd.f32 %v11946, %v11947
      %v11949 = vrot.slane %v11610, 4
      %v11950 = vadd.f32 %v11610, %v11949
      %v11951 = vrot.slane %v11950, 2
      %v11952 = vadd.f32 %v11950, %v11951
      %v11953 = vrot.slane %v11952, 1
      %v11954 = vadd.f32 %v11952, %v11953
      %v11955 = vrot.slane %v11624, 4
      %v11956 = vadd.f32 %v11624, %v11955
      %v11957 = vrot.slane %v11956, 2
      %v11958 = vadd.f32 %v11956, %v11957
      %v11959 = vrot.slane %v11958, 1
      %v11960 = vadd.f32 %v11958, %v11959
      %v11961 = vrot.slane %v11638, 4
      %v11962 = vadd.f32 %v11638, %v11961
      %v11963 = vrot.slane %v11962, 2
      %v11964 = vadd.f32 %v11962, %v11963
      %v11965 = vrot.slane %v11964, 1
      %v11966 = vadd.f32 %v11964, %v11965
      %v11967 = vrot.slane %v11652, 4
      %v11968 = vadd.f32 %v11652, %v11967
      %v11969 = vrot.slane %v11968, 2
      %v11970 = vadd.f32 %v11968, %v11969
      %v11971 = vrot.slane %v11970, 1
      %v11972 = vadd.f32 %v11970, %v11971
      %v11973 = vrot.slane %v11666, 4
      %v11974 = vadd.f32 %v11666, %v11973
      %v11975 = vrot.slane %v11974, 2
      %v11976 = vadd.f32 %v11974, %v11975
      %v11977 = vrot.slane %v11976, 1
      %v11978 = vadd.f32 %v11976, %v11977
      %v11979 = vrot.slane %v11680, 4
      %v11980 = vadd.f32 %v11680, %v11979
      %v11981 = vrot.slane %v11980, 2
      %v11982 = vadd.f32 %v11980, %v11981
      %v11983 = vrot.slane %v11982, 1
      %v11984 = vadd.f32 %v11982, %v11983
      %v11985 = vrot.slane %v11694, 4
      %v11986 = vadd.f32 %v11694, %v11985
      %v11987 = vrot.slane %v11986, 2
      %v11988 = vadd.f32 %v11986, %v11987
      %v11989 = vrot.slane %v11988, 1
      %v11990 = vadd.f32 %v11988, %v11989
      %v11991 = vrot.slane %v11708, 4
      %v11992 = vadd.f32 %v11708, %v11991
      %v11993 = vrot.slane %v11992, 2
      %v11994 = vadd.f32 %v11992, %v11993
      %v11995 = vrot.slane %v11994, 1
      %v11996 = vadd.f32 %v11994, %v11995
      %v11997 = vrot.slane %v11722, 4
      %v11998 = vadd.f32 %v11722, %v11997
      %v11999 = vrot.slane %v11998, 2
      %v12000 = vadd.f32 %v11998, %v11999
      %v12001 = vrot.slane %v12000, 1
      %v12002 = vadd.f32 %v12000, %v12001
      %v12003 = vrot.slane %v11736, 4
      %v12004 = vadd.f32 %v11736, %v12003
      %v12005 = vrot.slane %v12004, 2
      %v12006 = vadd.f32 %v12004, %v12005
      %v12007 = vrot.slane %v12006, 1
      %v12008 = vadd.f32 %v12006, %v12007
      %v12009 = vrot.slane %v11750, 4
      %v12010 = vadd.f32 %v11750, %v12009
      %v12011 = vrot.slane %v12010, 2
      %v12012 = vadd.f32 %v12010, %v12011
      %v12013 = vrot.slane %v12012, 1
      %v12014 = vadd.f32 %v12012, %v12013
      %v12015 = vrot.slane %v11764, 4
      %v12016 = vadd.f32 %v11764, %v12015
      %v12017 = vrot.slane %v12016, 2
      %v12018 = vadd.f32 %v12016, %v12017
      %v12019 = vrot.slane %v12018, 1
      %v12020 = vadd.f32 %v12018, %v12019
      %v12021 = vrot.slane %v11778, 4
      %v12022 = vadd.f32 %v11778, %v12021
      %v12023 = vrot.slane %v12022, 2
      %v12024 = vadd.f32 %v12022, %v12023
      %v12025 = vrot.slane %v12024, 1
      %v12026 = vadd.f32 %v12024, %v12025
      %v12027 = vrot.slane %v11792, 4
      %v12028 = vadd.f32 %v11792, %v12027
      %v12029 = vrot.slane %v12028, 2
      %v12030 = vadd.f32 %v12028, %v12029
      %v12031 = vrot.slane %v12030, 1
      %v12032 = vadd.f32 %v12030, %v12031
      %v12033 = vrot.slane %v11806, 4
      %v12034 = vadd.f32 %v11806, %v12033
      %v12035 = vrot.slane %v12034, 2
      %v12036 = vadd.f32 %v12034, %v12035
      %v12037 = vrot.slane %v12036, 1
      %v12038 = vadd.f32 %v12036, %v12037
      %v12039 = vrot.slane %v11820, 4
      %v12040 = vadd.f32 %v11820, %v12039
      %v12041 = vrot.slane %v12040, 2
      %v12042 = vadd.f32 %v12040, %v12041
      %v12043 = vrot.slane %v12042, 1
      %v12044 = vadd.f32 %v12042, %v12043
      %v12077 = vrot.slane %v11882, 7
      %v12078 = vsel %vm11367, %v12077, %v11858
      %v12079 = vrot.slane %v11906, 6
      %v12080 = vsel %vm11370, %v12079, %v12078
      %v12081 = vrot.slane %v11930, 5
      %v12082 = vsel %vm11373, %v12081, %v12080
      %v12083 = vrot.slane %v11954, 4
      %v12084 = vsel %vm11376, %v12083, %v12082
      %v12085 = vrot.slane %v11978, 3
      %v12086 = vsel %vm11379, %v12085, %v12084
      %v12087 = vrot.slane %v12002, 2
      %v12088 = vsel %vm11382, %v12087, %v12086
      %v12089 = vrot.slane %v12026, 1
      %v12090 = vsel %vm11385, %v12089, %v12088
      %v12091 = vrot.slane %v11888, 7
      %v12092 = vsel %vm11367, %v12091, %v11864
      %v12093 = vrot.slane %v11912, 6
      %v12094 = vsel %vm11370, %v12093, %v12092
      %v12095 = vrot.slane %v11936, 5
      %v12096 = vsel %vm11373, %v12095, %v12094
      %v12097 = vrot.slane %v11960, 4
      %v12098 = vsel %vm11376, %v12097, %v12096
      %v12099 = vrot.slane %v11984, 3
      %v12100 = vsel %vm11379, %v12099, %v12098
      %v12101 = vrot.slane %v12008, 2
      %v12102 = vsel %vm11382, %v12101, %v12100
      %v12103 = vrot.slane %v12032, 1
      %v12104 = vsel %vm11385, %v12103, %v12102
      %v12105 = vrot.slane %v11894, 7
      %v12106 = vsel %vm11367, %v12105, %v11870
      %v12107 = vrot.slane %v11918, 6
      %v12108 = vsel %vm11370, %v12107, %v12106
      %v12109 = vrot.slane %v11942, 5
      %v12110 = vsel %vm11373, %v12109, %v12108
      %v12111 = vrot.slane %v11966, 4
      %v12112 = vsel %vm11376, %v12111, %v12110
      %v12113 = vrot.slane %v11990, 3
      %v12114 = vsel %vm11379, %v12113, %v12112
      %v12115 = vrot.slane %v12014, 2
      %v12116 = vsel %vm11382, %v12115, %v12114
      %v12117 = vrot.slane %v12038, 1
      %v12118 = vsel %vm11385, %v12117, %v12116
      %v12119 = vrot.slane %v11900, 7
      %v12120 = vsel %vm11367, %v12119, %v11876
      %v12121 = vrot.slane %v11924, 6
      %v12122 = vsel %vm11370, %v12121, %v12120
      %v12123 = vrot.slane %v11948, 5
      %v12124 = vsel %vm11373, %v12123, %v12122
      %v12125 = vrot.slane %v11972, 4
      %v12126 = vsel %vm11376, %v12125, %v12124
      %v12127 = vrot.slane %v11996, 3
      %v12128 = vsel %vm11379, %v12127, %v12126
      %v12129 = vrot.slane %v12020, 2
      %v12130 = vsel %vm11382, %v12129, %v12128
      %v12131 = vrot.slane %v12044, 1
      %v12132 = vsel %vm11385, %v12131, %v12130
      %12137 = vst [vmem:[%s201] sm:$0xff] %v12090
      %12138 = vst [vmem:[%s201 + $0x8] sm:$0xff] %v12104
      %12139 = vst [vmem:[%s201 + $0x10] sm:$0xff] %v12118
      %12140 = vst [vmem:[%s201 + $0x18] sm:$0xff] %v12132
      %s12141 = smul.u32 4, %s18
      %p12142 = scmp.lt.s32.totalorder %s17, 1
      %s12143 = scalar_select %p12142, %s17, 1
      %p12144 = scmp.lt.s32.totalorder %s12141, 3
      %s12145 = scalar_select %p12144, %s12141, 3
      %s12146 = smul.addr %s12143, 4
      %s12147 = sadd.s32 %s12145, %s12146
      %s12148 = smul.addr %s12147, 8
      %s12149 = scalar_lea.vmem %s2, %s12148
      // Predicated region
      $region29: #{dfwin2_forward.1} parent=27 // pred_check
        %p12150 = pneg %p99
      $region30: #{dfwin2_forward.1} parent=27 // pred_check_branch
        %12152 = sbr.rel (%p12150) target = $region32
      $region31: #{dfwin2_forward.1} parent=27 // pred_region
        %s12153 = smul.u32 4, %s18
      $region32: #{dfwin2_forward.1} parent=27 // pred_fallthru
        _
    $region28: #{dfwin2_forward.1} parent=5 // pred_fallthru
      _
    %p12154 = scmp.le.s32.totalorder 2, %s8
    // Predicated region
    $region33: #{dfwin2_forward.1} parent=5 // pred_check
      %p12155 = pneg %p12154
    $region34: #{dfwin2_forward.1} parent=5 // pred_check_branch
      %12157 = sbr.rel (%p12155) target = $region36
    $region35: #{dfwin2_forward.1} parent=5 // pred_region
      %s12158 = ssub.s32 %s8, 2
      // Predicated region
      $region37: #{dfwin2_forward.1} parent=35 // pred_check
        %p12159 = pneg %p105
      $region38: #{dfwin2_forward.1} parent=35 // pred_check_branch
        %12161 = sbr.rel (%p12159) target = $region40
      $region39: #{dfwin2_forward.1} parent=35 // pred_region
        %s12162 = smul.u32 4, %s20
        %p12163 = scmp.lt.s32.totalorder %s19, 1
        %s12164 = scalar_select %p12163, %s19, 1
        %p12165 = scmp.lt.s32.totalorder %s12162, 3
        %s12166 = scalar_select %p12165, %s12162, 3
        %s12167 = smul.addr %s12164, 4
        %s12168 = sadd.s32 %s12166, %s12167
        %s12169 = smul.addr %s12168, 8
        %s12170 = scalar_lea.vmem %s2, %s12169
      $region40: #{dfwin2_forward.1} parent=35 // pred_fallthru
        _
    $region36: #{dfwin2_forward.1} parent=5 // pred_fallthru
      _
  $region6: #{dfwin2_forward.1} parent=0 // loop_footer
    %s12 = sadd.s32 1, %s8
  $region7: #{dfwin2_forward.1} parent=0 // loop_footer_branch
    %7 = sbr.rel target = $region3
  $region8: #{dfwin2_forward.1} parent=0 // loop_exit
    _

</llo_original>
